<compile_context>
chip_gen: v5e
topology: v5e:2x2
jax: 0.10.0
libtpu: 0.0.40
codegen_flags: <defaults>
</compile_context>

<pallas_src>
import math
import functools

import jax
import jax.numpy as jnp
from jax import lax
from jax.experimental import pallas as pl
from jax.experimental.pallas import tpu as pltpu


# ---------------------------------------------------------------------------- small helpers

def _cparams(*sem):
    """dimension_semantics compiler params (guarded for older jax versions)."""
    cls = getattr(pltpu, "CompilerParams", None) or getattr(pltpu, "TPUCompilerParams", None)
    if cls is None:
        return None
    try:
        return cls(dimension_semantics=tuple(sem))
    except Exception:
        return None


def _approx_recip(x):
    if hasattr(pl, "reciprocal"):
        return pl.reciprocal(x, approx=True)
    return 1.0 / x


def sequence_mask(lengths, max_len):
    return (jnp.arange(max_len)[None, :] < lengths[:, None]).astype(jnp.float32)


def im2col_flat(x_flat, mask_flat, B, T, K, dil):
    """(C, B*T) -> (K*C, B*T) bf16 with per-batch zero padding (PyTorch conv1d semantics)."""
    C = x_flat.shape[0]
    xm = x_flat if mask_flat is None else x_flat * mask_flat
    x3 = xm.reshape(C, B, T)
    pad = (K * dil - dil) // 2
    xp = jnp.pad(x3, ((0, 0), (0, 0), (pad, pad)))
    cols = [xp[:, :, k * dil:k * dil + T] for k in range(K)]
    return jnp.concatenate(cols, axis=0).reshape(K * C, B * T).astype(jnp.bfloat16)


# ---------------------------------------------------------------------------- Pallas kernels

def dense_pallas(x, w, b, *, relu=False, in_mask=None, out_mask=None):
    """Fused 1x1-conv / im2col-conv over the whole batch:
       out = [relu]((W @ (x [*in_mask])) + b) [*out_mask],  x: (C_in, N), W: (C_out, C_in)."""
    C_out, C_in = w.shape
    N = x.shape[1]
    b2 = b.reshape(C_out, 1)
    has_im = in_mask is not None
    has_om = out_mask is not None

    inputs = [x, w, b2]
    in_specs = [pl.BlockSpec((C_in, N), lambda i: (0, 0)),
                pl.BlockSpec((C_out, C_in), lambda i: (0, 0)),
                pl.BlockSpec((C_out, 1), lambda i: (0, 0))]
    if has_im:
        inputs.append(in_mask)
        in_specs.append(pl.BlockSpec((1, N), lambda i: (0, 0)))
    if has_om:
        inputs.append(out_mask)
        in_specs.append(pl.BlockSpec((1, N), lambda i: (0, 0)))

    def kernel(*refs):
        x_ref, w_ref, b_ref = refs[0], refs[1], refs[2]
        idx = 3
        im_ref = refs[idx] if has_im else None
        idx += int(has_im)
        om_ref = refs[idx] if has_om else None
        o_ref = refs[-1]

        xv = x_ref[...]
        if has_im:
            xv = xv.astype(jnp.float32) * im_ref[...]
        wv = w_ref[...]
        if C_in == 1:                                           # outer product, keep on VPU
            acc = wv.astype(jnp.float32) * xv.astype(jnp.float32)
        elif C_out == 1:                                        # row reduction, keep on VPU/XLU
            acc = jnp.sum(wv.astype(jnp.float32).reshape(C_in, 1) * xv.astype(jnp.float32),
                          axis=0, keepdims=True)
        else:                                                   # bf16 MXU, f32 accumulate
            acc = jnp.dot(wv.astype(jnp.bfloat16), xv.astype(jnp.bfloat16),
                          preferred_element_type=jnp.float32)
        acc = acc + b_ref[...]
        if relu:
            acc = jnp.maximum(acc, 0.0)
        if has_om:
            acc = acc * om_ref[...]
        o_ref[...] = acc

    return pl.pallas_call(
        kernel,
        out_shape=jax.ShapeDtypeStruct((C_out, N), jnp.float32),
        grid=(1,),
        in_specs=in_specs,
        out_specs=pl.BlockSpec((C_out, N), lambda i: (0, 0)),
        compiler_params=_cparams("arbitrary"),
    )(*inputs)


def layernorm_pallas(x, gamma, beta, *, residual=None, in_mask=None, out_mask=None, eps=1e-4):
    """attentions.LayerNorm over the channel axis of (C, N), with fused residual add and masks:
       LN((x [*in_mask]) [+ residual]) [*out_mask]."""
    C, N = x.shape
    g2 = gamma.reshape(C, 1)
    b2 = beta.reshape(C, 1)
    has_res = residual is not None
    has_im = in_mask is not None
    has_om = out_mask is not None

    inputs = [x, g2, b2]
    in_specs = [pl.BlockSpec((C, N), lambda i: (0, 0)),
                pl.BlockSpec((C, 1), lambda i: (0, 0)),
                pl.BlockSpec((C, 1), lambda i: (0, 0))]
    if has_res:
        inputs.append(residual)
        in_specs.append(pl.BlockSpec((C, N), lambda i: (0, 0)))
    if has_im:
        inputs.append(in_mask)
        in_specs.append(pl.BlockSpec((1, N), lambda i: (0, 0)))
    if has_om:
        inputs.append(out_mask)
        in_specs.append(pl.BlockSpec((1, N), lambda i: (0, 0)))

    def kernel(*refs):
        x_ref, g_ref, b_ref = refs[0], refs[1], refs[2]
        idx = 3
        r_ref = refs[idx] if has_res else None
        idx += int(has_res)
        im_ref = refs[idx] if has_im else None
        idx += int(has_im)
        om_ref = refs[idx] if has_om else None
        o_ref = refs[-1]

        xv = x_ref[...]
        if has_im:
            xv = xv * im_ref[...]
        if has_res:
            xv = xv + r_ref[...]
        mean = jnp.mean(xv, axis=0, keepdims=True)
        xc = xv - mean
        var = jnp.mean(xc * xc, axis=0, keepdims=True)
        yv = xc * lax.rsqrt(var + eps) * g_ref[...] + b_ref[...]
        if has_om:
            yv = yv * om_ref[...]
        o_ref[...] = yv

    return pl.pallas_call(
        kernel,
        out_shape=jax.ShapeDtypeStruct((C, N), jnp.float32),
        grid=(1,),
        in_specs=in_specs,
        out_specs=pl.BlockSpec((C, N), lambda i: (0, 0)),
        compiler_params=_cparams("arbitrary"),
    )(*inputs)


def mha_pallas(qkv, x_lengths, *, batch, seq, n_heads):
    """Fused multi-head self attention for the whole batch in one launch.
    qkv: (3H, B*T) fused q/k/v projection output; mask built in-kernel from x_lengths.
    Returns (B*H, T) with rows ordered (b, head, head_dim) so a cheap reshape recovers (H, B*T).
    """
    C3, N = qkv.shape
    H = C3 // 3
    dk = H // n_heads
    T = seq
    scale = 1.0 / math.sqrt(dk)

    def kernel(lens_ref, qkv_ref, o_ref):
        allv = qkv_ref[...]
        qrow = lax.broadcasted_iota(jnp.int32, (T, T), 0)
        kcol = lax.broadcasted_iota(jnp.int32, (T, T), 1)
        dn_qk = (((0,), (0,)), ((), ()))     # contract head_dim of q / k  -> (Tq, Tk)
        dn_pv = (((1,), (1,)), ((), ()))     # contract Tk of v / p        -> (dk, Tq)
        for b in range(batch):
            L = lens_ref[b]
            valid = (qrow < L) & (kcol < L)
            for h in range(n_heads):
                qs = allv[h * dk:(h + 1) * dk, b * T:(b + 1) * T]
                ks = allv[H + h * dk:H + (h + 1) * dk, b * T:(b + 1) * T]
                vs = allv[2 * H + h * dk:2 * H + (h + 1) * dk, b * T:(b + 1) * T]
                s = lax.dot_general(qs.astype(jnp.bfloat16), ks.astype(jnp.bfloat16),
                                    dn_qk, preferred_element_type=jnp.float32) * scale
                s = jnp.where(valid, s, -1e4)
                s = s - jnp.max(s, axis=-1, keepdims=True)
                p = jnp.exp(s)
                denom = jnp.sum(p, axis=-1, keepdims=True)
                p = p * _approx_recip(denom)
                ctx = lax.dot_general(vs.astype(jnp.bfloat16), p.astype(jnp.bfloat16),
                                      dn_pv, preferred_element_type=jnp.float32)
                r0 = (b * n_heads + h) * dk
                o_ref[r0:r0 + dk, :] = ctx

    grid_spec = pltpu.PrefetchScalarGridSpec(
        num_scalar_prefetch=1,
        grid=(1,),
        in_specs=[pl.BlockSpec((C3, N), lambda i, lens: (0, 0))],
        out_specs=pl.BlockSpec((batch * H, T), lambda i, lens: (0, 0)),
    )
    # TODO(synk): for production sequence lengths convert to a flash-style KV-tiled kernel
    # (online softmax) so VMEM stays bounded on v7x.
    return pl.pallas_call(
        kernel,
        out_shape=jax.ShapeDtypeStruct((batch * H, T), jnp.float32),
        grid_spec=grid_spec,
        compiler_params=_cparams("arbitrary"),
    )(x_lengths, qkv)


def actnorm_invconv_pallas(x, mask, bias, logs, mix):
    """Fused ActNorm + InvConvNear: z = (mix @ (bias + exp(logs) * x)) * mask.
    x: (C, N); bias/logs: (C, 1); mix: dense (C, C) channel-mixing matrix built from the 4x4
    InvConvNear weight (equivalent to the reshape/permute/1x1-conv of the reference)."""
    C, N = x.shape

    def kernel(x_ref, m_ref, b_ref, l_ref, w_ref, o_ref):
        y = b_ref[...] + jnp.exp(l_ref[...]) * x_ref[...]
        z = jnp.dot(w_ref[...].astype(jnp.bfloat16), y.astype(jnp.bfloat16),
                    preferred_element_type=jnp.float32)
        o_ref[...] = z * m_ref[...]

    return pl.pallas_call(
        kernel,
        out_shape=jax.ShapeDtypeStruct((C, N), jnp.float32),
        grid=(1,),
        in_specs=[pl.BlockSpec((C, N), lambda i: (0, 0)),
                  pl.BlockSpec((1, N), lambda i: (0, 0)),
                  pl.BlockSpec((C, 1), lambda i: (0, 0)),
                  pl.BlockSpec((C, 1), lambda i: (0, 0)),
                  pl.BlockSpec((C, C), lambda i: (0, 0))],
        out_specs=pl.BlockSpec((C, N), lambda i: (0, 0)),
        compiler_params=_cparams("arbitrary"),
    )(x, mask, bias, logs, mix)


def wavenet_layer_pallas(x_col, g_cond, h, skip, mask, w_in, b_in, w_rs, b_rs,
                         *, layer, hidden, last):
    """One fully-fused WaveNet layer: dilated conv (im2col matmul) + gated tanh/sigmoid +
    res/skip 1x1 + residual/skip update + mask.  Returns (h_new, skip_new)."""
    KHd, N = x_col.shape
    Hd = hidden
    rs_out = w_rs.shape[0]
    b_in2 = b_in.reshape(2 * Hd, 1)
    b_rs2 = b_rs.reshape(rs_out, 1)

    def kernel(xc_ref, g_ref, h_ref, s_ref, m_ref, wi_ref, bi_ref, wr_ref, br_ref,
               ho_ref, so_ref):
        x_in = jnp.dot(wi_ref[...].astype(jnp.bfloat16), xc_ref[...],
                       preferred_element_type=jnp.float32) + bi_ref[...]
        a = x_in + g_ref[...]
        acts = jnp.tanh(a[:Hd]) * jax.nn.sigmoid(a[Hd:])
        rs = jnp.dot(wr_ref[...].astype(jnp.bfloat16), acts.astype(jnp.bfloat16),
                     preferred_element_type=jnp.float32) + br_ref[...]
        if last:
            so_ref[...] = s_ref[...] + rs
            ho_ref[...] = h_ref[...]
        else:
            ho_ref[...] = (h_ref[...] + rs[:Hd]) * m_ref[...]
            so_ref[...] = s_ref[...] + rs[Hd:]

    in_specs = [
        pl.BlockSpec((KHd, N), lambda i: (0, 0)),
        pl.BlockSpec((2 * Hd, N), lambda i: (layer, 0)),   # only this layer's cond slab is DMA'd
        pl.BlockSpec((Hd, N), lambda i: (0, 0)),
        pl.BlockSpec((Hd, N), lambda i: (0, 0)),
        pl.BlockSpec((1, N), lambda i: (0, 0)),
        pl.BlockSpec((2 * Hd, KHd), lambda i: (0, 0)),
        pl.BlockSpec((2 * Hd, 1), lambda i: (0, 0)),
        pl.BlockSpec((rs_out, Hd), lambda i: (0, 0)),
        pl.BlockSpec((rs_out, 1), lambda i: (0, 0)),
    ]
    out_specs = [pl.BlockSpec((Hd, N), lambda i: (0, 0)),
                 pl.BlockSpec((Hd, N), lambda i: (0, 0))]
    return pl.pallas_call(
        kernel,
        out_shape=[jax.ShapeDtypeStruct((Hd, N), jnp.float32),
                   jax.ShapeDtypeStruct((Hd, N), jnp.float32)],
        grid=(1,),
        in_specs=in_specs,
        out_specs=out_specs,
        compiler_params=_cparams("arbitrary"),
    )(x_col, g_cond, h, skip, mask, w_in, b_in2, w_rs, b_rs2)


def coupling_end_pallas(skip, x1, mask, w_end, b_end, *, sigmoid_scale):
    """Fused coupling tail: end 1x1 conv on skip*mask, affine z1 = (m + exp(logs)*x1)*mask,
    plus the masked logs needed for the logdet."""
    Hd, N = skip.shape
    C = w_end.shape[0]
    half = C // 2
    b2 = b_end.reshape(C, 1)

    def kernel(s_ref, x1_ref, mk_ref, w_ref, b_ref, z_ref, l_ref):
        sm = s_ref[...] * mk_ref[...]
        out = jnp.dot(w_ref[...].astype(jnp.bfloat16), sm.astype(jnp.bfloat16),
                      preferred_element_type=jnp.float32) + b_ref[...]
        mu = out[:half]
        logs = out[half:]
        if sigmoid_scale:
            logs = jnp.log(1e-6 + jax.nn.sigmoid(logs + 2.0))
        z_ref[...] = (mu + jnp.exp(logs) * x1_ref[...]) * mk_ref[...]
        l_ref[...] = logs * mk_ref[...]

    return pl.pallas_call(
        kernel,
        out_shape=[jax.ShapeDtypeStruct((half, N), jnp.float32),
                   jax.ShapeDtypeStruct((half, N), jnp.float32)],
        grid=(1,),
        in_specs=[pl.BlockSpec((Hd, N), lambda i: (0, 0)),
                  pl.BlockSpec((half, N), lambda i: (0, 0)),
                  pl.BlockSpec((1, N), lambda i: (0, 0)),
                  pl.BlockSpec((C, Hd), lambda i: (0, 0)),
                  pl.BlockSpec((C, 1), lambda i: (0, 0))],
        out_specs=[pl.BlockSpec((half, N), lambda i: (0, 0)),
                   pl.BlockSpec((half, N), lambda i: (0, 0))],
        compiler_params=_cparams("arbitrary"),
    )(skip, x1, mask, w_end, b2)


def logp_pallas(x_m, x_logs, z):
    """Fused Gaussian log-prob grid (logp1+logp2+logp3+logp4) -> (B, Tx, Ty).
    All contractions run over the channel axis via dot_general (no in-kernel transposes)."""
    B, C, Tx = x_m.shape
    Ty = z.shape[2]
    cst = -0.5 * math.log(2.0 * math.pi)
    dn = (((0,), (0,)), ((), ()))

    def kernel(m_ref, s_ref, z_ref, o_ref):
        xm, xlogs, zv = m_ref[0], s_ref[0], z_ref[0]
        x_s_sq_r = jnp.exp(-2.0 * xlogs)                                   # (C, Tx)
        t2 = lax.dot_general(x_s_sq_r.astype(jnp.bfloat16),
                             (-0.5 * zv * zv).astype(jnp.bfloat16), dn,
                             preferred_element_type=jnp.float32)           # (Tx, Ty)
        t3 = lax.dot_general((xm * x_s_sq_r).astype(jnp.bfloat16),
                             zv.astype(jnp.bfloat16), dn,
                             preferred_element_type=jnp.float32)           # (Tx, Ty)
        cterm = cst - xlogs - 0.5 * xm * xm * x_s_sq_r                     # (C, Tx)
        t1 = lax.dot_general(cterm, jnp.ones((C, Ty), jnp.float32), dn,
                             preferred_element_type=jnp.float32)           # (Tx, Ty) col-sums
        o_ref[0] = t1 + t2 + t3

    return pl.pallas_call(
        kernel,
        out_shape=jax.ShapeDtypeStruct((B, Tx, Ty), jnp.float32),
        grid=(B,),
        in_specs=[pl.BlockSpec((1, C, Tx), lambda b: (b, 0, 0)),
                  pl.BlockSpec((1, C, Tx), lambda b: (b, 0, 0)),
                  pl.BlockSpec((1, C, Ty), lambda b: (b, 0, 0))],
        out_specs=pl.BlockSpec((1, Tx, Ty), lambda b: (b, 0, 0)),
        compiler_params=_cparams("parallel"),
    )(x_m, x_logs, z)


def ym_ylogs_pallas(attn, x_m, x_logs):
    """y_m / y_logs = x_{m,logs} @ attn, attn read once, no transpose-bmm-transpose."""
    B, Tx, Ty = attn.shape
    C = x_m.shape[1]

    def kernel(a_ref, m_ref, s_ref, ym_ref, ys_ref):
        a = a_ref[0].astype(jnp.bfloat16)
        ym_ref[0] = jnp.dot(m_ref[0].astype(jnp.bfloat16), a,
                            preferred_element_type=jnp.float32)
        ys_ref[0] = jnp.dot(s_ref[0].astype(jnp.bfloat16), a,
                            preferred_element_type=jnp.float32)

    return pl.pallas_call(
        kernel,
        out_shape=[jax.ShapeDtypeStruct((B, C, Ty), jnp.float32),
                   jax.ShapeDtypeStruct((B, C, Ty), jnp.float32)],
        grid=(B,),
        in_specs=[pl.BlockSpec((1, Tx, Ty), lambda b: (b, 0, 0)),
                  pl.BlockSpec((1, C, Tx), lambda b: (b, 0, 0)),
                  pl.BlockSpec((1, C, Tx), lambda b: (b, 0, 0))],
        out_specs=[pl.BlockSpec((1, C, Ty), lambda b: (b, 0, 0)),
                   pl.BlockSpec((1, C, Ty), lambda b: (b, 0, 0))],
        compiler_params=_cparams("parallel"),
    )(attn, x_m, x_logs)


# ---------------------------------------------------------------------------- model glue

def invconv_dense_matrix(weight, C, n_split):
    """Dense (C, C) channel-mixing matrix equivalent to InvConvNear's reshape/permute + 4x4 mix."""
    half = n_split // 2
    cg = C // n_split
    c = jnp.arange(C)
    a = c // (cg * half)
    rem = c % (cg * half)
    g = rem // half
    s = rem % half
    r = a * half + s
    same_group = (g[:, None] == g[None, :]).astype(weight.dtype)
    return weight[r[:, None], r[None, :]] * same_group


def text_encoder_forward(p, x_tokens, x_lengths, g_enc, hp):
    H = hp['hidden_channels']
    nh = hp['n_heads']
    K = hp['kernel_size']
    B, T = x_tokens.shape
    N = B * T

    emb = p['emb'][x_tokens] * math.sqrt(H)                    # (B, T, H)
    h = jnp.transpose(emb, (2, 0, 1)).reshape(H, N)            # (H, B*T) lane-dense layout
    mask_bt = sequence_mask(x_lengths, T)                      # (B, T)
    mask = mask_bt.reshape(1, N)                               # (1, B*T)

    n_layers = hp['n_layers_enc']
    for i in range(n_layers):
        ap = p['attn'][i]
        qkv = dense_pallas(h, ap['qkv_w'], ap['qkv_b'], in_mask=mask)          # fused q/k/v
        att = mha_pallas(qkv, x_lengths, batch=B, seq=T, n_heads=nh)           # (B*H, T)
        att = jnp.transpose(att.reshape(B, H, T), (1, 0, 2)).reshape(H, N)
        y = dense_pallas(att, ap['o_w'], ap['o_b'])
        h = layernorm_pallas(h, p['ln1'][i]['g'], p['ln1'][i]['b'],
                             residual=y, in_mask=mask)
        fp = p['ffn'][i]
        xc1 = im2col_flat(h, mask, B, T, K, 1)
        f1 = dense_pallas(xc1, fp['c1_w'], fp['c1_b'], relu=True)
        xc2 = im2col_flat(f1, mask, B, T, K, 1)
        y2 = dense_pallas(xc2, fp['c2_w'], fp['c2_b'], out_mask=mask)
        h = layernorm_pallas(h, p['ln2'][i]['g'], p['ln2'][i]['b'],
                             residual=y2,
                             out_mask=mask if i == n_layers - 1 else None)
    # h now == encoder output * x_mask

    # fused proj_m / proj_s (single matmul, 2C output rows)
    ms = dense_pallas(h, p['proj_ms_w'], p['proj_ms_b'], out_mask=mask)
    Cc = p['proj_ms_w'].shape[0] // 2
    x_m_flat, x_logs_flat = ms[:Cc], ms[Cc:]

    # duration / pitch predictors on [detach(x); speaker embedding]
    spk = g_enc.shape[1]
    g_bt = jnp.transpose(g_enc[:, :, 0], (1, 0))                               # (spk, B)
    g_exp = jnp.broadcast_to(g_bt[:, :, None], (spk, B, T)).reshape(spk, N)
    x_dp = jnp.concatenate([h, g_exp], axis=0)                                 # detach is a no-op
    xc_dp = im2col_flat(x_dp, mask, B, T, K, 1)

    def run_dp(dpp):
        a = dense_pallas(xc_dp, dpp['c1_w'], dpp['c1_b'], relu=True)
        a = layernorm_pallas(a, dpp['n1_g'], dpp['n1_b'])
        xc = im2col_flat(a, mask, B, T, K, 1)
        a = dense_pallas(xc, dpp['c2_w'], dpp['c2_b'], relu=True)
        a = layernorm_pallas(a, dpp['n2_g'], dpp['n2_b'])
        return dense_pallas(a, dpp['proj_w'], dpp['proj_b'],
                            in_mask=mask, out_mask=mask)                        # (1, N)

    logw_flat = run_dp(p['dp_w'])
    x_pitch_flat = run_dp(p['dp_pitch']) * mask

    def to_bct(a, c):
        return jnp.transpose(a.reshape(c, B, T), (1, 0, 2))

    x_m = to_bct(x_m_flat, Cc)
    x_logs = to_bct(x_logs_flat, Cc)
    logw = to_bct(logw_flat, 1)
    x_pitch = to_bct(x_pitch_flat, 1)
    x_mask = mask_bt[:, None, :]
    return x_m, x_logs, logw, x_mask, x_pitch


def flow_decoder_forward(p, x_flat, mask_flat, g_flat, x_len, B, Ty, hp):
    """FlowSpecDecoder forward (n_sqz == 1 -> squeeze/unsqueeze are identity), flattened layout."""
    C = hp['out_channels']
    ns = hp['n_split']
    Hd = hp['hidden_channels_dec']
    Kd = hp['kernel_size_dec']
    nbl = hp['n_block_layers']
    half = C // 2
    N = B * Ty

    x = x_flat
    logdet_tot = jnp.zeros((B,), jnp.float32)
    for blk in p['blocks']:
        # ---- ActNorm + InvConvNear fused into one kernel
        mix = invconv_dense_matrix(blk['inv_w'], C, ns)
        x = actnorm_invconv_pallas(x, mask_flat, blk['an_bias'], blk['an_logs'], mix)
        ld_an = jnp.sum(blk['an_logs']) * x_len
        sign, logabs = jnp.linalg.slogdet(blk['inv_w'])
        logdet_w = jnp.where(sign > 0, logabs, jnp.nan)        # torch.logdet semantics
        ld_inv = logdet_w * (C // ns) * x_len
        logdet_tot = logdet_tot + ld_an + ld_inv

        # ---- Coupling block
        cp = blk['coupling']
        x0, x1 = x[:half], x[half:]
        h = dense_pallas(x0, cp['start_w'], cp['start_b'], out_mask=mask_flat)
        g_cond = dense_pallas(g_flat, cp['cond_w'], cp['cond_b'])              # (2*Hd*nbl, N)
        skip = jnp.zeros((Hd, N), jnp.float32)
        for i in range(nbl):
            dil = hp['dilation_rate'] ** i
            xc = im2col_flat(h, None, B, Ty, Kd, dil)                          # h already masked
            h, skip = wavenet_layer_pallas(
                xc, g_cond, h, skip, mask_flat,
                cp['in_w'][i], cp['in_b'][i], cp['rs_w'][i], cp['rs_b'][i],
                layer=i, hidden=Hd, last=(i == nbl - 1))
        z1, logs_m = coupling_end_pallas(skip, x1, mask_flat, cp['end_w'], cp['end_b'],
                                         sigmoid_scale=hp['sigmoid_scale'])
        logdet_tot = logdet_tot + jnp.sum(logs_m.reshape(half, B, Ty), axis=(0, 2))
        x = jnp.concatenate([x0, z1], axis=0)
    return x, logdet_tot


def maximum_path_jax(value, mask):
    """monotonic_align.maximum_path (Viterbi-style DP + backtrack).  value, mask: (B, Tx, Ty)."""
    # TODO(synk): sequential DP + backtrack has no clean Pallas equivalent; kept in plain JAX.
    NEG = -1e9
    B, Tx, Ty = value.shape
    value = value * mask
    t_xs = jnp.sum(mask[:, :, 0], axis=1).astype(jnp.int32)
    t_ys = jnp.sum(mask[:, 0, :], axis=1).astype(jnp.int32)
    xs = jnp.arange(Tx)

    def single(v, t_x, t_y):
        def fwd(prev, y):
            v_cur = jnp.where(xs == y, NEG, prev)
            shifted = jnp.concatenate([jnp.full((1,), NEG), prev[:-1]])
            v_prev = jnp.where(xs == 0, jnp.where(y == 0, 0.0, NEG), shifted)
            new = jnp.maximum(v_cur, v_prev) + v[:, y]
            lo = jnp.maximum(0, t_x + y - t_y)
            hi = jnp.minimum(t_x, y + 1)
            new = jnp.where((xs >= lo) & (xs < hi), new, NEG)
            return new, new

        _, cols = lax.scan(fwd, jnp.full((Tx,), NEG), jnp.arange(Ty))
        vals = cols.T                                              # (Tx, Ty)

        def bwd(index, y):
            active = y < t_y
            col = jnp.where(active, jnp.zeros((Tx,)).at[index].set(1.0), jnp.zeros((Tx,)))
            dec = (index != 0) & (y > 0) & \
                  ((index == y) | (vals[index, y - 1] < vals[index - 1, y - 1]))
            new_index = jnp.where(active & dec, index - 1, index)
            return new_index, col

        _, pcols = lax.scan(bwd, t_x - 1, jnp.arange(Ty - 1, -1, -1))
        return jnp.flip(pcols, axis=0).T                           # (Tx, Ty)

    return jax.vmap(single)(value, t_xs, t_ys)


def extra_embedding(mel_btc, spk_id, p):
    # TODO(synk): ExtraEmbedding definition not provided in source; deterministic stand-in
    # (mean-pooled mel projection + speaker-id embedding) with compatible output shape.
    pooled = jnp.mean(mel_btc, axis=1)                             # (B, n_mel)
    proj = pooled @ p['mel_w'] + p['mel_b']                        # (B, spk_dim)
    spk = p['spk'][spk_id]                                         # (B, spk_dim)
    return (proj + spk)[:, :, None]                                # (B, spk_dim, 1)


def meaned_pitch(pitch, attn):
    # TODO(synk): PitchEmbedding.meaned_pitch definition not provided; stand-in:
    # attention-weighted mean of the frame-level pitch per text token.
    a = attn[:, 0]                                                 # (B, Tx, Ty)
    num = jnp.einsum('bxy,by->bx', a, pitch[:, 0])
    den = jnp.maximum(jnp.sum(a, axis=-1), 1.0)
    return (num / den)[:, None, :]                                 # (B, 1, Tx)


def flow_generator_forward(params, x, x_lengths, y, y_lengths, g, pitch, *, hp):
    """FlowGenerator.forward with gen=False (training path)."""
    B = x.shape[0]
    n_sqz = hp['n_sqz']
    C = hp['out_channels']

    # speaker embedding (g is not None branch) + F.normalize over the channel dim
    g_enc = extra_embedding(jnp.transpose(y, (0, 2, 1)), g, params['other']['emb_g'])
    g_enc = g_enc / jnp.maximum(
        jnp.sqrt(jnp.sum(g_enc * g_enc, axis=1, keepdims=True)), 1e-12)

    # text encoder
    x_m, x_logs, logw, x_mask, x_pitch = text_encoder_forward(
        params['enc'], x, x_lengths, g_enc, hp)
    Tx = x.shape[1]

    # preprocess y (n_sqz handling)
    y_max_length = (y.shape[2] // n_sqz) * n_sqz
    y = y[:, :, :y_max_length]
    y_lengths = (y_lengths // n_sqz) * n_sqz
    Ty = y_max_length
    y_mask_bt = sequence_mask(y_lengths, Ty)
    y_mask = y_mask_bt[:, None, :]
    attn_mask = x_mask[:, :, :, None] * y_mask[:, :, None, :]       # (B, 1, Tx, Ty)

    # decoder conditioning (speaker embedding ++ pitch embedding), flattened layout
    Ny = B * Ty
    spk = g_enc.shape[1]
    pitch_c = pitch[:, :, :Ty]
    pitch_flat = jnp.transpose(pitch_c, (1, 0, 2)).reshape(1, Ny)
    pitch_emb = dense_pallas(pitch_flat, params['other']['pitch_emb_w'],
                             params['other']['pitch_emb_b'])                    # (32, Ny)
    g_bt = jnp.transpose(g_enc[:, :, 0], (1, 0))
    g_exp = jnp.broadcast_to(g_bt[:, :, None], (spk, B, Ty)).reshape(spk, Ny)
    g_dec = jnp.concatenate([g_exp, pitch_emb], axis=0)                         # (gin, Ny)

    # flow decoder (forward direction)
    y_flat = jnp.transpose(y, (1, 0, 2)).reshape(C, Ny)
    y_mask_flat = y_mask_bt.reshape(1, Ny)
    z_flat, logdet = flow_decoder_forward(params['dec'], y_flat, y_mask_flat, g_dec,
                                          y_lengths.astype(jnp.float32), B, Ty, hp)
    z = jnp.transpose(z_flat.reshape(C, B, Ty), (1, 0, 2))

    # Gaussian log-likelihood grid + monotonic alignment
    logp = logp_pallas(x_m, x_logs, z)                              # (B, Tx, Ty)
    attn = maximum_path_jax(logp, attn_mask[:, 0])[:, None]         # (B, 1, Tx, Ty)

    mean_pitch = meaned_pitch(pitch_c, attn) * x_mask

    y_m, y_logs = ym_ylogs_pallas(attn[:, 0], x_m, x_logs)          # (B, C, Ty) x2
    logw_ = jnp.log(1e-8 + jnp.sum(attn, axis=-1)) * x_mask

    return (z, y_m, y_logs, logdet), attn, logw, logw_, x_m, x_logs, mean_pitch, x_pitch


# ---------------------------------------------------------------------------- params

class _Init:
    def __init__(self, key):
        self.key = key
        self.n = 0

    def normal(self, shape, scale):
        self.n += 1
        return scale * jax.random.normal(jax.random.fold_in(self.key, self.n),
                                         shape, jnp.float32)


def init_params(key, hp):
    pi = _Init(key)
    H, Fc, Fdp = hp['hidden_channels'], hp['filter_channels'], hp['filter_channels_dp']
    C, K = hp['out_channels'], hp['kernel_size']
    Kd, Hd = hp['kernel_size_dec'], hp['hidden_channels_dec']
    gin = hp['gin_channels']
    spk = gin - hp['pitch_dim']
    nbl = hp['n_block_layers']

    def conv_w(cout, cin, k):
        """Conv1d weight stored pre-reshaped for the im2col/1x1 dense kernels: (cout, k*cin)."""
        s = 1.0 / math.sqrt(cin * k)
        w = pi.normal((cout, cin, k), s)
        b = pi.normal((cout,), 0.01)
        return jnp.transpose(w, (0, 2, 1)).reshape(cout, k * cin), b

    enc = {'emb': pi.normal((hp['n_vocab'], H), H ** -0.5),
           'attn': [], 'ln1': [], 'ln2': [], 'ffn': []}
    for _ in range(hp['n_layers_enc']):
        qw, qb = conv_w(H, H, 1)
        kw, kb = conv_w(H, H, 1)
        vw, vb = conv_w(H, H, 1)
        ow, ob = conv_w(H, H, 1)
        enc['attn'].append({'qkv_w': jnp.concatenate([qw, kw, vw], axis=0),
                            'qkv_b': jnp.concatenate([qb, kb, vb], axis=0),
                            'o_w': ow, 'o_b': ob})
        enc['ln1'].append({'g': jnp.ones((H,)), 'b': jnp.zeros((H,))})
        enc['ln2'].append({'g': jnp.ones((H,)), 'b': jnp.zeros((H,))})
        c1w, c1b = conv_w(Fc, H, K)
        c2w, c2b = conv_w(H, Fc, K)
        enc['ffn'].append({'c1_w': c1w, 'c1_b': c1b, 'c2_w': c2w, 'c2_b': c2b})
    pmw, pmb = conv_w(C, H, 1)
    psw, psb = conv_w(C, H, 1)
    enc['proj_ms_w'] = jnp.concatenate([pmw, psw], axis=0)
    enc['proj_ms_b'] = jnp.concatenate([pmb, psb], axis=0)

    def dp(cin):
        c1w, c1b = conv_w(Fdp, cin, K)
        c2w, c2b = conv_w(Fdp, Fdp, K)
        pw, pb = conv_w(1, Fdp, 1)
        return {'c1_w': c1w, 'c1_b': c1b,
                'n1_g': jnp.ones((Fdp,)), 'n1_b': jnp.zeros((Fdp,)),
                'c2_w': c2w, 'c2_b': c2b,
                'n2_g': jnp.ones((Fdp,)), 'n2_b': jnp.zeros((Fdp,)),
                'proj_w': pw, 'proj_b': pb}
    enc['dp_w'] = dp(H + spk)
    enc['dp_pitch'] = dp(H + spk)

    dec = {'blocks': []}
    for _ in range(hp['n_blocks_dec']):
        blk = {'an_bias': pi.normal((C, 1), 0.01),
               'an_logs': pi.normal((C, 1), 0.01)}
        w0 = pi.normal((hp['n_split'], hp['n_split']), 1.0)
        q, _ = jnp.linalg.qr(w0)
        q = q.at[:, 0].multiply(jnp.where(jnp.linalg.det(q) < 0, -1.0, 1.0))
        blk['inv_w'] = q
        sw, sb = conv_w(Hd, C // 2, 1)
        ew, eb = conv_w(C, Hd, 1)
        cw, cb = conv_w(2 * Hd * nbl, gin, 1)
        cp = {'start_w': sw, 'start_b': sb,
              'end_w': ew * 0.1, 'end_b': eb,   # keep flow scales tame (torch zero-inits end)
              'cond_w': cw, 'cond_b': cb,
              'in_w': [], 'in_b': [], 'rs_w': [], 'rs_b': []}
        for i in range(nbl):
            iw, ib = conv_w(2 * Hd, Hd, Kd)
            rw, rb = conv_w(2 * Hd if i < nbl - 1 else Hd, Hd, 1)
            cp['in_w'].append(iw)
            cp['in_b'].append(ib)
            cp['rs_w'].append(rw)
            cp['rs_b'].append(rb)
        blk['coupling'] = cp
        dec['blocks'].append(blk)

    pw, pb = conv_w(hp['pitch_dim'], 1, 1)
    other = {
        # TODO(synk): ExtraEmbedding / PitchEmbedding definitions not provided; stand-in params.
        'emb_g': {'spk': pi.normal((hp['n_speakers'], spk), 1.0),
                  'mel_w': pi.normal((C, spk), C ** -0.5),
                  'mel_b': jnp.zeros((spk,))},
        'pitch_emb_w': pw, 'pitch_emb_b': pb,
    }
    return {'enc': enc, 'dec': dec, 'other': other}


# ---------------------------------------------------------------------------- main

if __name__ == "__main__":
    hp = dict(
        n_vocab=40, hidden_channels=32, filter_channels=64, filter_channels_dp=32,
        out_channels=16, kernel_size=3, n_heads=2, n_layers_enc=2,
        n_blocks_dec=2, kernel_size_dec=3, dilation_rate=2, n_block_layers=2,
        n_speakers=2, gin_channels=64, n_split=4, n_sqz=1, sigmoid_scale=False,
        hidden_channels_dec=32, pitch_dim=32,
    )

    params = init_params(jax.random.PRNGKey(0), hp)

    kx, ky, kp = jax.random.split(jax.random.PRNGKey(0), 3)
    B, T_x, T_y = 2, 16, 24
    x = jax.random.randint(kx, (B, T_x), 0, hp['n_vocab'], dtype=jnp.int32)
    x_lengths = jnp.array([16, 12], jnp.int32)
    y = jax.random.normal(ky, (B, hp['out_channels'], T_y), jnp.float32)
    y_lengths = jnp.array([24, 20], jnp.int32)
    g = jnp.array([0, 1], jnp.int32)
    pitch = jax.random.normal(kp, (B, 1, T_y), jnp.float32)

    fwd = jax.jit(functools.partial(flow_generator_forward, hp=hp))
    outs = fwd(params, x, x_lengths, y, y_lengths, g, pitch)
    jax.block_until_ready(outs)

    (z, y_m, y_logs, logdet), attn, logw, logw_, x_m, x_logs, mean_pitch, x_pitch = outs
    assert z.shape == (B, hp['out_channels'], T_y)
    assert y_m.shape == (B, hp['out_channels'], T_y) and y_logs.shape == y_m.shape
    assert attn.shape == (B, 1, T_x, T_y)
    assert logw.shape == (B, 1, T_x) and logw_.shape == (B, 1, T_x)
    assert x_m.shape == (B, hp['out_channels'], T_x) and x_logs.shape == x_m.shape
    assert mean_pitch.shape == (B, 1, T_x) and x_pitch.shape == (B, 1, T_x)
    assert logdet.shape == (B,)
    print("KERNEL_OK")
</pallas_src>

<mosaic_0001>
module attributes {stable_mosaic.version = 11 : i64} {
  func.func @kernel(%arg0: i32, %arg1: memref<16x48xf32, #tpu.memory_space<vmem>>, %arg2: memref<1x48xf32, #tpu.memory_space<vmem>>, %arg3: memref<16x1xf32, #tpu.memory_space<vmem>>, %arg4: memref<16x1xf32, #tpu.memory_space<vmem>>, %arg5: memref<16x16xf32, #tpu.memory_space<vmem>>, %arg6: memref<16x48xf32, #tpu.memory_space<vmem>>) attributes {dimension_semantics = [#tpu.dimension_semantics<arbitrary>], iteration_bounds = array<i64: 1>, scalar_prefetch = 0 : i64, scratch_operands = 0 : i64, tpu.core_type = #tpu.core_type<tc>, window_params = [{pipeline_mode = #tpu.pipeline_mode<synchronous>, transform_indices = @transform_0, window_bounds = array<i64: 16, 48>}, {pipeline_mode = #tpu.pipeline_mode<synchronous>, transform_indices = @transform_1, window_bounds = array<i64: 1, 48>}, {pipeline_mode = #tpu.pipeline_mode<synchronous>, transform_indices = @transform_2, window_bounds = array<i64: 16, 1>}, {pipeline_mode = #tpu.pipeline_mode<synchronous>, transform_indices = @transform_3, window_bounds = array<i64: 16, 1>}, {pipeline_mode = #tpu.pipeline_mode<synchronous>, transform_indices = @transform_4, window_bounds = array<i64: 16, 16>}, {pipeline_mode = #tpu.pipeline_mode<synchronous>, transform_indices = @transform_5, window_bounds = array<i64: 16, 48>}]} {
    %c0 = arith.constant 0 : index
    %c0_0 = arith.constant 0 : index
    %0 = vector.load %arg3[%c0, %c0_0] : memref<16x1xf32, #tpu.memory_space<vmem>>, vector<16x1xf32>
    %c0_1 = arith.constant 0 : index
    %c0_2 = arith.constant 0 : index
    %1 = vector.load %arg4[%c0_1, %c0_2] : memref<16x1xf32, #tpu.memory_space<vmem>>, vector<16x1xf32>
    %2 = math.exp %1 : vector<16x1xf32>
    %c0_3 = arith.constant 0 : index
    %c0_4 = arith.constant 0 : index
    %3 = vector.load %arg1[%c0_3, %c0_4] : memref<16x48xf32, #tpu.memory_space<vmem>>, vector<16x48xf32>
    %4 = vector.broadcast %2 : vector<16x1xf32> to vector<16x48xf32>
    %5 = arith.mulf %4, %3 : vector<16x48xf32>
    %6 = vector.broadcast %0 : vector<16x1xf32> to vector<16x48xf32>
    %7 = arith.addf %6, %5 : vector<16x48xf32>
    %c0_5 = arith.constant 0 : index
    %c0_6 = arith.constant 0 : index
    %8 = vector.load %arg5[%c0_5, %c0_6] : memref<16x16xf32, #tpu.memory_space<vmem>>, vector<16x16xf32>
    %9 = arith.truncf %8 : vector<16x16xf32> to vector<16x16xbf16>
    %10 = arith.truncf %7 : vector<16x48xf32> to vector<16x48xbf16>
    %cst = arith.constant dense<0.000000e+00> : vector<16x48xf32>
    %11 = tpu.matmul %9, %10, %cst {dimension_numbers = #tpu.dot_dimension_numbers<[1], [0], [0], [1], [0, 0, 1, 1], [], []>} : vector<16x16xbf16>, vector<16x48xbf16>, vector<16x48xf32> -> vector<16x48xf32>
    %c0_7 = arith.constant 0 : index
    %c0_8 = arith.constant 0 : index
    %12 = vector.load %arg2[%c0_7, %c0_8] : memref<1x48xf32, #tpu.memory_space<vmem>>, vector<1x48xf32>
    %13 = vector.broadcast %12 : vector<1x48xf32> to vector<16x48xf32>
    %14 = arith.mulf %11, %13 : vector<16x48xf32>
    %c0_9 = arith.constant 0 : index
    %c0_10 = arith.constant 0 : index
    %15 = vector.load %arg6[%c0_9, %c0_10] : memref<16x48xf32, #tpu.memory_space<vmem>>, vector<16x48xf32>
    tpu.vector_store %arg6[%c0_9, %c0_10], %14 {strides = array<i32>} : memref<16x48xf32, #tpu.memory_space<vmem>>, vector<16x48xf32>,
    return
  }
  func.func @transform_0(%arg0: i32) -> (i32, i32) {
    %c0_i32 = arith.constant 0 : i32
    %c0_i32_0 = arith.constant 0 : i32
    %c0_i32_1 = arith.constant 0 : i32
    return %c0_i32, %c0_i32_0 : i32, i32
  }
  func.func @transform_1(%arg0: i32) -> (i32, i32) {
    %c0_i32 = arith.constant 0 : i32
    %c0_i32_0 = arith.constant 0 : i32
    %c0_i32_1 = arith.constant 0 : i32
    return %c0_i32, %c0_i32_0 : i32, i32
  }
  func.func @transform_2(%arg0: i32) -> (i32, i32) {
    %c0_i32 = arith.constant 0 : i32
    %c0_i32_0 = arith.constant 0 : i32
    %c0_i32_1 = arith.constant 0 : i32
    return %c0_i32, %c0_i32_0 : i32, i32
  }
  func.func @transform_3(%arg0: i32) -> (i32, i32) {
    %c0_i32 = arith.constant 0 : i32
    %c0_i32_0 = arith.constant 0 : i32
    %c0_i32_1 = arith.constant 0 : i32
    return %c0_i32, %c0_i32_0 : i32, i32
  }
  func.func @transform_4(%arg0: i32) -> (i32, i32) {
    %c0_i32 = arith.constant 0 : i32
    %c0_i32_0 = arith.constant 0 : i32
    %c0_i32_1 = arith.constant 0 : i32
    return %c0_i32, %c0_i32_0 : i32, i32
  }
  func.func @transform_5(%arg0: i32) -> (i32, i32) {
    %c0_i32 = arith.constant 0 : i32
    %c0_i32_0 = arith.constant 0 : i32
    %c0_i32_1 = arith.constant 0 : i32
    return %c0_i32, %c0_i32_0 : i32, i32
  }
}

module attributes {stable_mosaic.version = 11 : i64} {
  func.func @kernel(%arg0: i32, %arg1: memref<8x48xf32, #tpu.memory_space<vmem>>, %arg2: memref<32x8xf32, #tpu.memory_space<vmem>>, %arg3: memref<32x1xf32, #tpu.memory_space<vmem>>, %arg4: memref<1x48xf32, #tpu.memory_space<vmem>>, %arg5: memref<32x48xf32, #tpu.memory_space<vmem>>) attributes {dimension_semantics = [#tpu.dimension_semantics<arbitrary>], iteration_bounds = array<i64: 1>, scalar_prefetch = 0 : i64, scratch_operands = 0 : i64, tpu.core_type = #tpu.core_type<tc>, window_params = [{pipeline_mode = #tpu.pipeline_mode<synchronous>, transform_indices = @transform_0, window_bounds = array<i64: 8, 48>}, {pipeline_mode = #tpu.pipeline_mode<synchronous>, transform_indices = @transform_1, window_bounds = array<i64: 32, 8>}, {pipeline_mode = #tpu.pipeline_mode<synchronous>, transform_indices = @transform_2, window_bounds = array<i64: 32, 1>}, {pipeline_mode = #tpu.pipeline_mode<synchronous>, transform_indices = @transform_3, window_bounds = array<i64: 1, 48>}, {pipeline_mode = #tpu.pipeline_mode<synchronous>, transform_indices = @transform_4, window_bounds = array<i64: 32, 48>}]} {
    %c0 = arith.constant 0 : index
    %c0_0 = arith.constant 0 : index
    %0 = vector.load %arg1[%c0, %c0_0] : memref<8x48xf32, #tpu.memory_space<vmem>>, vector<8x48xf32>
    %c0_1 = arith.constant 0 : index
    %c0_2 = arith.constant 0 : index
    %1 = vector.load %arg2[%c0_1, %c0_2] : memref<32x8xf32, #tpu.memory_space<vmem>>, vector<32x8xf32>
    %2 = arith.truncf %1 : vector<32x8xf32> to vector<32x8xbf16>
    %3 = arith.truncf %0 : vector<8x48xf32> to vector<8x48xbf16>
    %cst = arith.constant dense<0.000000e+00> : vector<32x48xf32>
    %4 = tpu.matmul %2, %3, %cst {dimension_numbers = #tpu.dot_dimension_numbers<[1], [0], [0], [1], [0, 0, 1, 1], [], []>} : vector<32x8xbf16>, vector<8x48xbf16>, vector<32x48xf32> -> vector<32x48xf32>
    %c0_3 = arith.constant 0 : index
    %c0_4 = arith.constant 0 : index
    %5 = vector.load %arg3[%c0_3, %c0_4] : memref<32x1xf32, #tpu.memory_space<vmem>>, vector<32x1xf32>
    %6 = vector.broadcast %5 : vector<32x1xf32> to vector<32x48xf32>
    %7 = arith.addf %4, %6 : vector<32x48xf32>
    %c0_5 = arith.constant 0 : index
    %c0_6 = arith.constant 0 : index
    %8 = vector.load %arg4[%c0_5, %c0_6] : memref<1x48xf32, #tpu.memory_space<vmem>>, vector<1x48xf32>
    %9 = vector.broadcast %8 : vector<1x48xf32> to vector<32x48xf32>
    %10 = arith.mulf %7, %9 : vector<32x48xf32>
    %c0_7 = arith.constant 0 : index
    %c0_8 = arith.constant 0 : index
    %11 = vector.load %arg5[%c0_7, %c0_8] : memref<32x48xf32, #tpu.memory_space<vmem>>, vector<32x48xf32>
    tpu.vector_store %arg5[%c0_7, %c0_8], %10 {strides = array<i32>} : memref<32x48xf32, #tpu.memory_space<vmem>>, vector<32x48xf32>,
    return
  }
  func.func @transform_0(%arg0: i32) -> (i32, i32) {
    %c0_i32 = arith.constant 0 : i32
    %c0_i32_0 = arith.constant 0 : i32
    %c0_i32_1 = arith.constant 0 : i32
    return %c0_i32, %c0_i32_0 : i32, i32
  }
  func.func @transform_1(%arg0: i32) -> (i32, i32) {
    %c0_i32 = arith.constant 0 : i32
    %c0_i32_0 = arith.constant 0 : i32
    %c0_i32_1 = arith.constant 0 : i32
    return %c0_i32, %c0_i32_0 : i32, i32
  }
  func.func @transform_2(%arg0: i32) -> (i32, i32) {
    %c0_i32 = arith.constant 0 : i32
    %c0_i32_0 = arith.constant 0 : i32
    %c0_i32_1 = arith.constant 0 : i32
    return %c0_i32, %c0_i32_0 : i32, i32
  }
  func.func @transform_3(%arg0: i32) -> (i32, i32) {
    %c0_i32 = arith.constant 0 : i32
    %c0_i32_0 = arith.constant 0 : i32
    %c0_i32_1 = arith.constant 0 : i32
    return %c0_i32, %c0_i32_0 : i32, i32
  }
  func.func @transform_4(%arg0: i32) -> (i32, i32) {
    %c0_i32 = arith.constant 0 : i32
    %c0_i32_0 = arith.constant 0 : i32
    %c0_i32_1 = arith.constant 0 : i32
    return %c0_i32, %c0_i32_0 : i32, i32
  }
}

module attributes {stable_mosaic.version = 11 : i64} {
  func.func @kernel(%arg0: i32, %arg1: memref<1x48xf32, #tpu.memory_space<vmem>>, %arg2: memref<32x1xf32, #tpu.memory_space<vmem>>, %arg3: memref<32x1xf32, #tpu.memory_space<vmem>>, %arg4: memref<32x48xf32, #tpu.memory_space<vmem>>) attributes {dimension_semantics = [#tpu.dimension_semantics<arbitrary>], iteration_bounds = array<i64: 1>, scalar_prefetch = 0 : i64, scratch_operands = 0 : i64, tpu.core_type = #tpu.core_type<tc>, window_params = [{pipeline_mode = #tpu.pipeline_mode<synchronous>, transform_indices = @transform_0, window_bounds = array<i64: 1, 48>}, {pipeline_mode = #tpu.pipeline_mode<synchronous>, transform_indices = @transform_1, window_bounds = array<i64: 32, 1>}, {pipeline_mode = #tpu.pipeline_mode<synchronous>, transform_indices = @transform_2, window_bounds = array<i64: 32, 1>}, {pipeline_mode = #tpu.pipeline_mode<synchronous>, transform_indices = @transform_3, window_bounds = array<i64: 32, 48>}]} {
    %c0 = arith.constant 0 : index
    %c0_0 = arith.constant 0 : index
    %0 = vector.load %arg1[%c0, %c0_0] : memref<1x48xf32, #tpu.memory_space<vmem>>, vector<1x48xf32>
    %c0_1 = arith.constant 0 : index
    %c0_2 = arith.constant 0 : index
    %1 = vector.load %arg2[%c0_1, %c0_2] : memref<32x1xf32, #tpu.memory_space<vmem>>, vector<32x1xf32>
    %2 = vector.broadcast %1 : vector<32x1xf32> to vector<32x48xf32>
    %3 = vector.broadcast %0 : vector<1x48xf32> to vector<32x48xf32>
    %4 = arith.mulf %2, %3 : vector<32x48xf32>
    %c0_3 = arith.constant 0 : index
    %c0_4 = arith.constant 0 : index
    %5 = vector.load %arg3[%c0_3, %c0_4] : memref<32x1xf32, #tpu.memory_space<vmem>>, vector<32x1xf32>
    %6 = vector.broadcast %5 : vector<32x1xf32> to vector<32x48xf32>
    %7 = arith.addf %4, %6 : vector<32x48xf32>
    %c0_5 = arith.constant 0 : index
    %c0_6 = arith.constant 0 : index
    %8 = vector.load %arg4[%c0_5, %c0_6] : memref<32x48xf32, #tpu.memory_space<vmem>>, vector<32x48xf32>
    tpu.vector_store %arg4[%c0_5, %c0_6], %7 {strides = array<i32>} : memref<32x48xf32, #tpu.memory_space<vmem>>, vector<32x48xf32>,
    return
  }
  func.func @transform_0(%arg0: i32) -> (i32, i32) {
    %c0_i32 = arith.constant 0 : i32
    %c0_i32_0 = arith.constant 0 : i32
    %c0_i32_1 = arith.constant 0 : i32
    return %c0_i32, %c0_i32_0 : i32, i32
  }
  func.func @transform_1(%arg0: i32) -> (i32, i32) {
    %c0_i32 = arith.constant 0 : i32
    %c0_i32_0 = arith.constant 0 : i32
    %c0_i32_1 = arith.constant 0 : i32
    return %c0_i32, %c0_i32_0 : i32, i32
  }
  func.func @transform_2(%arg0: i32) -> (i32, i32) {
    %c0_i32 = arith.constant 0 : i32
    %c0_i32_0 = arith.constant 0 : i32
    %c0_i32_1 = arith.constant 0 : i32
    return %c0_i32, %c0_i32_0 : i32, i32
  }
  func.func @transform_3(%arg0: i32) -> (i32, i32) {
    %c0_i32 = arith.constant 0 : i32
    %c0_i32_0 = arith.constant 0 : i32
    %c0_i32_1 = arith.constant 0 : i32
    return %c0_i32, %c0_i32_0 : i32, i32
  }
}

module attributes {stable_mosaic.version = 11 : i64} {
  func.func @kernel(%arg0: i32, %arg1: memref<64x48xf32, #tpu.memory_space<vmem>>, %arg2: memref<128x64xf32, #tpu.memory_space<vmem>>, %arg3: memref<128x1xf32, #tpu.memory_space<vmem>>, %arg4: memref<128x48xf32, #tpu.memory_space<vmem>>) attributes {dimension_semantics = [#tpu.dimension_semantics<arbitrary>], iteration_bounds = array<i64: 1>, scalar_prefetch = 0 : i64, scratch_operands = 0 : i64, tpu.core_type = #tpu.core_type<tc>, window_params = [{pipeline_mode = #tpu.pipeline_mode<synchronous>, transform_indices = @transform_0, window_bounds = array<i64: 64, 48>}, {pipeline_mode = #tpu.pipeline_mode<synchronous>, transform_indices = @transform_1, window_bounds = array<i64: 128, 64>}, {pipeline_mode = #tpu.pipeline_mode<synchronous>, transform_indices = @transform_2, window_bounds = array<i64: 128, 1>}, {pipeline_mode = #tpu.pipeline_mode<synchronous>, transform_indices = @transform_3, window_bounds = array<i64: 128, 48>}]} {
    %c0 = arith.constant 0 : index
    %c0_0 = arith.constant 0 : index
    %0 = vector.load %arg1[%c0, %c0_0] : memref<64x48xf32, #tpu.memory_space<vmem>>, vector<64x48xf32>
    %c0_1 = arith.constant 0 : index
    %c0_2 = arith.constant 0 : index
    %1 = vector.load %arg2[%c0_1, %c0_2] : memref<128x64xf32, #tpu.memory_space<vmem>>, vector<128x64xf32>
    %2 = arith.truncf %1 : vector<128x64xf32> to vector<128x64xbf16>
    %3 = arith.truncf %0 : vector<64x48xf32> to vector<64x48xbf16>
    %cst = arith.constant dense<0.000000e+00> : vector<128x48xf32>
    %4 = tpu.matmul %2, %3, %cst {dimension_numbers = #tpu.dot_dimension_numbers<[1], [0], [0], [1], [0, 0, 1, 1], [], []>} : vector<128x64xbf16>, vector<64x48xbf16>, vector<128x48xf32> -> vector<128x48xf32>
    %c0_3 = arith.constant 0 : index
    %c0_4 = arith.constant 0 : index
    %5 = vector.load %arg3[%c0_3, %c0_4] : memref<128x1xf32, #tpu.memory_space<vmem>>, vector<128x1xf32>
    %6 = vector.broadcast %5 : vector<128x1xf32> to vector<128x48xf32>
    %7 = arith.addf %4, %6 : vector<128x48xf32>
    %c0_5 = arith.constant 0 : index
    %c0_6 = arith.constant 0 : index
    %8 = vector.load %arg4[%c0_5, %c0_6] : memref<128x48xf32, #tpu.memory_space<vmem>>, vector<128x48xf32>
    tpu.vector_store %arg4[%c0_5, %c0_6], %7 {strides = array<i32>} : memref<128x48xf32, #tpu.memory_space<vmem>>, vector<128x48xf32>,
    return
  }
  func.func @transform_0(%arg0: i32) -> (i32, i32) {
    %c0_i32 = arith.constant 0 : i32
    %c0_i32_0 = arith.constant 0 : i32
    %c0_i32_1 = arith.constant 0 : i32
    return %c0_i32, %c0_i32_0 : i32, i32
  }
  func.func @transform_1(%arg0: i32) -> (i32, i32) {
    %c0_i32 = arith.constant 0 : i32
    %c0_i32_0 = arith.constant 0 : i32
    %c0_i32_1 = arith.constant 0 : i32
    return %c0_i32, %c0_i32_0 : i32, i32
  }
  func.func @transform_2(%arg0: i32) -> (i32, i32) {
    %c0_i32 = arith.constant 0 : i32
    %c0_i32_0 = arith.constant 0 : i32
    %c0_i32_1 = arith.constant 0 : i32
    return %c0_i32, %c0_i32_0 : i32, i32
  }
  func.func @transform_3(%arg0: i32) -> (i32, i32) {
    %c0_i32 = arith.constant 0 : i32
    %c0_i32_0 = arith.constant 0 : i32
    %c0_i32_1 = arith.constant 0 : i32
    return %c0_i32, %c0_i32_0 : i32, i32
  }
}

module attributes {stable_mosaic.version = 11 : i64} {
  func.func @kernel(%arg0: i32, %arg1: memref<96x48xbf16, #tpu.memory_space<vmem>>, %arg2: memref<64x48xf32, #tpu.memory_space<vmem>>, %arg3: memref<32x48xf32, #tpu.memory_space<vmem>>, %arg4: memref<32x48xf32, #tpu.memory_space<vmem>>, %arg5: memref<1x48xf32, #tpu.memory_space<vmem>>, %arg6: memref<64x96xf32, #tpu.memory_space<vmem>>, %arg7: memref<64x1xf32, #tpu.memory_space<vmem>>, %arg8: memref<64x32xf32, #tpu.memory_space<vmem>>, %arg9: memref<64x1xf32, #tpu.memory_space<vmem>>, %arg10: memref<32x48xf32, #tpu.memory_space<vmem>>, %arg11: memref<32x48xf32, #tpu.memory_space<vmem>>) attributes {dimension_semantics = [#tpu.dimension_semantics<arbitrary>], iteration_bounds = array<i64: 1>, scalar_prefetch = 0 : i64, scratch_operands = 0 : i64, tpu.core_type = #tpu.core_type<tc>, window_params = [{pipeline_mode = #tpu.pipeline_mode<synchronous>, transform_indices = @transform_0, window_bounds = array<i64: 96, 48>}, {transform_indices = @transform_1, window_bounds = array<i64: 64, 48>}, {pipeline_mode = #tpu.pipeline_mode<synchronous>, transform_indices = @transform_2, window_bounds = array<i64: 32, 48>}, {pipeline_mode = #tpu.pipeline_mode<synchronous>, transform_indices = @transform_3, window_bounds = array<i64: 32, 48>}, {pipeline_mode = #tpu.pipeline_mode<synchronous>, transform_indices = @transform_4, window_bounds = array<i64: 1, 48>}, {pipeline_mode = #tpu.pipeline_mode<synchronous>, transform_indices = @transform_5, window_bounds = array<i64: 64, 96>}, {pipeline_mode = #tpu.pipeline_mode<synchronous>, transform_indices = @transform_6, window_bounds = array<i64: 64, 1>}, {pipeline_mode = #tpu.pipeline_mode<synchronous>, transform_indices = @transform_7, window_bounds = array<i64: 64, 32>}, {pipeline_mode = #tpu.pipeline_mode<synchronous>, transform_indices = @transform_8, window_bounds = array<i64: 64, 1>}, {pipeline_mode = #tpu.pipeline_mode<synchronous>, transform_indices = @transform_9, window_bounds = array<i64: 32, 48>}, {pipeline_mode = #tpu.pipeline_mode<synchronous>, transform_indices = @transform_10, window_bounds = array<i64: 32, 48>}]} {
    %c0 = arith.constant 0 : index
    %c0_0 = arith.constant 0 : index
    %0 = vector.load %arg6[%c0, %c0_0] : memref<64x96xf32, #tpu.memory_space<vmem>>, vector<64x96xf32>
    %1 = arith.truncf %0 : vector<64x96xf32> to vector<64x96xbf16>
    %c0_1 = arith.constant 0 : index
    %c0_2 = arith.constant 0 : index
    %2 = vector.load %arg1[%c0_1, %c0_2] : memref<96x48xbf16, #tpu.memory_space<vmem>>, vector<96x48xbf16>
    %cst = arith.constant dense<0.000000e+00> : vector<64x48xf32>
    %3 = tpu.matmul %1, %2, %cst {dimension_numbers = #tpu.dot_dimension_numbers<[1], [0], [0], [1], [0, 0, 1, 1], [], []>} : vector<64x96xbf16>, vector<96x48xbf16>, vector<64x48xf32> -> vector<64x48xf32>
    %c0_3 = arith.constant 0 : index
    %c0_4 = arith.constant 0 : index
    %4 = vector.load %arg7[%c0_3, %c0_4] : memref<64x1xf32, #tpu.memory_space<vmem>>, vector<64x1xf32>
    %5 = vector.broadcast %4 : vector<64x1xf32> to vector<64x48xf32>
    %6 = arith.addf %3, %5 : vector<64x48xf32>
    %c0_5 = arith.constant 0 : index
    %c0_6 = arith.constant 0 : index
    %7 = vector.load %arg2[%c0_5, %c0_6] : memref<64x48xf32, #tpu.memory_space<vmem>>, vector<64x48xf32>
    %8 = arith.addf %6, %7 : vector<64x48xf32>
    %9 = vector.extract_strided_slice %8 {offsets = [0, 0], sizes = [32, 48], strides = [1, 1]} : vector<64x48xf32> to vector<32x48xf32>
    %10 = math.tanh %9 : vector<32x48xf32>
    %11 = vector.extract_strided_slice %8 {offsets = [32, 0], sizes = [32, 48], strides = [1, 1]} : vector<64x48xf32> to vector<32x48xf32>
    %12 = arith.negf %11 : vector<32x48xf32>
    %13 = math.exp %12 : vector<32x48xf32>
    %cst_7 = arith.constant 1.000000e+00 : f32
    %14 = vector.broadcast %cst_7 : f32 to vector<32x48xf32>
    %15 = arith.addf %14, %13 : vector<32x48xf32>
    %16 = arith.divf %14, %15 : vector<32x48xf32>
    %17 = arith.mulf %10, %16 : vector<32x48xf32>
    %c0_8 = arith.constant 0 : index
    %c0_9 = arith.constant 0 : index
    %18 = vector.load %arg8[%c0_8, %c0_9] : memref<64x32xf32, #tpu.memory_space<vmem>>, vector<64x32xf32>
    %19 = arith.truncf %18 : vector<64x32xf32> to vector<64x32xbf16>
    %20 = arith.truncf %17 : vector<32x48xf32> to vector<32x48xbf16>
    %cst_10 = arith.constant dense<0.000000e+00> : vector<64x48xf32>
    %21 = tpu.matmul %19, %20, %cst_10 {dimension_numbers = #tpu.dot_dimension_numbers<[1], [0], [0], [1], [0, 0, 1, 1], [], []>} : vector<64x32xbf16>, vector<32x48xbf16>, vector<64x48xf32> -> vector<64x48xf32>
    %c0_11 = arith.constant 0 : index
    %c0_12 = arith.constant 0 : index
    %22 = vector.load %arg9[%c0_11, %c0_12] : memref<64x1xf32, #tpu.memory_space<vmem>>, vector<64x1xf32>
    %23 = vector.broadcast %22 : vector<64x1xf32> to vector<64x48xf32>
    %24 = arith.addf %21, %23 : vector<64x48xf32>
    %c0_13 = arith.constant 0 : index
    %c0_14 = arith.constant 0 : index
    %25 = vector.load %arg3[%c0_13, %c0_14] : memref<32x48xf32, #tpu.memory_space<vmem>>, vector<32x48xf32>
    %26 = vector.extract_strided_slice %24 {offsets = [0, 0], sizes = [32, 48], strides = [1, 1]} : vector<64x48xf32> to vector<32x48xf32>
    %27 = arith.addf %25, %26 : vector<32x48xf32>
    %c0_15 = arith.constant 0 : index
    %c0_16 = arith.constant 0 : index
    %28 = vector.load %arg5[%c0_15, %c0_16] : memref<1x48xf32, #tpu.memory_space<vmem>>, vector<1x48xf32>
    %29 = vector.broadcast %28 : vector<1x48xf32> to vector<32x48xf32>
    %30 = arith.mulf %27, %29 : vector<32x48xf32>
    %c0_17 = arith.constant 0 : index
    %c0_18 = arith.constant 0 : index
    %31 = vector.load %arg10[%c0_17, %c0_18] : memref<32x48xf32, #tpu.memory_space<vmem>>, vector<32x48xf32>
    tpu.vector_store %arg10[%c0_17, %c0_18], %30 {strides = array<i32>} : memref<32x48xf32, #tpu.memory_space<vmem>>, vector<32x48xf32>,
    %c0_19 = arith.constant 0 : index
    %c0_20 = arith.constant 0 : index
    %32 = vector.load %arg4[%c0_19, %c0_20] : memref<32x48xf32, #tpu.memory_space<vmem>>, vector<32x48xf32>
    %33 = vector.extract_strided_slice %24 {offsets = [32, 0], sizes = [32, 48], strides = [1, 1]} : vector<64x48xf32> to vector<32x48xf32>
    %34 = arith.addf %32, %33 : vector<32x48xf32>
    %c0_21 = arith.constant 0 : index
    %c0_22 = arith.constant 0 : index
    %35 = vector.load %arg11[%c0_21, %c0_22] : memref<32x48xf32, #tpu.memory_space<vmem>>, vector<32x48xf32>
    tpu.vector_store %arg11[%c0_21, %c0_22], %34 {strides = array<i32>} : memref<32x48xf32, #tpu.memory_space<vmem>>, vector<32x48xf32>,
    return
  }
  func.func @transform_0(%arg0: i32) -> (i32, i32) {
    %c0_i32 = arith.constant 0 : i32
    %c0_i32_0 = arith.constant 0 : i32
    %c0_i32_1 = arith.constant 0 : i32
    return %c0_i32, %c0_i32_0 : i32, i32
  }
  func.func @transform_1(%arg0: i32) -> (i32, i32) {
    %c0_i32 = arith.constant 0 : i32
    %c0_i32_0 = arith.constant 0 : i32
    %c0_i32_1 = arith.constant 0 : i32
    return %c0_i32, %c0_i32_0 : i32, i32
  }
  func.func @transform_2(%arg0: i32) -> (i32, i32) {
    %c0_i32 = arith.constant 0 : i32
    %c0_i32_0 = arith.constant 0 : i32
    %c0_i32_1 = arith.constant 0 : i32
    return %c0_i32, %c0_i32_0 : i32, i32
  }
  func.func @transform_3(%arg0: i32) -> (i32, i32) {
    %c0_i32 = arith.constant 0 : i32
    %c0_i32_0 = arith.constant 0 : i32
    %c0_i32_1 = arith.constant 0 : i32
    return %c0_i32, %c0_i32_0 : i32, i32
  }
  func.func @transform_4(%arg0: i32) -> (i32, i32) {
    %c0_i32 = arith.constant 0 : i32
    %c0_i32_0 = arith.constant 0 : i32
    %c0_i32_1 = arith.constant 0 : i32
    return %c0_i32, %c0_i32_0 : i32, i32
  }
  func.func @transform_5(%arg0: i32) -> (i32, i32) {
    %c0_i32 = arith.constant 0 : i32
    %c0_i32_0 = arith.constant 0 : i32
    %c0_i32_1 = arith.constant 0 : i32
    return %c0_i32, %c0_i32_0 : i32, i32
  }
  func.func @transform_6(%arg0: i32) -> (i32, i32) {
    %c0_i32 = arith.constant 0 : i32
    %c0_i32_0 = arith.constant 0 : i32
    %c0_i32_1 = arith.constant 0 : i32
    return %c0_i32, %c0_i32_0 : i32, i32
  }
  func.func @transform_7(%arg0: i32) -> (i32, i32) {
    %c0_i32 = arith.constant 0 : i32
    %c0_i32_0 = arith.constant 0 : i32
    %c0_i32_1 = arith.constant 0 : i32
    return %c0_i32, %c0_i32_0 : i32, i32
  }
  func.func @transform_8(%arg0: i32) -> (i32, i32) {
    %c0_i32 = arith.constant 0 : i32
    %c0_i32_0 = arith.constant 0 : i32
    %c0_i32_1 = arith.constant 0 : i32
    return %c0_i32, %c0_i32_0 : i32, i32
  }
  func.func @transform_9(%arg0: i32) -> (i32, i32) {
    %c0_i32 = arith.constant 0 : i32
    %c0_i32_0 = arith.constant 0 : i32
    %c0_i32_1 = arith.constant 0 : i32
    return %c0_i32, %c0_i32_0 : i32, i32
  }
  func.func @transform_10(%arg0: i32) -> (i32, i32) {
    %c0_i32 = arith.constant 0 : i32
    %c0_i32_0 = arith.constant 0 : i32
    %c0_i32_1 = arith.constant 0 : i32
    return %c0_i32, %c0_i32_0 : i32, i32
  }
}

module attributes {stable_mosaic.version = 11 : i64} {
  func.func @kernel(%arg0: i32, %arg1: memref<96x48xbf16, #tpu.memory_space<vmem>>, %arg2: memref<64x48xf32, #tpu.memory_space<vmem>>, %arg3: memref<32x48xf32, #tpu.memory_space<vmem>>, %arg4: memref<32x48xf32, #tpu.memory_space<vmem>>, %arg5: memref<1x48xf32, #tpu.memory_space<vmem>>, %arg6: memref<64x96xf32, #tpu.memory_space<vmem>>, %arg7: memref<64x1xf32, #tpu.memory_space<vmem>>, %arg8: memref<32x32xf32, #tpu.memory_space<vmem>>, %arg9: memref<32x1xf32, #tpu.memory_space<vmem>>, %arg10: memref<32x48xf32, #tpu.memory_space<vmem>>, %arg11: memref<32x48xf32, #tpu.memory_space<vmem>>) attributes {dimension_semantics = [#tpu.dimension_semantics<arbitrary>], iteration_bounds = array<i64: 1>, scalar_prefetch = 0 : i64, scratch_operands = 0 : i64, tpu.core_type = #tpu.core_type<tc>, window_params = [{pipeline_mode = #tpu.pipeline_mode<synchronous>, transform_indices = @transform_0, window_bounds = array<i64: 96, 48>}, {transform_indices = @transform_1, window_bounds = array<i64: 64, 48>}, {pipeline_mode = #tpu.pipeline_mode<synchronous>, transform_indices = @transform_2, window_bounds = array<i64: 32, 48>}, {pipeline_mode = #tpu.pipeline_mode<synchronous>, transform_indices = @transform_3, window_bounds = array<i64: 32, 48>}, {pipeline_mode = #tpu.pipeline_mode<synchronous>, transform_indices = @transform_4, window_bounds = array<i64: 1, 48>}, {pipeline_mode = #tpu.pipeline_mode<synchronous>, transform_indices = @transform_5, window_bounds = array<i64: 64, 96>}, {pipeline_mode = #tpu.pipeline_mode<synchronous>, transform_indices = @transform_6, window_bounds = array<i64: 64, 1>}, {pipeline_mode = #tpu.pipeline_mode<synchronous>, transform_indices = @transform_7, window_bounds = array<i64: 32, 32>}, {pipeline_mode = #tpu.pipeline_mode<synchronous>, transform_indices = @transform_8, window_bounds = array<i64: 32, 1>}, {pipeline_mode = #tpu.pipeline_mode<synchronous>, transform_indices = @transform_9, window_bounds = array<i64: 32, 48>}, {pipeline_mode = #tpu.pipeline_mode<synchronous>, transform_indices = @transform_10, window_bounds = array<i64: 32, 48>}]} {
    %c0 = arith.constant 0 : index
    %c0_0 = arith.constant 0 : index
    %0 = vector.load %arg6[%c0, %c0_0] : memref<64x96xf32, #tpu.memory_space<vmem>>, vector<64x96xf32>
    %1 = arith.truncf %0 : vector<64x96xf32> to vector<64x96xbf16>
    %c0_1 = arith.constant 0 : index
    %c0_2 = arith.constant 0 : index
    %2 = vector.load %arg1[%c0_1, %c0_2] : memref<96x48xbf16, #tpu.memory_space<vmem>>, vector<96x48xbf16>
    %cst = arith.constant dense<0.000000e+00> : vector<64x48xf32>
    %3 = tpu.matmul %1, %2, %cst {dimension_numbers = #tpu.dot_dimension_numbers<[1], [0], [0], [1], [0, 0, 1, 1], [], []>} : vector<64x96xbf16>, vector<96x48xbf16>, vector<64x48xf32> -> vector<64x48xf32>
    %c0_3 = arith.constant 0 : index
    %c0_4 = arith.constant 0 : index
    %4 = vector.load %arg7[%c0_3, %c0_4] : memref<64x1xf32, #tpu.memory_space<vmem>>, vector<64x1xf32>
    %5 = vector.broadcast %4 : vector<64x1xf32> to vector<64x48xf32>
    %6 = arith.addf %3, %5 : vector<64x48xf32>
    %c0_5 = arith.constant 0 : index
    %c0_6 = arith.constant 0 : index
    %7 = vector.load %arg2[%c0_5, %c0_6] : memref<64x48xf32, #tpu.memory_space<vmem>>, vector<64x48xf32>
    %8 = arith.addf %6, %7 : vector<64x48xf32>
    %9 = vector.extract_strided_slice %8 {offsets = [0, 0], sizes = [32, 48], strides = [1, 1]} : vector<64x48xf32> to vector<32x48xf32>
    %10 = math.tanh %9 : vector<32x48xf32>
    %11 = vector.extract_strided_slice %8 {offsets = [32, 0], sizes = [32, 48], strides = [1, 1]} : vector<64x48xf32> to vector<32x48xf32>
    %12 = arith.negf %11 : vector<32x48xf32>
    %13 = math.exp %12 : vector<32x48xf32>
    %cst_7 = arith.constant 1.000000e+00 : f32
    %14 = vector.broadcast %cst_7 : f32 to vector<32x48xf32>
    %15 = arith.addf %14, %13 : vector<32x48xf32>
    %16 = arith.divf %14, %15 : vector<32x48xf32>
    %17 = arith.mulf %10, %16 : vector<32x48xf32>
    %c0_8 = arith.constant 0 : index
    %c0_9 = arith.constant 0 : index
    %18 = vector.load %arg8[%c0_8, %c0_9] : memref<32x32xf32, #tpu.memory_space<vmem>>, vector<32x32xf32>
    %19 = arith.truncf %18 : vector<32x32xf32> to vector<32x32xbf16>
    %20 = arith.truncf %17 : vector<32x48xf32> to vector<32x48xbf16>
    %cst_10 = arith.constant dense<0.000000e+00> : vector<32x48xf32>
    %21 = tpu.matmul %19, %20, %cst_10 {dimension_numbers = #tpu.dot_dimension_numbers<[1], [0], [0], [1], [0, 0, 1, 1], [], []>} : vector<32x32xbf16>, vector<32x48xbf16>, vector<32x48xf32> -> vector<32x48xf32>
    %c0_11 = arith.constant 0 : index
    %c0_12 = arith.constant 0 : index
    %22 = vector.load %arg9[%c0_11, %c0_12] : memref<32x1xf32, #tpu.memory_space<vmem>>, vector<32x1xf32>
    %23 = vector.broadcast %22 : vector<32x1xf32> to vector<32x48xf32>
    %24 = arith.addf %21, %23 : vector<32x48xf32>
    %c0_13 = arith.constant 0 : index
    %c0_14 = arith.constant 0 : index
    %25 = vector.load %arg4[%c0_13, %c0_14] : memref<32x48xf32, #tpu.memory_space<vmem>>, vector<32x48xf32>
    %26 = arith.addf %25, %24 : vector<32x48xf32>
    %c0_15 = arith.constant 0 : index
    %c0_16 = arith.constant 0 : index
    %27 = vector.load %arg11[%c0_15, %c0_16] : memref<32x48xf32, #tpu.memory_space<vmem>>, vector<32x48xf32>
    tpu.vector_store %arg11[%c0_15, %c0_16], %26 {strides = array<i32>} : memref<32x48xf32, #tpu.memory_space<vmem>>, vector<32x48xf32>,
    %c0_17 = arith.constant 0 : index
    %c0_18 = arith.constant 0 : index
    %28 = vector.load %arg3[%c0_17, %c0_18] : memref<32x48xf32, #tpu.memory_space<vmem>>, vector<32x48xf32>
    %c0_19 = arith.constant 0 : index
    %c0_20 = arith.constant 0 : index
    %29 = vector.load %arg10[%c0_19, %c0_20] : memref<32x48xf32, #tpu.memory_space<vmem>>, vector<32x48xf32>
    tpu.vector_store %arg10[%c0_19, %c0_20], %28 {strides = array<i32>} : memref<32x48xf32, #tpu.memory_space<vmem>>, vector<32x48xf32>,
    return
  }
  func.func @transform_0(%arg0: i32) -> (i32, i32) {
    %c0_i32 = arith.constant 0 : i32
    %c0_i32_0 = arith.constant 0 : i32
    %c0_i32_1 = arith.constant 0 : i32
    return %c0_i32, %c0_i32_0 : i32, i32
  }
  func.func @transform_1(%arg0: i32) -> (i32, i32) {
    %c1_i32 = arith.constant 1 : i32
    %c0_i32 = arith.constant 0 : i32
    %c0_i32_0 = arith.constant 0 : i32
    return %c1_i32, %c0_i32 : i32, i32
  }
  func.func @transform_2(%arg0: i32) -> (i32, i32) {
    %c0_i32 = arith.constant 0 : i32
    %c0_i32_0 = arith.constant 0 : i32
    %c0_i32_1 = arith.constant 0 : i32
    return %c0_i32, %c0_i32_0 : i32, i32
  }
  func.func @transform_3(%arg0: i32) -> (i32, i32) {
    %c0_i32 = arith.constant 0 : i32
    %c0_i32_0 = arith.constant 0 : i32
    %c0_i32_1 = arith.constant 0 : i32
    return %c0_i32, %c0_i32_0 : i32, i32
  }
  func.func @transform_4(%arg0: i32) -> (i32, i32) {
    %c0_i32 = arith.constant 0 : i32
    %c0_i32_0 = arith.constant 0 : i32
    %c0_i32_1 = arith.constant 0 : i32
    return %c0_i32, %c0_i32_0 : i32, i32
  }
  func.func @transform_5(%arg0: i32) -> (i32, i32) {
    %c0_i32 = arith.constant 0 : i32
    %c0_i32_0 = arith.constant 0 : i32
    %c0_i32_1 = arith.constant 0 : i32
    return %c0_i32, %c0_i32_0 : i32, i32
  }
  func.func @transform_6(%arg0: i32) -> (i32, i32) {
    %c0_i32 = arith.constant 0 : i32
    %c0_i32_0 = arith.constant 0 : i32
    %c0_i32_1 = arith.constant 0 : i32
    return %c0_i32, %c0_i32_0 : i32, i32
  }
  func.func @transform_7(%arg0: i32) -> (i32, i32) {
    %c0_i32 = arith.constant 0 : i32
    %c0_i32_0 = arith.constant 0 : i32
    %c0_i32_1 = arith.constant 0 : i32
    return %c0_i32, %c0_i32_0 : i32, i32
  }
  func.func @transform_8(%arg0: i32) -> (i32, i32) {
    %c0_i32 = arith.constant 0 : i32
    %c0_i32_0 = arith.constant 0 : i32
    %c0_i32_1 = arith.constant 0 : i32
    return %c0_i32, %c0_i32_0 : i32, i32
  }
  func.func @transform_9(%arg0: i32) -> (i32, i32) {
    %c0_i32 = arith.constant 0 : i32
    %c0_i32_0 = arith.constant 0 : i32
    %c0_i32_1 = arith.constant 0 : i32
    return %c0_i32, %c0_i32_0 : i32, i32
  }
  func.func @transform_10(%arg0: i32) -> (i32, i32) {
    %c0_i32 = arith.constant 0 : i32
    %c0_i32_0 = arith.constant 0 : i32
    %c0_i32_1 = arith.constant 0 : i32
    return %c0_i32, %c0_i32_0 : i32, i32
  }
}

module attributes {stable_mosaic.version = 11 : i64} {
  func.func @kernel(%arg0: i32, %arg1: memref<32x48xf32, #tpu.memory_space<vmem>>, %arg2: memref<8x48xf32, #tpu.memory_space<vmem>>, %arg3: memref<1x48xf32, #tpu.memory_space<vmem>>, %arg4: memref<16x32xf32, #tpu.memory_space<vmem>>, %arg5: memref<16x1xf32, #tpu.memory_space<vmem>>, %arg6: memref<8x48xf32, #tpu.memory_space<vmem>>, %arg7: memref<8x48xf32, #tpu.memory_space<vmem>>) attributes {dimension_semantics = [#tpu.dimension_semantics<arbitrary>], iteration_bounds = array<i64: 1>, scalar_prefetch = 0 : i64, scratch_operands = 0 : i64, tpu.core_type = #tpu.core_type<tc>, window_params = [{pipeline_mode = #tpu.pipeline_mode<synchronous>, transform_indices = @transform_0, window_bounds = array<i64: 32, 48>}, {pipeline_mode = #tpu.pipeline_mode<synchronous>, transform_indices = @transform_1, window_bounds = array<i64: 8, 48>}, {pipeline_mode = #tpu.pipeline_mode<synchronous>, transform_indices = @transform_2, window_bounds = array<i64: 1, 48>}, {pipeline_mode = #tpu.pipeline_mode<synchronous>, transform_indices = @transform_3, window_bounds = array<i64: 16, 32>}, {pipeline_mode = #tpu.pipeline_mode<synchronous>, transform_indices = @transform_4, window_bounds = array<i64: 16, 1>}, {pipeline_mode = #tpu.pipeline_mode<synchronous>, transform_indices = @transform_5, window_bounds = array<i64: 8, 48>}, {pipeline_mode = #tpu.pipeline_mode<synchronous>, transform_indices = @transform_6, window_bounds = array<i64: 8, 48>}]} {
    %c0 = arith.constant 0 : index
    %c0_0 = arith.constant 0 : index
    %0 = vector.load %arg1[%c0, %c0_0] : memref<32x48xf32, #tpu.memory_space<vmem>>, vector<32x48xf32>
    %c0_1 = arith.constant 0 : index
    %c0_2 = arith.constant 0 : index
    %1 = vector.load %arg3[%c0_1, %c0_2] : memref<1x48xf32, #tpu.memory_space<vmem>>, vector<1x48xf32>
    %2 = vector.broadcast %1 : vector<1x48xf32> to vector<32x48xf32>
    %3 = arith.mulf %0, %2 : vector<32x48xf32>
    %c0_3 = arith.constant 0 : index
    %c0_4 = arith.constant 0 : index
    %4 = vector.load %arg4[%c0_3, %c0_4] : memref<16x32xf32, #tpu.memory_space<vmem>>, vector<16x32xf32>
    %5 = arith.truncf %4 : vector<16x32xf32> to vector<16x32xbf16>
    %6 = arith.truncf %3 : vector<32x48xf32> to vector<32x48xbf16>
    %cst = arith.constant dense<0.000000e+00> : vector<16x48xf32>
    %7 = tpu.matmul %5, %6, %cst {dimension_numbers = #tpu.dot_dimension_numbers<[1], [0], [0], [1], [0, 0, 1, 1], [], []>} : vector<16x32xbf16>, vector<32x48xbf16>, vector<16x48xf32> -> vector<16x48xf32>
    %c0_5 = arith.constant 0 : index
    %c0_6 = arith.constant 0 : index
    %8 = vector.load %arg5[%c0_5, %c0_6] : memref<16x1xf32, #tpu.memory_space<vmem>>, vector<16x1xf32>
    %9 = vector.broadcast %8 : vector<16x1xf32> to vector<16x48xf32>
    %10 = arith.addf %7, %9 : vector<16x48xf32>
    %11 = vector.extract_strided_slice %10 {offsets = [0, 0], sizes = [8, 48], strides = [1, 1]} : vector<16x48xf32> to vector<8x48xf32>
    %12 = vector.extract_strided_slice %10 {offsets = [8, 0], sizes = [8, 48], strides = [1, 1]} : vector<16x48xf32> to vector<8x48xf32>
    %13 = math.exp %12 : vector<8x48xf32>
    %c0_7 = arith.constant 0 : index
    %c0_8 = arith.constant 0 : index
    %14 = vector.load %arg2[%c0_7, %c0_8] : memref<8x48xf32, #tpu.memory_space<vmem>>, vector<8x48xf32>
    %15 = arith.mulf %13, %14 : vector<8x48xf32>
    %16 = arith.addf %11, %15 : vector<8x48xf32>
    %c0_9 = arith.constant 0 : index
    %c0_10 = arith.constant 0 : index
    %17 = vector.load %arg3[%c0_9, %c0_10] : memref<1x48xf32, #tpu.memory_space<vmem>>, vector<1x48xf32>
    %18 = vector.broadcast %17 : vector<1x48xf32> to vector<8x48xf32>
    %19 = arith.mulf %16, %18 : vector<8x48xf32>
    %c0_11 = arith.constant 0 : index
    %c0_12 = arith.constant 0 : index
    %20 = vector.load %arg6[%c0_11, %c0_12] : memref<8x48xf32, #tpu.memory_space<vmem>>, vector<8x48xf32>
    tpu.vector_store %arg6[%c0_11, %c0_12], %19 {strides = array<i32>} : memref<8x48xf32, #tpu.memory_space<vmem>>, vector<8x48xf32>,
    %c0_13 = arith.constant 0 : index
    %c0_14 = arith.constant 0 : index
    %21 = vector.load %arg3[%c0_13, %c0_14] : memref<1x48xf32, #tpu.memory_space<vmem>>, vector<1x48xf32>
    %22 = vector.broadcast %21 : vector<1x48xf32> to vector<8x48xf32>
    %23 = arith.mulf %12, %22 : vector<8x48xf32>
    %c0_15 = arith.constant 0 : index
    %c0_16 = arith.constant 0 : index
    %24 = vector.load %arg7[%c0_15, %c0_16] : memref<8x48xf32, #tpu.memory_space<vmem>>, vector<8x48xf32>
    tpu.vector_store %arg7[%c0_15, %c0_16], %23 {strides = array<i32>} : memref<8x48xf32, #tpu.memory_space<vmem>>, vector<8x48xf32>,
    return
  }
  func.func @transform_0(%arg0: i32) -> (i32, i32) {
    %c0_i32 = arith.constant 0 : i32
    %c0_i32_0 = arith.constant 0 : i32
    %c0_i32_1 = arith.constant 0 : i32
    return %c0_i32, %c0_i32_0 : i32, i32
  }
  func.func @transform_1(%arg0: i32) -> (i32, i32) {
    %c0_i32 = arith.constant 0 : i32
    %c0_i32_0 = arith.constant 0 : i32
    %c0_i32_1 = arith.constant 0 : i32
    return %c0_i32, %c0_i32_0 : i32, i32
  }
  func.func @transform_2(%arg0: i32) -> (i32, i32) {
    %c0_i32 = arith.constant 0 : i32
    %c0_i32_0 = arith.constant 0 : i32
    %c0_i32_1 = arith.constant 0 : i32
    return %c0_i32, %c0_i32_0 : i32, i32
  }
  func.func @transform_3(%arg0: i32) -> (i32, i32) {
    %c0_i32 = arith.constant 0 : i32
    %c0_i32_0 = arith.constant 0 : i32
    %c0_i32_1 = arith.constant 0 : i32
    return %c0_i32, %c0_i32_0 : i32, i32
  }
  func.func @transform_4(%arg0: i32) -> (i32, i32) {
    %c0_i32 = arith.constant 0 : i32
    %c0_i32_0 = arith.constant 0 : i32
    %c0_i32_1 = arith.constant 0 : i32
    return %c0_i32, %c0_i32_0 : i32, i32
  }
  func.func @transform_5(%arg0: i32) -> (i32, i32) {
    %c0_i32 = arith.constant 0 : i32
    %c0_i32_0 = arith.constant 0 : i32
    %c0_i32_1 = arith.constant 0 : i32
    return %c0_i32, %c0_i32_0 : i32, i32
  }
  func.func @transform_6(%arg0: i32) -> (i32, i32) {
    %c0_i32 = arith.constant 0 : i32
    %c0_i32_0 = arith.constant 0 : i32
    %c0_i32_1 = arith.constant 0 : i32
    return %c0_i32, %c0_i32_0 : i32, i32
  }
}

module attributes {stable_mosaic.version = 11 : i64} {
  func.func @kernel(%arg0: i32, %arg1: memref<32x32xf32, #tpu.memory_space<vmem>>, %arg2: memref<96x32xf32, #tpu.memory_space<vmem>>, %arg3: memref<96x1xf32, #tpu.memory_space<vmem>>, %arg4: memref<1x32xf32, #tpu.memory_space<vmem>>, %arg5: memref<96x32xf32, #tpu.memory_space<vmem>>) attributes {dimension_semantics = [#tpu.dimension_semantics<arbitrary>], iteration_bounds = array<i64: 1>, scalar_prefetch = 0 : i64, scratch_operands = 0 : i64, tpu.core_type = #tpu.core_type<tc>, window_params = [{pipeline_mode = #tpu.pipeline_mode<synchronous>, transform_indices = @transform_0, window_bounds = array<i64: 32, 32>}, {pipeline_mode = #tpu.pipeline_mode<synchronous>, transform_indices = @transform_1, window_bounds = array<i64: 96, 32>}, {pipeline_mode = #tpu.pipeline_mode<synchronous>, transform_indices = @transform_2, window_bounds = array<i64: 96, 1>}, {pipeline_mode = #tpu.pipeline_mode<synchronous>, transform_indices = @transform_3, window_bounds = array<i64: 1, 32>}, {pipeline_mode = #tpu.pipeline_mode<synchronous>, transform_indices = @transform_4, window_bounds = array<i64: 96, 32>}]} {
    %c0 = arith.constant 0 : index
    %c0_0 = arith.constant 0 : index
    %0 = vector.load %arg1[%c0, %c0_0] : memref<32x32xf32, #tpu.memory_space<vmem>>, vector<32x32xf32>
    %c0_1 = arith.constant 0 : index
    %c0_2 = arith.constant 0 : index
    %1 = vector.load %arg4[%c0_1, %c0_2] : memref<1x32xf32, #tpu.memory_space<vmem>>, vector<1x32xf32>
    %2 = vector.broadcast %1 : vector<1x32xf32> to vector<32x32xf32>
    %3 = arith.mulf %0, %2 : vector<32x32xf32>
    %c0_3 = arith.constant 0 : index
    %c0_4 = arith.constant 0 : index
    %4 = vector.load %arg2[%c0_3, %c0_4] : memref<96x32xf32, #tpu.memory_space<vmem>>, vector<96x32xf32>
    %5 = arith.truncf %4 : vector<96x32xf32> to vector<96x32xbf16>
    %6 = arith.truncf %3 : vector<32x32xf32> to vector<32x32xbf16>
    %cst = arith.constant dense<0.000000e+00> : vector<96x32xf32>
    %7 = tpu.matmul %5, %6, %cst {dimension_numbers = #tpu.dot_dimension_numbers<[1], [0], [0], [1], [0, 0, 1, 1], [], []>} : vector<96x32xbf16>, vector<32x32xbf16>, vector<96x32xf32> -> vector<96x32xf32>
    %c0_5 = arith.constant 0 : index
    %c0_6 = arith.constant 0 : index
    %8 = vector.load %arg3[%c0_5, %c0_6] : memref<96x1xf32, #tpu.memory_space<vmem>>, vector<96x1xf32>
    %9 = vector.broadcast %8 : vector<96x1xf32> to vector<96x32xf32>
    %10 = arith.addf %7, %9 : vector<96x32xf32>
    %c0_7 = arith.constant 0 : index
    %c0_8 = arith.constant 0 : index
    %11 = vector.load %arg5[%c0_7, %c0_8] : memref<96x32xf32, #tpu.memory_space<vmem>>, vector<96x32xf32>
    tpu.vector_store %arg5[%c0_7, %c0_8], %10 {strides = array<i32>} : memref<96x32xf32, #tpu.memory_space<vmem>>, vector<96x32xf32>,
    return
  }
  func.func @transform_0(%arg0: i32) -> (i32, i32) {
    %c0_i32 = arith.constant 0 : i32
    %c0_i32_0 = arith.constant 0 : i32
    %c0_i32_1 = arith.constant 0 : i32
    return %c0_i32, %c0_i32_0 : i32, i32
  }
  func.func @transform_1(%arg0: i32) -> (i32, i32) {
    %c0_i32 = arith.constant 0 : i32
    %c0_i32_0 = arith.constant 0 : i32
    %c0_i32_1 = arith.constant 0 : i32
    return %c0_i32, %c0_i32_0 : i32, i32
  }
  func.func @transform_2(%arg0: i32) -> (i32, i32) {
    %c0_i32 = arith.constant 0 : i32
    %c0_i32_0 = arith.constant 0 : i32
    %c0_i32_1 = arith.constant 0 : i32
    return %c0_i32, %c0_i32_0 : i32, i32
  }
  func.func @transform_3(%arg0: i32) -> (i32, i32) {
    %c0_i32 = arith.constant 0 : i32
    %c0_i32_0 = arith.constant 0 : i32
    %c0_i32_1 = arith.constant 0 : i32
    return %c0_i32, %c0_i32_0 : i32, i32
  }
  func.func @transform_4(%arg0: i32) -> (i32, i32) {
    %c0_i32 = arith.constant 0 : i32
    %c0_i32_0 = arith.constant 0 : i32
    %c0_i32_1 = arith.constant 0 : i32
    return %c0_i32, %c0_i32_0 : i32, i32
  }
}

module attributes {stable_mosaic.version = 11 : i64} {
  func.func @kernel(%arg0: i32, %arg1: memref<32x32xf32, #tpu.memory_space<vmem>>, %arg2: memref<32x32xf32, #tpu.memory_space<vmem>>, %arg3: memref<32x1xf32, #tpu.memory_space<vmem>>, %arg4: memref<32x32xf32, #tpu.memory_space<vmem>>) attributes {dimension_semantics = [#tpu.dimension_semantics<arbitrary>], iteration_bounds = array<i64: 1>, scalar_prefetch = 0 : i64, scratch_operands = 0 : i64, tpu.core_type = #tpu.core_type<tc>, window_params = [{pipeline_mode = #tpu.pipeline_mode<synchronous>, transform_indices = @transform_0, window_bounds = array<i64: 32, 32>}, {pipeline_mode = #tpu.pipeline_mode<synchronous>, transform_indices = @transform_1, window_bounds = array<i64: 32, 32>}, {pipeline_mode = #tpu.pipeline_mode<synchronous>, transform_indices = @transform_2, window_bounds = array<i64: 32, 1>}, {pipeline_mode = #tpu.pipeline_mode<synchronous>, transform_indices = @transform_3, window_bounds = array<i64: 32, 32>}]} {
    %c0 = arith.constant 0 : index
    %c0_0 = arith.constant 0 : index
    %0 = vector.load %arg1[%c0, %c0_0] : memref<32x32xf32, #tpu.memory_space<vmem>>, vector<32x32xf32>
    %c0_1 = arith.constant 0 : index
    %c0_2 = arith.constant 0 : index
    %1 = vector.load %arg2[%c0_1, %c0_2] : memref<32x32xf32, #tpu.memory_space<vmem>>, vector<32x32xf32>
    %2 = arith.truncf %1 : vector<32x32xf32> to vector<32x32xbf16>
    %3 = arith.truncf %0 : vector<32x32xf32> to vector<32x32xbf16>
    %cst = arith.constant dense<0.000000e+00> : vector<32x32xf32>
    %4 = tpu.matmul %2, %3, %cst {dimension_numbers = #tpu.dot_dimension_numbers<[1], [0], [0], [1], [0, 0, 1, 1], [], []>} : vector<32x32xbf16>, vector<32x32xbf16>, vector<32x32xf32> -> vector<32x32xf32>
    %c0_3 = arith.constant 0 : index
    %c0_4 = arith.constant 0 : index
    %5 = vector.load %arg3[%c0_3, %c0_4] : memref<32x1xf32, #tpu.memory_space<vmem>>, vector<32x1xf32>
    %6 = vector.broadcast %5 : vector<32x1xf32> to vector<32x32xf32>
    %7 = arith.addf %4, %6 : vector<32x32xf32>
    %c0_5 = arith.constant 0 : index
    %c0_6 = arith.constant 0 : index
    %8 = vector.load %arg4[%c0_5, %c0_6] : memref<32x32xf32, #tpu.memory_space<vmem>>, vector<32x32xf32>
    tpu.vector_store %arg4[%c0_5, %c0_6], %7 {strides = array<i32>} : memref<32x32xf32, #tpu.memory_space<vmem>>, vector<32x32xf32>,
    return
  }
  func.func @transform_0(%arg0: i32) -> (i32, i32) {
    %c0_i32 = arith.constant 0 : i32
    %c0_i32_0 = arith.constant 0 : i32
    %c0_i32_1 = arith.constant 0 : i32
    return %c0_i32, %c0_i32_0 : i32, i32
  }
  func.func @transform_1(%arg0: i32) -> (i32, i32) {
    %c0_i32 = arith.constant 0 : i32
    %c0_i32_0 = arith.constant 0 : i32
    %c0_i32_1 = arith.constant 0 : i32
    return %c0_i32, %c0_i32_0 : i32, i32
  }
  func.func @transform_2(%arg0: i32) -> (i32, i32) {
    %c0_i32 = arith.constant 0 : i32
    %c0_i32_0 = arith.constant 0 : i32
    %c0_i32_1 = arith.constant 0 : i32
    return %c0_i32, %c0_i32_0 : i32, i32
  }
  func.func @transform_3(%arg0: i32) -> (i32, i32) {
    %c0_i32 = arith.constant 0 : i32
    %c0_i32_0 = arith.constant 0 : i32
    %c0_i32_1 = arith.constant 0 : i32
    return %c0_i32, %c0_i32_0 : i32, i32
  }
}

module attributes {stable_mosaic.version = 11 : i64} {
  func.func @kernel(%arg0: i32, %arg1: memref<32x32xf32, #tpu.memory_space<vmem>>, %arg2: memref<32x1xf32, #tpu.memory_space<vmem>>, %arg3: memref<32x1xf32, #tpu.memory_space<vmem>>, %arg4: memref<32x32xf32, #tpu.memory_space<vmem>>, %arg5: memref<1x32xf32, #tpu.memory_space<vmem>>, %arg6: memref<32x32xf32, #tpu.memory_space<vmem>>) attributes {dimension_semantics = [#tpu.dimension_semantics<arbitrary>], iteration_bounds = array<i64: 1>, scalar_prefetch = 0 : i64, scratch_operands = 0 : i64, tpu.core_type = #tpu.core_type<tc>, window_params = [{pipeline_mode = #tpu.pipeline_mode<synchronous>, transform_indices = @transform_0, window_bounds = array<i64: 32, 32>}, {pipeline_mode = #tpu.pipeline_mode<synchronous>, transform_indices = @transform_1, window_bounds = array<i64: 32, 1>}, {pipeline_mode = #tpu.pipeline_mode<synchronous>, transform_indices = @transform_2, window_bounds = array<i64: 32, 1>}, {pipeline_mode = #tpu.pipeline_mode<synchronous>, transform_indices = @transform_3, window_bounds = array<i64: 32, 32>}, {pipeline_mode = #tpu.pipeline_mode<synchronous>, transform_indices = @transform_4, window_bounds = array<i64: 1, 32>}, {pipeline_mode = #tpu.pipeline_mode<synchronous>, transform_indices = @transform_5, window_bounds = array<i64: 32, 32>}]} {
    %c0 = arith.constant 0 : index
    %c0_0 = arith.constant 0 : index
    %0 = vector.load %arg1[%c0, %c0_0] : memref<32x32xf32, #tpu.memory_space<vmem>>, vector<32x32xf32>
    %c0_1 = arith.constant 0 : index
    %c0_2 = arith.constant 0 : index
    %1 = vector.load %arg5[%c0_1, %c0_2] : memref<1x32xf32, #tpu.memory_space<vmem>>, vector<1x32xf32>
    %2 = vector.broadcast %1 : vector<1x32xf32> to vector<32x32xf32>
    %3 = arith.mulf %0, %2 : vector<32x32xf32>
    %c0_3 = arith.constant 0 : index
    %c0_4 = arith.constant 0 : index
    %4 = vector.load %arg4[%c0_3, %c0_4] : memref<32x32xf32, #tpu.memory_space<vmem>>, vector<32x32xf32>
    %5 = arith.addf %3, %4 : vector<32x32xf32>
    %cst = arith.constant dense<0.000000e+00> : vector<32xf32>
    %6 = vector.multi_reduction <add>, %5, %cst [0] : vector<32x32xf32> to vector<32xf32>
    %7 = vector.shape_cast %6 : vector<32xf32> to vector<1x32xf32>
    %cst_5 = arith.constant 3.200000e+01 : f32
    %8 = vector.broadcast %cst_5 : f32 to vector<1x32xf32>
    %9 = arith.divf %7, %8 : vector<1x32xf32>
    %10 = vector.broadcast %9 : vector<1x32xf32> to vector<32x32xf32>
    %11 = arith.subf %5, %10 : vector<32x32xf32>
    %12 = arith.mulf %11, %11 : vector<32x32xf32>
    %cst_6 = arith.constant dense<0.000000e+00> : vector<32xf32>
    %13 = vector.multi_reduction <add>, %12, %cst_6 [0] : vector<32x32xf32> to vector<32xf32>
    %14 = vector.shape_cast %13 : vector<32xf32> to vector<1x32xf32>
    %cst_7 = arith.constant 3.200000e+01 : f32
    %15 = vector.broadcast %cst_7 : f32 to vector<1x32xf32>
    %16 = arith.divf %14, %15 : vector<1x32xf32>
    %cst_8 = arith.constant 9.99999974E-5 : f32
    %17 = vector.broadcast %cst_8 : f32 to vector<1x32xf32>
    %18 = arith.addf %16, %17 : vector<1x32xf32>
    %19 = math.rsqrt %18 : vector<1x32xf32>
    %20 = vector.broadcast %19 : vector<1x32xf32> to vector<32x32xf32>
    %21 = arith.mulf %11, %20 : vector<32x32xf32>
    %c0_9 = arith.constant 0 : index
    %c0_10 = arith.constant 0 : index
    %22 = vector.load %arg2[%c0_9, %c0_10] : memref<32x1xf32, #tpu.memory_space<vmem>>, vector<32x1xf32>
    %23 = vector.broadcast %22 : vector<32x1xf32> to vector<32x32xf32>
    %24 = arith.mulf %21, %23 : vector<32x32xf32>
    %c0_11 = arith.constant 0 : index
    %c0_12 = arith.constant 0 : index
    %25 = vector.load %arg3[%c0_11, %c0_12] : memref<32x1xf32, #tpu.memory_space<vmem>>, vector<32x1xf32>
    %26 = vector.broadcast %25 : vector<32x1xf32> to vector<32x32xf32>
    %27 = arith.addf %24, %26 : vector<32x32xf32>
    %c0_13 = arith.constant 0 : index
    %c0_14 = arith.constant 0 : index
    %28 = vector.load %arg6[%c0_13, %c0_14] : memref<32x32xf32, #tpu.memory_space<vmem>>, vector<32x32xf32>
    tpu.vector_store %arg6[%c0_13, %c0_14], %27 {strides = array<i32>} : memref<32x32xf32, #tpu.memory_space<vmem>>, vector<32x32xf32>,
    return
  }
  func.func @transform_0(%arg0: i32) -> (i32, i32) {
    %c0_i32 = arith.constant 0 : i32
    %c0_i32_0 = arith.constant 0 : i32
    %c0_i32_1 = arith.constant 0 : i32
    return %c0_i32, %c0_i32_0 : i32, i32
  }
  func.func @transform_1(%arg0: i32) -> (i32, i32) {
    %c0_i32 = arith.constant 0 : i32
    %c0_i32_0 = arith.constant 0 : i32
    %c0_i32_1 = arith.constant 0 : i32
    return %c0_i32, %c0_i32_0 : i32, i32
  }
  func.func @transform_2(%arg0: i32) -> (i32, i32) {
    %c0_i32 = arith.constant 0 : i32
    %c0_i32_0 = arith.constant 0 : i32
    %c0_i32_1 = arith.constant 0 : i32
    return %c0_i32, %c0_i32_0 : i32, i32
  }
  func.func @transform_3(%arg0: i32) -> (i32, i32) {
    %c0_i32 = arith.constant 0 : i32
    %c0_i32_0 = arith.constant 0 : i32
    %c0_i32_1 = arith.constant 0 : i32
    return %c0_i32, %c0_i32_0 : i32, i32
  }
  func.func @transform_4(%arg0: i32) -> (i32, i32) {
    %c0_i32 = arith.constant 0 : i32
    %c0_i32_0 = arith.constant 0 : i32
    %c0_i32_1 = arith.constant 0 : i32
    return %c0_i32, %c0_i32_0 : i32, i32
  }
  func.func @transform_5(%arg0: i32) -> (i32, i32) {
    %c0_i32 = arith.constant 0 : i32
    %c0_i32_0 = arith.constant 0 : i32
    %c0_i32_1 = arith.constant 0 : i32
    return %c0_i32, %c0_i32_0 : i32, i32
  }
}

module attributes {stable_mosaic.version = 11 : i64} {
  func.func @kernel(%arg0: i32, %arg1: memref<2xi32, #tpu.memory_space<smem>>, %arg2: memref<96x32xf32, #tpu.memory_space<vmem>>, %arg3: memref<64x16xf32, #tpu.memory_space<vmem>>) attributes {dimension_semantics = [#tpu.dimension_semantics<arbitrary>], iteration_bounds = array<i64: 1>, scalar_prefetch = 1 : i64, scratch_operands = 0 : i64, tpu.core_type = #tpu.core_type<tc>, window_params = [{pipeline_mode = #tpu.pipeline_mode<synchronous>, transform_indices = @transform_0, window_bounds = array<i64: 96, 32>}, {pipeline_mode = #tpu.pipeline_mode<synchronous>, transform_indices = @transform_1, window_bounds = array<i64: 64, 16>}]} {
    %c0 = arith.constant 0 : index
    %c0_0 = arith.constant 0 : index
    %0 = vector.load %arg2[%c0, %c0_0] : memref<96x32xf32, #tpu.memory_space<vmem>>, vector<96x32xf32>
    %1 = tpu.iota {dimensions = array<i32: 0>} : vector<16x16xi32>
    %2 = tpu.iota {dimensions = array<i32: 1>} : vector<16x16xi32>
    %c0_1 = arith.constant 0 : index
    %3 = memref.load %arg1[%c0_1] : memref<2xi32, #tpu.memory_space<smem>>
    %4 = vector.broadcast %3 : i32 to vector<16x16xi32>
    %5 = arith.cmpi slt, %1, %4 : vector<16x16xi32>
    %6 = vector.broadcast %3 : i32 to vector<16x16xi32>
    %7 = arith.cmpi slt, %2, %6 : vector<16x16xi32>
    %8 = arith.andi %5, %7 : vector<16x16xi1>
    %9 = vector.extract_strided_slice %0 {offsets = [0, 0], sizes = [16, 16], strides = [1, 1]} : vector<96x32xf32> to vector<16x16xf32>
    %10 = vector.extract_strided_slice %0 {offsets = [32, 0], sizes = [16, 16], strides = [1, 1]} : vector<96x32xf32> to vector<16x16xf32>
    %11 = vector.extract_strided_slice %0 {offsets = [64, 0], sizes = [16, 16], strides = [1, 1]} : vector<96x32xf32> to vector<16x16xf32>
    %12 = arith.truncf %9 : vector<16x16xf32> to vector<16x16xbf16>
    %13 = arith.truncf %10 : vector<16x16xf32> to vector<16x16xbf16>
    %cst = arith.constant dense<0.000000e+00> : vector<16x16xf32>
    %14 = tpu.matmul %12, %13, %cst {dimension_numbers = #tpu.dot_dimension_numbers<[0], [0], [1], [1], [0, 1, 1, 1], [], []>} : vector<16x16xbf16>, vector<16x16xbf16>, vector<16x16xf32> -> vector<16x16xf32>
    %cst_2 = arith.constant 2.500000e-01 : f32
    %15 = vector.broadcast %cst_2 : f32 to vector<16x16xf32>
    %16 = arith.mulf %14, %15 : vector<16x16xf32>
    %cst_3 = arith.constant -1.000000e+04 : f32
    %17 = vector.broadcast %cst_3 : f32 to vector<16x16xf32>
    %18 = arith.select %8, %16, %17 : vector<16x16xi1>, vector<16x16xf32>
    %cst_4 = arith.constant dense<0xFF800000> : vector<16xf32>
    %19 = vector.multi_reduction <maximumf>, %18, %cst_4 [1] : vector<16x16xf32> to vector<16xf32>
    %20 = vector.shape_cast %19 : vector<16xf32> to vector<16x1xf32>
    %21 = vector.broadcast %20 : vector<16x1xf32> to vector<16x16xf32>
    %22 = arith.subf %18, %21 : vector<16x16xf32>
    %23 = math.exp %22 : vector<16x16xf32>
    %cst_5 = arith.constant dense<0.000000e+00> : vector<16xf32>
    %24 = vector.multi_reduction <add>, %23, %cst_5 [1] : vector<16x16xf32> to vector<16xf32>
    %25 = vector.shape_cast %24 : vector<16xf32> to vector<16x1xf32>
    %26 = tpu.reciprocal %25 {approx = true} : vector<16x1xf32> -> vector<16x1xf32>
    %27 = vector.broadcast %26 : vector<16x1xf32> to vector<16x16xf32>
    %28 = arith.mulf %23, %27 : vector<16x16xf32>
    %29 = arith.truncf %11 : vector<16x16xf32> to vector<16x16xbf16>
    %30 = arith.truncf %28 : vector<16x16xf32> to vector<16x16xbf16>
    %cst_6 = arith.constant dense<0.000000e+00> : vector<16x16xf32>
    %31 = tpu.matmul %29, %30, %cst_6 {dimension_numbers = #tpu.dot_dimension_numbers<[1], [1], [0], [0], [0, 0, 1, 0], [], []>} : vector<16x16xbf16>, vector<16x16xbf16>, vector<16x16xf32> -> vector<16x16xf32>
    %c0_7 = arith.constant 0 : index
    %c0_8 = arith.constant 0 : index
    %32 = vector.load %arg3[%c0_7, %c0_8] : memref<64x16xf32, #tpu.memory_space<vmem>>, vector<16x16xf32>
    tpu.vector_store %arg3[%c0_7, %c0_8], %31 {strides = array<i32>} : memref<64x16xf32, #tpu.memory_space<vmem>>, vector<16x16xf32>,
    %33 = vector.extract_strided_slice %0 {offsets = [16, 0], sizes = [16, 16], strides = [1, 1]} : vector<96x32xf32> to vector<16x16xf32>
    %34 = vector.extract_strided_slice %0 {offsets = [48, 0], sizes = [16, 16], strides = [1, 1]} : vector<96x32xf32> to vector<16x16xf32>
    %35 = vector.extract_strided_slice %0 {offsets = [80, 0], sizes = [16, 16], strides = [1, 1]} : vector<96x32xf32> to vector<16x16xf32>
    %36 = arith.truncf %33 : vector<16x16xf32> to vector<16x16xbf16>
    %37 = arith.truncf %34 : vector<16x16xf32> to vector<16x16xbf16>
    %cst_9 = arith.constant dense<0.000000e+00> : vector<16x16xf32>
    %38 = tpu.matmul %36, %37, %cst_9 {dimension_numbers = #tpu.dot_dimension_numbers<[0], [0], [1], [1], [0, 1, 1, 1], [], []>} : vector<16x16xbf16>, vector<16x16xbf16>, vector<16x16xf32> -> vector<16x16xf32>
    %cst_10 = arith.constant 2.500000e-01 : f32
    %39 = vector.broadcast %cst_10 : f32 to vector<16x16xf32>
    %40 = arith.mulf %38, %39 : vector<16x16xf32>
    %cst_11 = arith.constant -1.000000e+04 : f32
    %41 = vector.broadcast %cst_11 : f32 to vector<16x16xf32>
    %42 = arith.select %8, %40, %41 : vector<16x16xi1>, vector<16x16xf32>
    %cst_12 = arith.constant dense<0xFF800000> : vector<16xf32>
    %43 = vector.multi_reduction <maximumf>, %42, %cst_12 [1] : vector<16x16xf32> to vector<16xf32>
    %44 = vector.shape_cast %43 : vector<16xf32> to vector<16x1xf32>
    %45 = vector.broadcast %44 : vector<16x1xf32> to vector<16x16xf32>
    %46 = arith.subf %42, %45 : vector<16x16xf32>
    %47 = math.exp %46 : vector<16x16xf32>
    %cst_13 = arith.constant dense<0.000000e+00> : vector<16xf32>
    %48 = vector.multi_reduction <add>, %47, %cst_13 [1] : vector<16x16xf32> to vector<16xf32>
    %49 = vector.shape_cast %48 : vector<16xf32> to vector<16x1xf32>
    %50 = tpu.reciprocal %49 {approx = true} : vector<16x1xf32> -> vector<16x1xf32>
    %51 = vector.broadcast %50 : vector<16x1xf32> to vector<16x16xf32>
    %52 = arith.mulf %47, %51 : vector<16x16xf32>
    %53 = arith.truncf %35 : vector<16x16xf32> to vector<16x16xbf16>
    %54 = arith.truncf %52 : vector<16x16xf32> to vector<16x16xbf16>
    %cst_14 = arith.constant dense<0.000000e+00> : vector<16x16xf32>
    %55 = tpu.matmul %53, %54, %cst_14 {dimension_numbers = #tpu.dot_dimension_numbers<[1], [1], [0], [0], [0, 0, 1, 0], [], []>} : vector<16x16xbf16>, vector<16x16xbf16>, vector<16x16xf32> -> vector<16x16xf32>
    %c16 = arith.constant 16 : index
    %c0_15 = arith.constant 0 : index
    %56 = vector.load %arg3[%c16, %c0_15] : memref<64x16xf32, #tpu.memory_space<vmem>>, vector<16x16xf32>
    tpu.vector_store %arg3[%c16, %c0_15], %55 {strides = array<i32>} : memref<64x16xf32, #tpu.memory_space<vmem>>, vector<16x16xf32>,
    %c1 = arith.constant 1 : index
    %57 = memref.load %arg1[%c1] : memref<2xi32, #tpu.memory_space<smem>>
    %58 = vector.broadcast %57 : i32 to vector<16x16xi32>
    %59 = arith.cmpi slt, %1, %58 : vector<16x16xi32>
    %60 = vector.broadcast %57 : i32 to vector<16x16xi32>
    %61 = arith.cmpi slt, %2, %60 : vector<16x16xi32>
    %62 = arith.andi %59, %61 : vector<16x16xi1>
    %63 = vector.extract_strided_slice %0 {offsets = [0, 16], sizes = [16, 16], strides = [1, 1]} : vector<96x32xf32> to vector<16x16xf32>
    %64 = vector.extract_strided_slice %0 {offsets = [32, 16], sizes = [16, 16], strides = [1, 1]} : vector<96x32xf32> to vector<16x16xf32>
    %65 = vector.extract_strided_slice %0 {offsets = [64, 16], sizes = [16, 16], strides = [1, 1]} : vector<96x32xf32> to vector<16x16xf32>
    %66 = arith.truncf %63 : vector<16x16xf32> to vector<16x16xbf16>
    %67 = arith.truncf %64 : vector<16x16xf32> to vector<16x16xbf16>
    %cst_16 = arith.constant dense<0.000000e+00> : vector<16x16xf32>
    %68 = tpu.matmul %66, %67, %cst_16 {dimension_numbers = #tpu.dot_dimension_numbers<[0], [0], [1], [1], [0, 1, 1, 1], [], []>} : vector<16x16xbf16>, vector<16x16xbf16>, vector<16x16xf32> -> vector<16x16xf32>
    %cst_17 = arith.constant 2.500000e-01 : f32
    %69 = vector.broadcast %cst_17 : f32 to vector<16x16xf32>
    %70 = arith.mulf %68, %69 : vector<16x16xf32>
    %cst_18 = arith.constant -1.000000e+04 : f32
    %71 = vector.broadcast %cst_18 : f32 to vector<16x16xf32>
    %72 = arith.select %62, %70, %71 : vector<16x16xi1>, vector<16x16xf32>
    %cst_19 = arith.constant dense<0xFF800000> : vector<16xf32>
    %73 = vector.multi_reduction <maximumf>, %72, %cst_19 [1] : vector<16x16xf32> to vector<16xf32>
    %74 = vector.shape_cast %73 : vector<16xf32> to vector<16x1xf32>
    %75 = vector.broadcast %74 : vector<16x1xf32> to vector<16x16xf32>
    %76 = arith.subf %72, %75 : vector<16x16xf32>
    %77 = math.exp %76 : vector<16x16xf32>
    %cst_20 = arith.constant dense<0.000000e+00> : vector<16xf32>
    %78 = vector.multi_reduction <add>, %77, %cst_20 [1] : vector<16x16xf32> to vector<16xf32>
    %79 = vector.shape_cast %78 : vector<16xf32> to vector<16x1xf32>
    %80 = tpu.reciprocal %79 {approx = true} : vector<16x1xf32> -> vector<16x1xf32>
    %81 = vector.broadcast %80 : vector<16x1xf32> to vector<16x16xf32>
    %82 = arith.mulf %77, %81 : vector<16x16xf32>
    %83 = arith.truncf %65 : vector<16x16xf32> to vector<16x16xbf16>
    %84 = arith.truncf %82 : vector<16x16xf32> to vector<16x16xbf16>
    %cst_21 = arith.constant dense<0.000000e+00> : vector<16x16xf32>
    %85 = tpu.matmul %83, %84, %cst_21 {dimension_numbers = #tpu.dot_dimension_numbers<[1], [1], [0], [0], [0, 0, 1, 0], [], []>} : vector<16x16xbf16>, vector<16x16xbf16>, vector<16x16xf32> -> vector<16x16xf32>
    %c32 = arith.constant 32 : index
    %c0_22 = arith.constant 0 : index
    %86 = vector.load %arg3[%c32, %c0_22] : memref<64x16xf32, #tpu.memory_space<vmem>>, vector<16x16xf32>
    tpu.vector_store %arg3[%c32, %c0_22], %85 {strides = array<i32>} : memref<64x16xf32, #tpu.memory_space<vmem>>, vector<16x16xf32>,
    %87 = vector.extract_strided_slice %0 {offsets = [16, 16], sizes = [16, 16], strides = [1, 1]} : vector<96x32xf32> to vector<16x16xf32>
    %88 = vector.extract_strided_slice %0 {offsets = [48, 16], sizes = [16, 16], strides = [1, 1]} : vector<96x32xf32> to vector<16x16xf32>
    %89 = vector.extract_strided_slice %0 {offsets = [80, 16], sizes = [16, 16], strides = [1, 1]} : vector<96x32xf32> to vector<16x16xf32>
    %90 = arith.truncf %87 : vector<16x16xf32> to vector<16x16xbf16>
    %91 = arith.truncf %88 : vector<16x16xf32> to vector<16x16xbf16>
    %cst_23 = arith.constant dense<0.000000e+00> : vector<16x16xf32>
    %92 = tpu.matmul %90, %91, %cst_23 {dimension_numbers = #tpu.dot_dimension_numbers<[0], [0], [1], [1], [0, 1, 1, 1], [], []>} : vector<16x16xbf16>, vector<16x16xbf16>, vector<16x16xf32> -> vector<16x16xf32>
    %cst_24 = arith.constant 2.500000e-01 : f32
    %93 = vector.broadcast %cst_24 : f32 to vector<16x16xf32>
    %94 = arith.mulf %92, %93 : vector<16x16xf32>
    %cst_25 = arith.constant -1.000000e+04 : f32
    %95 = vector.broadcast %cst_25 : f32 to vector<16x16xf32>
    %96 = arith.select %62, %94, %95 : vector<16x16xi1>, vector<16x16xf32>
    %cst_26 = arith.constant dense<0xFF800000> : vector<16xf32>
    %97 = vector.multi_reduction <maximumf>, %96, %cst_26 [1] : vector<16x16xf32> to vector<16xf32>
    %98 = vector.shape_cast %97 : vector<16xf32> to vector<16x1xf32>
    %99 = vector.broadcast %98 : vector<16x1xf32> to vector<16x16xf32>
    %100 = arith.subf %96, %99 : vector<16x16xf32>
    %101 = math.exp %100 : vector<16x16xf32>
    %cst_27 = arith.constant dense<0.000000e+00> : vector<16xf32>
    %102 = vector.multi_reduction <add>, %101, %cst_27 [1] : vector<16x16xf32> to vector<16xf32>
    %103 = vector.shape_cast %102 : vector<16xf32> to vector<16x1xf32>
    %104 = tpu.reciprocal %103 {approx = true} : vector<16x1xf32> -> vector<16x1xf32>
    %105 = vector.broadcast %104 : vector<16x1xf32> to vector<16x16xf32>
    %106 = arith.mulf %101, %105 : vector<16x16xf32>
    %107 = arith.truncf %89 : vector<16x16xf32> to vector<16x16xbf16>
    %108 = arith.truncf %106 : vector<16x16xf32> to vector<16x16xbf16>
    %cst_28 = arith.constant dense<0.000000e+00> : vector<16x16xf32>
    %109 = tpu.matmul %107, %108, %cst_28 {dimension_numbers = #tpu.dot_dimension_numbers<[1], [1], [0], [0], [0, 0, 1, 0], [], []>} : vector<16x16xbf16>, vector<16x16xbf16>, vector<16x16xf32> -> vector<16x16xf32>
    %c48 = arith.constant 48 : index
    %c0_29 = arith.constant 0 : index
    %110 = vector.load %arg3[%c48, %c0_29] : memref<64x16xf32, #tpu.memory_space<vmem>>, vector<16x16xf32>
    tpu.vector_store %arg3[%c48, %c0_29], %109 {strides = array<i32>} : memref<64x16xf32, #tpu.memory_space<vmem>>, vector<16x16xf32>,
    return
  }
  func.func @transform_0(%arg0: i32, %arg1: memref<2xi32, #tpu.memory_space<smem>>) -> (i32, i32) {
    %c0_i32 = arith.constant 0 : i32
    %c0_i32_0 = arith.constant 0 : i32
    %c0_i32_1 = arith.constant 0 : i32
    return %c0_i32, %c0_i32_0 : i32, i32
  }
  func.func @transform_1(%arg0: i32, %arg1: memref<2xi32, #tpu.memory_space<smem>>) -> (i32, i32) {
    %c0_i32 = arith.constant 0 : i32
    %c0_i32_0 = arith.constant 0 : i32
    %c0_i32_1 = arith.constant 0 : i32
    return %c0_i32, %c0_i32_0 : i32, i32
  }
}

module attributes {stable_mosaic.version = 11 : i64} {
  func.func @kernel(%arg0: i32, %arg1: memref<96x32xbf16, #tpu.memory_space<vmem>>, %arg2: memref<64x96xf32, #tpu.memory_space<vmem>>, %arg3: memref<64x1xf32, #tpu.memory_space<vmem>>, %arg4: memref<64x32xf32, #tpu.memory_space<vmem>>) attributes {dimension_semantics = [#tpu.dimension_semantics<arbitrary>], iteration_bounds = array<i64: 1>, scalar_prefetch = 0 : i64, scratch_operands = 0 : i64, tpu.core_type = #tpu.core_type<tc>, window_params = [{pipeline_mode = #tpu.pipeline_mode<synchronous>, transform_indices = @transform_0, window_bounds = array<i64: 96, 32>}, {pipeline_mode = #tpu.pipeline_mode<synchronous>, transform_indices = @transform_1, window_bounds = array<i64: 64, 96>}, {pipeline_mode = #tpu.pipeline_mode<synchronous>, transform_indices = @transform_2, window_bounds = array<i64: 64, 1>}, {pipeline_mode = #tpu.pipeline_mode<synchronous>, transform_indices = @transform_3, window_bounds = array<i64: 64, 32>}]} {
    %c0 = arith.constant 0 : index
    %c0_0 = arith.constant 0 : index
    %0 = vector.load %arg1[%c0, %c0_0] : memref<96x32xbf16, #tpu.memory_space<vmem>>, vector<96x32xbf16>
    %c0_1 = arith.constant 0 : index
    %c0_2 = arith.constant 0 : index
    %1 = vector.load %arg2[%c0_1, %c0_2] : memref<64x96xf32, #tpu.memory_space<vmem>>, vector<64x96xf32>
    %2 = arith.truncf %1 : vector<64x96xf32> to vector<64x96xbf16>
    %cst = arith.constant dense<0.000000e+00> : vector<64x32xf32>
    %3 = tpu.matmul %2, %0, %cst {dimension_numbers = #tpu.dot_dimension_numbers<[1], [0], [0], [1], [0, 0, 1, 1], [], []>} : vector<64x96xbf16>, vector<96x32xbf16>, vector<64x32xf32> -> vector<64x32xf32>
    %c0_3 = arith.constant 0 : index
    %c0_4 = arith.constant 0 : index
    %4 = vector.load %arg3[%c0_3, %c0_4] : memref<64x1xf32, #tpu.memory_space<vmem>>, vector<64x1xf32>
    %5 = vector.broadcast %4 : vector<64x1xf32> to vector<64x32xf32>
    %6 = arith.addf %3, %5 : vector<64x32xf32>
    %cst_5 = arith.constant 0.000000e+00 : f32
    %7 = vector.broadcast %cst_5 : f32 to vector<64x32xf32>
    %8 = arith.maximumf %6, %7 : vector<64x32xf32>
    %c0_6 = arith.constant 0 : index
    %c0_7 = arith.constant 0 : index
    %9 = vector.load %arg4[%c0_6, %c0_7] : memref<64x32xf32, #tpu.memory_space<vmem>>, vector<64x32xf32>
    tpu.vector_store %arg4[%c0_6, %c0_7], %8 {strides = array<i32>} : memref<64x32xf32, #tpu.memory_space<vmem>>, vector<64x32xf32>,
    return
  }
  func.func @transform_0(%arg0: i32) -> (i32, i32) {
    %c0_i32 = arith.constant 0 : i32
    %c0_i32_0 = arith.constant 0 : i32
    %c0_i32_1 = arith.constant 0 : i32
    return %c0_i32, %c0_i32_0 : i32, i32
  }
  func.func @transform_1(%arg0: i32) -> (i32, i32) {
    %c0_i32 = arith.constant 0 : i32
    %c0_i32_0 = arith.constant 0 : i32
    %c0_i32_1 = arith.constant 0 : i32
    return %c0_i32, %c0_i32_0 : i32, i32
  }
  func.func @transform_2(%arg0: i32) -> (i32, i32) {
    %c0_i32 = arith.constant 0 : i32
    %c0_i32_0 = arith.constant 0 : i32
    %c0_i32_1 = arith.constant 0 : i32
    return %c0_i32, %c0_i32_0 : i32, i32
  }
  func.func @transform_3(%arg0: i32) -> (i32, i32) {
    %c0_i32 = arith.constant 0 : i32
    %c0_i32_0 = arith.constant 0 : i32
    %c0_i32_1 = arith.constant 0 : i32
    return %c0_i32, %c0_i32_0 : i32, i32
  }
}

module attributes {stable_mosaic.version = 11 : i64} {
  func.func @kernel(%arg0: i32, %arg1: memref<192x32xbf16, #tpu.memory_space<vmem>>, %arg2: memref<32x192xf32, #tpu.memory_space<vmem>>, %arg3: memref<32x1xf32, #tpu.memory_space<vmem>>, %arg4: memref<1x32xf32, #tpu.memory_space<vmem>>, %arg5: memref<32x32xf32, #tpu.memory_space<vmem>>) attributes {dimension_semantics = [#tpu.dimension_semantics<arbitrary>], iteration_bounds = array<i64: 1>, scalar_prefetch = 0 : i64, scratch_operands = 0 : i64, tpu.core_type = #tpu.core_type<tc>, window_params = [{pipeline_mode = #tpu.pipeline_mode<synchronous>, transform_indices = @transform_0, window_bounds = array<i64: 192, 32>}, {pipeline_mode = #tpu.pipeline_mode<synchronous>, transform_indices = @transform_1, window_bounds = array<i64: 32, 192>}, {pipeline_mode = #tpu.pipeline_mode<synchronous>, transform_indices = @transform_2, window_bounds = array<i64: 32, 1>}, {pipeline_mode = #tpu.pipeline_mode<synchronous>, transform_indices = @transform_3, window_bounds = array<i64: 1, 32>}, {pipeline_mode = #tpu.pipeline_mode<synchronous>, transform_indices = @transform_4, window_bounds = array<i64: 32, 32>}]} {
    %c0 = arith.constant 0 : index
    %c0_0 = arith.constant 0 : index
    %0 = vector.load %arg1[%c0, %c0_0] : memref<192x32xbf16, #tpu.memory_space<vmem>>, vector<192x32xbf16>
    %c0_1 = arith.constant 0 : index
    %c0_2 = arith.constant 0 : index
    %1 = vector.load %arg2[%c0_1, %c0_2] : memref<32x192xf32, #tpu.memory_space<vmem>>, vector<32x192xf32>
    %2 = arith.truncf %1 : vector<32x192xf32> to vector<32x192xbf16>
    %cst = arith.constant dense<0.000000e+00> : vector<32x32xf32>
    %3 = tpu.matmul %2, %0, %cst {dimension_numbers = #tpu.dot_dimension_numbers<[1], [0], [0], [1], [0, 0, 1, 1], [], []>} : vector<32x192xbf16>, vector<192x32xbf16>, vector<32x32xf32> -> vector<32x32xf32>
    %c0_3 = arith.constant 0 : index
    %c0_4 = arith.constant 0 : index
    %4 = vector.load %arg3[%c0_3, %c0_4] : memref<32x1xf32, #tpu.memory_space<vmem>>, vector<32x1xf32>
    %5 = vector.broadcast %4 : vector<32x1xf32> to vector<32x32xf32>
    %6 = arith.addf %3, %5 : vector<32x32xf32>
    %c0_5 = arith.constant 0 : index
    %c0_6 = arith.constant 0 : index
    %7 = vector.load %arg4[%c0_5, %c0_6] : memref<1x32xf32, #tpu.memory_space<vmem>>, vector<1x32xf32>
    %8 = vector.broadcast %7 : vector<1x32xf32> to vector<32x32xf32>
    %9 = arith.mulf %6, %8 : vector<32x32xf32>
    %c0_7 = arith.constant 0 : index
    %c0_8 = arith.constant 0 : index
    %10 = vector.load %arg5[%c0_7, %c0_8] : memref<32x32xf32, #tpu.memory_space<vmem>>, vector<32x32xf32>
    tpu.vector_store %arg5[%c0_7, %c0_8], %9 {strides = array<i32>} : memref<32x32xf32, #tpu.memory_space<vmem>>, vector<32x32xf32>,
    return
  }
  func.func @transform_0(%arg0: i32) -> (i32, i32) {
    %c0_i32 = arith.constant 0 : i32
    %c0_i32_0 = arith.constant 0 : i32
    %c0_i32_1 = arith.constant 0 : i32
    return %c0_i32, %c0_i32_0 : i32, i32
  }
  func.func @transform_1(%arg0: i32) -> (i32, i32) {
    %c0_i32 = arith.constant 0 : i32
    %c0_i32_0 = arith.constant 0 : i32
    %c0_i32_1 = arith.constant 0 : i32
    return %c0_i32, %c0_i32_0 : i32, i32
  }
  func.func @transform_2(%arg0: i32) -> (i32, i32) {
    %c0_i32 = arith.constant 0 : i32
    %c0_i32_0 = arith.constant 0 : i32
    %c0_i32_1 = arith.constant 0 : i32
    return %c0_i32, %c0_i32_0 : i32, i32
  }
  func.func @transform_3(%arg0: i32) -> (i32, i32) {
    %c0_i32 = arith.constant 0 : i32
    %c0_i32_0 = arith.constant 0 : i32
    %c0_i32_1 = arith.constant 0 : i32
    return %c0_i32, %c0_i32_0 : i32, i32
  }
  func.func @transform_4(%arg0: i32) -> (i32, i32) {
    %c0_i32 = arith.constant 0 : i32
    %c0_i32_0 = arith.constant 0 : i32
    %c0_i32_1 = arith.constant 0 : i32
    return %c0_i32, %c0_i32_0 : i32, i32
  }
}

module attributes {stable_mosaic.version = 11 : i64} {
  func.func @kernel(%arg0: i32, %arg1: memref<32x32xf32, #tpu.memory_space<vmem>>, %arg2: memref<32x1xf32, #tpu.memory_space<vmem>>, %arg3: memref<32x1xf32, #tpu.memory_space<vmem>>, %arg4: memref<32x32xf32, #tpu.memory_space<vmem>>, %arg5: memref<32x32xf32, #tpu.memory_space<vmem>>) attributes {dimension_semantics = [#tpu.dimension_semantics<arbitrary>], iteration_bounds = array<i64: 1>, scalar_prefetch = 0 : i64, scratch_operands = 0 : i64, tpu.core_type = #tpu.core_type<tc>, window_params = [{pipeline_mode = #tpu.pipeline_mode<synchronous>, transform_indices = @transform_0, window_bounds = array<i64: 32, 32>}, {pipeline_mode = #tpu.pipeline_mode<synchronous>, transform_indices = @transform_1, window_bounds = array<i64: 32, 1>}, {pipeline_mode = #tpu.pipeline_mode<synchronous>, transform_indices = @transform_2, window_bounds = array<i64: 32, 1>}, {pipeline_mode = #tpu.pipeline_mode<synchronous>, transform_indices = @transform_3, window_bounds = array<i64: 32, 32>}, {pipeline_mode = #tpu.pipeline_mode<synchronous>, transform_indices = @transform_4, window_bounds = array<i64: 32, 32>}]} {
    %c0 = arith.constant 0 : index
    %c0_0 = arith.constant 0 : index
    %0 = vector.load %arg1[%c0, %c0_0] : memref<32x32xf32, #tpu.memory_space<vmem>>, vector<32x32xf32>
    %c0_1 = arith.constant 0 : index
    %c0_2 = arith.constant 0 : index
    %1 = vector.load %arg4[%c0_1, %c0_2] : memref<32x32xf32, #tpu.memory_space<vmem>>, vector<32x32xf32>
    %2 = arith.addf %0, %1 : vector<32x32xf32>
    %cst = arith.constant dense<0.000000e+00> : vector<32xf32>
    %3 = vector.multi_reduction <add>, %2, %cst [0] : vector<32x32xf32> to vector<32xf32>
    %4 = vector.shape_cast %3 : vector<32xf32> to vector<1x32xf32>
    %cst_3 = arith.constant 3.200000e+01 : f32
    %5 = vector.broadcast %cst_3 : f32 to vector<1x32xf32>
    %6 = arith.divf %4, %5 : vector<1x32xf32>
    %7 = vector.broadcast %6 : vector<1x32xf32> to vector<32x32xf32>
    %8 = arith.subf %2, %7 : vector<32x32xf32>
    %9 = arith.mulf %8, %8 : vector<32x32xf32>
    %cst_4 = arith.constant dense<0.000000e+00> : vector<32xf32>
    %10 = vector.multi_reduction <add>, %9, %cst_4 [0] : vector<32x32xf32> to vector<32xf32>
    %11 = vector.shape_cast %10 : vector<32xf32> to vector<1x32xf32>
    %cst_5 = arith.constant 3.200000e+01 : f32
    %12 = vector.broadcast %cst_5 : f32 to vector<1x32xf32>
    %13 = arith.divf %11, %12 : vector<1x32xf32>
    %cst_6 = arith.constant 9.99999974E-5 : f32
    %14 = vector.broadcast %cst_6 : f32 to vector<1x32xf32>
    %15 = arith.addf %13, %14 : vector<1x32xf32>
    %16 = math.rsqrt %15 : vector<1x32xf32>
    %17 = vector.broadcast %16 : vector<1x32xf32> to vector<32x32xf32>
    %18 = arith.mulf %8, %17 : vector<32x32xf32>
    %c0_7 = arith.constant 0 : index
    %c0_8 = arith.constant 0 : index
    %19 = vector.load %arg2[%c0_7, %c0_8] : memref<32x1xf32, #tpu.memory_space<vmem>>, vector<32x1xf32>
    %20 = vector.broadcast %19 : vector<32x1xf32> to vector<32x32xf32>
    %21 = arith.mulf %18, %20 : vector<32x32xf32>
    %c0_9 = arith.constant 0 : index
    %c0_10 = arith.constant 0 : index
    %22 = vector.load %arg3[%c0_9, %c0_10] : memref<32x1xf32, #tpu.memory_space<vmem>>, vector<32x1xf32>
    %23 = vector.broadcast %22 : vector<32x1xf32> to vector<32x32xf32>
    %24 = arith.addf %21, %23 : vector<32x32xf32>
    %c0_11 = arith.constant 0 : index
    %c0_12 = arith.constant 0 : index
    %25 = vector.load %arg5[%c0_11, %c0_12] : memref<32x32xf32, #tpu.memory_space<vmem>>, vector<32x32xf32>
    tpu.vector_store %arg5[%c0_11, %c0_12], %24 {strides = array<i32>} : memref<32x32xf32, #tpu.memory_space<vmem>>, vector<32x32xf32>,
    return
  }
  func.func @transform_0(%arg0: i32) -> (i32, i32) {
    %c0_i32 = arith.constant 0 : i32
    %c0_i32_0 = arith.constant 0 : i32
    %c0_i32_1 = arith.constant 0 : i32
    return %c0_i32, %c0_i32_0 : i32, i32
  }
  func.func @transform_1(%arg0: i32) -> (i32, i32) {
    %c0_i32 = arith.constant 0 : i32
    %c0_i32_0 = arith.constant 0 : i32
    %c0_i32_1 = arith.constant 0 : i32
    return %c0_i32, %c0_i32_0 : i32, i32
  }
  func.func @transform_2(%arg0: i32) -> (i32, i32) {
    %c0_i32 = arith.constant 0 : i32
    %c0_i32_0 = arith.constant 0 : i32
    %c0_i32_1 = arith.constant 0 : i32
    return %c0_i32, %c0_i32_0 : i32, i32
  }
  func.func @transform_3(%arg0: i32) -> (i32, i32) {
    %c0_i32 = arith.constant 0 : i32
    %c0_i32_0 = arith.constant 0 : i32
    %c0_i32_1 = arith.constant 0 : i32
    return %c0_i32, %c0_i32_0 : i32, i32
  }
  func.func @transform_4(%arg0: i32) -> (i32, i32) {
    %c0_i32 = arith.constant 0 : i32
    %c0_i32_0 = arith.constant 0 : i32
    %c0_i32_1 = arith.constant 0 : i32
    return %c0_i32, %c0_i32_0 : i32, i32
  }
}

module attributes {stable_mosaic.version = 11 : i64} {
  func.func @kernel(%arg0: i32, %arg1: memref<32x32xf32, #tpu.memory_space<vmem>>, %arg2: memref<32x1xf32, #tpu.memory_space<vmem>>, %arg3: memref<32x1xf32, #tpu.memory_space<vmem>>, %arg4: memref<32x32xf32, #tpu.memory_space<vmem>>, %arg5: memref<1x32xf32, #tpu.memory_space<vmem>>, %arg6: memref<32x32xf32, #tpu.memory_space<vmem>>) attributes {dimension_semantics = [#tpu.dimension_semantics<arbitrary>], iteration_bounds = array<i64: 1>, scalar_prefetch = 0 : i64, scratch_operands = 0 : i64, tpu.core_type = #tpu.core_type<tc>, window_params = [{pipeline_mode = #tpu.pipeline_mode<synchronous>, transform_indices = @transform_0, window_bounds = array<i64: 32, 32>}, {pipeline_mode = #tpu.pipeline_mode<synchronous>, transform_indices = @transform_1, window_bounds = array<i64: 32, 1>}, {pipeline_mode = #tpu.pipeline_mode<synchronous>, transform_indices = @transform_2, window_bounds = array<i64: 32, 1>}, {pipeline_mode = #tpu.pipeline_mode<synchronous>, transform_indices = @transform_3, window_bounds = array<i64: 32, 32>}, {pipeline_mode = #tpu.pipeline_mode<synchronous>, transform_indices = @transform_4, window_bounds = array<i64: 1, 32>}, {pipeline_mode = #tpu.pipeline_mode<synchronous>, transform_indices = @transform_5, window_bounds = array<i64: 32, 32>}]} {
    %c0 = arith.constant 0 : index
    %c0_0 = arith.constant 0 : index
    %0 = vector.load %arg1[%c0, %c0_0] : memref<32x32xf32, #tpu.memory_space<vmem>>, vector<32x32xf32>
    %c0_1 = arith.constant 0 : index
    %c0_2 = arith.constant 0 : index
    %1 = vector.load %arg4[%c0_1, %c0_2] : memref<32x32xf32, #tpu.memory_space<vmem>>, vector<32x32xf32>
    %2 = arith.addf %0, %1 : vector<32x32xf32>
    %cst = arith.constant dense<0.000000e+00> : vector<32xf32>
    %3 = vector.multi_reduction <add>, %2, %cst [0] : vector<32x32xf32> to vector<32xf32>
    %4 = vector.shape_cast %3 : vector<32xf32> to vector<1x32xf32>
    %cst_3 = arith.constant 3.200000e+01 : f32
    %5 = vector.broadcast %cst_3 : f32 to vector<1x32xf32>
    %6 = arith.divf %4, %5 : vector<1x32xf32>
    %7 = vector.broadcast %6 : vector<1x32xf32> to vector<32x32xf32>
    %8 = arith.subf %2, %7 : vector<32x32xf32>
    %9 = arith.mulf %8, %8 : vector<32x32xf32>
    %cst_4 = arith.constant dense<0.000000e+00> : vector<32xf32>
    %10 = vector.multi_reduction <add>, %9, %cst_4 [0] : vector<32x32xf32> to vector<32xf32>
    %11 = vector.shape_cast %10 : vector<32xf32> to vector<1x32xf32>
    %cst_5 = arith.constant 3.200000e+01 : f32
    %12 = vector.broadcast %cst_5 : f32 to vector<1x32xf32>
    %13 = arith.divf %11, %12 : vector<1x32xf32>
    %cst_6 = arith.constant 9.99999974E-5 : f32
    %14 = vector.broadcast %cst_6 : f32 to vector<1x32xf32>
    %15 = arith.addf %13, %14 : vector<1x32xf32>
    %16 = math.rsqrt %15 : vector<1x32xf32>
    %17 = vector.broadcast %16 : vector<1x32xf32> to vector<32x32xf32>
    %18 = arith.mulf %8, %17 : vector<32x32xf32>
    %c0_7 = arith.constant 0 : index
    %c0_8 = arith.constant 0 : index
    %19 = vector.load %arg2[%c0_7, %c0_8] : memref<32x1xf32, #tpu.memory_space<vmem>>, vector<32x1xf32>
    %20 = vector.broadcast %19 : vector<32x1xf32> to vector<32x32xf32>
    %21 = arith.mulf %18, %20 : vector<32x32xf32>
    %c0_9 = arith.constant 0 : index
    %c0_10 = arith.constant 0 : index
    %22 = vector.load %arg3[%c0_9, %c0_10] : memref<32x1xf32, #tpu.memory_space<vmem>>, vector<32x1xf32>
    %23 = vector.broadcast %22 : vector<32x1xf32> to vector<32x32xf32>
    %24 = arith.addf %21, %23 : vector<32x32xf32>
    %c0_11 = arith.constant 0 : index
    %c0_12 = arith.constant 0 : index
    %25 = vector.load %arg5[%c0_11, %c0_12] : memref<1x32xf32, #tpu.memory_space<vmem>>, vector<1x32xf32>
    %26 = vector.broadcast %25 : vector<1x32xf32> to vector<32x32xf32>
    %27 = arith.mulf %24, %26 : vector<32x32xf32>
    %c0_13 = arith.constant 0 : index
    %c0_14 = arith.constant 0 : index
    %28 = vector.load %arg6[%c0_13, %c0_14] : memref<32x32xf32, #tpu.memory_space<vmem>>, vector<32x32xf32>
    tpu.vector_store %arg6[%c0_13, %c0_14], %27 {strides = array<i32>} : memref<32x32xf32, #tpu.memory_space<vmem>>, vector<32x32xf32>,
    return
  }
  func.func @transform_0(%arg0: i32) -> (i32, i32) {
    %c0_i32 = arith.constant 0 : i32
    %c0_i32_0 = arith.constant 0 : i32
    %c0_i32_1 = arith.constant 0 : i32
    return %c0_i32, %c0_i32_0 : i32, i32
  }
  func.func @transform_1(%arg0: i32) -> (i32, i32) {
    %c0_i32 = arith.constant 0 : i32
    %c0_i32_0 = arith.constant 0 : i32
    %c0_i32_1 = arith.constant 0 : i32
    return %c0_i32, %c0_i32_0 : i32, i32
  }
  func.func @transform_2(%arg0: i32) -> (i32, i32) {
    %c0_i32 = arith.constant 0 : i32
    %c0_i32_0 = arith.constant 0 : i32
    %c0_i32_1 = arith.constant 0 : i32
    return %c0_i32, %c0_i32_0 : i32, i32
  }
  func.func @transform_3(%arg0: i32) -> (i32, i32) {
    %c0_i32 = arith.constant 0 : i32
    %c0_i32_0 = arith.constant 0 : i32
    %c0_i32_1 = arith.constant 0 : i32
    return %c0_i32, %c0_i32_0 : i32, i32
  }
  func.func @transform_4(%arg0: i32) -> (i32, i32) {
    %c0_i32 = arith.constant 0 : i32
    %c0_i32_0 = arith.constant 0 : i32
    %c0_i32_1 = arith.constant 0 : i32
    return %c0_i32, %c0_i32_0 : i32, i32
  }
  func.func @transform_5(%arg0: i32) -> (i32, i32) {
    %c0_i32 = arith.constant 0 : i32
    %c0_i32_0 = arith.constant 0 : i32
    %c0_i32_1 = arith.constant 0 : i32
    return %c0_i32, %c0_i32_0 : i32, i32
  }
}

module attributes {stable_mosaic.version = 11 : i64} {
  func.func @kernel(%arg0: i32, %arg1: memref<32x32xf32, #tpu.memory_space<vmem>>, %arg2: memref<32x32xf32, #tpu.memory_space<vmem>>, %arg3: memref<32x1xf32, #tpu.memory_space<vmem>>, %arg4: memref<1x32xf32, #tpu.memory_space<vmem>>, %arg5: memref<32x32xf32, #tpu.memory_space<vmem>>) attributes {dimension_semantics = [#tpu.dimension_semantics<arbitrary>], iteration_bounds = array<i64: 1>, scalar_prefetch = 0 : i64, scratch_operands = 0 : i64, tpu.core_type = #tpu.core_type<tc>, window_params = [{pipeline_mode = #tpu.pipeline_mode<synchronous>, transform_indices = @transform_0, window_bounds = array<i64: 32, 32>}, {pipeline_mode = #tpu.pipeline_mode<synchronous>, transform_indices = @transform_1, window_bounds = array<i64: 32, 32>}, {pipeline_mode = #tpu.pipeline_mode<synchronous>, transform_indices = @transform_2, window_bounds = array<i64: 32, 1>}, {pipeline_mode = #tpu.pipeline_mode<synchronous>, transform_indices = @transform_3, window_bounds = array<i64: 1, 32>}, {pipeline_mode = #tpu.pipeline_mode<synchronous>, transform_indices = @transform_4, window_bounds = array<i64: 32, 32>}]} {
    %c0 = arith.constant 0 : index
    %c0_0 = arith.constant 0 : index
    %0 = vector.load %arg1[%c0, %c0_0] : memref<32x32xf32, #tpu.memory_space<vmem>>, vector<32x32xf32>
    %c0_1 = arith.constant 0 : index
    %c0_2 = arith.constant 0 : index
    %1 = vector.load %arg2[%c0_1, %c0_2] : memref<32x32xf32, #tpu.memory_space<vmem>>, vector<32x32xf32>
    %2 = arith.truncf %1 : vector<32x32xf32> to vector<32x32xbf16>
    %3 = arith.truncf %0 : vector<32x32xf32> to vector<32x32xbf16>
    %cst = arith.constant dense<0.000000e+00> : vector<32x32xf32>
    %4 = tpu.matmul %2, %3, %cst {dimension_numbers = #tpu.dot_dimension_numbers<[1], [0], [0], [1], [0, 0, 1, 1], [], []>} : vector<32x32xbf16>, vector<32x32xbf16>, vector<32x32xf32> -> vector<32x32xf32>
    %c0_3 = arith.constant 0 : index
    %c0_4 = arith.constant 0 : index
    %5 = vector.load %arg3[%c0_3, %c0_4] : memref<32x1xf32, #tpu.memory_space<vmem>>, vector<32x1xf32>
    %6 = vector.broadcast %5 : vector<32x1xf32> to vector<32x32xf32>
    %7 = arith.addf %4, %6 : vector<32x32xf32>
    %c0_5 = arith.constant 0 : index
    %c0_6 = arith.constant 0 : index
    %8 = vector.load %arg4[%c0_5, %c0_6] : memref<1x32xf32, #tpu.memory_space<vmem>>, vector<1x32xf32>
    %9 = vector.broadcast %8 : vector<1x32xf32> to vector<32x32xf32>
    %10 = arith.mulf %7, %9 : vector<32x32xf32>
    %c0_7 = arith.constant 0 : index
    %c0_8 = arith.constant 0 : index
    %11 = vector.load %arg5[%c0_7, %c0_8] : memref<32x32xf32, #tpu.memory_space<vmem>>, vector<32x32xf32>
    tpu.vector_store %arg5[%c0_7, %c0_8], %10 {strides = array<i32>} : memref<32x32xf32, #tpu.memory_space<vmem>>, vector<32x32xf32>,
    return
  }
  func.func @transform_0(%arg0: i32) -> (i32, i32) {
    %c0_i32 = arith.constant 0 : i32
    %c0_i32_0 = arith.constant 0 : i32
    %c0_i32_1 = arith.constant 0 : i32
    return %c0_i32, %c0_i32_0 : i32, i32
  }
  func.func @transform_1(%arg0: i32) -> (i32, i32) {
    %c0_i32 = arith.constant 0 : i32
    %c0_i32_0 = arith.constant 0 : i32
    %c0_i32_1 = arith.constant 0 : i32
    return %c0_i32, %c0_i32_0 : i32, i32
  }
  func.func @transform_2(%arg0: i32) -> (i32, i32) {
    %c0_i32 = arith.constant 0 : i32
    %c0_i32_0 = arith.constant 0 : i32
    %c0_i32_1 = arith.constant 0 : i32
    return %c0_i32, %c0_i32_0 : i32, i32
  }
  func.func @transform_3(%arg0: i32) -> (i32, i32) {
    %c0_i32 = arith.constant 0 : i32
    %c0_i32_0 = arith.constant 0 : i32
    %c0_i32_1 = arith.constant 0 : i32
    return %c0_i32, %c0_i32_0 : i32, i32
  }
  func.func @transform_4(%arg0: i32) -> (i32, i32) {
    %c0_i32 = arith.constant 0 : i32
    %c0_i32_0 = arith.constant 0 : i32
    %c0_i32_1 = arith.constant 0 : i32
    return %c0_i32, %c0_i32_0 : i32, i32
  }
}

module attributes {stable_mosaic.version = 11 : i64} {
  func.func @kernel(%arg0: i32, %arg1: memref<1x16x16xf32, #tpu.memory_space<vmem>>, %arg2: memref<1x16x16xf32, #tpu.memory_space<vmem>>, %arg3: memref<1x16x24xf32, #tpu.memory_space<vmem>>, %arg4: memref<1x16x24xf32, #tpu.memory_space<vmem>>) attributes {dimension_semantics = [#tpu.dimension_semantics<parallel>], iteration_bounds = array<i64: 2>, scalar_prefetch = 0 : i64, scratch_operands = 0 : i64, tpu.core_type = #tpu.core_type<tc>, window_params = [{transform_indices = @transform_0, window_bounds = array<i64: 1, 16, 16>}, {transform_indices = @transform_1, window_bounds = array<i64: 1, 16, 16>}, {transform_indices = @transform_2, window_bounds = array<i64: 1, 16, 24>}, {transform_indices = @transform_3, window_bounds = array<i64: 1, 16, 24>}]} {
    %c0 = arith.constant 0 : index
    %c0_0 = arith.constant 0 : index
    %c0_1 = arith.constant 0 : index
    %0 = vector.load %arg1[%c0, %c0_0, %c0_1] : memref<1x16x16xf32, #tpu.memory_space<vmem>>, vector<1x16x16xf32>
    %1 = vector.shape_cast %0 : vector<1x16x16xf32> to vector<16x16xf32>
    %c0_2 = arith.constant 0 : index
    %c0_3 = arith.constant 0 : index
    %c0_4 = arith.constant 0 : index
    %2 = vector.load %arg2[%c0_2, %c0_3, %c0_4] : memref<1x16x16xf32, #tpu.memory_space<vmem>>, vector<1x16x16xf32>
    %3 = vector.shape_cast %2 : vector<1x16x16xf32> to vector<16x16xf32>
    %c0_5 = arith.constant 0 : index
    %c0_6 = arith.constant 0 : index
    %c0_7 = arith.constant 0 : index
    %4 = vector.load %arg3[%c0_5, %c0_6, %c0_7] : memref<1x16x24xf32, #tpu.memory_space<vmem>>, vector<1x16x24xf32>
    %5 = vector.shape_cast %4 : vector<1x16x24xf32> to vector<16x24xf32>
    %cst = arith.constant -2.000000e+00 : f32
    %6 = vector.broadcast %cst : f32 to vector<16x16xf32>
    %7 = arith.mulf %6, %3 : vector<16x16xf32>
    %8 = math.exp %7 : vector<16x16xf32>
    %9 = arith.truncf %8 : vector<16x16xf32> to vector<16x16xbf16>
    %cst_8 = arith.constant -5.000000e-01 : f32
    %10 = vector.broadcast %cst_8 : f32 to vector<16x24xf32>
    %11 = arith.mulf %10, %5 : vector<16x24xf32>
    %12 = arith.mulf %11, %5 : vector<16x24xf32>
    %13 = arith.truncf %12 : vector<16x24xf32> to vector<16x24xbf16>
    %cst_9 = arith.constant dense<0.000000e+00> : vector<16x24xf32>
    %14 = tpu.matmul %9, %13, %cst_9 {dimension_numbers = #tpu.dot_dimension_numbers<[0], [0], [1], [1], [0, 1, 1, 1], [], []>} : vector<16x16xbf16>, vector<16x24xbf16>, vector<16x24xf32> -> vector<16x24xf32>
    %15 = arith.mulf %1, %8 : vector<16x16xf32>
    %16 = arith.truncf %15 : vector<16x16xf32> to vector<16x16xbf16>
    %17 = arith.truncf %5 : vector<16x24xf32> to vector<16x24xbf16>
    %cst_10 = arith.constant dense<0.000000e+00> : vector<16x24xf32>
    %18 = tpu.matmul %16, %17, %cst_10 {dimension_numbers = #tpu.dot_dimension_numbers<[0], [0], [1], [1], [0, 1, 1, 1], [], []>} : vector<16x16xbf16>, vector<16x24xbf16>, vector<16x24xf32> -> vector<16x24xf32>
    %cst_11 = arith.constant -0.918938517 : f32
    %19 = vector.broadcast %cst_11 : f32 to vector<16x16xf32>
    %20 = arith.subf %19, %3 : vector<16x16xf32>
    %cst_12 = arith.constant 5.000000e-01 : f32
    %21 = vector.broadcast %cst_12 : f32 to vector<16x16xf32>
    %22 = arith.mulf %21, %1 : vector<16x16xf32>
    %23 = arith.mulf %22, %1 : vector<16x16xf32>
    %24 = arith.mulf %23, %8 : vector<16x16xf32>
    %25 = arith.subf %20, %24 : vector<16x16xf32>
    %cst_13 = arith.constant 1.000000e+00 : f32
    %26 = vector.broadcast %cst_13 : f32 to vector<16x24xf32>
    %cst_14 = arith.constant dense<0.000000e+00> : vector<16x24xf32>
    %27 = tpu.matmul %25, %26, %cst_14 {dimension_numbers = #tpu.dot_dimension_numbers<[0], [0], [1], [1], [0, 1, 1, 1], [], []>} : vector<16x16xf32>, vector<16x24xf32>, vector<16x24xf32> -> vector<16x24xf32>
    %28 = arith.addf %27, %14 : vector<16x24xf32>
    %29 = arith.addf %28, %18 : vector<16x24xf32>
    %c0_15 = arith.constant 0 : index
    %c0_16 = arith.constant 0 : index
    %c0_17 = arith.constant 0 : index
    %30 = vector.load %arg4[%c0_15, %c0_16, %c0_17] : memref<1x16x24xf32, #tpu.memory_space<vmem>>, vector<1x16x24xf32>
    %31 = vector.shape_cast %30 : vector<1x16x24xf32> to vector<16x24xf32>
    %32 = vector.shape_cast %29 : vector<16x24xf32> to vector<1x16x24xf32>
    tpu.vector_store %arg4[%c0_15, %c0_16, %c0_17], %32 {strides = array<i32>} : memref<1x16x24xf32, #tpu.memory_space<vmem>>, vector<1x16x24xf32>,
    return
  }
  func.func @transform_0(%arg0: i32) -> (i32, i32, i32) {
    %c0_i32 = arith.constant 0 : i32
    %c0_i32_0 = arith.constant 0 : i32
    %c0_i32_1 = arith.constant 0 : i32
    return %arg0, %c0_i32, %c0_i32_0 : i32, i32, i32
  }
  func.func @transform_1(%arg0: i32) -> (i32, i32, i32) {
    %c0_i32 = arith.constant 0 : i32
    %c0_i32_0 = arith.constant 0 : i32
    %c0_i32_1 = arith.constant 0 : i32
    return %arg0, %c0_i32, %c0_i32_0 : i32, i32, i32
  }
  func.func @transform_2(%arg0: i32) -> (i32, i32, i32) {
    %c0_i32 = arith.constant 0 : i32
    %c0_i32_0 = arith.constant 0 : i32
    %c0_i32_1 = arith.constant 0 : i32
    return %arg0, %c0_i32, %c0_i32_0 : i32, i32, i32
  }
  func.func @transform_3(%arg0: i32) -> (i32, i32, i32) {
    %c0_i32 = arith.constant 0 : i32
    %c0_i32_0 = arith.constant 0 : i32
    %c0_i32_1 = arith.constant 0 : i32
    return %arg0, %c0_i32, %c0_i32_0 : i32, i32, i32
  }
}

module attributes {stable_mosaic.version = 11 : i64} {
  func.func @kernel(%arg0: i32, %arg1: memref<1x16x24xf32, #tpu.memory_space<vmem>>, %arg2: memref<1x16x16xf32, #tpu.memory_space<vmem>>, %arg3: memref<1x16x16xf32, #tpu.memory_space<vmem>>, %arg4: memref<1x16x24xf32, #tpu.memory_space<vmem>>, %arg5: memref<1x16x24xf32, #tpu.memory_space<vmem>>) attributes {dimension_semantics = [#tpu.dimension_semantics<parallel>], iteration_bounds = array<i64: 2>, scalar_prefetch = 0 : i64, scratch_operands = 0 : i64, tpu.core_type = #tpu.core_type<tc>, window_params = [{transform_indices = @transform_0, window_bounds = array<i64: 1, 16, 24>}, {transform_indices = @transform_1, window_bounds = array<i64: 1, 16, 16>}, {transform_indices = @transform_2, window_bounds = array<i64: 1, 16, 16>}, {transform_indices = @transform_3, window_bounds = array<i64: 1, 16, 24>}, {transform_indices = @transform_4, window_bounds = array<i64: 1, 16, 24>}]} {
    %c0 = arith.constant 0 : index
    %c0_0 = arith.constant 0 : index
    %c0_1 = arith.constant 0 : index
    %0 = vector.load %arg1[%c0, %c0_0, %c0_1] : memref<1x16x24xf32, #tpu.memory_space<vmem>>, vector<1x16x24xf32>
    %1 = vector.shape_cast %0 : vector<1x16x24xf32> to vector<16x24xf32>
    %2 = arith.truncf %1 : vector<16x24xf32> to vector<16x24xbf16>
    %c0_2 = arith.constant 0 : index
    %c0_3 = arith.constant 0 : index
    %c0_4 = arith.constant 0 : index
    %3 = vector.load %arg2[%c0_2, %c0_3, %c0_4] : memref<1x16x16xf32, #tpu.memory_space<vmem>>, vector<1x16x16xf32>
    %4 = vector.shape_cast %3 : vector<1x16x16xf32> to vector<16x16xf32>
    %5 = arith.truncf %4 : vector<16x16xf32> to vector<16x16xbf16>
    %cst = arith.constant dense<0.000000e+00> : vector<16x24xf32>
    %6 = tpu.matmul %5, %2, %cst {dimension_numbers = #tpu.dot_dimension_numbers<[1], [0], [0], [1], [0, 0, 1, 1], [], []>} : vector<16x16xbf16>, vector<16x24xbf16>, vector<16x24xf32> -> vector<16x24xf32>
    %c0_5 = arith.constant 0 : index
    %c0_6 = arith.constant 0 : index
    %c0_7 = arith.constant 0 : index
    %7 = vector.load %arg4[%c0_5, %c0_6, %c0_7] : memref<1x16x24xf32, #tpu.memory_space<vmem>>, vector<1x16x24xf32>
    %8 = vector.shape_cast %7 : vector<1x16x24xf32> to vector<16x24xf32>
    %9 = vector.shape_cast %6 : vector<16x24xf32> to vector<1x16x24xf32>
    tpu.vector_store %arg4[%c0_5, %c0_6, %c0_7], %9 {strides = array<i32>} : memref<1x16x24xf32, #tpu.memory_space<vmem>>, vector<1x16x24xf32>,
    %c0_8 = arith.constant 0 : index
    %c0_9 = arith.constant 0 : index
    %c0_10 = arith.constant 0 : index
    %10 = vector.load %arg3[%c0_8, %c0_9, %c0_10] : memref<1x16x16xf32, #tpu.memory_space<vmem>>, vector<1x16x16xf32>
    %11 = vector.shape_cast %10 : vector<1x16x16xf32> to vector<16x16xf32>
    %12 = arith.truncf %11 : vector<16x16xf32> to vector<16x16xbf16>
    %cst_11 = arith.constant dense<0.000000e+00> : vector<16x24xf32>
    %13 = tpu.matmul %12, %2, %cst_11 {dimension_numbers = #tpu.dot_dimension_numbers<[1], [0], [0], [1], [0, 0, 1, 1], [], []>} : vector<16x16xbf16>, vector<16x24xbf16>, vector<16x24xf32> -> vector<16x24xf32>
    %c0_12 = arith.constant 0 : index
    %c0_13 = arith.constant 0 : index
    %c0_14 = arith.constant 0 : index
    %14 = vector.load %arg5[%c0_12, %c0_13, %c0_14] : memref<1x16x24xf32, #tpu.memory_space<vmem>>, vector<1x16x24xf32>
    %15 = vector.shape_cast %14 : vector<1x16x24xf32> to vector<16x24xf32>
    %16 = vector.shape_cast %13 : vector<16x24xf32> to vector<1x16x24xf32>
    tpu.vector_store %arg5[%c0_12, %c0_13, %c0_14], %16 {strides = array<i32>} : memref<1x16x24xf32, #tpu.memory_space<vmem>>, vector<1x16x24xf32>,
    return
  }
  func.func @transform_0(%arg0: i32) -> (i32, i32, i32) {
    %c0_i32 = arith.constant 0 : i32
    %c0_i32_0 = arith.constant 0 : i32
    %c0_i32_1 = arith.constant 0 : i32
    return %arg0, %c0_i32, %c0_i32_0 : i32, i32, i32
  }
  func.func @transform_1(%arg0: i32) -> (i32, i32, i32) {
    %c0_i32 = arith.constant 0 : i32
    %c0_i32_0 = arith.constant 0 : i32
    %c0_i32_1 = arith.constant 0 : i32
    return %arg0, %c0_i32, %c0_i32_0 : i32, i32, i32
  }
  func.func @transform_2(%arg0: i32) -> (i32, i32, i32) {
    %c0_i32 = arith.constant 0 : i32
    %c0_i32_0 = arith.constant 0 : i32
    %c0_i32_1 = arith.constant 0 : i32
    return %arg0, %c0_i32, %c0_i32_0 : i32, i32, i32
  }
  func.func @transform_3(%arg0: i32) -> (i32, i32, i32) {
    %c0_i32 = arith.constant 0 : i32
    %c0_i32_0 = arith.constant 0 : i32
    %c0_i32_1 = arith.constant 0 : i32
    return %arg0, %c0_i32, %c0_i32_0 : i32, i32, i32
  }
  func.func @transform_4(%arg0: i32) -> (i32, i32, i32) {
    %c0_i32 = arith.constant 0 : i32
    %c0_i32_0 = arith.constant 0 : i32
    %c0_i32_1 = arith.constant 0 : i32
    return %arg0, %c0_i32, %c0_i32_0 : i32, i32, i32
  }
}

module attributes {stable_mosaic.version = 11 : i64} {
  func.func @kernel(%arg0: i32, %arg1: memref<192x32xbf16, #tpu.memory_space<vmem>>, %arg2: memref<32x192xf32, #tpu.memory_space<vmem>>, %arg3: memref<32x1xf32, #tpu.memory_space<vmem>>, %arg4: memref<32x32xf32, #tpu.memory_space<vmem>>) attributes {dimension_semantics = [#tpu.dimension_semantics<arbitrary>], iteration_bounds = array<i64: 1>, scalar_prefetch = 0 : i64, scratch_operands = 0 : i64, tpu.core_type = #tpu.core_type<tc>, window_params = [{pipeline_mode = #tpu.pipeline_mode<synchronous>, transform_indices = @transform_0, window_bounds = array<i64: 192, 32>}, {pipeline_mode = #tpu.pipeline_mode<synchronous>, transform_indices = @transform_1, window_bounds = array<i64: 32, 192>}, {pipeline_mode = #tpu.pipeline_mode<synchronous>, transform_indices = @transform_2, window_bounds = array<i64: 32, 1>}, {pipeline_mode = #tpu.pipeline_mode<synchronous>, transform_indices = @transform_3, window_bounds = array<i64: 32, 32>}]} {
    %c0 = arith.constant 0 : index
    %c0_0 = arith.constant 0 : index
    %0 = vector.load %arg1[%c0, %c0_0] : memref<192x32xbf16, #tpu.memory_space<vmem>>, vector<192x32xbf16>
    %c0_1 = arith.constant 0 : index
    %c0_2 = arith.constant 0 : index
    %1 = vector.load %arg2[%c0_1, %c0_2] : memref<32x192xf32, #tpu.memory_space<vmem>>, vector<32x192xf32>
    %2 = arith.truncf %1 : vector<32x192xf32> to vector<32x192xbf16>
    %cst = arith.constant dense<0.000000e+00> : vector<32x32xf32>
    %3 = tpu.matmul %2, %0, %cst {dimension_numbers = #tpu.dot_dimension_numbers<[1], [0], [0], [1], [0, 0, 1, 1], [], []>} : vector<32x192xbf16>, vector<192x32xbf16>, vector<32x32xf32> -> vector<32x32xf32>
    %c0_3 = arith.constant 0 : index
    %c0_4 = arith.constant 0 : index
    %4 = vector.load %arg3[%c0_3, %c0_4] : memref<32x1xf32, #tpu.memory_space<vmem>>, vector<32x1xf32>
    %5 = vector.broadcast %4 : vector<32x1xf32> to vector<32x32xf32>
    %6 = arith.addf %3, %5 : vector<32x32xf32>
    %cst_5 = arith.constant 0.000000e+00 : f32
    %7 = vector.broadcast %cst_5 : f32 to vector<32x32xf32>
    %8 = arith.maximumf %6, %7 : vector<32x32xf32>
    %c0_6 = arith.constant 0 : index
    %c0_7 = arith.constant 0 : index
    %9 = vector.load %arg4[%c0_6, %c0_7] : memref<32x32xf32, #tpu.memory_space<vmem>>, vector<32x32xf32>
    tpu.vector_store %arg4[%c0_6, %c0_7], %8 {strides = array<i32>} : memref<32x32xf32, #tpu.memory_space<vmem>>, vector<32x32xf32>,
    return
  }
  func.func @transform_0(%arg0: i32) -> (i32, i32) {
    %c0_i32 = arith.constant 0 : i32
    %c0_i32_0 = arith.constant 0 : i32
    %c0_i32_1 = arith.constant 0 : i32
    return %c0_i32, %c0_i32_0 : i32, i32
  }
  func.func @transform_1(%arg0: i32) -> (i32, i32) {
    %c0_i32 = arith.constant 0 : i32
    %c0_i32_0 = arith.constant 0 : i32
    %c0_i32_1 = arith.constant 0 : i32
    return %c0_i32, %c0_i32_0 : i32, i32
  }
  func.func @transform_2(%arg0: i32) -> (i32, i32) {
    %c0_i32 = arith.constant 0 : i32
    %c0_i32_0 = arith.constant 0 : i32
    %c0_i32_1 = arith.constant 0 : i32
    return %c0_i32, %c0_i32_0 : i32, i32
  }
  func.func @transform_3(%arg0: i32) -> (i32, i32) {
    %c0_i32 = arith.constant 0 : i32
    %c0_i32_0 = arith.constant 0 : i32
    %c0_i32_1 = arith.constant 0 : i32
    return %c0_i32, %c0_i32_0 : i32, i32
  }
}

module attributes {stable_mosaic.version = 11 : i64} {
  func.func @kernel(%arg0: i32, %arg1: memref<32x32xf32, #tpu.memory_space<vmem>>, %arg2: memref<32x1xf32, #tpu.memory_space<vmem>>, %arg3: memref<32x1xf32, #tpu.memory_space<vmem>>, %arg4: memref<32x32xf32, #tpu.memory_space<vmem>>) attributes {dimension_semantics = [#tpu.dimension_semantics<arbitrary>], iteration_bounds = array<i64: 1>, scalar_prefetch = 0 : i64, scratch_operands = 0 : i64, tpu.core_type = #tpu.core_type<tc>, window_params = [{pipeline_mode = #tpu.pipeline_mode<synchronous>, transform_indices = @transform_0, window_bounds = array<i64: 32, 32>}, {pipeline_mode = #tpu.pipeline_mode<synchronous>, transform_indices = @transform_1, window_bounds = array<i64: 32, 1>}, {pipeline_mode = #tpu.pipeline_mode<synchronous>, transform_indices = @transform_2, window_bounds = array<i64: 32, 1>}, {pipeline_mode = #tpu.pipeline_mode<synchronous>, transform_indices = @transform_3, window_bounds = array<i64: 32, 32>}]} {
    %c0 = arith.constant 0 : index
    %c0_0 = arith.constant 0 : index
    %0 = vector.load %arg1[%c0, %c0_0] : memref<32x32xf32, #tpu.memory_space<vmem>>, vector<32x32xf32>
    %cst = arith.constant dense<0.000000e+00> : vector<32xf32>
    %1 = vector.multi_reduction <add>, %0, %cst [0] : vector<32x32xf32> to vector<32xf32>
    %2 = vector.shape_cast %1 : vector<32xf32> to vector<1x32xf32>
    %cst_1 = arith.constant 3.200000e+01 : f32
    %3 = vector.broadcast %cst_1 : f32 to vector<1x32xf32>
    %4 = arith.divf %2, %3 : vector<1x32xf32>
    %5 = vector.broadcast %4 : vector<1x32xf32> to vector<32x32xf32>
    %6 = arith.subf %0, %5 : vector<32x32xf32>
    %7 = arith.mulf %6, %6 : vector<32x32xf32>
    %cst_2 = arith.constant dense<0.000000e+00> : vector<32xf32>
    %8 = vector.multi_reduction <add>, %7, %cst_2 [0] : vector<32x32xf32> to vector<32xf32>
    %9 = vector.shape_cast %8 : vector<32xf32> to vector<1x32xf32>
    %cst_3 = arith.constant 3.200000e+01 : f32
    %10 = vector.broadcast %cst_3 : f32 to vector<1x32xf32>
    %11 = arith.divf %9, %10 : vector<1x32xf32>
    %cst_4 = arith.constant 9.99999974E-5 : f32
    %12 = vector.broadcast %cst_4 : f32 to vector<1x32xf32>
    %13 = arith.addf %11, %12 : vector<1x32xf32>
    %14 = math.rsqrt %13 : vector<1x32xf32>
    %15 = vector.broadcast %14 : vector<1x32xf32> to vector<32x32xf32>
    %16 = arith.mulf %6, %15 : vector<32x32xf32>
    %c0_5 = arith.constant 0 : index
    %c0_6 = arith.constant 0 : index
    %17 = vector.load %arg2[%c0_5, %c0_6] : memref<32x1xf32, #tpu.memory_space<vmem>>, vector<32x1xf32>
    %18 = vector.broadcast %17 : vector<32x1xf32> to vector<32x32xf32>
    %19 = arith.mulf %16, %18 : vector<32x32xf32>
    %c0_7 = arith.constant 0 : index
    %c0_8 = arith.constant 0 : index
    %20 = vector.load %arg3[%c0_7, %c0_8] : memref<32x1xf32, #tpu.memory_space<vmem>>, vector<32x1xf32>
    %21 = vector.broadcast %20 : vector<32x1xf32> to vector<32x32xf32>
    %22 = arith.addf %19, %21 : vector<32x32xf32>
    %c0_9 = arith.constant 0 : index
    %c0_10 = arith.constant 0 : index
    %23 = vector.load %arg4[%c0_9, %c0_10] : memref<32x32xf32, #tpu.memory_space<vmem>>, vector<32x32xf32>
    tpu.vector_store %arg4[%c0_9, %c0_10], %22 {strides = array<i32>} : memref<32x32xf32, #tpu.memory_space<vmem>>, vector<32x32xf32>,
    return
  }
  func.func @transform_0(%arg0: i32) -> (i32, i32) {
    %c0_i32 = arith.constant 0 : i32
    %c0_i32_0 = arith.constant 0 : i32
    %c0_i32_1 = arith.constant 0 : i32
    return %c0_i32, %c0_i32_0 : i32, i32
  }
  func.func @transform_1(%arg0: i32) -> (i32, i32) {
    %c0_i32 = arith.constant 0 : i32
    %c0_i32_0 = arith.constant 0 : i32
    %c0_i32_1 = arith.constant 0 : i32
    return %c0_i32, %c0_i32_0 : i32, i32
  }
  func.func @transform_2(%arg0: i32) -> (i32, i32) {
    %c0_i32 = arith.constant 0 : i32
    %c0_i32_0 = arith.constant 0 : i32
    %c0_i32_1 = arith.constant 0 : i32
    return %c0_i32, %c0_i32_0 : i32, i32
  }
  func.func @transform_3(%arg0: i32) -> (i32, i32) {
    %c0_i32 = arith.constant 0 : i32
    %c0_i32_0 = arith.constant 0 : i32
    %c0_i32_1 = arith.constant 0 : i32
    return %c0_i32, %c0_i32_0 : i32, i32
  }
}

module attributes {stable_mosaic.version = 11 : i64} {
  func.func @kernel(%arg0: i32, %arg1: memref<96x32xbf16, #tpu.memory_space<vmem>>, %arg2: memref<32x96xf32, #tpu.memory_space<vmem>>, %arg3: memref<32x1xf32, #tpu.memory_space<vmem>>, %arg4: memref<32x32xf32, #tpu.memory_space<vmem>>) attributes {dimension_semantics = [#tpu.dimension_semantics<arbitrary>], iteration_bounds = array<i64: 1>, scalar_prefetch = 0 : i64, scratch_operands = 0 : i64, tpu.core_type = #tpu.core_type<tc>, window_params = [{pipeline_mode = #tpu.pipeline_mode<synchronous>, transform_indices = @transform_0, window_bounds = array<i64: 96, 32>}, {pipeline_mode = #tpu.pipeline_mode<synchronous>, transform_indices = @transform_1, window_bounds = array<i64: 32, 96>}, {pipeline_mode = #tpu.pipeline_mode<synchronous>, transform_indices = @transform_2, window_bounds = array<i64: 32, 1>}, {pipeline_mode = #tpu.pipeline_mode<synchronous>, transform_indices = @transform_3, window_bounds = array<i64: 32, 32>}]} {
    %c0 = arith.constant 0 : index
    %c0_0 = arith.constant 0 : index
    %0 = vector.load %arg1[%c0, %c0_0] : memref<96x32xbf16, #tpu.memory_space<vmem>>, vector<96x32xbf16>
    %c0_1 = arith.constant 0 : index
    %c0_2 = arith.constant 0 : index
    %1 = vector.load %arg2[%c0_1, %c0_2] : memref<32x96xf32, #tpu.memory_space<vmem>>, vector<32x96xf32>
    %2 = arith.truncf %1 : vector<32x96xf32> to vector<32x96xbf16>
    %cst = arith.constant dense<0.000000e+00> : vector<32x32xf32>
    %3 = tpu.matmul %2, %0, %cst {dimension_numbers = #tpu.dot_dimension_numbers<[1], [0], [0], [1], [0, 0, 1, 1], [], []>} : vector<32x96xbf16>, vector<96x32xbf16>, vector<32x32xf32> -> vector<32x32xf32>
    %c0_3 = arith.constant 0 : index
    %c0_4 = arith.constant 0 : index
    %4 = vector.load %arg3[%c0_3, %c0_4] : memref<32x1xf32, #tpu.memory_space<vmem>>, vector<32x1xf32>
    %5 = vector.broadcast %4 : vector<32x1xf32> to vector<32x32xf32>
    %6 = arith.addf %3, %5 : vector<32x32xf32>
    %cst_5 = arith.constant 0.000000e+00 : f32
    %7 = vector.broadcast %cst_5 : f32 to vector<32x32xf32>
    %8 = arith.maximumf %6, %7 : vector<32x32xf32>
    %c0_6 = arith.constant 0 : index
    %c0_7 = arith.constant 0 : index
    %9 = vector.load %arg4[%c0_6, %c0_7] : memref<32x32xf32, #tpu.memory_space<vmem>>, vector<32x32xf32>
    tpu.vector_store %arg4[%c0_6, %c0_7], %8 {strides = array<i32>} : memref<32x32xf32, #tpu.memory_space<vmem>>, vector<32x32xf32>,
    return
  }
  func.func @transform_0(%arg0: i32) -> (i32, i32) {
    %c0_i32 = arith.constant 0 : i32
    %c0_i32_0 = arith.constant 0 : i32
    %c0_i32_1 = arith.constant 0 : i32
    return %c0_i32, %c0_i32_0 : i32, i32
  }
  func.func @transform_1(%arg0: i32) -> (i32, i32) {
    %c0_i32 = arith.constant 0 : i32
    %c0_i32_0 = arith.constant 0 : i32
    %c0_i32_1 = arith.constant 0 : i32
    return %c0_i32, %c0_i32_0 : i32, i32
  }
  func.func @transform_2(%arg0: i32) -> (i32, i32) {
    %c0_i32 = arith.constant 0 : i32
    %c0_i32_0 = arith.constant 0 : i32
    %c0_i32_1 = arith.constant 0 : i32
    return %c0_i32, %c0_i32_0 : i32, i32
  }
  func.func @transform_3(%arg0: i32) -> (i32, i32) {
    %c0_i32 = arith.constant 0 : i32
    %c0_i32_0 = arith.constant 0 : i32
    %c0_i32_1 = arith.constant 0 : i32
    return %c0_i32, %c0_i32_0 : i32, i32
  }
}

module attributes {stable_mosaic.version = 11 : i64} {
  func.func @kernel(%arg0: i32, %arg1: memref<32x32xf32, #tpu.memory_space<vmem>>, %arg2: memref<1x32xf32, #tpu.memory_space<vmem>>, %arg3: memref<1x1xf32, #tpu.memory_space<vmem>>, %arg4: memref<1x32xf32, #tpu.memory_space<vmem>>, %arg5: memref<1x32xf32, #tpu.memory_space<vmem>>, %arg6: memref<1x32xf32, #tpu.memory_space<vmem>>) attributes {dimension_semantics = [#tpu.dimension_semantics<arbitrary>], iteration_bounds = array<i64: 1>, scalar_prefetch = 0 : i64, scratch_operands = 0 : i64, tpu.core_type = #tpu.core_type<tc>, window_params = [{pipeline_mode = #tpu.pipeline_mode<synchronous>, transform_indices = @transform_0, window_bounds = array<i64: 32, 32>}, {pipeline_mode = #tpu.pipeline_mode<synchronous>, transform_indices = @transform_1, window_bounds = array<i64: 1, 32>}, {pipeline_mode = #tpu.pipeline_mode<synchronous>, transform_indices = @transform_2, window_bounds = array<i64: 1, 1>}, {pipeline_mode = #tpu.pipeline_mode<synchronous>, transform_indices = @transform_3, window_bounds = array<i64: 1, 32>}, {pipeline_mode = #tpu.pipeline_mode<synchronous>, transform_indices = @transform_4, window_bounds = array<i64: 1, 32>}, {pipeline_mode = #tpu.pipeline_mode<synchronous>, transform_indices = @transform_5, window_bounds = array<i64: 1, 32>}]} {
    %c0 = arith.constant 0 : index
    %c0_0 = arith.constant 0 : index
    %0 = vector.load %arg1[%c0, %c0_0] : memref<32x32xf32, #tpu.memory_space<vmem>>, vector<32x32xf32>
    %c0_1 = arith.constant 0 : index
    %c0_2 = arith.constant 0 : index
    %1 = vector.load %arg4[%c0_1, %c0_2] : memref<1x32xf32, #tpu.memory_space<vmem>>, vector<1x32xf32>
    %2 = vector.broadcast %1 : vector<1x32xf32> to vector<32x32xf32>
    %3 = arith.mulf %0, %2 : vector<32x32xf32>
    %c0_3 = arith.constant 0 : index
    %c0_4 = arith.constant 0 : index
    %4 = vector.load %arg2[%c0_3, %c0_4] : memref<1x32xf32, #tpu.memory_space<vmem>>, vector<1x32xf32>
    %5 = vector.shape_cast %4 : vector<1x32xf32> to vector<32x1xf32>
    %6 = vector.broadcast %5 : vector<32x1xf32> to vector<32x32xf32>
    %7 = arith.mulf %6, %3 : vector<32x32xf32>
    %cst = arith.constant dense<0.000000e+00> : vector<32xf32>
    %8 = vector.multi_reduction <add>, %7, %cst [0] : vector<32x32xf32> to vector<32xf32>
    %9 = vector.shape_cast %8 : vector<32xf32> to vector<1x32xf32>
    %c0_5 = arith.constant 0 : index
    %c0_6 = arith.constant 0 : index
    %10 = vector.load %arg3[%c0_5, %c0_6] : memref<1x1xf32, #tpu.memory_space<vmem>>, vector<1x1xf32>
    %11 = vector.broadcast %10 : vector<1x1xf32> to vector<1x32xf32>
    %12 = arith.addf %9, %11 : vector<1x32xf32>
    %c0_7 = arith.constant 0 : index
    %c0_8 = arith.constant 0 : index
    %13 = vector.load %arg5[%c0_7, %c0_8] : memref<1x32xf32, #tpu.memory_space<vmem>>, vector<1x32xf32>
    %14 = arith.mulf %12, %13 : vector<1x32xf32>
    %c0_9 = arith.constant 0 : index
    %c0_10 = arith.constant 0 : index
    %15 = vector.load %arg6[%c0_9, %c0_10] : memref<1x32xf32, #tpu.memory_space<vmem>>, vector<1x32xf32>
    tpu.vector_store %arg6[%c0_9, %c0_10], %14 {strides = array<i32>} : memref<1x32xf32, #tpu.memory_space<vmem>>, vector<1x32xf32>,
    return
  }
  func.func @transform_0(%arg0: i32) -> (i32, i32) {
    %c0_i32 = arith.constant 0 : i32
    %c0_i32_0 = arith.constant 0 : i32
    %c0_i32_1 = arith.constant 0 : i32
    return %c0_i32, %c0_i32_0 : i32, i32
  }
  func.func @transform_1(%arg0: i32) -> (i32, i32) {
    %c0_i32 = arith.constant 0 : i32
    %c0_i32_0 = arith.constant 0 : i32
    %c0_i32_1 = arith.constant 0 : i32
    return %c0_i32, %c0_i32_0 : i32, i32
  }
  func.func @transform_2(%arg0: i32) -> (i32, i32) {
    %c0_i32 = arith.constant 0 : i32
    %c0_i32_0 = arith.constant 0 : i32
    %c0_i32_1 = arith.constant 0 : i32
    return %c0_i32, %c0_i32_0 : i32, i32
  }
  func.func @transform_3(%arg0: i32) -> (i32, i32) {
    %c0_i32 = arith.constant 0 : i32
    %c0_i32_0 = arith.constant 0 : i32
    %c0_i32_1 = arith.constant 0 : i32
    return %c0_i32, %c0_i32_0 : i32, i32
  }
  func.func @transform_4(%arg0: i32) -> (i32, i32) {
    %c0_i32 = arith.constant 0 : i32
    %c0_i32_0 = arith.constant 0 : i32
    %c0_i32_1 = arith.constant 0 : i32
    return %c0_i32, %c0_i32_0 : i32, i32
  }
  func.func @transform_5(%arg0: i32) -> (i32, i32) {
    %c0_i32 = arith.constant 0 : i32
    %c0_i32_0 = arith.constant 0 : i32
    %c0_i32_1 = arith.constant 0 : i32
    return %c0_i32, %c0_i32_0 : i32, i32
  }
}

</mosaic_0001>

<llo_original>
// kernel: flow_generator_forward.66
$region0: #{flow_generator_forward.66}
  #allocation0 [shape = 'u32[]', space=smem, size = 0x4, offset = 0x4, fixed_abs, tag = 'smem constant byte address 0x4 - core index']
  #allocation1 [shape = 'u32[72,128]{1,0:T(1,128)}', space=vmem, size = 0x9000, scoped, tag = 'internal scratch']
  %s0 = inlined_call_operand.vmem [shape: f32[16,48], index: 0, kind: input, shape index: {}]
  %s1 = inlined_call_operand.vmem [shape: f32[1,48], index: 1, kind: input, shape index: {}]
  %s2 = inlined_call_operand.vmem [shape: f32[16,1], index: 2, kind: input, shape index: {}]
  %s3 = inlined_call_operand.vmem [shape: f32[16,1], index: 3, kind: input, shape index: {}]
  %s4 = inlined_call_operand.vmem [shape: f32[16,16], index: 4, kind: input, shape index: {}]
  %s5 = inlined_call_operand.vmem [shape: f32[16,48], index: 5, kind: output, shape index: {}]
  %s6 = sld [smem:[#allocation0]]
  $region30: #{flow_generator_forward.66} parent=0
    _
  %s8 = ssub.s32 1, %s6
  %s9 = scalar_select 0, %s8, %s6
  // Predicated region
  $region2: #{flow_generator_forward.66} parent=0 // pred_check
    _
  $region3: #{flow_generator_forward.66} parent=0 // pred_check_branch
    %11 = sbr.rel (0) target = $region5
  $region4: #{flow_generator_forward.66} parent=0 // pred_region
    _
  $region5: #{flow_generator_forward.66} parent=0 // pred_fallthru
    _
  // Predicated region
  $region6: #{flow_generator_forward.66} parent=0 // pred_check
    _
  $region7: #{flow_generator_forward.66} parent=0 // pred_check_branch
    %13 = sbr.rel (0) target = $region9
  $region8: #{flow_generator_forward.66} parent=0 // pred_region
    _
  $region9: #{flow_generator_forward.66} parent=0 // pred_fallthru
    _
  // Predicated region
  $region10: #{flow_generator_forward.66} parent=0 // pred_check
    _
  $region11: #{flow_generator_forward.66} parent=0 // pred_check_branch
    %15 = sbr.rel (0) target = $region13
  $region12: #{flow_generator_forward.66} parent=0 // pred_region
    _
  $region13: #{flow_generator_forward.66} parent=0 // pred_fallthru
    _
  // Predicated region
  $region14: #{flow_generator_forward.66} parent=0 // pred_check
    _
  $region15: #{flow_generator_forward.66} parent=0 // pred_check_branch
    %17 = sbr.rel (0) target = $region17
  $region16: #{flow_generator_forward.66} parent=0 // pred_region
    _
  $region17: #{flow_generator_forward.66} parent=0 // pred_fallthru
    _
  // Predicated region
  $region18: #{flow_generator_forward.66} parent=0 // pred_check
    _
  $region19: #{flow_generator_forward.66} parent=0 // pred_check_branch
    %19 = sbr.rel (0) target = $region21
  $region20: #{flow_generator_forward.66} parent=0 // pred_region
    _
  $region21: #{flow_generator_forward.66} parent=0 // pred_fallthru
    _
  %v21 = vld [vmem:[%s2] sm:$0xff]
  %v22 = vld [vmem:[%s2 + $0x8] sm:$0xff]
  %v23 = vld [vmem:[%s3] sm:$0xff]
  %v24 = vld [vmem:[%s3 + $0x8] sm:$0xff]
  %v25 = vmul.f32 %v23, 1.442695
  %v26 = vpow.pop %v25
  %v27 = vmul.f32 %v24, 1.442695
  %v28 = vpow.pop %v27
  %v29 = vld [vmem:[%s0] sm:$0xff]
  %v30 = vld [vmem:[%s0 + $0x8] sm:$0xff]
  %32 = vset.pattern.permute.xlu0 0
  %33 = vperm.xlu0 %32, %v26
  %v34 = vpop.permute.xlu0 %33
  %37 = vset.pattern.permute.xlu0 0
  %38 = vperm.xlu0 %37, %v28
  %v39 = vpop.permute.xlu0 %38
  %v41 = vmul.f32 %v34, %v29
  %v42 = vmul.f32 %v39, %v30
  %44 = vset.pattern.permute.xlu0 0
  %45 = vperm.xlu0 %44, %v21
  %v46 = vpop.permute.xlu0 %45
  %49 = vset.pattern.permute.xlu0 0
  %50 = vperm.xlu0 %49, %v22
  %v51 = vpop.permute.xlu0 %50
  %v53 = vadd.f32 %v46, %v41
  %v54 = vadd.f32 %v51, %v42
  %v55 = vld [vmem:[%s4] sm:$0xff]
  %v56 = vld [vmem:[%s4 + $0x8] sm:$0xff]
  %v57 = vpack.c.bf16 %v56, %v55
  %v58 = vpack.c.bf16 %v54, %v53
  %vm59 = vcmask 130048
  %v61 = vsel %vm59, %v57, 0
  %63 = vmatpush.bf16.msra.mxu0 0
  %64 = vmatpush.bf16.msra.mxu0 0
  %65 = vmatpush.bf16.msra.mxu0 0
  %66 = vmatpush.bf16.msra.mxu0 0
  %67 = vmatpush.bf16.msra.mxu0 0
  %68 = vmatpush.bf16.msra.mxu0 0
  %69 = vmatpush.bf16.msra.mxu0 0
  %70 = vmatpush.bf16.msra.mxu0 %v58
  %71 = vmatmul.bf16.gmra.mxu0 %v61
  %v72 = vpop.f32.mrf.mxu0
  %v73 = vadd.f32 0.0, %v72
  %v74 = vpop.f32.mrf.mxu0
  %v75 = vadd.f32 0.0, %v74
  %76 = vdwg.mxu0
  %v77 = vld [vmem:[%s1] sm:$0x1]
  %v79 = vperm.slane %v77, 0
  %v81 = vmul.f32 %v73, %v79
  %v82 = vmul.f32 %v75, %v79
  %vm83 = vcmask 392192
  %84 = vst.msk [vmem:[%s5] sm:$0xff] %vm83, %v81
  %85 = vst.msk [vmem:[%s5 + $0x8] sm:$0xff] %vm83, %v82
  // Predicated region
  $region22: #{flow_generator_forward.66} parent=0 // pred_check
    _
  $region23: #{flow_generator_forward.66} parent=0 // pred_check_branch
    %87 = sbr.rel (0) target = $region25
  $region24: #{flow_generator_forward.66} parent=0 // pred_region
    _
  $region25: #{flow_generator_forward.66} parent=0 // pred_fallthru
    _
  // Predicated region
  $region26: #{flow_generator_forward.66} parent=0 // pred_check
    _
  $region27: #{flow_generator_forward.66} parent=0 // pred_check_branch
    %89 = sbr.rel (0) target = $region29
  $region28: #{flow_generator_forward.66} parent=0 // pred_region
    _
  $region29: #{flow_generator_forward.66} parent=0 // pred_fallthru
    _

// kernel: flow_generator_forward.67
$region0: #{flow_generator_forward.67}
  #allocation0 [shape = 'u32[]', space=smem, size = 0x4, offset = 0x4, fixed_abs, tag = 'smem constant byte address 0x4 - core index']
  #allocation1 [shape = 'u32[72,128]{1,0:T(1,128)}', space=vmem, size = 0x9000, scoped, tag = 'internal scratch']
  %s0 = inlined_call_operand.vmem [shape: f32[8,48], index: 0, kind: input, shape index: {}]
  %s1 = inlined_call_operand.vmem [shape: f32[32,8], index: 1, kind: input, shape index: {}]
  %s2 = inlined_call_operand.vmem [shape: f32[32,1], index: 2, kind: input, shape index: {}]
  %s3 = inlined_call_operand.vmem [shape: f32[1,48], index: 3, kind: input, shape index: {}]
  %s4 = inlined_call_operand.vmem [shape: f32[32,48], index: 4, kind: output, shape index: {}]
  %s5 = sld [smem:[#allocation0]]
  $region26: #{flow_generator_forward.67} parent=0
    _
  %s7 = ssub.s32 1, %s5
  %s8 = scalar_select 0, %s7, %s5
  // Predicated region
  $region2: #{flow_generator_forward.67} parent=0 // pred_check
    _
  $region3: #{flow_generator_forward.67} parent=0 // pred_check_branch
    %10 = sbr.rel (0) target = $region5
  $region4: #{flow_generator_forward.67} parent=0 // pred_region
    _
  $region5: #{flow_generator_forward.67} parent=0 // pred_fallthru
    _
  // Predicated region
  $region6: #{flow_generator_forward.67} parent=0 // pred_check
    _
  $region7: #{flow_generator_forward.67} parent=0 // pred_check_branch
    %12 = sbr.rel (0) target = $region9
  $region8: #{flow_generator_forward.67} parent=0 // pred_region
    _
  $region9: #{flow_generator_forward.67} parent=0 // pred_fallthru
    _
  // Predicated region
  $region10: #{flow_generator_forward.67} parent=0 // pred_check
    _
  $region11: #{flow_generator_forward.67} parent=0 // pred_check_branch
    %14 = sbr.rel (0) target = $region13
  $region12: #{flow_generator_forward.67} parent=0 // pred_region
    _
  $region13: #{flow_generator_forward.67} parent=0 // pred_fallthru
    _
  // Predicated region
  $region14: #{flow_generator_forward.67} parent=0 // pred_check
    _
  $region15: #{flow_generator_forward.67} parent=0 // pred_check_branch
    %16 = sbr.rel (0) target = $region17
  $region16: #{flow_generator_forward.67} parent=0 // pred_region
    _
  $region17: #{flow_generator_forward.67} parent=0 // pred_fallthru
    _
  %v18 = vld [vmem:[%s0] sm:$0xff]
  %v19 = vld [vmem:[%s1] sm:$0xff]
  %v20 = vld [vmem:[%s1 + $0x8] sm:$0xff]
  %v21 = vld [vmem:[%s1 + $0x10] sm:$0xff]
  %v22 = vld [vmem:[%s1 + $0x18] sm:$0xff]
  %v23 = vpack.c.bf16 %v20, %v19
  %v24 = vpack.c.bf16 %v22, %v21
  %v25 = vpack.c.bf16 %v18, %v18
  %v26 = vld [vmem:[%s2] sm:$0xff]
  %v27 = vld [vmem:[%s2 + $0x8] sm:$0xff]
  %v28 = vld [vmem:[%s2 + $0x10] sm:$0xff]
  %v29 = vld [vmem:[%s2 + $0x18] sm:$0xff]
  %31 = vset.pattern.permute.xlu0 0
  %32 = vperm.xlu0 %31, %v26
  %v33 = vpop.permute.xlu0 %32
  %36 = vset.pattern.permute.xlu0 0
  %37 = vperm.xlu0 %36, %v27
  %v38 = vpop.permute.xlu0 %37
  %41 = vset.pattern.permute.xlu0 0
  %42 = vperm.xlu0 %41, %v28
  %v43 = vpop.permute.xlu0 %42
  %46 = vset.pattern.permute.xlu0 0
  %47 = vperm.xlu0 %46, %v29
  %v48 = vpop.permute.xlu0 %47
  %vm50 = vcmask 64512
  %v52 = vsel %vm50, %v23, 0
  %v55 = vsel %vm50, %v24, 0
  %vm57 = vcmask 1043456
  %v59 = vsel %vm57, %v25, 0
  %61 = vmatpush.bf16.msra.mxu0 0
  %62 = vmatpush.bf16.msra.mxu0 0
  %63 = vmatpush.bf16.msra.mxu0 0
  %64 = vmatpush.bf16.msra.mxu0 0
  %65 = vmatpush.bf16.msra.mxu0 0
  %66 = vmatpush.bf16.msra.mxu0 0
  %67 = vmatpush.bf16.msra.mxu0 0
  %68 = vmatpush.bf16.msra.mxu0 %v59
  %69 = vmatmul.bf16.gmra.mxu0 %v52
  %v70 = vpop.f32.mrf.mxu0
  %v71 = vadd.f32 %v33, %v70
  %v72 = vpop.f32.mrf.mxu0
  %v73 = vadd.f32 %v38, %v72
  %74 = vmatmul.bf16.gmra.mxu0 %v55
  %v75 = vpop.f32.mrf.mxu0
  %v76 = vadd.f32 %v43, %v75
  %v77 = vpop.f32.mrf.mxu0
  %v78 = vadd.f32 %v48, %v77
  %79 = vdwg.mxu0
  %v80 = vld [vmem:[%s3] sm:$0x1]
  %v82 = vperm.slane %v80, 0
  %v84 = vmul.f32 %v71, %v82
  %v85 = vmul.f32 %v73, %v82
  %v86 = vmul.f32 %v76, %v82
  %v87 = vmul.f32 %v78, %v82
  %vm88 = vcmask 392192
  %89 = vst.msk [vmem:[%s4] sm:$0xff] %vm88, %v84
  %90 = vst.msk [vmem:[%s4 + $0x8] sm:$0xff] %vm88, %v85
  %91 = vst.msk [vmem:[%s4 + $0x10] sm:$0xff] %vm88, %v86
  %92 = vst.msk [vmem:[%s4 + $0x18] sm:$0xff] %vm88, %v87
  // Predicated region
  $region18: #{flow_generator_forward.67} parent=0 // pred_check
    _
  $region19: #{flow_generator_forward.67} parent=0 // pred_check_branch
    %94 = sbr.rel (0) target = $region21
  $region20: #{flow_generator_forward.67} parent=0 // pred_region
    _
  $region21: #{flow_generator_forward.67} parent=0 // pred_fallthru
    _
  // Predicated region
  $region22: #{flow_generator_forward.67} parent=0 // pred_check
    _
  $region23: #{flow_generator_forward.67} parent=0 // pred_check_branch
    %96 = sbr.rel (0) target = $region25
  $region24: #{flow_generator_forward.67} parent=0 // pred_region
    _
  $region25: #{flow_generator_forward.67} parent=0 // pred_fallthru
    _

// kernel: flow_generator_forward.65
$region0: #{flow_generator_forward.65}
  #allocation0 [shape = 'u32[]', space=smem, size = 0x4, offset = 0x4, fixed_abs, tag = 'smem constant byte address 0x4 - core index']
  #allocation1 [shape = 'u32[72,128]{1,0:T(1,128)}', space=vmem, size = 0x9000, scoped, tag = 'internal scratch']
  %s0 = inlined_call_operand.vmem [shape: f32[1,48], index: 0, kind: input, shape index: {}]
  %s1 = inlined_call_operand.vmem [shape: f32[32,1], index: 1, kind: input, shape index: {}]
  %s2 = inlined_call_operand.vmem [shape: f32[32,1], index: 2, kind: input, shape index: {}]
  %s3 = inlined_call_operand.vmem [shape: f32[32,48], index: 3, kind: output, shape index: {}]
  %s4 = sld [smem:[#allocation0]]
  $region22: #{flow_generator_forward.65} parent=0
    _
  %s6 = ssub.s32 1, %s4
  %s7 = scalar_select 0, %s6, %s4
  // Predicated region
  $region2: #{flow_generator_forward.65} parent=0 // pred_check
    _
  $region3: #{flow_generator_forward.65} parent=0 // pred_check_branch
    %9 = sbr.rel (0) target = $region5
  $region4: #{flow_generator_forward.65} parent=0 // pred_region
    _
  $region5: #{flow_generator_forward.65} parent=0 // pred_fallthru
    _
  // Predicated region
  $region6: #{flow_generator_forward.65} parent=0 // pred_check
    _
  $region7: #{flow_generator_forward.65} parent=0 // pred_check_branch
    %11 = sbr.rel (0) target = $region9
  $region8: #{flow_generator_forward.65} parent=0 // pred_region
    _
  $region9: #{flow_generator_forward.65} parent=0 // pred_fallthru
    _
  // Predicated region
  $region10: #{flow_generator_forward.65} parent=0 // pred_check
    _
  $region11: #{flow_generator_forward.65} parent=0 // pred_check_branch
    %13 = sbr.rel (0) target = $region13
  $region12: #{flow_generator_forward.65} parent=0 // pred_region
    _
  $region13: #{flow_generator_forward.65} parent=0 // pred_fallthru
    _
  %v14 = vld [vmem:[%s0] sm:$0x1]
  %v15 = vld [vmem:[%s1] sm:$0xff]
  %v16 = vld [vmem:[%s1 + $0x8] sm:$0xff]
  %v17 = vld [vmem:[%s1 + $0x10] sm:$0xff]
  %v18 = vld [vmem:[%s1 + $0x18] sm:$0xff]
  %20 = vset.pattern.permute.xlu0 0
  %21 = vperm.xlu0 %20, %v15
  %v22 = vpop.permute.xlu0 %21
  %25 = vset.pattern.permute.xlu0 0
  %26 = vperm.xlu0 %25, %v16
  %v27 = vpop.permute.xlu0 %26
  %30 = vset.pattern.permute.xlu0 0
  %31 = vperm.xlu0 %30, %v17
  %v32 = vpop.permute.xlu0 %31
  %35 = vset.pattern.permute.xlu0 0
  %36 = vperm.xlu0 %35, %v18
  %v37 = vpop.permute.xlu0 %36
  %v40 = vperm.slane %v14, 0
  %v42 = vmul.f32 %v22, %v40
  %v43 = vmul.f32 %v27, %v40
  %v44 = vmul.f32 %v32, %v40
  %v45 = vmul.f32 %v37, %v40
  %v46 = vld [vmem:[%s2] sm:$0xff]
  %v47 = vld [vmem:[%s2 + $0x8] sm:$0xff]
  %v48 = vld [vmem:[%s2 + $0x10] sm:$0xff]
  %v49 = vld [vmem:[%s2 + $0x18] sm:$0xff]
  %51 = vset.pattern.permute.xlu0 0
  %52 = vperm.xlu0 %51, %v46
  %v53 = vpop.permute.xlu0 %52
  %56 = vset.pattern.permute.xlu0 0
  %57 = vperm.xlu0 %56, %v47
  %v58 = vpop.permute.xlu0 %57
  %61 = vset.pattern.permute.xlu0 0
  %62 = vperm.xlu0 %61, %v48
  %v63 = vpop.permute.xlu0 %62
  %66 = vset.pattern.permute.xlu0 0
  %67 = vperm.xlu0 %66, %v49
  %v68 = vpop.permute.xlu0 %67
  %v70 = vadd.f32 %v42, %v53
  %v71 = vadd.f32 %v43, %v58
  %v72 = vadd.f32 %v44, %v63
  %v73 = vadd.f32 %v45, %v68
  %vm74 = vcmask 392192
  %75 = vst.msk [vmem:[%s3] sm:$0xff] %vm74, %v70
  %76 = vst.msk [vmem:[%s3 + $0x8] sm:$0xff] %vm74, %v71
  %77 = vst.msk [vmem:[%s3 + $0x10] sm:$0xff] %vm74, %v72
  %78 = vst.msk [vmem:[%s3 + $0x18] sm:$0xff] %vm74, %v73
  // Predicated region
  $region14: #{flow_generator_forward.65} parent=0 // pred_check
    _
  $region15: #{flow_generator_forward.65} parent=0 // pred_check_branch
    %80 = sbr.rel (0) target = $region17
  $region16: #{flow_generator_forward.65} parent=0 // pred_region
    _
  $region17: #{flow_generator_forward.65} parent=0 // pred_fallthru
    _
  // Predicated region
  $region18: #{flow_generator_forward.65} parent=0 // pred_check
    _
  $region19: #{flow_generator_forward.65} parent=0 // pred_check_branch
    %82 = sbr.rel (0) target = $region21
  $region20: #{flow_generator_forward.65} parent=0 // pred_region
    _
  $region21: #{flow_generator_forward.65} parent=0 // pred_fallthru
    _

// kernel: flow_generator_forward.68
$region0: #{flow_generator_forward.68}
  #allocation0 [shape = 'u32[]', space=smem, size = 0x4, offset = 0x4, fixed_abs, tag = 'smem constant byte address 0x4 - core index']
  #allocation1 [shape = 'u32[72,128]{1,0:T(1,128)}', space=vmem, size = 0x9000, scoped, tag = 'internal scratch']
  %s0 = inlined_call_operand.vmem [shape: f32[64,48], index: 0, kind: input, shape index: {}]
  %s1 = inlined_call_operand.vmem [shape: f32[128,64], index: 1, kind: input, shape index: {}]
  %s2 = inlined_call_operand.vmem [shape: f32[128,1], index: 2, kind: input, shape index: {}]
  %s3 = inlined_call_operand.vmem [shape: f32[128,48], index: 3, kind: output, shape index: {}]
  %s4 = sld [smem:[#allocation0]]
  $region22: #{flow_generator_forward.68} parent=0
    _
  %s6 = ssub.s32 1, %s4
  %s7 = scalar_select 0, %s6, %s4
  // Predicated region
  $region2: #{flow_generator_forward.68} parent=0 // pred_check
    _
  $region3: #{flow_generator_forward.68} parent=0 // pred_check_branch
    %9 = sbr.rel (0) target = $region5
  $region4: #{flow_generator_forward.68} parent=0 // pred_region
    _
  $region5: #{flow_generator_forward.68} parent=0 // pred_fallthru
    _
  // Predicated region
  $region6: #{flow_generator_forward.68} parent=0 // pred_check
    _
  $region7: #{flow_generator_forward.68} parent=0 // pred_check_branch
    %11 = sbr.rel (0) target = $region9
  $region8: #{flow_generator_forward.68} parent=0 // pred_region
    _
  $region9: #{flow_generator_forward.68} parent=0 // pred_fallthru
    _
  // Predicated region
  $region10: #{flow_generator_forward.68} parent=0 // pred_check
    _
  $region11: #{flow_generator_forward.68} parent=0 // pred_check_branch
    %13 = sbr.rel (0) target = $region13
  $region12: #{flow_generator_forward.68} parent=0 // pred_region
    _
  $region13: #{flow_generator_forward.68} parent=0 // pred_fallthru
    _
  %v15 = vld [vmem:[%s0] sm:$0xff]
  %v16 = vld [vmem:[%s0 + $0x8] sm:$0xff]
  %v17 = vld [vmem:[%s0 + $0x10] sm:$0xff]
  %v18 = vld [vmem:[%s0 + $0x18] sm:$0xff]
  %v19 = vld [vmem:[%s0 + $0x20] sm:$0xff]
  %v20 = vld [vmem:[%s0 + $0x28] sm:$0xff]
  %v21 = vld [vmem:[%s0 + $0x30] sm:$0xff]
  %v22 = vld [vmem:[%s0 + $0x38] sm:$0xff]
  %v23 = vld [vmem:[%s1] sm:$0xff]
  %v24 = vld [vmem:[%s1 + $0x8] sm:$0xff]
  %v25 = vld [vmem:[%s1 + $0x10] sm:$0xff]
  %v26 = vld [vmem:[%s1 + $0x18] sm:$0xff]
  %v27 = vld [vmem:[%s1 + $0x20] sm:$0xff]
  %v28 = vld [vmem:[%s1 + $0x28] sm:$0xff]
  %v29 = vld [vmem:[%s1 + $0x30] sm:$0xff]
  %v30 = vld [vmem:[%s1 + $0x38] sm:$0xff]
  %v31 = vld [vmem:[%s1 + $0x40] sm:$0xff]
  %v32 = vld [vmem:[%s1 + $0x48] sm:$0xff]
  %v33 = vld [vmem:[%s1 + $0x50] sm:$0xff]
  %v34 = vld [vmem:[%s1 + $0x58] sm:$0xff]
  %v35 = vld [vmem:[%s1 + $0x60] sm:$0xff]
  %v36 = vld [vmem:[%s1 + $0x68] sm:$0xff]
  %v37 = vld [vmem:[%s1 + $0x70] sm:$0xff]
  %v38 = vld [vmem:[%s1 + $0x78] sm:$0xff]
  %v39 = vpack.c.bf16 %v24, %v23
  %v40 = vpack.c.bf16 %v26, %v25
  %v41 = vpack.c.bf16 %v28, %v27
  %v42 = vpack.c.bf16 %v30, %v29
  %v43 = vpack.c.bf16 %v32, %v31
  %v44 = vpack.c.bf16 %v34, %v33
  %v45 = vpack.c.bf16 %v36, %v35
  %v46 = vpack.c.bf16 %v38, %v37
  %v47 = vpack.c.bf16 %v16, %v15
  %v48 = vpack.c.bf16 %v18, %v17
  %v49 = vpack.c.bf16 %v20, %v19
  %v50 = vpack.c.bf16 %v22, %v21
  %v51 = vld [vmem:[%s2] sm:$0xff]
  %v52 = vld [vmem:[%s2 + $0x8] sm:$0xff]
  %v53 = vld [vmem:[%s2 + $0x10] sm:$0xff]
  %v54 = vld [vmem:[%s2 + $0x18] sm:$0xff]
  %v55 = vld [vmem:[%s2 + $0x20] sm:$0xff]
  %v56 = vld [vmem:[%s2 + $0x28] sm:$0xff]
  %v57 = vld [vmem:[%s2 + $0x30] sm:$0xff]
  %v58 = vld [vmem:[%s2 + $0x38] sm:$0xff]
  %v59 = vld [vmem:[%s2 + $0x40] sm:$0xff]
  %v60 = vld [vmem:[%s2 + $0x48] sm:$0xff]
  %v61 = vld [vmem:[%s2 + $0x50] sm:$0xff]
  %v62 = vld [vmem:[%s2 + $0x58] sm:$0xff]
  %v63 = vld [vmem:[%s2 + $0x60] sm:$0xff]
  %v64 = vld [vmem:[%s2 + $0x68] sm:$0xff]
  %v65 = vld [vmem:[%s2 + $0x70] sm:$0xff]
  %v66 = vld [vmem:[%s2 + $0x78] sm:$0xff]
  %68 = vset.pattern.permute.xlu0 0
  %69 = vperm.xlu0 %68, %v51
  %v70 = vpop.permute.xlu0 %69
  %73 = vset.pattern.permute.xlu0 0
  %74 = vperm.xlu0 %73, %v52
  %v75 = vpop.permute.xlu0 %74
  %78 = vset.pattern.permute.xlu0 0
  %79 = vperm.xlu0 %78, %v53
  %v80 = vpop.permute.xlu0 %79
  %83 = vset.pattern.permute.xlu0 0
  %84 = vperm.xlu0 %83, %v54
  %v85 = vpop.permute.xlu0 %84
  %88 = vset.pattern.permute.xlu0 0
  %89 = vperm.xlu0 %88, %v55
  %v90 = vpop.permute.xlu0 %89
  %93 = vset.pattern.permute.xlu0 0
  %94 = vperm.xlu0 %93, %v56
  %v95 = vpop.permute.xlu0 %94
  %98 = vset.pattern.permute.xlu0 0
  %99 = vperm.xlu0 %98, %v57
  %v100 = vpop.permute.xlu0 %99
  %103 = vset.pattern.permute.xlu0 0
  %104 = vperm.xlu0 %103, %v58
  %v105 = vpop.permute.xlu0 %104
  %108 = vset.pattern.permute.xlu0 0
  %109 = vperm.xlu0 %108, %v59
  %v110 = vpop.permute.xlu0 %109
  %113 = vset.pattern.permute.xlu0 0
  %114 = vperm.xlu0 %113, %v60
  %v115 = vpop.permute.xlu0 %114
  %118 = vset.pattern.permute.xlu0 0
  %119 = vperm.xlu0 %118, %v61
  %v120 = vpop.permute.xlu0 %119
  %123 = vset.pattern.permute.xlu0 0
  %124 = vperm.xlu0 %123, %v62
  %v125 = vpop.permute.xlu0 %124
  %128 = vset.pattern.permute.xlu0 0
  %129 = vperm.xlu0 %128, %v63
  %v130 = vpop.permute.xlu0 %129
  %133 = vset.pattern.permute.xlu0 0
  %134 = vperm.xlu0 %133, %v64
  %v135 = vpop.permute.xlu0 %134
  %138 = vset.pattern.permute.xlu0 0
  %139 = vperm.xlu0 %138, %v65
  %v140 = vpop.permute.xlu0 %139
  %143 = vset.pattern.permute.xlu0 0
  %144 = vperm.xlu0 %143, %v66
  %v145 = vpop.permute.xlu0 %144
  %vm147 = vcmask 523264
  %v149 = vsel %vm147, %v39, 0
  %v152 = vsel %vm147, %v40, 0
  %v155 = vsel %vm147, %v41, 0
  %v158 = vsel %vm147, %v42, 0
  %v161 = vsel %vm147, %v43, 0
  %v164 = vsel %vm147, %v44, 0
  %v167 = vsel %vm147, %v45, 0
  %v170 = vsel %vm147, %v46, 0
  %172 = vmatpush.bf16.msra.mxu0 0
  %173 = vmatpush.bf16.msra.mxu0 0
  %174 = vmatpush.bf16.msra.mxu0 0
  %175 = vmatpush.bf16.msra.mxu0 0
  %176 = vmatpush.bf16.msra.mxu0 %v50
  %177 = vmatpush.bf16.msra.mxu0 %v49
  %178 = vmatpush.bf16.msra.mxu0 %v48
  %179 = vmatpush.bf16.msra.mxu0 %v47
  %180 = vmatmul.bf16.gmra.mxu0 %v149
  %v181 = vpop.f32.mrf.mxu0
  %v182 = vadd.f32 %v70, %v181
  %v183 = vpop.f32.mrf.mxu0
  %v184 = vadd.f32 %v75, %v183
  %185 = vmatmul.bf16.gmra.mxu0 %v152
  %v186 = vpop.f32.mrf.mxu0
  %v187 = vadd.f32 %v80, %v186
  %v188 = vpop.f32.mrf.mxu0
  %v189 = vadd.f32 %v85, %v188
  %190 = vmatmul.bf16.gmra.mxu0 %v155
  %v191 = vpop.f32.mrf.mxu0
  %v192 = vadd.f32 %v90, %v191
  %v193 = vpop.f32.mrf.mxu0
  %v194 = vadd.f32 %v95, %v193
  %195 = vmatmul.bf16.gmra.mxu0 %v158
  %v196 = vpop.f32.mrf.mxu0
  %v197 = vadd.f32 %v100, %v196
  %v198 = vpop.f32.mrf.mxu0
  %v199 = vadd.f32 %v105, %v198
  %200 = vmatmul.bf16.gmra.mxu0 %v161
  %v201 = vpop.f32.mrf.mxu0
  %v202 = vadd.f32 %v110, %v201
  %v203 = vpop.f32.mrf.mxu0
  %v204 = vadd.f32 %v115, %v203
  %205 = vmatmul.bf16.gmra.mxu0 %v164
  %v206 = vpop.f32.mrf.mxu0
  %v207 = vadd.f32 %v120, %v206
  %v208 = vpop.f32.mrf.mxu0
  %v209 = vadd.f32 %v125, %v208
  %210 = vmatmul.bf16.gmra.mxu0 %v167
  %v211 = vpop.f32.mrf.mxu0
  %v212 = vadd.f32 %v130, %v211
  %v213 = vpop.f32.mrf.mxu0
  %v214 = vadd.f32 %v135, %v213
  %215 = vmatmul.bf16.gmra.mxu0 %v170
  %v216 = vpop.f32.mrf.mxu0
  %v217 = vadd.f32 %v140, %v216
  %v218 = vpop.f32.mrf.mxu0
  %v219 = vadd.f32 %v145, %v218
  %220 = vdwg.mxu0
  %vm221 = vcmask 392192
  %222 = vst.msk [vmem:[%s3] sm:$0xff] %vm221, %v182
  %223 = vst.msk [vmem:[%s3 + $0x8] sm:$0xff] %vm221, %v184
  %224 = vst.msk [vmem:[%s3 + $0x10] sm:$0xff] %vm221, %v187
  %225 = vst.msk [vmem:[%s3 + $0x18] sm:$0xff] %vm221, %v189
  %226 = vst.msk [vmem:[%s3 + $0x20] sm:$0xff] %vm221, %v192
  %227 = vst.msk [vmem:[%s3 + $0x28] sm:$0xff] %vm221, %v194
  %228 = vst.msk [vmem:[%s3 + $0x30] sm:$0xff] %vm221, %v197
  %229 = vst.msk [vmem:[%s3 + $0x38] sm:$0xff] %vm221, %v199
  %230 = vst.msk [vmem:[%s3 + $0x40] sm:$0xff] %vm221, %v202
  %231 = vst.msk [vmem:[%s3 + $0x48] sm:$0xff] %vm221, %v204
  %232 = vst.msk [vmem:[%s3 + $0x50] sm:$0xff] %vm221, %v207
  %233 = vst.msk [vmem:[%s3 + $0x58] sm:$0xff] %vm221, %v209
  %234 = vst.msk [vmem:[%s3 + $0x60] sm:$0xff] %vm221, %v212
  %235 = vst.msk [vmem:[%s3 + $0x68] sm:$0xff] %vm221, %v214
  %236 = vst.msk [vmem:[%s3 + $0x70] sm:$0xff] %vm221, %v217
  %237 = vst.msk [vmem:[%s3 + $0x78] sm:$0xff] %vm221, %v219
  // Predicated region
  $region14: #{flow_generator_forward.68} parent=0 // pred_check
    _
  $region15: #{flow_generator_forward.68} parent=0 // pred_check_branch
    %239 = sbr.rel (0) target = $region17
  $region16: #{flow_generator_forward.68} parent=0 // pred_region
    _
  $region17: #{flow_generator_forward.68} parent=0 // pred_fallthru
    _
  // Predicated region
  $region18: #{flow_generator_forward.68} parent=0 // pred_check
    _
  $region19: #{flow_generator_forward.68} parent=0 // pred_check_branch
    %241 = sbr.rel (0) target = $region21
  $region20: #{flow_generator_forward.68} parent=0 // pred_region
    _
  $region21: #{flow_generator_forward.68} parent=0 // pred_fallthru
    _

// kernel: flow_generator_forward.69
$region0: #{flow_generator_forward.69}
  #allocation0 [shape = 'u32[]', space=smem, size = 0x4, offset = 0x4, fixed_abs, tag = 'smem constant byte address 0x4 - core index']
  #allocation1 [shape = 'u32[72,128]{1,0:T(1,128)}', space=vmem, size = 0x9000, scoped, tag = 'internal scratch']
  %s0 = inlined_call_operand.vmem [shape: bf16[96,48], index: 0, kind: input, shape index: {}]
  %s1 = inlined_call_operand.vmem [shape: f32[128,48], index: 1, kind: input, shape index: {}]
  %s2 = inlined_call_operand.vmem [shape: f32[32,48], index: 2, kind: input, shape index: {}]
  %s3 = inlined_call_operand.vmem [shape: f32[32,48], index: 3, kind: input, shape index: {}]
  %s4 = inlined_call_operand.vmem [shape: f32[1,48], index: 4, kind: input, shape index: {}]
  %s5 = inlined_call_operand.vmem [shape: f32[64,96], index: 5, kind: input, shape index: {}]
  %s6 = inlined_call_operand.vmem [shape: f32[64,1], index: 6, kind: input, shape index: {}]
  %s7 = inlined_call_operand.vmem [shape: f32[64,32], index: 7, kind: input, shape index: {}]
  %s8 = inlined_call_operand.vmem [shape: f32[64,1], index: 8, kind: input, shape index: {}]
  %s9 = inlined_call_operand.vmem [shape: f32[32,48], index: 9, kind: output, shape index: {0}]
  %s10 = inlined_call_operand.vmem [shape: f32[32,48], index: 10, kind: output, shape index: {1}]
  %11 = xla_tuple %s9, %s10
  %s12 = sld [smem:[#allocation0]]
  $region54: #{flow_generator_forward.69} parent=0
    _
  %s14 = ssub.s32 1, %s12
  %s15 = scalar_select 0, %s14, %s12
  // Predicated region
  $region2: #{flow_generator_forward.69} parent=0 // pred_check
    _
  $region3: #{flow_generator_forward.69} parent=0 // pred_check_branch
    %17 = sbr.rel (0) target = $region5
  $region4: #{flow_generator_forward.69} parent=0 // pred_region
    _
  $region5: #{flow_generator_forward.69} parent=0 // pred_fallthru
    _
  // Predicated region
  $region6: #{flow_generator_forward.69} parent=0 // pred_check
    _
  $region7: #{flow_generator_forward.69} parent=0 // pred_check_branch
    %19 = sbr.rel (0) target = $region9
  $region8: #{flow_generator_forward.69} parent=0 // pred_region
    _
  $region9: #{flow_generator_forward.69} parent=0 // pred_fallthru
    _
  // Predicated region
  $region10: #{flow_generator_forward.69} parent=0 // pred_check
    _
  $region11: #{flow_generator_forward.69} parent=0 // pred_check_branch
    %21 = sbr.rel (0) target = $region13
  $region12: #{flow_generator_forward.69} parent=0 // pred_region
    _
  $region13: #{flow_generator_forward.69} parent=0 // pred_fallthru
    _
  // Predicated region
  $region14: #{flow_generator_forward.69} parent=0 // pred_check
    _
  $region15: #{flow_generator_forward.69} parent=0 // pred_check_branch
    %23 = sbr.rel (0) target = $region17
  $region16: #{flow_generator_forward.69} parent=0 // pred_region
    _
  $region17: #{flow_generator_forward.69} parent=0 // pred_fallthru
    _
  // Predicated region
  $region18: #{flow_generator_forward.69} parent=0 // pred_check
    _
  $region19: #{flow_generator_forward.69} parent=0 // pred_check_branch
    %25 = sbr.rel (0) target = $region21
  $region20: #{flow_generator_forward.69} parent=0 // pred_region
    _
  $region21: #{flow_generator_forward.69} parent=0 // pred_fallthru
    _
  // Predicated region
  $region22: #{flow_generator_forward.69} parent=0 // pred_check
    _
  $region23: #{flow_generator_forward.69} parent=0 // pred_check_branch
    %27 = sbr.rel (0) target = $region25
  $region24: #{flow_generator_forward.69} parent=0 // pred_region
    _
  $region25: #{flow_generator_forward.69} parent=0 // pred_fallthru
    _
  // Predicated region
  $region26: #{flow_generator_forward.69} parent=0 // pred_check
    _
  $region27: #{flow_generator_forward.69} parent=0 // pred_check_branch
    %29 = sbr.rel (0) target = $region29
  $region28: #{flow_generator_forward.69} parent=0 // pred_region
    _
  $region29: #{flow_generator_forward.69} parent=0 // pred_fallthru
    _
  // Predicated region
  $region30: #{flow_generator_forward.69} parent=0 // pred_check
    _
  $region31: #{flow_generator_forward.69} parent=0 // pred_check_branch
    %31 = sbr.rel (0) target = $region33
  $region32: #{flow_generator_forward.69} parent=0 // pred_region
    _
  $region33: #{flow_generator_forward.69} parent=0 // pred_fallthru
    _
  // Predicated region
  $region34: #{flow_generator_forward.69} parent=0 // pred_check
    _
  $region35: #{flow_generator_forward.69} parent=0 // pred_check_branch
    %33 = sbr.rel (0) target = $region37
  $region36: #{flow_generator_forward.69} parent=0 // pred_region
    _
  $region37: #{flow_generator_forward.69} parent=0 // pred_fallthru
    _
  %v35 = vld [vmem:[%s5] sm:$0xff]
  %v36 = vld [vmem:[%s5 + $0x8] sm:$0xff]
  %v37 = vld [vmem:[%s5 + $0x10] sm:$0xff]
  %v38 = vld [vmem:[%s5 + $0x18] sm:$0xff]
  %v39 = vld [vmem:[%s5 + $0x20] sm:$0xff]
  %v40 = vld [vmem:[%s5 + $0x28] sm:$0xff]
  %v41 = vld [vmem:[%s5 + $0x30] sm:$0xff]
  %v42 = vld [vmem:[%s5 + $0x38] sm:$0xff]
  %v43 = vpack.c.bf16 %v36, %v35
  %v44 = vpack.c.bf16 %v38, %v37
  %v45 = vpack.c.bf16 %v40, %v39
  %v46 = vpack.c.bf16 %v42, %v41
  %v47 = vld [vmem:[%s0] sm:$0xf]
  %v48 = vld [vmem:[%s0 + $0x4] sm:$0xf]
  %v49 = vld [vmem:[%s0 + $0x8] sm:$0xf]
  %v50 = vld [vmem:[%s0 + $0xc] sm:$0xf]
  %v51 = vld [vmem:[%s0 + $0x10] sm:$0xf]
  %v52 = vld [vmem:[%s0 + $0x14] sm:$0xf]
  %v53 = vld [vmem:[%s0 + $0x18] sm:$0xf]
  %v54 = vld [vmem:[%s0 + $0x1c] sm:$0xf]
  %v55 = vld [vmem:[%s0 + $0x20] sm:$0xf]
  %v56 = vld [vmem:[%s0 + $0x24] sm:$0xf]
  %v57 = vld [vmem:[%s0 + $0x28] sm:$0xf]
  %v58 = vld [vmem:[%s0 + $0x2c] sm:$0xf]
  %v59 = vld [vmem:[%s6] sm:$0xff]
  %v60 = vld [vmem:[%s6 + $0x8] sm:$0xff]
  %v61 = vld [vmem:[%s6 + $0x10] sm:$0xff]
  %v62 = vld [vmem:[%s6 + $0x18] sm:$0xff]
  %v63 = vld [vmem:[%s6 + $0x20] sm:$0xff]
  %v64 = vld [vmem:[%s6 + $0x28] sm:$0xff]
  %v65 = vld [vmem:[%s6 + $0x30] sm:$0xff]
  %v66 = vld [vmem:[%s6 + $0x38] sm:$0xff]
  %68 = vset.pattern.permute.xlu0 0
  %69 = vperm.xlu0 %68, %v59
  %v70 = vpop.permute.xlu0 %69
  %73 = vset.pattern.permute.xlu0 0
  %74 = vperm.xlu0 %73, %v60
  %v75 = vpop.permute.xlu0 %74
  %78 = vset.pattern.permute.xlu0 0
  %79 = vperm.xlu0 %78, %v61
  %v80 = vpop.permute.xlu0 %79
  %83 = vset.pattern.permute.xlu0 0
  %84 = vperm.xlu0 %83, %v62
  %v85 = vpop.permute.xlu0 %84
  %88 = vset.pattern.permute.xlu0 0
  %89 = vperm.xlu0 %88, %v63
  %v90 = vpop.permute.xlu0 %89
  %93 = vset.pattern.permute.xlu0 0
  %94 = vperm.xlu0 %93, %v64
  %v95 = vpop.permute.xlu0 %94
  %98 = vset.pattern.permute.xlu0 0
  %99 = vperm.xlu0 %98, %v65
  %v100 = vpop.permute.xlu0 %99
  %103 = vset.pattern.permute.xlu0 0
  %104 = vperm.xlu0 %103, %v66
  %v105 = vpop.permute.xlu0 %104
  %v119 = vunpack.c.l.b16 %v47
  %v120 = vunpack.c.l.b16 %v48
  %v121 = vunpack.c.l.b16 %v49
  %v122 = vunpack.c.l.b16 %v50
  %v123 = vunpack.c.l.b16 %v51
  %v124 = vunpack.c.l.b16 %v52
  %v125 = vunpack.c.l.b16 %v53
  %v126 = vunpack.c.l.b16 %v54
  %v127 = vunpack.c.l.b16 %v55
  %v128 = vunpack.c.l.b16 %v56
  %v129 = vunpack.c.l.b16 %v57
  %v130 = vunpack.c.l.b16 %v58
  %v131 = vpack.c.b16 %v120, %v119
  %v132 = vpack.c.b16 %v122, %v121
  %v133 = vpack.c.b16 %v124, %v123
  %v134 = vpack.c.b16 %v126, %v125
  %v135 = vpack.c.b16 %v128, %v127
  %v136 = vpack.c.b16 %v130, %v129
  %vm143 = vcmask 785408
  %v145 = vsel %vm143, %v43, 0
  %v148 = vsel %vm143, %v44, 0
  %v151 = vsel %vm143, %v45, 0
  %v154 = vsel %vm143, %v46, 0
  %156 = vmatpush.bf16.msra.mxu0 0
  %157 = vmatpush.bf16.msra.mxu0 0
  %158 = vmatpush.bf16.msra.mxu0 %v136
  %159 = vmatpush.bf16.msra.mxu0 %v135
  %160 = vmatpush.bf16.msra.mxu0 %v134
  %161 = vmatpush.bf16.msra.mxu0 %v133
  %162 = vmatpush.bf16.msra.mxu0 %v132
  %163 = vmatpush.bf16.msra.mxu0 %v131
  %164 = vmatmul.bf16.gmra.mxu0 %v145
  %v165 = vpop.f32.mrf.mxu0
  %v166 = vadd.f32 %v70, %v165
  %v167 = vpop.f32.mrf.mxu0
  %v168 = vadd.f32 %v75, %v167
  %169 = vmatmul.bf16.gmra.mxu0 %v148
  %v170 = vpop.f32.mrf.mxu0
  %v171 = vadd.f32 %v80, %v170
  %v172 = vpop.f32.mrf.mxu0
  %v173 = vadd.f32 %v85, %v172
  %174 = vmatmul.bf16.gmra.mxu0 %v151
  %v175 = vpop.f32.mrf.mxu0
  %v176 = vadd.f32 %v90, %v175
  %v177 = vpop.f32.mrf.mxu0
  %v178 = vadd.f32 %v95, %v177
  %179 = vmatmul.bf16.gmra.mxu0 %v154
  %v180 = vpop.f32.mrf.mxu0
  %v181 = vadd.f32 %v100, %v180
  %v182 = vpop.f32.mrf.mxu0
  %v183 = vadd.f32 %v105, %v182
  %184 = vdwg.mxu0
  %v185 = vld [vmem:[%s1] sm:$0xff]
  %v186 = vld [vmem:[%s1 + $0x8] sm:$0xff]
  %v187 = vld [vmem:[%s1 + $0x10] sm:$0xff]
  %v188 = vld [vmem:[%s1 + $0x18] sm:$0xff]
  %v189 = vld [vmem:[%s1 + $0x20] sm:$0xff]
  %v190 = vld [vmem:[%s1 + $0x28] sm:$0xff]
  %v191 = vld [vmem:[%s1 + $0x30] sm:$0xff]
  %v192 = vld [vmem:[%s1 + $0x38] sm:$0xff]
  %v193 = vadd.f32 %v166, %v185
  %v194 = vadd.f32 %v168, %v186
  %v195 = vadd.f32 %v171, %v187
  %v196 = vadd.f32 %v173, %v188
  %v197 = vadd.f32 %v176, %v189
  %v198 = vadd.f32 %v178, %v190
  %v199 = vadd.f32 %v181, %v191
  %v200 = vadd.f32 %v183, %v192
  %v201 = vtanh.pop %v193
  %v202 = vtanh.pop %v194
  %v203 = vtanh.pop %v195
  %v204 = vtanh.pop %v196
  %v205 = vxor.u32 %v197, 2147483648
  %v206 = vxor.u32 %v198, 2147483648
  %v207 = vxor.u32 %v199, 2147483648
  %v208 = vxor.u32 %v200, 2147483648
  %v209 = vmul.f32 %v205, 1.442695
  %v210 = vpow.pop %v209
  %v211 = vmul.f32 %v206, 1.442695
  %v212 = vpow.pop %v211
  %v213 = vmul.f32 %v207, 1.442695
  %v214 = vpow.pop %v213
  %v215 = vmul.f32 %v208, 1.442695
  %v216 = vpow.pop %v215
  %v217 = vadd.f32 %v210, 1.0
  %v218 = vadd.f32 %v212, 1.0
  %v219 = vadd.f32 %v214, 1.0
  %v220 = vadd.f32 %v216, 1.0
  %v221 = vrcp.pop %v217
  %v222 = vmul.f32 %v217, %v221
  %v223 = vsub.f32 1.0, %v222
  %v224 = vmul.f32 %v221, %v223
  %v225 = vadd.f32 %v221, %v224
  %vm226 = vweird.f32 %v217
  %vm227 = vweird.f32 %v221
  %vm228 = vmor %vm226, %vm227
  %v229 = vsel %vm228, %v221, %v225
  %v230 = vand.u32 2147483647, %v217
  %vm231 = vcmp.eq.f32.partialorder %v230, 8.507059e+37
  %v232 = vand.u32 %v217, 2147483648
  %v233 = vor.u32 1.1754944e-38, %v232
  %v234 = vsel %vm231, %v233, %v229
  %v235 = vmul.f32 1.0, %v234
  %v236 = vrcp.pop %v218
  %v237 = vmul.f32 %v218, %v236
  %v238 = vsub.f32 1.0, %v237
  %v239 = vmul.f32 %v236, %v238
  %v240 = vadd.f32 %v236, %v239
  %vm241 = vweird.f32 %v218
  %vm242 = vweird.f32 %v236
  %vm243 = vmor %vm241, %vm242
  %v244 = vsel %vm243, %v236, %v240
  %v245 = vand.u32 2147483647, %v218
  %vm246 = vcmp.eq.f32.partialorder %v245, 8.507059e+37
  %v247 = vand.u32 %v218, 2147483648
  %v248 = vor.u32 1.1754944e-38, %v247
  %v249 = vsel %vm246, %v248, %v244
  %v250 = vmul.f32 1.0, %v249
  %v251 = vrcp.pop %v219
  %v252 = vmul.f32 %v219, %v251
  %v253 = vsub.f32 1.0, %v252
  %v254 = vmul.f32 %v251, %v253
  %v255 = vadd.f32 %v251, %v254
  %vm256 = vweird.f32 %v219
  %vm257 = vweird.f32 %v251
  %vm258 = vmor %vm256, %vm257
  %v259 = vsel %vm258, %v251, %v255
  %v260 = vand.u32 2147483647, %v219
  %vm261 = vcmp.eq.f32.partialorder %v260, 8.507059e+37
  %v262 = vand.u32 %v219, 2147483648
  %v263 = vor.u32 1.1754944e-38, %v262
  %v264 = vsel %vm261, %v263, %v259
  %v265 = vmul.f32 1.0, %v264
  %v266 = vrcp.pop %v220
  %v267 = vmul.f32 %v220, %v266
  %v268 = vsub.f32 1.0, %v267
  %v269 = vmul.f32 %v266, %v268
  %v270 = vadd.f32 %v266, %v269
  %vm271 = vweird.f32 %v220
  %vm272 = vweird.f32 %v266
  %vm273 = vmor %vm271, %vm272
  %v274 = vsel %vm273, %v266, %v270
  %v275 = vand.u32 2147483647, %v220
  %vm276 = vcmp.eq.f32.partialorder %v275, 8.507059e+37
  %v277 = vand.u32 %v220, 2147483648
  %v278 = vor.u32 1.1754944e-38, %v277
  %v279 = vsel %vm276, %v278, %v274
  %v280 = vmul.f32 1.0, %v279
  %v281 = vmul.f32 %v201, %v235
  %v282 = vmul.f32 %v202, %v250
  %v283 = vmul.f32 %v203, %v265
  %v284 = vmul.f32 %v204, %v280
  %v285 = vld [vmem:[%s7] sm:$0xff]
  %v286 = vld [vmem:[%s7 + $0x8] sm:$0xff]
  %v287 = vld [vmem:[%s7 + $0x10] sm:$0xff]
  %v288 = vld [vmem:[%s7 + $0x18] sm:$0xff]
  %v289 = vld [vmem:[%s7 + $0x20] sm:$0xff]
  %v290 = vld [vmem:[%s7 + $0x28] sm:$0xff]
  %v291 = vld [vmem:[%s7 + $0x30] sm:$0xff]
  %v292 = vld [vmem:[%s7 + $0x38] sm:$0xff]
  %v293 = vpack.c.bf16 %v286, %v285
  %v294 = vpack.c.bf16 %v288, %v287
  %v295 = vpack.c.bf16 %v290, %v289
  %v296 = vpack.c.bf16 %v292, %v291
  %v297 = vpack.c.bf16 %v282, %v281
  %v298 = vpack.c.bf16 %v284, %v283
  %v299 = vld [vmem:[%s8] sm:$0xff]
  %v300 = vld [vmem:[%s8 + $0x8] sm:$0xff]
  %v301 = vld [vmem:[%s8 + $0x10] sm:$0xff]
  %v302 = vld [vmem:[%s8 + $0x18] sm:$0xff]
  %v303 = vld [vmem:[%s8 + $0x20] sm:$0xff]
  %v304 = vld [vmem:[%s8 + $0x28] sm:$0xff]
  %v305 = vld [vmem:[%s8 + $0x30] sm:$0xff]
  %v306 = vld [vmem:[%s8 + $0x38] sm:$0xff]
  %308 = vset.pattern.permute.xlu0 0
  %309 = vperm.xlu0 %308, %v299
  %v310 = vpop.permute.xlu0 %309
  %313 = vset.pattern.permute.xlu0 0
  %314 = vperm.xlu0 %313, %v300
  %v315 = vpop.permute.xlu0 %314
  %318 = vset.pattern.permute.xlu0 0
  %319 = vperm.xlu0 %318, %v301
  %v320 = vpop.permute.xlu0 %319
  %323 = vset.pattern.permute.xlu0 0
  %324 = vperm.xlu0 %323, %v302
  %v325 = vpop.permute.xlu0 %324
  %328 = vset.pattern.permute.xlu0 0
  %329 = vperm.xlu0 %328, %v303
  %v330 = vpop.permute.xlu0 %329
  %333 = vset.pattern.permute.xlu0 0
  %334 = vperm.xlu0 %333, %v304
  %v335 = vpop.permute.xlu0 %334
  %338 = vset.pattern.permute.xlu0 0
  %339 = vperm.xlu0 %338, %v305
  %v340 = vpop.permute.xlu0 %339
  %343 = vset.pattern.permute.xlu0 0
  %344 = vperm.xlu0 %343, %v306
  %v345 = vpop.permute.xlu0 %344
  %vm347 = vcmask 261120
  %v349 = vsel %vm347, %v293, 0
  %v352 = vsel %vm347, %v294, 0
  %v355 = vsel %vm347, %v295, 0
  %v358 = vsel %vm347, %v296, 0
  %360 = vmatpush.bf16.msra.mxu0 0
  %361 = vmatpush.bf16.msra.mxu0 0
  %362 = vmatpush.bf16.msra.mxu0 0
  %363 = vmatpush.bf16.msra.mxu0 0
  %364 = vmatpush.bf16.msra.mxu0 0
  %365 = vmatpush.bf16.msra.mxu0 0
  %366 = vmatpush.bf16.msra.mxu0 %v298
  %367 = vmatpush.bf16.msra.mxu0 %v297
  %368 = vmatmul.bf16.gmra.mxu0 %v349
  %v369 = vpop.f32.mrf.mxu0
  %v370 = vadd.f32 %v310, %v369
  %v371 = vpop.f32.mrf.mxu0
  %v372 = vadd.f32 %v315, %v371
  %373 = vmatmul.bf16.gmra.mxu0 %v352
  %v374 = vpop.f32.mrf.mxu0
  %v375 = vadd.f32 %v320, %v374
  %v376 = vpop.f32.mrf.mxu0
  %v377 = vadd.f32 %v325, %v376
  %378 = vmatmul.bf16.gmra.mxu0 %v355
  %v379 = vpop.f32.mrf.mxu0
  %v380 = vadd.f32 %v330, %v379
  %v381 = vpop.f32.mrf.mxu0
  %v382 = vadd.f32 %v335, %v381
  %383 = vmatmul.bf16.gmra.mxu0 %v358
  %v384 = vpop.f32.mrf.mxu0
  %v385 = vadd.f32 %v340, %v384
  %v386 = vpop.f32.mrf.mxu0
  %v387 = vadd.f32 %v345, %v386
  %388 = vdwg.mxu0
  %v389 = vld [vmem:[%s2] sm:$0xff]
  %v390 = vld [vmem:[%s2 + $0x8] sm:$0xff]
  %v391 = vld [vmem:[%s2 + $0x10] sm:$0xff]
  %v392 = vld [vmem:[%s2 + $0x18] sm:$0xff]
  %v393 = vadd.f32 %v389, %v370
  %v394 = vadd.f32 %v390, %v372
  %v395 = vadd.f32 %v391, %v375
  %v396 = vadd.f32 %v392, %v377
  %v397 = vld [vmem:[%s4] sm:$0x1]
  %v399 = vperm.slane %v397, 0
  %v401 = vmul.f32 %v393, %v399
  %v402 = vmul.f32 %v394, %v399
  %v403 = vmul.f32 %v395, %v399
  %v404 = vmul.f32 %v396, %v399
  %vm405 = vcmask 392192
  %406 = vst.msk [vmem:[%s9] sm:$0xff] %vm405, %v401
  %407 = vst.msk [vmem:[%s9 + $0x8] sm:$0xff] %vm405, %v402
  %408 = vst.msk [vmem:[%s9 + $0x10] sm:$0xff] %vm405, %v403
  %409 = vst.msk [vmem:[%s9 + $0x18] sm:$0xff] %vm405, %v404
  %v410 = vld [vmem:[%s3] sm:$0xff]
  %v411 = vld [vmem:[%s3 + $0x8] sm:$0xff]
  %v412 = vld [vmem:[%s3 + $0x10] sm:$0xff]
  %v413 = vld [vmem:[%s3 + $0x18] sm:$0xff]
  %v414 = vadd.f32 %v410, %v380
  %v415 = vadd.f32 %v411, %v382
  %v416 = vadd.f32 %v412, %v385
  %v417 = vadd.f32 %v413, %v387
  %418 = vst.msk [vmem:[%s10] sm:$0xff] %vm405, %v414
  %419 = vst.msk [vmem:[%s10 + $0x8] sm:$0xff] %vm405, %v415
  %420 = vst.msk [vmem:[%s10 + $0x10] sm:$0xff] %vm405, %v416
  %421 = vst.msk [vmem:[%s10 + $0x18] sm:$0xff] %vm405, %v417
  // Predicated region
  $region38: #{flow_generator_forward.69} parent=0 // pred_check
    _
  $region39: #{flow_generator_forward.69} parent=0 // pred_check_branch
    %423 = sbr.rel (0) target = $region41
  $region40: #{flow_generator_forward.69} parent=0 // pred_region
    _
  $region41: #{flow_generator_forward.69} parent=0 // pred_fallthru
    _
  // Predicated region
  $region42: #{flow_generator_forward.69} parent=0 // pred_check
    _
  $region43: #{flow_generator_forward.69} parent=0 // pred_check_branch
    %425 = sbr.rel (0) target = $region45
  $region44: #{flow_generator_forward.69} parent=0 // pred_region
    _
  $region45: #{flow_generator_forward.69} parent=0 // pred_fallthru
    _
  // Predicated region
  $region46: #{flow_generator_forward.69} parent=0 // pred_check
    _
  $region47: #{flow_generator_forward.69} parent=0 // pred_check_branch
    %427 = sbr.rel (0) target = $region49
  $region48: #{flow_generator_forward.69} parent=0 // pred_region
    _
  $region49: #{flow_generator_forward.69} parent=0 // pred_fallthru
    _
  // Predicated region
  $region50: #{flow_generator_forward.69} parent=0 // pred_check
    _
  $region51: #{flow_generator_forward.69} parent=0 // pred_check_branch
    %429 = sbr.rel (0) target = $region53
  $region52: #{flow_generator_forward.69} parent=0 // pred_region
    _
  $region53: #{flow_generator_forward.69} parent=0 // pred_fallthru
    _

// kernel: flow_generator_forward.71
$region0: #{flow_generator_forward.71}
  #allocation0 [shape = 'u32[]', space=smem, size = 0x4, offset = 0x4, fixed_abs, tag = 'smem constant byte address 0x4 - core index']
  #allocation1 [shape = 'u32[72,128]{1,0:T(1,128)}', space=vmem, size = 0x9000, scoped, tag = 'internal scratch']
  %s0 = inlined_call_operand.vmem [shape: f32[32,48], index: 0, kind: input, shape index: {}]
  %s1 = inlined_call_operand.vmem [shape: f32[8,48], index: 1, kind: input, shape index: {}]
  %s2 = inlined_call_operand.vmem [shape: f32[1,48], index: 2, kind: input, shape index: {}]
  %s3 = inlined_call_operand.vmem [shape: f32[16,32], index: 3, kind: input, shape index: {}]
  %s4 = inlined_call_operand.vmem [shape: f32[16,1], index: 4, kind: input, shape index: {}]
  %s5 = inlined_call_operand.vmem [shape: f32[8,48], index: 5, kind: output, shape index: {0}]
  %s6 = inlined_call_operand.vmem [shape: f32[8,48], index: 6, kind: output, shape index: {1}]
  %7 = xla_tuple %s5, %s6
  %s8 = sld [smem:[#allocation0]]
  $region38: #{flow_generator_forward.71} parent=0
    _
  %s10 = ssub.s32 1, %s8
  %s11 = scalar_select 0, %s10, %s8
  // Predicated region
  $region2: #{flow_generator_forward.71} parent=0 // pred_check
    _
  $region3: #{flow_generator_forward.71} parent=0 // pred_check_branch
    %13 = sbr.rel (0) target = $region5
  $region4: #{flow_generator_forward.71} parent=0 // pred_region
    _
  $region5: #{flow_generator_forward.71} parent=0 // pred_fallthru
    _
  // Predicated region
  $region6: #{flow_generator_forward.71} parent=0 // pred_check
    _
  $region7: #{flow_generator_forward.71} parent=0 // pred_check_branch
    %15 = sbr.rel (0) target = $region9
  $region8: #{flow_generator_forward.71} parent=0 // pred_region
    _
  $region9: #{flow_generator_forward.71} parent=0 // pred_fallthru
    _
  // Predicated region
  $region10: #{flow_generator_forward.71} parent=0 // pred_check
    _
  $region11: #{flow_generator_forward.71} parent=0 // pred_check_branch
    %17 = sbr.rel (0) target = $region13
  $region12: #{flow_generator_forward.71} parent=0 // pred_region
    _
  $region13: #{flow_generator_forward.71} parent=0 // pred_fallthru
    _
  // Predicated region
  $region14: #{flow_generator_forward.71} parent=0 // pred_check
    _
  $region15: #{flow_generator_forward.71} parent=0 // pred_check_branch
    %19 = sbr.rel (0) target = $region17
  $region16: #{flow_generator_forward.71} parent=0 // pred_region
    _
  $region17: #{flow_generator_forward.71} parent=0 // pred_fallthru
    _
  // Predicated region
  $region18: #{flow_generator_forward.71} parent=0 // pred_check
    _
  $region19: #{flow_generator_forward.71} parent=0 // pred_check_branch
    %21 = sbr.rel (0) target = $region21
  $region20: #{flow_generator_forward.71} parent=0 // pred_region
    _
  $region21: #{flow_generator_forward.71} parent=0 // pred_fallthru
    _
  %v23 = vld [vmem:[%s0] sm:$0xff]
  %v24 = vld [vmem:[%s0 + $0x8] sm:$0xff]
  %v25 = vld [vmem:[%s0 + $0x10] sm:$0xff]
  %v26 = vld [vmem:[%s0 + $0x18] sm:$0xff]
  %v27 = vld [vmem:[%s2] sm:$0x1]
  %v29 = vperm.slane %v27, 0
  %v31 = vmul.f32 %v23, %v29
  %v32 = vmul.f32 %v24, %v29
  %v33 = vmul.f32 %v25, %v29
  %v34 = vmul.f32 %v26, %v29
  %v35 = vld [vmem:[%s3] sm:$0xff]
  %v36 = vld [vmem:[%s3 + $0x8] sm:$0xff]
  %v37 = vpack.c.bf16 %v36, %v35
  %v38 = vpack.c.bf16 %v32, %v31
  %v39 = vpack.c.bf16 %v34, %v33
  %v40 = vld [vmem:[%s4] sm:$0xff]
  %v41 = vld [vmem:[%s4 + $0x8] sm:$0xff]
  %43 = vset.pattern.permute.xlu0 0
  %44 = vperm.xlu0 %43, %v40
  %v45 = vpop.permute.xlu0 %44
  %48 = vset.pattern.permute.xlu0 0
  %49 = vperm.xlu0 %48, %v41
  %v50 = vpop.permute.xlu0 %49
  %vm52 = vcmask 261120
  %v54 = vsel %vm52, %v37, 0
  %56 = vmatpush.bf16.msra.mxu0 0
  %57 = vmatpush.bf16.msra.mxu0 0
  %58 = vmatpush.bf16.msra.mxu0 0
  %59 = vmatpush.bf16.msra.mxu0 0
  %60 = vmatpush.bf16.msra.mxu0 0
  %61 = vmatpush.bf16.msra.mxu0 0
  %62 = vmatpush.bf16.msra.mxu0 %v39
  %63 = vmatpush.bf16.msra.mxu0 %v38
  %64 = vmatmul.bf16.gmra.mxu0 %v54
  %v65 = vpop.f32.mrf.mxu0
  %v66 = vadd.f32 %v45, %v65
  %v67 = vpop.f32.mrf.mxu0
  %v68 = vadd.f32 %v50, %v67
  %69 = vdwg.mxu0
  %v70 = vmul.f32 %v68, 1.442695
  %v71 = vpow.pop %v70
  %v72 = vld [vmem:[%s1] sm:$0xff]
  %v73 = vmul.f32 %v71, %v72
  %v74 = vadd.f32 %v66, %v73
  %v75 = vmul.f32 %v74, %v29
  %vm76 = vcmask 392192
  %77 = vst.msk [vmem:[%s5] sm:$0xff] %vm76, %v75
  %v78 = vld [vmem:[%s2] sm:$0x1]
  %v80 = vperm.slane %v78, 0
  %v82 = vmul.f32 %v68, %v80
  %83 = vst.msk [vmem:[%s6] sm:$0xff] %vm76, %v82
  // Predicated region
  $region22: #{flow_generator_forward.71} parent=0 // pred_check
    _
  $region23: #{flow_generator_forward.71} parent=0 // pred_check_branch
    %85 = sbr.rel (0) target = $region25
  $region24: #{flow_generator_forward.71} parent=0 // pred_region
    _
  $region25: #{flow_generator_forward.71} parent=0 // pred_fallthru
    _
  // Predicated region
  $region26: #{flow_generator_forward.71} parent=0 // pred_check
    _
  $region27: #{flow_generator_forward.71} parent=0 // pred_check_branch
    %87 = sbr.rel (0) target = $region29
  $region28: #{flow_generator_forward.71} parent=0 // pred_region
    _
  $region29: #{flow_generator_forward.71} parent=0 // pred_fallthru
    _
  // Predicated region
  $region30: #{flow_generator_forward.71} parent=0 // pred_check
    _
  $region31: #{flow_generator_forward.71} parent=0 // pred_check_branch
    %89 = sbr.rel (0) target = $region33
  $region32: #{flow_generator_forward.71} parent=0 // pred_region
    _
  $region33: #{flow_generator_forward.71} parent=0 // pred_fallthru
    _
  // Predicated region
  $region34: #{flow_generator_forward.71} parent=0 // pred_check
    _
  $region35: #{flow_generator_forward.71} parent=0 // pred_check_branch
    %91 = sbr.rel (0) target = $region37
  $region36: #{flow_generator_forward.71} parent=0 // pred_region
    _
  $region37: #{flow_generator_forward.71} parent=0 // pred_fallthru
    _

// kernel: flow_generator_forward.70
$region0: #{flow_generator_forward.70}
  #allocation0 [shape = 'u32[]', space=smem, size = 0x4, offset = 0x4, fixed_abs, tag = 'smem constant byte address 0x4 - core index']
  #allocation1 [shape = 'u32[72,128]{1,0:T(1,128)}', space=vmem, size = 0x9000, scoped, tag = 'internal scratch']
  %s0 = inlined_call_operand.vmem [shape: bf16[96,48], index: 0, kind: input, shape index: {}]
  %s1 = inlined_call_operand.vmem [shape: f32[128,48], index: 1, kind: input, shape index: {}]
  %s2 = inlined_call_operand.vmem [shape: f32[32,48], index: 2, kind: input, shape index: {}]
  %s3 = inlined_call_operand.vmem [shape: f32[32,48], index: 3, kind: input, shape index: {}]
  %s4 = inlined_call_operand.vmem [shape: f32[1,48], index: 4, kind: input, shape index: {}]
  %s5 = inlined_call_operand.vmem [shape: f32[64,96], index: 5, kind: input, shape index: {}]
  %s6 = inlined_call_operand.vmem [shape: f32[64,1], index: 6, kind: input, shape index: {}]
  %s7 = inlined_call_operand.vmem [shape: f32[32,32], index: 7, kind: input, shape index: {}]
  %s8 = inlined_call_operand.vmem [shape: f32[32,1], index: 8, kind: input, shape index: {}]
  %s9 = inlined_call_operand.hbm [shape: f32[32,48], index: 9, kind: output, shape index: {0}]
  %s10 = inlined_call_operand.vmem [shape: f32[32,48], index: 10, kind: output, shape index: {1}]
  %11 = xla_tuple %s9, %s10
  %s12 = sld [smem:[#allocation0]]
  $region54: #{flow_generator_forward.70} parent=0
    _
  %s14 = ssub.s32 1, %s12
  %s15 = scalar_select 0, %s14, %s12
  $region1: #{flow_generator_forward.70} parent=0
    #allocation2 [shape = 'u8[16384]{0}', space=vmem, size = 0x4000, scoped, tag = 'output window, operand 0, single buffered']
    #allocation3 [shape = 's32[1]{0}', space=sflag, size = 0x4, scoped, tag = 'scoped memory for flow_generator_forward.70']
    %16 = vsyncpa [#allocation3], 0
    // Predicated region
    $region2: #{flow_generator_forward.70} parent=1 // pred_check
      _
    $region3: #{flow_generator_forward.70} parent=1 // pred_check_branch
      %18 = sbr.rel (0) target = $region5
    $region4: #{flow_generator_forward.70} parent=1 // pred_region
      _
    $region5: #{flow_generator_forward.70} parent=1 // pred_fallthru
      _
    // Predicated region
    $region6: #{flow_generator_forward.70} parent=1 // pred_check
      _
    $region7: #{flow_generator_forward.70} parent=1 // pred_check_branch
      %20 = sbr.rel (0) target = $region9
    $region8: #{flow_generator_forward.70} parent=1 // pred_region
      %s21 = scalar_lea.vmem %s1, 64
    $region9: #{flow_generator_forward.70} parent=1 // pred_fallthru
      _
    // Predicated region
    $region10: #{flow_generator_forward.70} parent=1 // pred_check
      _
    $region11: #{flow_generator_forward.70} parent=1 // pred_check_branch
      %23 = sbr.rel (0) target = $region13
    $region12: #{flow_generator_forward.70} parent=1 // pred_region
      _
    $region13: #{flow_generator_forward.70} parent=1 // pred_fallthru
      _
    // Predicated region
    $region14: #{flow_generator_forward.70} parent=1 // pred_check
      _
    $region15: #{flow_generator_forward.70} parent=1 // pred_check_branch
      %25 = sbr.rel (0) target = $region17
    $region16: #{flow_generator_forward.70} parent=1 // pred_region
      _
    $region17: #{flow_generator_forward.70} parent=1 // pred_fallthru
      _
    // Predicated region
    $region18: #{flow_generator_forward.70} parent=1 // pred_check
      _
    $region19: #{flow_generator_forward.70} parent=1 // pred_check_branch
      %27 = sbr.rel (0) target = $region21
    $region20: #{flow_generator_forward.70} parent=1 // pred_region
      _
    $region21: #{flow_generator_forward.70} parent=1 // pred_fallthru
      _
    // Predicated region
    $region22: #{flow_generator_forward.70} parent=1 // pred_check
      _
    $region23: #{flow_generator_forward.70} parent=1 // pred_check_branch
      %29 = sbr.rel (0) target = $region25
    $region24: #{flow_generator_forward.70} parent=1 // pred_region
      _
    $region25: #{flow_generator_forward.70} parent=1 // pred_fallthru
      _
    // Predicated region
    $region26: #{flow_generator_forward.70} parent=1 // pred_check
      _
    $region27: #{flow_generator_forward.70} parent=1 // pred_check_branch
      %31 = sbr.rel (0) target = $region29
    $region28: #{flow_generator_forward.70} parent=1 // pred_region
      _
    $region29: #{flow_generator_forward.70} parent=1 // pred_fallthru
      _
    // Predicated region
    $region30: #{flow_generator_forward.70} parent=1 // pred_check
      _
    $region31: #{flow_generator_forward.70} parent=1 // pred_check_branch
      %33 = sbr.rel (0) target = $region33
    $region32: #{flow_generator_forward.70} parent=1 // pred_region
      _
    $region33: #{flow_generator_forward.70} parent=1 // pred_fallthru
      _
    // Predicated region
    $region34: #{flow_generator_forward.70} parent=1 // pred_check
      _
    $region35: #{flow_generator_forward.70} parent=1 // pred_check_branch
      %35 = sbr.rel (0) target = $region37
    $region36: #{flow_generator_forward.70} parent=1 // pred_region
      _
    $region37: #{flow_generator_forward.70} parent=1 // pred_fallthru
      _
    %s36 = scalar_lea.vmem %s1, 64
    %s37 = scalar_lea.vmem %s1, 64
    %v39 = vld [vmem:[%s5] sm:$0xff]
    %v40 = vld [vmem:[%s5 + $0x8] sm:$0xff]
    %v41 = vld [vmem:[%s5 + $0x10] sm:$0xff]
    %v42 = vld [vmem:[%s5 + $0x18] sm:$0xff]
    %v43 = vld [vmem:[%s5 + $0x20] sm:$0xff]
    %v44 = vld [vmem:[%s5 + $0x28] sm:$0xff]
    %v45 = vld [vmem:[%s5 + $0x30] sm:$0xff]
    %v46 = vld [vmem:[%s5 + $0x38] sm:$0xff]
    %v47 = vpack.c.bf16 %v40, %v39
    %v48 = vpack.c.bf16 %v42, %v41
    %v49 = vpack.c.bf16 %v44, %v43
    %v50 = vpack.c.bf16 %v46, %v45
    %v51 = vld [vmem:[%s0] sm:$0xf]
    %v52 = vld [vmem:[%s0 + $0x4] sm:$0xf]
    %v53 = vld [vmem:[%s0 + $0x8] sm:$0xf]
    %v54 = vld [vmem:[%s0 + $0xc] sm:$0xf]
    %v55 = vld [vmem:[%s0 + $0x10] sm:$0xf]
    %v56 = vld [vmem:[%s0 + $0x14] sm:$0xf]
    %v57 = vld [vmem:[%s0 + $0x18] sm:$0xf]
    %v58 = vld [vmem:[%s0 + $0x1c] sm:$0xf]
    %v59 = vld [vmem:[%s0 + $0x20] sm:$0xf]
    %v60 = vld [vmem:[%s0 + $0x24] sm:$0xf]
    %v61 = vld [vmem:[%s0 + $0x28] sm:$0xf]
    %v62 = vld [vmem:[%s0 + $0x2c] sm:$0xf]
    %v63 = vld [vmem:[%s6] sm:$0xff]
    %v64 = vld [vmem:[%s6 + $0x8] sm:$0xff]
    %v65 = vld [vmem:[%s6 + $0x10] sm:$0xff]
    %v66 = vld [vmem:[%s6 + $0x18] sm:$0xff]
    %v67 = vld [vmem:[%s6 + $0x20] sm:$0xff]
    %v68 = vld [vmem:[%s6 + $0x28] sm:$0xff]
    %v69 = vld [vmem:[%s6 + $0x30] sm:$0xff]
    %v70 = vld [vmem:[%s6 + $0x38] sm:$0xff]
    %72 = vset.pattern.permute.xlu0 0
    %73 = vperm.xlu0 %72, %v63
    %v74 = vpop.permute.xlu0 %73
    %77 = vset.pattern.permute.xlu0 0
    %78 = vperm.xlu0 %77, %v64
    %v79 = vpop.permute.xlu0 %78
    %82 = vset.pattern.permute.xlu0 0
    %83 = vperm.xlu0 %82, %v65
    %v84 = vpop.permute.xlu0 %83
    %87 = vset.pattern.permute.xlu0 0
    %88 = vperm.xlu0 %87, %v66
    %v89 = vpop.permute.xlu0 %88
    %92 = vset.pattern.permute.xlu0 0
    %93 = vperm.xlu0 %92, %v67
    %v94 = vpop.permute.xlu0 %93
    %97 = vset.pattern.permute.xlu0 0
    %98 = vperm.xlu0 %97, %v68
    %v99 = vpop.permute.xlu0 %98
    %102 = vset.pattern.permute.xlu0 0
    %103 = vperm.xlu0 %102, %v69
    %v104 = vpop.permute.xlu0 %103
    %107 = vset.pattern.permute.xlu0 0
    %108 = vperm.xlu0 %107, %v70
    %v109 = vpop.permute.xlu0 %108
    %v123 = vunpack.c.l.b16 %v51
    %v124 = vunpack.c.l.b16 %v52
    %v125 = vunpack.c.l.b16 %v53
    %v126 = vunpack.c.l.b16 %v54
    %v127 = vunpack.c.l.b16 %v55
    %v128 = vunpack.c.l.b16 %v56
    %v129 = vunpack.c.l.b16 %v57
    %v130 = vunpack.c.l.b16 %v58
    %v131 = vunpack.c.l.b16 %v59
    %v132 = vunpack.c.l.b16 %v60
    %v133 = vunpack.c.l.b16 %v61
    %v134 = vunpack.c.l.b16 %v62
    %v135 = vpack.c.b16 %v124, %v123
    %v136 = vpack.c.b16 %v126, %v125
    %v137 = vpack.c.b16 %v128, %v127
    %v138 = vpack.c.b16 %v130, %v129
    %v139 = vpack.c.b16 %v132, %v131
    %v140 = vpack.c.b16 %v134, %v133
    %vm147 = vcmask 785408
    %v149 = vsel %vm147, %v47, 0
    %v152 = vsel %vm147, %v48, 0
    %v155 = vsel %vm147, %v49, 0
    %v158 = vsel %vm147, %v50, 0
    %160 = vmatpush.bf16.msra.mxu0 0
    %161 = vmatpush.bf16.msra.mxu0 0
    %162 = vmatpush.bf16.msra.mxu0 %v140
    %163 = vmatpush.bf16.msra.mxu0 %v139
    %164 = vmatpush.bf16.msra.mxu0 %v138
    %165 = vmatpush.bf16.msra.mxu0 %v137
    %166 = vmatpush.bf16.msra.mxu0 %v136
    %167 = vmatpush.bf16.msra.mxu0 %v135
    %168 = vmatmul.bf16.gmra.mxu0 %v149
    %v169 = vpop.f32.mrf.mxu0
    %v170 = vadd.f32 %v74, %v169
    %v171 = vpop.f32.mrf.mxu0
    %v172 = vadd.f32 %v79, %v171
    %173 = vmatmul.bf16.gmra.mxu0 %v152
    %v174 = vpop.f32.mrf.mxu0
    %v175 = vadd.f32 %v84, %v174
    %v176 = vpop.f32.mrf.mxu0
    %v177 = vadd.f32 %v89, %v176
    %178 = vmatmul.bf16.gmra.mxu0 %v155
    %v179 = vpop.f32.mrf.mxu0
    %v180 = vadd.f32 %v94, %v179
    %v181 = vpop.f32.mrf.mxu0
    %v182 = vadd.f32 %v99, %v181
    %183 = vmatmul.bf16.gmra.mxu0 %v158
    %v184 = vpop.f32.mrf.mxu0
    %v185 = vadd.f32 %v104, %v184
    %v186 = vpop.f32.mrf.mxu0
    %v187 = vadd.f32 %v109, %v186
    %188 = vdwg.mxu0
    %v189 = vld [vmem:[%s37] sm:$0xff]
    %v190 = vld [vmem:[%s37 + $0x8] sm:$0xff]
    %v191 = vld [vmem:[%s37 + $0x10] sm:$0xff]
    %v192 = vld [vmem:[%s37 + $0x18] sm:$0xff]
    %v193 = vld [vmem:[%s37 + $0x20] sm:$0xff]
    %v194 = vld [vmem:[%s37 + $0x28] sm:$0xff]
    %v195 = vld [vmem:[%s37 + $0x30] sm:$0xff]
    %v196 = vld [vmem:[%s37 + $0x38] sm:$0xff]
    %v197 = vadd.f32 %v170, %v189
    %v198 = vadd.f32 %v172, %v190
    %v199 = vadd.f32 %v175, %v191
    %v200 = vadd.f32 %v177, %v192
    %v201 = vadd.f32 %v180, %v193
    %v202 = vadd.f32 %v182, %v194
    %v203 = vadd.f32 %v185, %v195
    %v204 = vadd.f32 %v187, %v196
    %v205 = vtanh.pop %v197
    %v206 = vtanh.pop %v198
    %v207 = vtanh.pop %v199
    %v208 = vtanh.pop %v200
    %v209 = vxor.u32 %v201, 2147483648
    %v210 = vxor.u32 %v202, 2147483648
    %v211 = vxor.u32 %v203, 2147483648
    %v212 = vxor.u32 %v204, 2147483648
    %v213 = vmul.f32 %v209, 1.442695
    %v214 = vpow.pop %v213
    %v215 = vmul.f32 %v210, 1.442695
    %v216 = vpow.pop %v215
    %v217 = vmul.f32 %v211, 1.442695
    %v218 = vpow.pop %v217
    %v219 = vmul.f32 %v212, 1.442695
    %v220 = vpow.pop %v219
    %v221 = vadd.f32 %v214, 1.0
    %v222 = vadd.f32 %v216, 1.0
    %v223 = vadd.f32 %v218, 1.0
    %v224 = vadd.f32 %v220, 1.0
    %v225 = vrcp.pop %v221
    %v226 = vmul.f32 %v221, %v225
    %v227 = vsub.f32 1.0, %v226
    %v228 = vmul.f32 %v225, %v227
    %v229 = vadd.f32 %v225, %v228
    %vm230 = vweird.f32 %v221
    %vm231 = vweird.f32 %v225
    %vm232 = vmor %vm230, %vm231
    %v233 = vsel %vm232, %v225, %v229
    %v234 = vand.u32 2147483647, %v221
    %vm235 = vcmp.eq.f32.partialorder %v234, 8.507059e+37
    %v236 = vand.u32 %v221, 2147483648
    %v237 = vor.u32 1.1754944e-38, %v236
    %v238 = vsel %vm235, %v237, %v233
    %v239 = vmul.f32 1.0, %v238
    %v240 = vrcp.pop %v222
    %v241 = vmul.f32 %v222, %v240
    %v242 = vsub.f32 1.0, %v241
    %v243 = vmul.f32 %v240, %v242
    %v244 = vadd.f32 %v240, %v243
    %vm245 = vweird.f32 %v222
    %vm246 = vweird.f32 %v240
    %vm247 = vmor %vm245, %vm246
    %v248 = vsel %vm247, %v240, %v244
    %v249 = vand.u32 2147483647, %v222
    %vm250 = vcmp.eq.f32.partialorder %v249, 8.507059e+37
    %v251 = vand.u32 %v222, 2147483648
    %v252 = vor.u32 1.1754944e-38, %v251
    %v253 = vsel %vm250, %v252, %v248
    %v254 = vmul.f32 1.0, %v253
    %v255 = vrcp.pop %v223
    %v256 = vmul.f32 %v223, %v255
    %v257 = vsub.f32 1.0, %v256
    %v258 = vmul.f32 %v255, %v257
    %v259 = vadd.f32 %v255, %v258
    %vm260 = vweird.f32 %v223
    %vm261 = vweird.f32 %v255
    %vm262 = vmor %vm260, %vm261
    %v263 = vsel %vm262, %v255, %v259
    %v264 = vand.u32 2147483647, %v223
    %vm265 = vcmp.eq.f32.partialorder %v264, 8.507059e+37
    %v266 = vand.u32 %v223, 2147483648
    %v267 = vor.u32 1.1754944e-38, %v266
    %v268 = vsel %vm265, %v267, %v263
    %v269 = vmul.f32 1.0, %v268
    %v270 = vrcp.pop %v224
    %v271 = vmul.f32 %v224, %v270
    %v272 = vsub.f32 1.0, %v271
    %v273 = vmul.f32 %v270, %v272
    %v274 = vadd.f32 %v270, %v273
    %vm275 = vweird.f32 %v224
    %vm276 = vweird.f32 %v270
    %vm277 = vmor %vm275, %vm276
    %v278 = vsel %vm277, %v270, %v274
    %v279 = vand.u32 2147483647, %v224
    %vm280 = vcmp.eq.f32.partialorder %v279, 8.507059e+37
    %v281 = vand.u32 %v224, 2147483648
    %v282 = vor.u32 1.1754944e-38, %v281
    %v283 = vsel %vm280, %v282, %v278
    %v284 = vmul.f32 1.0, %v283
    %v285 = vmul.f32 %v205, %v239
    %v286 = vmul.f32 %v206, %v254
    %v287 = vmul.f32 %v207, %v269
    %v288 = vmul.f32 %v208, %v284
    %v289 = vld [vmem:[%s7] sm:$0xff]
    %v290 = vld [vmem:[%s7 + $0x8] sm:$0xff]
    %v291 = vld [vmem:[%s7 + $0x10] sm:$0xff]
    %v292 = vld [vmem:[%s7 + $0x18] sm:$0xff]
    %v293 = vpack.c.bf16 %v290, %v289
    %v294 = vpack.c.bf16 %v292, %v291
    %v295 = vpack.c.bf16 %v286, %v285
    %v296 = vpack.c.bf16 %v288, %v287
    %v297 = vld [vmem:[%s8] sm:$0xff]
    %v298 = vld [vmem:[%s8 + $0x8] sm:$0xff]
    %v299 = vld [vmem:[%s8 + $0x10] sm:$0xff]
    %v300 = vld [vmem:[%s8 + $0x18] sm:$0xff]
    %302 = vset.pattern.permute.xlu0 0
    %303 = vperm.xlu0 %302, %v297
    %v304 = vpop.permute.xlu0 %303
    %307 = vset.pattern.permute.xlu0 0
    %308 = vperm.xlu0 %307, %v298
    %v309 = vpop.permute.xlu0 %308
    %312 = vset.pattern.permute.xlu0 0
    %313 = vperm.xlu0 %312, %v299
    %v314 = vpop.permute.xlu0 %313
    %317 = vset.pattern.permute.xlu0 0
    %318 = vperm.xlu0 %317, %v300
    %v319 = vpop.permute.xlu0 %318
    %vm321 = vcmask 261120
    %v323 = vsel %vm321, %v293, 0
    %v326 = vsel %vm321, %v294, 0
    %328 = vmatpush.bf16.msra.mxu0 0
    %329 = vmatpush.bf16.msra.mxu0 0
    %330 = vmatpush.bf16.msra.mxu0 0
    %331 = vmatpush.bf16.msra.mxu0 0
    %332 = vmatpush.bf16.msra.mxu0 0
    %333 = vmatpush.bf16.msra.mxu0 0
    %334 = vmatpush.bf16.msra.mxu0 %v296
    %335 = vmatpush.bf16.msra.mxu0 %v295
    %336 = vmatmul.bf16.gmra.mxu0 %v323
    %v337 = vpop.f32.mrf.mxu0
    %v338 = vadd.f32 %v304, %v337
    %v339 = vpop.f32.mrf.mxu0
    %v340 = vadd.f32 %v309, %v339
    %341 = vmatmul.bf16.gmra.mxu0 %v326
    %v342 = vpop.f32.mrf.mxu0
    %v343 = vadd.f32 %v314, %v342
    %v344 = vpop.f32.mrf.mxu0
    %v345 = vadd.f32 %v319, %v344
    %346 = vdwg.mxu0
    %v347 = vld [vmem:[%s3] sm:$0xff]
    %v348 = vld [vmem:[%s3 + $0x8] sm:$0xff]
    %v349 = vld [vmem:[%s3 + $0x10] sm:$0xff]
    %v350 = vld [vmem:[%s3 + $0x18] sm:$0xff]
    %v351 = vadd.f32 %v347, %v338
    %v352 = vadd.f32 %v348, %v340
    %v353 = vadd.f32 %v349, %v343
    %v354 = vadd.f32 %v350, %v345
    %vm355 = vcmask 392192
    %356 = vst.msk [vmem:[%s10] sm:$0xff] %vm355, %v351
    %357 = vst.msk [vmem:[%s10 + $0x8] sm:$0xff] %vm355, %v352
    %358 = vst.msk [vmem:[%s10 + $0x10] sm:$0xff] %vm355, %v353
    %359 = vst.msk [vmem:[%s10 + $0x18] sm:$0xff] %vm355, %v354
    %v360 = vld [vmem:[%s2] sm:$0xff]
    %v361 = vld [vmem:[%s2 + $0x8] sm:$0xff]
    %v362 = vld [vmem:[%s2 + $0x10] sm:$0xff]
    %v363 = vld [vmem:[%s2 + $0x18] sm:$0xff]
    %364 = vst.msk [vmem:[#allocation2] sm:$0xff] %vm355, %v360
    %365 = vst.msk [vmem:[#allocation2 + $0x8] sm:$0xff] %vm355, %v361
    %366 = vst.msk [vmem:[#allocation2 + $0x10] sm:$0xff] %vm355, %v362
    %367 = vst.msk [vmem:[#allocation2 + $0x18] sm:$0xff] %vm355, %v363
    // Predicated region
    $region38: #{flow_generator_forward.70} parent=1 // pred_check
      _
    $region39: #{flow_generator_forward.70} parent=1 // pred_check_branch
      %369 = sbr.rel (0) target = $region41
    $region40: #{flow_generator_forward.70} parent=1 // pred_region
      %371 = vsyncadd [#allocation3], 0
      %s372 = sshll.u32 [#allocation2], 4
      %s373 = int_to_ptr.vmem [resolvable:$true] %s372
      %s374 = sshll.u32 %s9, 4
      %s375 = int_to_ptr.hbm [resolvable:$true] %s374
      %380 = dma.vmem_to_hbm [thread:$0]  %s373, 512, %s375, [#allocation3], 128, 128, 8
    $region41: #{flow_generator_forward.70} parent=1 // pred_fallthru
      _
    // Predicated region
    $region42: #{flow_generator_forward.70} parent=1 // pred_check
      _
    $region43: #{flow_generator_forward.70} parent=1 // pred_check_branch
      %382 = sbr.rel (0) target = $region45
    $region44: #{flow_generator_forward.70} parent=1 // pred_region
      _
    $region45: #{flow_generator_forward.70} parent=1 // pred_fallthru
      _
    // Predicated region
    $region46: #{flow_generator_forward.70} parent=1 // pred_check
      _
    $region47: #{flow_generator_forward.70} parent=1 // pred_check_branch
      %384 = sbr.rel (0) target = $region49
    $region48: #{flow_generator_forward.70} parent=1 // pred_region
      %386 = dma.done [#allocation3], 512
    $region49: #{flow_generator_forward.70} parent=1 // pred_fallthru
      _
    // Predicated region
    $region50: #{flow_generator_forward.70} parent=1 // pred_check
      _
    $region51: #{flow_generator_forward.70} parent=1 // pred_check_branch
      %388 = sbr.rel (0) target = $region53
    $region52: #{flow_generator_forward.70} parent=1 // pred_region
      _
    $region53: #{flow_generator_forward.70} parent=1 // pred_fallthru
      _
    %389 = vsyncpa [#allocation3], 1

// kernel: flow_generator_forward.42
$region0: #{flow_generator_forward.42}
  #allocation0 [shape = 'u32[]', space=smem, size = 0x4, offset = 0x4, fixed_abs, tag = 'smem constant byte address 0x4 - core index']
  #allocation1 [shape = 'u32[72,128]{1,0:T(1,128)}', space=vmem, size = 0x9000, scoped, tag = 'internal scratch']
  %s0 = inlined_call_operand.vmem [shape: f32[32,32], index: 0, kind: input, shape index: {}]
  %s1 = inlined_call_operand.vmem [shape: f32[32,32], index: 1, kind: input, shape index: {}]
  %s2 = inlined_call_operand.vmem [shape: f32[32,1], index: 2, kind: input, shape index: {}]
  %s3 = inlined_call_operand.vmem [shape: f32[32,32], index: 3, kind: output, shape index: {}]
  %s4 = sld [smem:[#allocation0]]
  $region22: #{flow_generator_forward.42} parent=0
    _
  %s6 = ssub.s32 1, %s4
  %s7 = scalar_select 0, %s6, %s4
  // Predicated region
  $region2: #{flow_generator_forward.42} parent=0 // pred_check
    _
  $region3: #{flow_generator_forward.42} parent=0 // pred_check_branch
    %9 = sbr.rel (0) target = $region5
  $region4: #{flow_generator_forward.42} parent=0 // pred_region
    _
  $region5: #{flow_generator_forward.42} parent=0 // pred_fallthru
    _
  // Predicated region
  $region6: #{flow_generator_forward.42} parent=0 // pred_check
    _
  $region7: #{flow_generator_forward.42} parent=0 // pred_check_branch
    %11 = sbr.rel (0) target = $region9
  $region8: #{flow_generator_forward.42} parent=0 // pred_region
    _
  $region9: #{flow_generator_forward.42} parent=0 // pred_fallthru
    _
  // Predicated region
  $region10: #{flow_generator_forward.42} parent=0 // pred_check
    _
  $region11: #{flow_generator_forward.42} parent=0 // pred_check_branch
    %13 = sbr.rel (0) target = $region13
  $region12: #{flow_generator_forward.42} parent=0 // pred_region
    _
  $region13: #{flow_generator_forward.42} parent=0 // pred_fallthru
    _
  %v15 = vld [vmem:[%s0] sm:$0xff]
  %v16 = vld [vmem:[%s0 + $0x8] sm:$0xff]
  %v17 = vld [vmem:[%s0 + $0x10] sm:$0xff]
  %v18 = vld [vmem:[%s0 + $0x18] sm:$0xff]
  %v19 = vld [vmem:[%s1] sm:$0xff]
  %v20 = vld [vmem:[%s1 + $0x8] sm:$0xff]
  %v21 = vld [vmem:[%s1 + $0x10] sm:$0xff]
  %v22 = vld [vmem:[%s1 + $0x18] sm:$0xff]
  %v23 = vpack.c.bf16 %v20, %v19
  %v24 = vpack.c.bf16 %v22, %v21
  %v25 = vpack.c.bf16 %v16, %v15
  %v26 = vpack.c.bf16 %v18, %v17
  %v27 = vld [vmem:[%s2] sm:$0xff]
  %v28 = vld [vmem:[%s2 + $0x8] sm:$0xff]
  %v29 = vld [vmem:[%s2 + $0x10] sm:$0xff]
  %v30 = vld [vmem:[%s2 + $0x18] sm:$0xff]
  %32 = vset.pattern.permute.xlu0 0
  %33 = vperm.xlu0 %32, %v27
  %v34 = vpop.permute.xlu0 %33
  %37 = vset.pattern.permute.xlu0 0
  %38 = vperm.xlu0 %37, %v28
  %v39 = vpop.permute.xlu0 %38
  %42 = vset.pattern.permute.xlu0 0
  %43 = vperm.xlu0 %42, %v29
  %v44 = vpop.permute.xlu0 %43
  %47 = vset.pattern.permute.xlu0 0
  %48 = vperm.xlu0 %47, %v30
  %v49 = vpop.permute.xlu0 %48
  %vm51 = vcmask 261120
  %v53 = vsel %vm51, %v23, 0
  %v56 = vsel %vm51, %v24, 0
  %58 = vmatpush.bf16.msra.mxu0 0
  %59 = vmatpush.bf16.msra.mxu0 0
  %60 = vmatpush.bf16.msra.mxu0 0
  %61 = vmatpush.bf16.msra.mxu0 0
  %62 = vmatpush.bf16.msra.mxu0 0
  %63 = vmatpush.bf16.msra.mxu0 0
  %64 = vmatpush.bf16.msra.mxu0 %v26
  %65 = vmatpush.bf16.msra.mxu0 %v25
  %66 = vmatmul.bf16.gmra.mxu0 %v53
  %v67 = vpop.f32.mrf.mxu0
  %v68 = vadd.f32 %v34, %v67
  %v69 = vpop.f32.mrf.mxu0
  %v70 = vadd.f32 %v39, %v69
  %71 = vmatmul.bf16.gmra.mxu0 %v56
  %v72 = vpop.f32.mrf.mxu0
  %v73 = vadd.f32 %v44, %v72
  %v74 = vpop.f32.mrf.mxu0
  %v75 = vadd.f32 %v49, %v74
  %76 = vdwg.mxu0
  %77 = vst.msk [vmem:[%s3] sm:$0xff] %vm51, %v68
  %78 = vst.msk [vmem:[%s3 + $0x8] sm:$0xff] %vm51, %v70
  %79 = vst.msk [vmem:[%s3 + $0x10] sm:$0xff] %vm51, %v73
  %80 = vst.msk [vmem:[%s3 + $0x18] sm:$0xff] %vm51, %v75
  // Predicated region
  $region14: #{flow_generator_forward.42} parent=0 // pred_check
    _
  $region15: #{flow_generator_forward.42} parent=0 // pred_check_branch
    %82 = sbr.rel (0) target = $region17
  $region16: #{flow_generator_forward.42} parent=0 // pred_region
    _
  $region17: #{flow_generator_forward.42} parent=0 // pred_fallthru
    _
  // Predicated region
  $region18: #{flow_generator_forward.42} parent=0 // pred_check
    _
  $region19: #{flow_generator_forward.42} parent=0 // pred_check_branch
    %84 = sbr.rel (0) target = $region21
  $region20: #{flow_generator_forward.42} parent=0 // pred_region
    _
  $region21: #{flow_generator_forward.42} parent=0 // pred_fallthru
    _

// kernel: flow_generator_forward.40
$region0: #{flow_generator_forward.40}
  #allocation0 [shape = 'u32[]', space=smem, size = 0x4, offset = 0x4, fixed_abs, tag = 'smem constant byte address 0x4 - core index']
  #allocation1 [shape = 'u32[72,128]{1,0:T(1,128)}', space=vmem, size = 0x9000, scoped, tag = 'internal scratch']
  %s0 = inlined_call_operand.vmem [shape: f32[32,32], index: 0, kind: input, shape index: {}]
  %s1 = inlined_call_operand.vmem [shape: f32[96,32], index: 1, kind: input, shape index: {}]
  %s2 = inlined_call_operand.vmem [shape: f32[96,1], index: 2, kind: input, shape index: {}]
  %s3 = inlined_call_operand.vmem [shape: f32[1,32], index: 3, kind: input, shape index: {}]
  %s4 = inlined_call_operand.vmem [shape: f32[96,32], index: 4, kind: output, shape index: {}]
  %s5 = sld [smem:[#allocation0]]
  $region26: #{flow_generator_forward.40} parent=0
    _
  %s7 = ssub.s32 1, %s5
  %s8 = scalar_select 0, %s7, %s5
  // Predicated region
  $region2: #{flow_generator_forward.40} parent=0 // pred_check
    _
  $region3: #{flow_generator_forward.40} parent=0 // pred_check_branch
    %10 = sbr.rel (0) target = $region5
  $region4: #{flow_generator_forward.40} parent=0 // pred_region
    _
  $region5: #{flow_generator_forward.40} parent=0 // pred_fallthru
    _
  // Predicated region
  $region6: #{flow_generator_forward.40} parent=0 // pred_check
    _
  $region7: #{flow_generator_forward.40} parent=0 // pred_check_branch
    %12 = sbr.rel (0) target = $region9
  $region8: #{flow_generator_forward.40} parent=0 // pred_region
    _
  $region9: #{flow_generator_forward.40} parent=0 // pred_fallthru
    _
  // Predicated region
  $region10: #{flow_generator_forward.40} parent=0 // pred_check
    _
  $region11: #{flow_generator_forward.40} parent=0 // pred_check_branch
    %14 = sbr.rel (0) target = $region13
  $region12: #{flow_generator_forward.40} parent=0 // pred_region
    _
  $region13: #{flow_generator_forward.40} parent=0 // pred_fallthru
    _
  // Predicated region
  $region14: #{flow_generator_forward.40} parent=0 // pred_check
    _
  $region15: #{flow_generator_forward.40} parent=0 // pred_check_branch
    %16 = sbr.rel (0) target = $region17
  $region16: #{flow_generator_forward.40} parent=0 // pred_region
    _
  $region17: #{flow_generator_forward.40} parent=0 // pred_fallthru
    _
  %v18 = vld [vmem:[%s0] sm:$0xff]
  %v19 = vld [vmem:[%s0 + $0x8] sm:$0xff]
  %v20 = vld [vmem:[%s0 + $0x10] sm:$0xff]
  %v21 = vld [vmem:[%s0 + $0x18] sm:$0xff]
  %v22 = vld [vmem:[%s3] sm:$0x1]
  %v24 = vperm.slane %v22, 0
  %v26 = vmul.f32 %v18, %v24
  %v27 = vmul.f32 %v19, %v24
  %v28 = vmul.f32 %v20, %v24
  %v29 = vmul.f32 %v21, %v24
  %v30 = vld [vmem:[%s1] sm:$0xff]
  %v31 = vld [vmem:[%s1 + $0x8] sm:$0xff]
  %v32 = vld [vmem:[%s1 + $0x10] sm:$0xff]
  %v33 = vld [vmem:[%s1 + $0x18] sm:$0xff]
  %v34 = vld [vmem:[%s1 + $0x20] sm:$0xff]
  %v35 = vld [vmem:[%s1 + $0x28] sm:$0xff]
  %v36 = vld [vmem:[%s1 + $0x30] sm:$0xff]
  %v37 = vld [vmem:[%s1 + $0x38] sm:$0xff]
  %v38 = vld [vmem:[%s1 + $0x40] sm:$0xff]
  %v39 = vld [vmem:[%s1 + $0x48] sm:$0xff]
  %v40 = vld [vmem:[%s1 + $0x50] sm:$0xff]
  %v41 = vld [vmem:[%s1 + $0x58] sm:$0xff]
  %v42 = vpack.c.bf16 %v31, %v30
  %v43 = vpack.c.bf16 %v33, %v32
  %v44 = vpack.c.bf16 %v35, %v34
  %v45 = vpack.c.bf16 %v37, %v36
  %v46 = vpack.c.bf16 %v39, %v38
  %v47 = vpack.c.bf16 %v41, %v40
  %v48 = vpack.c.bf16 %v27, %v26
  %v49 = vpack.c.bf16 %v29, %v28
  %v50 = vld [vmem:[%s2] sm:$0xff]
  %v51 = vld [vmem:[%s2 + $0x8] sm:$0xff]
  %v52 = vld [vmem:[%s2 + $0x10] sm:$0xff]
  %v53 = vld [vmem:[%s2 + $0x18] sm:$0xff]
  %v54 = vld [vmem:[%s2 + $0x20] sm:$0xff]
  %v55 = vld [vmem:[%s2 + $0x28] sm:$0xff]
  %v56 = vld [vmem:[%s2 + $0x30] sm:$0xff]
  %v57 = vld [vmem:[%s2 + $0x38] sm:$0xff]
  %v58 = vld [vmem:[%s2 + $0x40] sm:$0xff]
  %v59 = vld [vmem:[%s2 + $0x48] sm:$0xff]
  %v60 = vld [vmem:[%s2 + $0x50] sm:$0xff]
  %v61 = vld [vmem:[%s2 + $0x58] sm:$0xff]
  %63 = vset.pattern.permute.xlu0 0
  %64 = vperm.xlu0 %63, %v50
  %v65 = vpop.permute.xlu0 %64
  %68 = vset.pattern.permute.xlu0 0
  %69 = vperm.xlu0 %68, %v51
  %v70 = vpop.permute.xlu0 %69
  %73 = vset.pattern.permute.xlu0 0
  %74 = vperm.xlu0 %73, %v52
  %v75 = vpop.permute.xlu0 %74
  %78 = vset.pattern.permute.xlu0 0
  %79 = vperm.xlu0 %78, %v53
  %v80 = vpop.permute.xlu0 %79
  %83 = vset.pattern.permute.xlu0 0
  %84 = vperm.xlu0 %83, %v54
  %v85 = vpop.permute.xlu0 %84
  %88 = vset.pattern.permute.xlu0 0
  %89 = vperm.xlu0 %88, %v55
  %v90 = vpop.permute.xlu0 %89
  %93 = vset.pattern.permute.xlu0 0
  %94 = vperm.xlu0 %93, %v56
  %v95 = vpop.permute.xlu0 %94
  %98 = vset.pattern.permute.xlu0 0
  %99 = vperm.xlu0 %98, %v57
  %v100 = vpop.permute.xlu0 %99
  %103 = vset.pattern.permute.xlu0 0
  %104 = vperm.xlu0 %103, %v58
  %v105 = vpop.permute.xlu0 %104
  %108 = vset.pattern.permute.xlu0 0
  %109 = vperm.xlu0 %108, %v59
  %v110 = vpop.permute.xlu0 %109
  %113 = vset.pattern.permute.xlu0 0
  %114 = vperm.xlu0 %113, %v60
  %v115 = vpop.permute.xlu0 %114
  %118 = vset.pattern.permute.xlu0 0
  %119 = vperm.xlu0 %118, %v61
  %v120 = vpop.permute.xlu0 %119
  %vm122 = vcmask 261120
  %v124 = vsel %vm122, %v42, 0
  %v127 = vsel %vm122, %v43, 0
  %v130 = vsel %vm122, %v44, 0
  %v133 = vsel %vm122, %v45, 0
  %v136 = vsel %vm122, %v46, 0
  %v139 = vsel %vm122, %v47, 0
  %141 = vmatpush.bf16.msra.mxu0 0
  %142 = vmatpush.bf16.msra.mxu0 0
  %143 = vmatpush.bf16.msra.mxu0 0
  %144 = vmatpush.bf16.msra.mxu0 0
  %145 = vmatpush.bf16.msra.mxu0 0
  %146 = vmatpush.bf16.msra.mxu0 0
  %147 = vmatpush.bf16.msra.mxu0 %v49
  %148 = vmatpush.bf16.msra.mxu0 %v48
  %149 = vmatmul.bf16.gmra.mxu0 %v124
  %v150 = vpop.f32.mrf.mxu0
  %v151 = vadd.f32 %v65, %v150
  %v152 = vpop.f32.mrf.mxu0
  %v153 = vadd.f32 %v70, %v152
  %154 = vmatmul.bf16.gmra.mxu0 %v127
  %v155 = vpop.f32.mrf.mxu0
  %v156 = vadd.f32 %v75, %v155
  %v157 = vpop.f32.mrf.mxu0
  %v158 = vadd.f32 %v80, %v157
  %159 = vmatmul.bf16.gmra.mxu0 %v130
  %v160 = vpop.f32.mrf.mxu0
  %v161 = vadd.f32 %v85, %v160
  %v162 = vpop.f32.mrf.mxu0
  %v163 = vadd.f32 %v90, %v162
  %164 = vmatmul.bf16.gmra.mxu0 %v133
  %v165 = vpop.f32.mrf.mxu0
  %v166 = vadd.f32 %v95, %v165
  %v167 = vpop.f32.mrf.mxu0
  %v168 = vadd.f32 %v100, %v167
  %169 = vmatmul.bf16.gmra.mxu0 %v136
  %v170 = vpop.f32.mrf.mxu0
  %v171 = vadd.f32 %v105, %v170
  %v172 = vpop.f32.mrf.mxu0
  %v173 = vadd.f32 %v110, %v172
  %174 = vmatmul.bf16.gmra.mxu0 %v139
  %v175 = vpop.f32.mrf.mxu0
  %v176 = vadd.f32 %v115, %v175
  %v177 = vpop.f32.mrf.mxu0
  %v178 = vadd.f32 %v120, %v177
  %179 = vdwg.mxu0
  %180 = vst.msk [vmem:[%s4] sm:$0xff] %vm122, %v151
  %181 = vst.msk [vmem:[%s4 + $0x8] sm:$0xff] %vm122, %v153
  %182 = vst.msk [vmem:[%s4 + $0x10] sm:$0xff] %vm122, %v156
  %183 = vst.msk [vmem:[%s4 + $0x18] sm:$0xff] %vm122, %v158
  %184 = vst.msk [vmem:[%s4 + $0x20] sm:$0xff] %vm122, %v161
  %185 = vst.msk [vmem:[%s4 + $0x28] sm:$0xff] %vm122, %v163
  %186 = vst.msk [vmem:[%s4 + $0x30] sm:$0xff] %vm122, %v166
  %187 = vst.msk [vmem:[%s4 + $0x38] sm:$0xff] %vm122, %v168
  %188 = vst.msk [vmem:[%s4 + $0x40] sm:$0xff] %vm122, %v171
  %189 = vst.msk [vmem:[%s4 + $0x48] sm:$0xff] %vm122, %v173
  %190 = vst.msk [vmem:[%s4 + $0x50] sm:$0xff] %vm122, %v176
  %191 = vst.msk [vmem:[%s4 + $0x58] sm:$0xff] %vm122, %v178
  // Predicated region
  $region18: #{flow_generator_forward.40} parent=0 // pred_check
    _
  $region19: #{flow_generator_forward.40} parent=0 // pred_check_branch
    %193 = sbr.rel (0) target = $region21
  $region20: #{flow_generator_forward.40} parent=0 // pred_region
    _
  $region21: #{flow_generator_forward.40} parent=0 // pred_fallthru
    _
  // Predicated region
  $region22: #{flow_generator_forward.40} parent=0 // pred_check
    _
  $region23: #{flow_generator_forward.40} parent=0 // pred_check_branch
    %195 = sbr.rel (0) target = $region25
  $region24: #{flow_generator_forward.40} parent=0 // pred_region
    _
  $region25: #{flow_generator_forward.40} parent=0 // pred_fallthru
    _

// kernel: flow_generator_forward.43
$region0: #{flow_generator_forward.43}
  #allocation0 [shape = 'u32[]', space=smem, size = 0x4, offset = 0x4, fixed_abs, tag = 'smem constant byte address 0x4 - core index']
  #allocation1 [shape = 'u32[72,128]{1,0:T(1,128)}', space=vmem, size = 0x9000, scoped, tag = 'internal scratch']
  %s0 = inlined_call_operand.vmem [shape: f32[32,32], index: 0, kind: input, shape index: {}]
  %s1 = inlined_call_operand.vmem [shape: f32[32,1], index: 1, kind: input, shape index: {}]
  %s2 = inlined_call_operand.vmem [shape: f32[32,1], index: 2, kind: input, shape index: {}]
  %s3 = inlined_call_operand.vmem [shape: f32[32,32], index: 3, kind: input, shape index: {}]
  %s4 = inlined_call_operand.vmem [shape: f32[1,32], index: 4, kind: input, shape index: {}]
  %s5 = inlined_call_operand.vmem [shape: f32[32,32], index: 5, kind: output, shape index: {}]
  %s6 = sld [smem:[#allocation0]]
  $region30: #{flow_generator_forward.43} parent=0
    _
  %s8 = ssub.s32 1, %s6
  %s9 = scalar_select 0, %s8, %s6
  // Predicated region
  $region2: #{flow_generator_forward.43} parent=0 // pred_check
    _
  $region3: #{flow_generator_forward.43} parent=0 // pred_check_branch
    %11 = sbr.rel (0) target = $region5
  $region4: #{flow_generator_forward.43} parent=0 // pred_region
    _
  $region5: #{flow_generator_forward.43} parent=0 // pred_fallthru
    _
  // Predicated region
  $region6: #{flow_generator_forward.43} parent=0 // pred_check
    _
  $region7: #{flow_generator_forward.43} parent=0 // pred_check_branch
    %13 = sbr.rel (0) target = $region9
  $region8: #{flow_generator_forward.43} parent=0 // pred_region
    _
  $region9: #{flow_generator_forward.43} parent=0 // pred_fallthru
    _
  // Predicated region
  $region10: #{flow_generator_forward.43} parent=0 // pred_check
    _
  $region11: #{flow_generator_forward.43} parent=0 // pred_check_branch
    %15 = sbr.rel (0) target = $region13
  $region12: #{flow_generator_forward.43} parent=0 // pred_region
    _
  $region13: #{flow_generator_forward.43} parent=0 // pred_fallthru
    _
  // Predicated region
  $region14: #{flow_generator_forward.43} parent=0 // pred_check
    _
  $region15: #{flow_generator_forward.43} parent=0 // pred_check_branch
    %17 = sbr.rel (0) target = $region17
  $region16: #{flow_generator_forward.43} parent=0 // pred_region
    _
  $region17: #{flow_generator_forward.43} parent=0 // pred_fallthru
    _
  // Predicated region
  $region18: #{flow_generator_forward.43} parent=0 // pred_check
    _
  $region19: #{flow_generator_forward.43} parent=0 // pred_check_branch
    %19 = sbr.rel (0) target = $region21
  $region20: #{flow_generator_forward.43} parent=0 // pred_region
    _
  $region21: #{flow_generator_forward.43} parent=0 // pred_fallthru
    _
  %v20 = vld [vmem:[%s0] sm:$0xff]
  %v21 = vld [vmem:[%s0 + $0x8] sm:$0xff]
  %v22 = vld [vmem:[%s0 + $0x10] sm:$0xff]
  %v23 = vld [vmem:[%s0 + $0x18] sm:$0xff]
  %v24 = vld [vmem:[%s4] sm:$0x1]
  %v26 = vperm.slane %v24, 0
  %v28 = vmul.f32 %v20, %v26
  %v29 = vmul.f32 %v21, %v26
  %v30 = vmul.f32 %v22, %v26
  %v31 = vmul.f32 %v23, %v26
  %v32 = vld [vmem:[%s3] sm:$0xff]
  %v33 = vld [vmem:[%s3 + $0x8] sm:$0xff]
  %v34 = vld [vmem:[%s3 + $0x10] sm:$0xff]
  %v35 = vld [vmem:[%s3 + $0x18] sm:$0xff]
  %v36 = vadd.f32 %v28, %v32
  %v37 = vadd.f32 %v29, %v33
  %v38 = vadd.f32 %v30, %v34
  %v39 = vadd.f32 %v31, %v35
  %vm40 = vcmask 261120
  %v41 = vsel %vm40, %v36, 0.0
  %v42 = vsel %vm40, %v37, 0.0
  %v43 = vadd.f32 %v41, %v42
  %v44 = vsel %vm40, %v38, 0.0
  %v45 = vadd.f32 %v43, %v44
  %v46 = vsel %vm40, %v39, 0.0
  %v47 = vadd.f32 %v45, %v46
  %v48 = vrot.slane %v47, 4
  %v49 = vadd.f32 %v47, %v48
  %v50 = vrot.slane %v49, 2
  %v51 = vadd.f32 %v49, %v50
  %v52 = vrot.slane %v51, 1
  %v53 = vadd.f32 %v51, %v52
  %v54 = vrcp.pop 32.0
  %v55 = vmul.f32 32.0, %v54
  %v56 = vsub.f32 1.0, %v55
  %v57 = vmul.f32 %v54, %v56
  %v58 = vadd.f32 %v54, %v57
  %vm59 = vweird.f32 %v54
  %v60 = vsel %vm59, %v54, %v58
  %v61 = vmul.f32 %v53, %v60
  %v62 = vsub.f32 %v36, %v61
  %v63 = vsub.f32 %v37, %v61
  %v64 = vsub.f32 %v38, %v61
  %v65 = vsub.f32 %v39, %v61
  %v66 = vmul.f32 %v62, %v62
  %v67 = vmul.f32 %v63, %v63
  %v68 = vmul.f32 %v64, %v64
  %v69 = vmul.f32 %v65, %v65
  %v70 = vsel %vm40, %v66, 0.0
  %v71 = vsel %vm40, %v67, 0.0
  %v72 = vadd.f32 %v70, %v71
  %v73 = vsel %vm40, %v68, 0.0
  %v74 = vadd.f32 %v72, %v73
  %v75 = vsel %vm40, %v69, 0.0
  %v76 = vadd.f32 %v74, %v75
  %v77 = vrot.slane %v76, 4
  %v78 = vadd.f32 %v76, %v77
  %v79 = vrot.slane %v78, 2
  %v80 = vadd.f32 %v78, %v79
  %v81 = vrot.slane %v80, 1
  %v82 = vadd.f32 %v80, %v81
  %v83 = vmul.f32 %v82, %v60
  %v84 = vadd.f32 %v83, 0.0001
  %v85 = vrsqrt.pop %v84
  %v86 = vmul.f32 %v85, %v84
  %v87 = vmul.f32 %v86, %v85
  %v88 = vmul.f32 0.5, %v87
  %v89 = vsub.f32 1.5, %v88
  %v90 = vmul.f32 %v85, %v89
  %vm91 = vweird.f32 %v84
  %vm92 = vweird.f32 %v85
  %vm93 = vmor %vm91, %vm92
  %v94 = vsel %vm93, %v85, %v90
  %v95 = vmul.f32 %v62, %v94
  %v96 = vmul.f32 %v63, %v94
  %v97 = vmul.f32 %v64, %v94
  %v98 = vmul.f32 %v65, %v94
  %v99 = vld [vmem:[%s1] sm:$0xff]
  %v100 = vld [vmem:[%s1 + $0x8] sm:$0xff]
  %v101 = vld [vmem:[%s1 + $0x10] sm:$0xff]
  %v102 = vld [vmem:[%s1 + $0x18] sm:$0xff]
  %104 = vset.pattern.permute.xlu0 0
  %105 = vperm.xlu0 %104, %v99
  %v106 = vpop.permute.xlu0 %105
  %109 = vset.pattern.permute.xlu0 0
  %110 = vperm.xlu0 %109, %v100
  %v111 = vpop.permute.xlu0 %110
  %114 = vset.pattern.permute.xlu0 0
  %115 = vperm.xlu0 %114, %v101
  %v116 = vpop.permute.xlu0 %115
  %119 = vset.pattern.permute.xlu0 0
  %120 = vperm.xlu0 %119, %v102
  %v121 = vpop.permute.xlu0 %120
  %v123 = vmul.f32 %v95, %v106
  %v124 = vmul.f32 %v96, %v111
  %v125 = vmul.f32 %v97, %v116
  %v126 = vmul.f32 %v98, %v121
  %v127 = vld [vmem:[%s2] sm:$0xff]
  %v128 = vld [vmem:[%s2 + $0x8] sm:$0xff]
  %v129 = vld [vmem:[%s2 + $0x10] sm:$0xff]
  %v130 = vld [vmem:[%s2 + $0x18] sm:$0xff]
  %132 = vset.pattern.permute.xlu0 0
  %133 = vperm.xlu0 %132, %v127
  %v134 = vpop.permute.xlu0 %133
  %137 = vset.pattern.permute.xlu0 0
  %138 = vperm.xlu0 %137, %v128
  %v139 = vpop.permute.xlu0 %138
  %142 = vset.pattern.permute.xlu0 0
  %143 = vperm.xlu0 %142, %v129
  %v144 = vpop.permute.xlu0 %143
  %147 = vset.pattern.permute.xlu0 0
  %148 = vperm.xlu0 %147, %v130
  %v149 = vpop.permute.xlu0 %148
  %v151 = vadd.f32 %v123, %v134
  %v152 = vadd.f32 %v124, %v139
  %v153 = vadd.f32 %v125, %v144
  %v154 = vadd.f32 %v126, %v149
  %155 = vst.msk [vmem:[%s5] sm:$0xff] %vm40, %v151
  %156 = vst.msk [vmem:[%s5 + $0x8] sm:$0xff] %vm40, %v152
  %157 = vst.msk [vmem:[%s5 + $0x10] sm:$0xff] %vm40, %v153
  %158 = vst.msk [vmem:[%s5 + $0x18] sm:$0xff] %vm40, %v154
  // Predicated region
  $region22: #{flow_generator_forward.43} parent=0 // pred_check
    _
  $region23: #{flow_generator_forward.43} parent=0 // pred_check_branch
    %160 = sbr.rel (0) target = $region25
  $region24: #{flow_generator_forward.43} parent=0 // pred_region
    _
  $region25: #{flow_generator_forward.43} parent=0 // pred_fallthru
    _
  // Predicated region
  $region26: #{flow_generator_forward.43} parent=0 // pred_check
    _
  $region27: #{flow_generator_forward.43} parent=0 // pred_check_branch
    %162 = sbr.rel (0) target = $region29
  $region28: #{flow_generator_forward.43} parent=0 // pred_region
    _
  $region29: #{flow_generator_forward.43} parent=0 // pred_fallthru
    _

// kernel: flow_generator_forward.41
$region0: #{flow_generator_forward.41}
  #allocation0 [shape = 'u32[]', space=smem, size = 0x4, offset = 0x4, fixed_abs, tag = 'smem constant byte address 0x4 - core index']
  #allocation1 [shape = 'u32[72,128]{1,0:T(1,128)}', space=vmem, size = 0x9000, scoped, tag = 'internal scratch']
  #allocation2 [shape = 's32[1]{0}', space=sflag, size = 0x4, scoped, tag = 'scoped memory for flow_generator_forward.41']
  #allocation3 [shape = 'u8[512]{0}', space=smem, size = 0x200, scoped, tag = 'prefetched SMEM operand 0']
  %s0 = inlined_call_operand.vmem [shape: s32[2], index: 0, kind: input, shape index: {}]
  %s1 = inlined_call_operand.vmem [shape: f32[96,32], index: 1, kind: input, shape index: {}]
  %s2 = inlined_call_operand.vmem [shape: f32[64,16], index: 2, kind: output, shape index: {}]
  %s3 = sld [smem:[#allocation0]]
  $region14: #{flow_generator_forward.41} parent=0
    _
  %s5 = ssub.s32 1, %s3
  %s6 = scalar_select 0, %s5, %s3
  %s8 = sshll.u32 %s0, 4
  %s9 = int_to_ptr.vmem [resolvable:$true] %s8
  %11 = dma.vmem_to_smem %s9, 16, [#allocation3], [#allocation2]
  %13 = dma.done [#allocation2], 16
  %14 = sfence
  // Predicated region
  $region2: #{flow_generator_forward.41} parent=0 // pred_check
    _
  $region3: #{flow_generator_forward.41} parent=0 // pred_check_branch
    %16 = sbr.rel (0) target = $region5
  $region4: #{flow_generator_forward.41} parent=0 // pred_region
    _
  $region5: #{flow_generator_forward.41} parent=0 // pred_fallthru
    _
  %v18 = vld [vmem:[%s1] sm:$0xff]
  %v19 = vld [vmem:[%s1 + $0x8] sm:$0xff]
  %v20 = vld [vmem:[%s1 + $0x10] sm:$0xff]
  %v21 = vld [vmem:[%s1 + $0x18] sm:$0xff]
  %v22 = vld [vmem:[%s1 + $0x20] sm:$0xff]
  %v23 = vld [vmem:[%s1 + $0x28] sm:$0xff]
  %v24 = vld [vmem:[%s1 + $0x30] sm:$0xff]
  %v25 = vld [vmem:[%s1 + $0x38] sm:$0xff]
  %v26 = vld [vmem:[%s1 + $0x40] sm:$0xff]
  %v27 = vld [vmem:[%s1 + $0x48] sm:$0xff]
  %v28 = vld [vmem:[%s1 + $0x50] sm:$0xff]
  %v29 = vld [vmem:[%s1 + $0x58] sm:$0xff]
  %v30 = vlaneseq
  %v31 = vshrl.u32 %v30, 7
  %v32 = vadd.s32 %v31, 8
  %v33 = vlaneseq
  %v34 = vand.u32 %v33, 127
  %s35 = sld [smem:[#allocation3]]
  %v36 = vstv %s35
  %vm37 = vcmp.lt.s32.totalorder %v31, %v36
  %vm38 = vcmp.lt.s32.totalorder %v32, %v36
  %vm39 = vcmp.lt.s32.totalorder %v34, %v36
  %vm40 = vmand %vm37, %vm39
  %vm41 = vmand %vm38, %vm39
  %v42 = vpack.c.bf16 %v19, %v18
  %v43 = vpack.c.bf16 %v23, %v22
  %44 = vxpose.xlu0.c.b16.start [1/8] %v42, 128
  %45 = vxpose.xlu0.c.b16.cont [2/8] 0, 128
  %46 = vxpose.xlu0.c.b16.cont [3/8] 0, 128
  %47 = vxpose.xlu0.c.b16.cont [4/8] 0, 128
  %48 = vxpose.xlu0.c.b16.cont [5/8] 0, 128
  %49 = vxpose.xlu0.c.b16.cont [6/8] 0, 128
  %50 = vxpose.xlu0.c.b16.cont [7/8] 0, 128
  %51 = vxpose.xlu0.c.b16.end [8/8] 0, 128
  %v52 = vpop.trf.xlu0
  %v53 = vpop.trf.xlu0
  %v54 = vpop.trf.xlu0
  %v55 = vpop.trf.xlu0
  %v56 = vpop.trf.xlu0
  %v57 = vpop.trf.xlu0
  %v58 = vpop.trf.xlu0
  %v59 = vpop.trf.xlu0
  %vm60 = vcmask 130048
  %v62 = vsel %vm60, %v52, 0
  %64 = vmatpush.bf16.msra.mxu0 0
  %65 = vmatpush.bf16.msra.mxu0 0
  %66 = vmatpush.bf16.msra.mxu0 0
  %67 = vmatpush.bf16.msra.mxu0 0
  %68 = vmatpush.bf16.msra.mxu0 0
  %69 = vmatpush.bf16.msra.mxu0 0
  %70 = vmatpush.bf16.msra.mxu0 0
  %71 = vmatpush.bf16.msra.mxu0 %v43
  %72 = vmatmul.bf16.gmra.mxu0 %v62
  %v73 = vpop.f32.mrf.mxu0
  %v74 = vadd.f32 0.0, %v73
  %v75 = vpop.f32.mrf.mxu0
  %v76 = vadd.f32 0.0, %v75
  %77 = vdwg.mxu0
  %v78 = vmul.f32 %v74, 0.25
  %v79 = vmul.f32 %v76, 0.25
  %v80 = vsel %vm40, %v78, -10000.0
  %v81 = vsel %vm41, %v79, -10000.0
  %v82 = vsel %vm60, %v80, -inf
  %83 = vmax.xlane.f32.xlu0 %v82
  %v84 = vpop.xlane.xlu0 %83
  %v85 = vsel %vm60, %v81, -inf
  %86 = vmax.xlane.f32.xlu0 %v85
  %v87 = vpop.xlane.xlu0 %86
  %v88 = vsub.f32 %v80, %v84
  %v89 = vsub.f32 %v81, %v87
  %v90 = vmul.f32 %v88, 1.442695
  %v91 = vpow.pop %v90
  %v92 = vmul.f32 %v89, 1.442695
  %v93 = vpow.pop %v92
  %v94 = vsel %vm60, %v91, 0.0
  %95 = vadd.xlane.f32.xlu0 %v94
  %v96 = vpop.xlane.xlu0 %95
  %v97 = vsel %vm60, %v93, 0.0
  %98 = vadd.xlane.f32.xlu0 %v97
  %v99 = vpop.xlane.xlu0 %98
  %v100 = vrcp.pop %v96
  %v101 = vrcp.pop %v99
  %v102 = vmul.f32 %v91, %v100
  %v103 = vmul.f32 %v93, %v101
  %v104 = vpack.c.bf16 %v27, %v26
  %v105 = vpack.c.bf16 %v103, %v102
  %v107 = vsel %vm60, %v104, 0
  %v110 = vsel %vm60, %v105, 0
  %112 = vmatpush.bf16.xpose.msra.mxu0 0
  %113 = vmatpush.bf16.xpose.msra.mxu0 0
  %114 = vmatpush.bf16.xpose.msra.mxu0 0
  %115 = vmatpush.bf16.xpose.msra.mxu0 0
  %116 = vmatpush.bf16.xpose.msra.mxu0 0
  %117 = vmatpush.bf16.xpose.msra.mxu0 0
  %118 = vmatpush.bf16.xpose.msra.mxu0 0
  %119 = vmatpush.bf16.xpose.msra.mxu0 %v110
  %120 = vmatmul.bf16.gmra.mxu0 %v107
  %v121 = vpop.f32.mrf.mxu0
  %v122 = vadd.f32 0.0, %v121
  %v123 = vpop.f32.mrf.mxu0
  %v124 = vadd.f32 0.0, %v123
  %125 = vdwg.mxu0
  %126 = vst.msk [vmem:[%s2] sm:$0xff] %vm60, %v122
  %127 = vst.msk [vmem:[%s2 + $0x8] sm:$0xff] %vm60, %v124
  %v128 = vpack.c.bf16 %v21, %v20
  %v129 = vpack.c.bf16 %v25, %v24
  %130 = vxpose.xlu0.c.b16.start [1/8] %v128, 128
  %131 = vxpose.xlu0.c.b16.cont [2/8] 0, 128
  %132 = vxpose.xlu0.c.b16.cont [3/8] 0, 128
  %133 = vxpose.xlu0.c.b16.cont [4/8] 0, 128
  %134 = vxpose.xlu0.c.b16.cont [5/8] 0, 128
  %135 = vxpose.xlu0.c.b16.cont [6/8] 0, 128
  %136 = vxpose.xlu0.c.b16.cont [7/8] 0, 128
  %137 = vxpose.xlu0.c.b16.end [8/8] 0, 128
  %v138 = vpop.trf.xlu0
  %v139 = vpop.trf.xlu0
  %v140 = vpop.trf.xlu0
  %v141 = vpop.trf.xlu0
  %v142 = vpop.trf.xlu0
  %v143 = vpop.trf.xlu0
  %v144 = vpop.trf.xlu0
  %v145 = vpop.trf.xlu0
  %v147 = vsel %vm60, %v138, 0
  %149 = vmatpush.bf16.msra.mxu0 0
  %150 = vmatpush.bf16.msra.mxu0 0
  %151 = vmatpush.bf16.msra.mxu0 0
  %152 = vmatpush.bf16.msra.mxu0 0
  %153 = vmatpush.bf16.msra.mxu0 0
  %154 = vmatpush.bf16.msra.mxu0 0
  %155 = vmatpush.bf16.msra.mxu0 0
  %156 = vmatpush.bf16.msra.mxu0 %v129
  %157 = vmatmul.bf16.gmra.mxu0 %v147
  %v158 = vpop.f32.mrf.mxu0
  %v159 = vadd.f32 0.0, %v158
  %v160 = vpop.f32.mrf.mxu0
  %v161 = vadd.f32 0.0, %v160
  %162 = vdwg.mxu0
  %v163 = vmul.f32 %v159, 0.25
  %v164 = vmul.f32 %v161, 0.25
  %v165 = vsel %vm40, %v163, -10000.0
  %v166 = vsel %vm41, %v164, -10000.0
  %v167 = vsel %vm60, %v165, -inf
  %168 = vmax.xlane.f32.xlu0 %v167
  %v169 = vpop.xlane.xlu0 %168
  %v170 = vsel %vm60, %v166, -inf
  %171 = vmax.xlane.f32.xlu0 %v170
  %v172 = vpop.xlane.xlu0 %171
  %v173 = vsub.f32 %v165, %v169
  %v174 = vsub.f32 %v166, %v172
  %v175 = vmul.f32 %v173, 1.442695
  %v176 = vpow.pop %v175
  %v177 = vmul.f32 %v174, 1.442695
  %v178 = vpow.pop %v177
  %v179 = vsel %vm60, %v176, 0.0
  %180 = vadd.xlane.f32.xlu0 %v179
  %v181 = vpop.xlane.xlu0 %180
  %v182 = vsel %vm60, %v178, 0.0
  %183 = vadd.xlane.f32.xlu0 %v182
  %v184 = vpop.xlane.xlu0 %183
  %v185 = vrcp.pop %v181
  %v186 = vrcp.pop %v184
  %v187 = vmul.f32 %v176, %v185
  %v188 = vmul.f32 %v178, %v186
  %v189 = vpack.c.bf16 %v29, %v28
  %v190 = vpack.c.bf16 %v188, %v187
  %v192 = vsel %vm60, %v189, 0
  %v195 = vsel %vm60, %v190, 0
  %197 = vmatpush.bf16.xpose.msra.mxu0 0
  %198 = vmatpush.bf16.xpose.msra.mxu0 0
  %199 = vmatpush.bf16.xpose.msra.mxu0 0
  %200 = vmatpush.bf16.xpose.msra.mxu0 0
  %201 = vmatpush.bf16.xpose.msra.mxu0 0
  %202 = vmatpush.bf16.xpose.msra.mxu0 0
  %203 = vmatpush.bf16.xpose.msra.mxu0 0
  %204 = vmatpush.bf16.xpose.msra.mxu0 %v195
  %205 = vmatmul.bf16.gmra.mxu0 %v192
  %v206 = vpop.f32.mrf.mxu0
  %v207 = vadd.f32 0.0, %v206
  %v208 = vpop.f32.mrf.mxu0
  %v209 = vadd.f32 0.0, %v208
  %210 = vdwg.mxu0
  %211 = vst.msk [vmem:[%s2 + $0x10] sm:$0xff] %vm60, %v207
  %212 = vst.msk [vmem:[%s2 + $0x18] sm:$0xff] %vm60, %v209
  %s213 = sld [smem:[#allocation3 + $0x1]]
  %v214 = vstv %s213
  %vm215 = vcmp.lt.s32.totalorder %v31, %v214
  %vm216 = vcmp.lt.s32.totalorder %v32, %v214
  %vm217 = vcmp.lt.s32.totalorder %v34, %v214
  %vm218 = vmand %vm215, %vm217
  %vm219 = vmand %vm216, %vm217
  %221 = vrot.lane.b32.xlu0 %v42, 112
  %v222 = vpop.permute.xlu0 %221
  %224 = vxpose.xlu0.c.b16.start [1/8] %v222, 128
  %225 = vxpose.xlu0.c.b16.cont [2/8] 0, 128
  %226 = vxpose.xlu0.c.b16.cont [3/8] 0, 128
  %227 = vxpose.xlu0.c.b16.cont [4/8] 0, 128
  %228 = vxpose.xlu0.c.b16.cont [5/8] 0, 128
  %229 = vxpose.xlu0.c.b16.cont [6/8] 0, 128
  %230 = vxpose.xlu0.c.b16.cont [7/8] 0, 128
  %231 = vxpose.xlu0.c.b16.end [8/8] 0, 128
  %v232 = vpop.trf.xlu0
  %v233 = vpop.trf.xlu0
  %v234 = vpop.trf.xlu0
  %v235 = vpop.trf.xlu0
  %v236 = vpop.trf.xlu0
  %v237 = vpop.trf.xlu0
  %v238 = vpop.trf.xlu0
  %v239 = vpop.trf.xlu0
  %241 = vrot.lane.b32.xlu0 %v43, 112
  %v242 = vpop.permute.xlu0 %241
  %v245 = vsel %vm60, %v232, 0
  %247 = vmatpush.bf16.msra.mxu0 0
  %248 = vmatpush.bf16.msra.mxu0 0
  %249 = vmatpush.bf16.msra.mxu0 0
  %250 = vmatpush.bf16.msra.mxu0 0
  %251 = vmatpush.bf16.msra.mxu0 0
  %252 = vmatpush.bf16.msra.mxu0 0
  %253 = vmatpush.bf16.msra.mxu0 0
  %254 = vmatpush.bf16.msra.mxu0 %v242
  %255 = vmatmul.bf16.gmra.mxu0 %v245
  %v256 = vpop.f32.mrf.mxu0
  %v257 = vadd.f32 0.0, %v256
  %v258 = vpop.f32.mrf.mxu0
  %v259 = vadd.f32 0.0, %v258
  %260 = vdwg.mxu0
  %v261 = vmul.f32 %v257, 0.25
  %v262 = vmul.f32 %v259, 0.25
  %v263 = vsel %vm218, %v261, -10000.0
  %v264 = vsel %vm219, %v262, -10000.0
  %v265 = vsel %vm60, %v263, -inf
  %266 = vmax.xlane.f32.xlu0 %v265
  %v267 = vpop.xlane.xlu0 %266
  %v268 = vsel %vm60, %v264, -inf
  %269 = vmax.xlane.f32.xlu0 %v268
  %v270 = vpop.xlane.xlu0 %269
  %v271 = vsub.f32 %v263, %v267
  %v272 = vsub.f32 %v264, %v270
  %v273 = vmul.f32 %v271, 1.442695
  %v274 = vpow.pop %v273
  %v275 = vmul.f32 %v272, 1.442695
  %v276 = vpow.pop %v275
  %v277 = vsel %vm60, %v274, 0.0
  %278 = vadd.xlane.f32.xlu0 %v277
  %v279 = vpop.xlane.xlu0 %278
  %v280 = vsel %vm60, %v276, 0.0
  %281 = vadd.xlane.f32.xlu0 %v280
  %v282 = vpop.xlane.xlu0 %281
  %v283 = vrcp.pop %v279
  %v284 = vrcp.pop %v282
  %v285 = vmul.f32 %v274, %v283
  %v286 = vmul.f32 %v276, %v284
  %v287 = vpack.c.bf16 %v286, %v285
  %289 = vrot.lane.b32.xlu0 %v104, 112
  %v290 = vpop.permute.xlu0 %289
  %v292 = vsel %vm60, %v290, 0
  %v295 = vsel %vm60, %v287, 0
  %297 = vmatpush.bf16.xpose.msra.mxu0 0
  %298 = vmatpush.bf16.xpose.msra.mxu0 0
  %299 = vmatpush.bf16.xpose.msra.mxu0 0
  %300 = vmatpush.bf16.xpose.msra.mxu0 0
  %301 = vmatpush.bf16.xpose.msra.mxu0 0
  %302 = vmatpush.bf16.xpose.msra.mxu0 0
  %303 = vmatpush.bf16.xpose.msra.mxu0 0
  %304 = vmatpush.bf16.xpose.msra.mxu0 %v295
  %305 = vmatmul.bf16.gmra.mxu0 %v292
  %v306 = vpop.f32.mrf.mxu0
  %v307 = vadd.f32 0.0, %v306
  %v308 = vpop.f32.mrf.mxu0
  %v309 = vadd.f32 0.0, %v308
  %310 = vdwg.mxu0
  %311 = vst.msk [vmem:[%s2 + $0x20] sm:$0xff] %vm60, %v307
  %312 = vst.msk [vmem:[%s2 + $0x28] sm:$0xff] %vm60, %v309
  %314 = vrot.lane.b32.xlu0 %v128, 112
  %v315 = vpop.permute.xlu0 %314
  %317 = vxpose.xlu0.c.b16.start [1/8] %v315, 128
  %318 = vxpose.xlu0.c.b16.cont [2/8] 0, 128
  %319 = vxpose.xlu0.c.b16.cont [3/8] 0, 128
  %320 = vxpose.xlu0.c.b16.cont [4/8] 0, 128
  %321 = vxpose.xlu0.c.b16.cont [5/8] 0, 128
  %322 = vxpose.xlu0.c.b16.cont [6/8] 0, 128
  %323 = vxpose.xlu0.c.b16.cont [7/8] 0, 128
  %324 = vxpose.xlu0.c.b16.end [8/8] 0, 128
  %v325 = vpop.trf.xlu0
  %v326 = vpop.trf.xlu0
  %v327 = vpop.trf.xlu0
  %v328 = vpop.trf.xlu0
  %v329 = vpop.trf.xlu0
  %v330 = vpop.trf.xlu0
  %v331 = vpop.trf.xlu0
  %v332 = vpop.trf.xlu0
  %334 = vrot.lane.b32.xlu0 %v129, 112
  %v335 = vpop.permute.xlu0 %334
  %v338 = vsel %vm60, %v325, 0
  %340 = vmatpush.bf16.msra.mxu0 0
  %341 = vmatpush.bf16.msra.mxu0 0
  %342 = vmatpush.bf16.msra.mxu0 0
  %343 = vmatpush.bf16.msra.mxu0 0
  %344 = vmatpush.bf16.msra.mxu0 0
  %345 = vmatpush.bf16.msra.mxu0 0
  %346 = vmatpush.bf16.msra.mxu0 0
  %347 = vmatpush.bf16.msra.mxu0 %v335
  %348 = vmatmul.bf16.gmra.mxu0 %v338
  %v349 = vpop.f32.mrf.mxu0
  %v350 = vadd.f32 0.0, %v349
  %v351 = vpop.f32.mrf.mxu0
  %v352 = vadd.f32 0.0, %v351
  %353 = vdwg.mxu0
  %v354 = vmul.f32 %v350, 0.25
  %v355 = vmul.f32 %v352, 0.25
  %v356 = vsel %vm218, %v354, -10000.0
  %v357 = vsel %vm219, %v355, -10000.0
  %v358 = vsel %vm60, %v356, -inf
  %359 = vmax.xlane.f32.xlu0 %v358
  %v360 = vpop.xlane.xlu0 %359
  %v361 = vsel %vm60, %v357, -inf
  %362 = vmax.xlane.f32.xlu0 %v361
  %v363 = vpop.xlane.xlu0 %362
  %v364 = vsub.f32 %v356, %v360
  %v365 = vsub.f32 %v357, %v363
  %v366 = vmul.f32 %v364, 1.442695
  %v367 = vpow.pop %v366
  %v368 = vmul.f32 %v365, 1.442695
  %v369 = vpow.pop %v368
  %v370 = vsel %vm60, %v367, 0.0
  %371 = vadd.xlane.f32.xlu0 %v370
  %v372 = vpop.xlane.xlu0 %371
  %v373 = vsel %vm60, %v369, 0.0
  %374 = vadd.xlane.f32.xlu0 %v373
  %v375 = vpop.xlane.xlu0 %374
  %v376 = vrcp.pop %v372
  %v377 = vrcp.pop %v375
  %v378 = vmul.f32 %v367, %v376
  %v379 = vmul.f32 %v369, %v377
  %v380 = vpack.c.bf16 %v379, %v378
  %382 = vrot.lane.b32.xlu0 %v189, 112
  %v383 = vpop.permute.xlu0 %382
  %v385 = vsel %vm60, %v383, 0
  %v388 = vsel %vm60, %v380, 0
  %390 = vmatpush.bf16.xpose.msra.mxu0 0
  %391 = vmatpush.bf16.xpose.msra.mxu0 0
  %392 = vmatpush.bf16.xpose.msra.mxu0 0
  %393 = vmatpush.bf16.xpose.msra.mxu0 0
  %394 = vmatpush.bf16.xpose.msra.mxu0 0
  %395 = vmatpush.bf16.xpose.msra.mxu0 0
  %396 = vmatpush.bf16.xpose.msra.mxu0 0
  %397 = vmatpush.bf16.xpose.msra.mxu0 %v388
  %398 = vmatmul.bf16.gmra.mxu0 %v385
  %v399 = vpop.f32.mrf.mxu0
  %v400 = vadd.f32 0.0, %v399
  %v401 = vpop.f32.mrf.mxu0
  %v402 = vadd.f32 0.0, %v401
  %403 = vdwg.mxu0
  %404 = vst.msk [vmem:[%s2 + $0x30] sm:$0xff] %vm60, %v400
  %405 = vst.msk [vmem:[%s2 + $0x38] sm:$0xff] %vm60, %v402
  // Predicated region
  $region6: #{flow_generator_forward.41} parent=0 // pred_check
    _
  $region7: #{flow_generator_forward.41} parent=0 // pred_check_branch
    %407 = sbr.rel (0) target = $region9
  $region8: #{flow_generator_forward.41} parent=0 // pred_region
    _
  $region9: #{flow_generator_forward.41} parent=0 // pred_fallthru
    _
  // Predicated region
  $region10: #{flow_generator_forward.41} parent=0 // pred_check
    _
  $region11: #{flow_generator_forward.41} parent=0 // pred_check_branch
    %409 = sbr.rel (0) target = $region13
  $region12: #{flow_generator_forward.41} parent=0 // pred_region
    _
  $region13: #{flow_generator_forward.41} parent=0 // pred_fallthru
    _

// kernel: flow_generator_forward.44
$region0: #{flow_generator_forward.44}
  #allocation0 [shape = 'u32[]', space=smem, size = 0x4, offset = 0x4, fixed_abs, tag = 'smem constant byte address 0x4 - core index']
  #allocation1 [shape = 'u32[72,128]{1,0:T(1,128)}', space=vmem, size = 0x9000, scoped, tag = 'internal scratch']
  %s0 = inlined_call_operand.vmem [shape: bf16[96,32], index: 0, kind: input, shape index: {}]
  %s1 = inlined_call_operand.vmem [shape: f32[64,96], index: 1, kind: input, shape index: {}]
  %s2 = inlined_call_operand.vmem [shape: f32[64,1], index: 2, kind: input, shape index: {}]
  %s3 = inlined_call_operand.vmem [shape: f32[64,32], index: 3, kind: output, shape index: {}]
  %s4 = sld [smem:[#allocation0]]
  $region22: #{flow_generator_forward.44} parent=0
    _
  %s6 = ssub.s32 1, %s4
  %s7 = scalar_select 0, %s6, %s4
  // Predicated region
  $region2: #{flow_generator_forward.44} parent=0 // pred_check
    _
  $region3: #{flow_generator_forward.44} parent=0 // pred_check_branch
    %9 = sbr.rel (0) target = $region5
  $region4: #{flow_generator_forward.44} parent=0 // pred_region
    _
  $region5: #{flow_generator_forward.44} parent=0 // pred_fallthru
    _
  // Predicated region
  $region6: #{flow_generator_forward.44} parent=0 // pred_check
    _
  $region7: #{flow_generator_forward.44} parent=0 // pred_check_branch
    %11 = sbr.rel (0) target = $region9
  $region8: #{flow_generator_forward.44} parent=0 // pred_region
    _
  $region9: #{flow_generator_forward.44} parent=0 // pred_fallthru
    _
  // Predicated region
  $region10: #{flow_generator_forward.44} parent=0 // pred_check
    _
  $region11: #{flow_generator_forward.44} parent=0 // pred_check_branch
    %13 = sbr.rel (0) target = $region13
  $region12: #{flow_generator_forward.44} parent=0 // pred_region
    _
  $region13: #{flow_generator_forward.44} parent=0 // pred_fallthru
    _
  %v15 = vld [vmem:[%s0] sm:$0xf]
  %v16 = vld [vmem:[%s0 + $0x4] sm:$0xf]
  %v17 = vld [vmem:[%s0 + $0x8] sm:$0xf]
  %v18 = vld [vmem:[%s0 + $0xc] sm:$0xf]
  %v19 = vld [vmem:[%s0 + $0x10] sm:$0xf]
  %v20 = vld [vmem:[%s0 + $0x14] sm:$0xf]
  %v21 = vld [vmem:[%s0 + $0x18] sm:$0xf]
  %v22 = vld [vmem:[%s0 + $0x1c] sm:$0xf]
  %v23 = vld [vmem:[%s0 + $0x20] sm:$0xf]
  %v24 = vld [vmem:[%s0 + $0x24] sm:$0xf]
  %v25 = vld [vmem:[%s0 + $0x28] sm:$0xf]
  %v26 = vld [vmem:[%s0 + $0x2c] sm:$0xf]
  %v27 = vld [vmem:[%s1] sm:$0xff]
  %v28 = vld [vmem:[%s1 + $0x8] sm:$0xff]
  %v29 = vld [vmem:[%s1 + $0x10] sm:$0xff]
  %v30 = vld [vmem:[%s1 + $0x18] sm:$0xff]
  %v31 = vld [vmem:[%s1 + $0x20] sm:$0xff]
  %v32 = vld [vmem:[%s1 + $0x28] sm:$0xff]
  %v33 = vld [vmem:[%s1 + $0x30] sm:$0xff]
  %v34 = vld [vmem:[%s1 + $0x38] sm:$0xff]
  %v35 = vpack.c.bf16 %v28, %v27
  %v36 = vpack.c.bf16 %v30, %v29
  %v37 = vpack.c.bf16 %v32, %v31
  %v38 = vpack.c.bf16 %v34, %v33
  %v39 = vld [vmem:[%s2] sm:$0xff]
  %v40 = vld [vmem:[%s2 + $0x8] sm:$0xff]
  %v41 = vld [vmem:[%s2 + $0x10] sm:$0xff]
  %v42 = vld [vmem:[%s2 + $0x18] sm:$0xff]
  %v43 = vld [vmem:[%s2 + $0x20] sm:$0xff]
  %v44 = vld [vmem:[%s2 + $0x28] sm:$0xff]
  %v45 = vld [vmem:[%s2 + $0x30] sm:$0xff]
  %v46 = vld [vmem:[%s2 + $0x38] sm:$0xff]
  %48 = vset.pattern.permute.xlu0 0
  %49 = vperm.xlu0 %48, %v39
  %v50 = vpop.permute.xlu0 %49
  %53 = vset.pattern.permute.xlu0 0
  %54 = vperm.xlu0 %53, %v40
  %v55 = vpop.permute.xlu0 %54
  %58 = vset.pattern.permute.xlu0 0
  %59 = vperm.xlu0 %58, %v41
  %v60 = vpop.permute.xlu0 %59
  %63 = vset.pattern.permute.xlu0 0
  %64 = vperm.xlu0 %63, %v42
  %v65 = vpop.permute.xlu0 %64
  %68 = vset.pattern.permute.xlu0 0
  %69 = vperm.xlu0 %68, %v43
  %v70 = vpop.permute.xlu0 %69
  %73 = vset.pattern.permute.xlu0 0
  %74 = vperm.xlu0 %73, %v44
  %v75 = vpop.permute.xlu0 %74
  %78 = vset.pattern.permute.xlu0 0
  %79 = vperm.xlu0 %78, %v45
  %v80 = vpop.permute.xlu0 %79
  %83 = vset.pattern.permute.xlu0 0
  %84 = vperm.xlu0 %83, %v46
  %v85 = vpop.permute.xlu0 %84
  %v99 = vunpack.c.l.b16 %v15
  %v100 = vunpack.c.l.b16 %v16
  %v101 = vunpack.c.l.b16 %v17
  %v102 = vunpack.c.l.b16 %v18
  %v103 = vunpack.c.l.b16 %v19
  %v104 = vunpack.c.l.b16 %v20
  %v105 = vunpack.c.l.b16 %v21
  %v106 = vunpack.c.l.b16 %v22
  %v107 = vunpack.c.l.b16 %v23
  %v108 = vunpack.c.l.b16 %v24
  %v109 = vunpack.c.l.b16 %v25
  %v110 = vunpack.c.l.b16 %v26
  %v111 = vpack.c.b16 %v100, %v99
  %v112 = vpack.c.b16 %v102, %v101
  %v113 = vpack.c.b16 %v104, %v103
  %v114 = vpack.c.b16 %v106, %v105
  %v115 = vpack.c.b16 %v108, %v107
  %v116 = vpack.c.b16 %v110, %v109
  %vm123 = vcmask 785408
  %v125 = vsel %vm123, %v35, 0
  %v128 = vsel %vm123, %v36, 0
  %v131 = vsel %vm123, %v37, 0
  %v134 = vsel %vm123, %v38, 0
  %136 = vmatpush.bf16.msra.mxu0 0
  %137 = vmatpush.bf16.msra.mxu0 0
  %138 = vmatpush.bf16.msra.mxu0 %v116
  %139 = vmatpush.bf16.msra.mxu0 %v115
  %140 = vmatpush.bf16.msra.mxu0 %v114
  %141 = vmatpush.bf16.msra.mxu0 %v113
  %142 = vmatpush.bf16.msra.mxu0 %v112
  %143 = vmatpush.bf16.msra.mxu0 %v111
  %144 = vmatmul.bf16.gmra.mxu0 %v125
  %v145 = vpop.f32.mrf.mxu0
  %v146 = vadd.f32 %v50, %v145
  %v147 = vpop.f32.mrf.mxu0
  %v148 = vadd.f32 %v55, %v147
  %149 = vmatmul.bf16.gmra.mxu0 %v128
  %v150 = vpop.f32.mrf.mxu0
  %v151 = vadd.f32 %v60, %v150
  %v152 = vpop.f32.mrf.mxu0
  %v153 = vadd.f32 %v65, %v152
  %154 = vmatmul.bf16.gmra.mxu0 %v131
  %v155 = vpop.f32.mrf.mxu0
  %v156 = vadd.f32 %v70, %v155
  %v157 = vpop.f32.mrf.mxu0
  %v158 = vadd.f32 %v75, %v157
  %159 = vmatmul.bf16.gmra.mxu0 %v134
  %v160 = vpop.f32.mrf.mxu0
  %v161 = vadd.f32 %v80, %v160
  %v162 = vpop.f32.mrf.mxu0
  %v163 = vadd.f32 %v85, %v162
  %164 = vdwg.mxu0
  %v165 = vmax.f32 %v146, 0.0
  %v166 = vmax.f32 %v148, 0.0
  %v167 = vmax.f32 %v151, 0.0
  %v168 = vmax.f32 %v153, 0.0
  %v169 = vmax.f32 %v156, 0.0
  %v170 = vmax.f32 %v158, 0.0
  %v171 = vmax.f32 %v161, 0.0
  %v172 = vmax.f32 %v163, 0.0
  %vm173 = vcmask 261120
  %174 = vst.msk [vmem:[%s3] sm:$0xff] %vm173, %v165
  %175 = vst.msk [vmem:[%s3 + $0x8] sm:$0xff] %vm173, %v166
  %176 = vst.msk [vmem:[%s3 + $0x10] sm:$0xff] %vm173, %v167
  %177 = vst.msk [vmem:[%s3 + $0x18] sm:$0xff] %vm173, %v168
  %178 = vst.msk [vmem:[%s3 + $0x20] sm:$0xff] %vm173, %v169
  %179 = vst.msk [vmem:[%s3 + $0x28] sm:$0xff] %vm173, %v170
  %180 = vst.msk [vmem:[%s3 + $0x30] sm:$0xff] %vm173, %v171
  %181 = vst.msk [vmem:[%s3 + $0x38] sm:$0xff] %vm173, %v172
  // Predicated region
  $region14: #{flow_generator_forward.44} parent=0 // pred_check
    _
  $region15: #{flow_generator_forward.44} parent=0 // pred_check_branch
    %183 = sbr.rel (0) target = $region17
  $region16: #{flow_generator_forward.44} parent=0 // pred_region
    _
  $region17: #{flow_generator_forward.44} parent=0 // pred_fallthru
    _
  // Predicated region
  $region18: #{flow_generator_forward.44} parent=0 // pred_check
    _
  $region19: #{flow_generator_forward.44} parent=0 // pred_check_branch
    %185 = sbr.rel (0) target = $region21
  $region20: #{flow_generator_forward.44} parent=0 // pred_region
    _
  $region21: #{flow_generator_forward.44} parent=0 // pred_fallthru
    _

// kernel: flow_generator_forward.45
$region0: #{flow_generator_forward.45}
  #allocation0 [shape = 'u32[]', space=smem, size = 0x4, offset = 0x4, fixed_abs, tag = 'smem constant byte address 0x4 - core index']
  #allocation1 [shape = 'u32[72,128]{1,0:T(1,128)}', space=vmem, size = 0x9000, scoped, tag = 'internal scratch']
  %s0 = inlined_call_operand.vmem [shape: bf16[192,32], index: 0, kind: input, shape index: {}]
  %s1 = inlined_call_operand.vmem [shape: f32[32,192], index: 1, kind: input, shape index: {}]
  %s2 = inlined_call_operand.vmem [shape: f32[32,1], index: 2, kind: input, shape index: {}]
  %s3 = inlined_call_operand.vmem [shape: f32[1,32], index: 3, kind: input, shape index: {}]
  %s4 = inlined_call_operand.vmem [shape: f32[32,32], index: 4, kind: output, shape index: {}]
  %s5 = sld [smem:[#allocation0]]
  $region26: #{flow_generator_forward.45} parent=0
    _
  %s7 = ssub.s32 1, %s5
  %s8 = scalar_select 0, %s7, %s5
  // Predicated region
  $region2: #{flow_generator_forward.45} parent=0 // pred_check
    _
  $region3: #{flow_generator_forward.45} parent=0 // pred_check_branch
    %10 = sbr.rel (0) target = $region5
  $region4: #{flow_generator_forward.45} parent=0 // pred_region
    _
  $region5: #{flow_generator_forward.45} parent=0 // pred_fallthru
    _
  // Predicated region
  $region6: #{flow_generator_forward.45} parent=0 // pred_check
    _
  $region7: #{flow_generator_forward.45} parent=0 // pred_check_branch
    %12 = sbr.rel (0) target = $region9
  $region8: #{flow_generator_forward.45} parent=0 // pred_region
    _
  $region9: #{flow_generator_forward.45} parent=0 // pred_fallthru
    _
  // Predicated region
  $region10: #{flow_generator_forward.45} parent=0 // pred_check
    _
  $region11: #{flow_generator_forward.45} parent=0 // pred_check_branch
    %14 = sbr.rel (0) target = $region13
  $region12: #{flow_generator_forward.45} parent=0 // pred_region
    _
  $region13: #{flow_generator_forward.45} parent=0 // pred_fallthru
    _
  // Predicated region
  $region14: #{flow_generator_forward.45} parent=0 // pred_check
    _
  $region15: #{flow_generator_forward.45} parent=0 // pred_check_branch
    %16 = sbr.rel (0) target = $region17
  $region16: #{flow_generator_forward.45} parent=0 // pred_region
    _
  $region17: #{flow_generator_forward.45} parent=0 // pred_fallthru
    _
  %v18 = vld [vmem:[%s0] sm:$0xf]
  %v19 = vld [vmem:[%s0 + $0x4] sm:$0xf]
  %v20 = vld [vmem:[%s0 + $0x8] sm:$0xf]
  %v21 = vld [vmem:[%s0 + $0xc] sm:$0xf]
  %v22 = vld [vmem:[%s0 + $0x10] sm:$0xf]
  %v23 = vld [vmem:[%s0 + $0x14] sm:$0xf]
  %v24 = vld [vmem:[%s0 + $0x18] sm:$0xf]
  %v25 = vld [vmem:[%s0 + $0x1c] sm:$0xf]
  %v26 = vld [vmem:[%s0 + $0x20] sm:$0xf]
  %v27 = vld [vmem:[%s0 + $0x24] sm:$0xf]
  %v28 = vld [vmem:[%s0 + $0x28] sm:$0xf]
  %v29 = vld [vmem:[%s0 + $0x2c] sm:$0xf]
  %v30 = vld [vmem:[%s0 + $0x30] sm:$0xf]
  %v31 = vld [vmem:[%s0 + $0x34] sm:$0xf]
  %v32 = vld [vmem:[%s0 + $0x38] sm:$0xf]
  %v33 = vld [vmem:[%s0 + $0x3c] sm:$0xf]
  %v34 = vld [vmem:[%s0 + $0x40] sm:$0xf]
  %v35 = vld [vmem:[%s0 + $0x44] sm:$0xf]
  %v36 = vld [vmem:[%s0 + $0x48] sm:$0xf]
  %v37 = vld [vmem:[%s0 + $0x4c] sm:$0xf]
  %v38 = vld [vmem:[%s0 + $0x50] sm:$0xf]
  %v39 = vld [vmem:[%s0 + $0x54] sm:$0xf]
  %v40 = vld [vmem:[%s0 + $0x58] sm:$0xf]
  %v41 = vld [vmem:[%s0 + $0x5c] sm:$0xf]
  %v42 = vld [vmem:[%s1] sm:$0xff]
  %v43 = vld [vmem:[%s1 + $0x8] sm:$0xff]
  %v44 = vld [vmem:[%s1 + $0x10] sm:$0xff]
  %v45 = vld [vmem:[%s1 + $0x18] sm:$0xff]
  %v46 = vld [vmem:[%s1 + $0x20] sm:$0xff]
  %v47 = vld [vmem:[%s1 + $0x28] sm:$0xff]
  %v48 = vld [vmem:[%s1 + $0x30] sm:$0xff]
  %v49 = vld [vmem:[%s1 + $0x38] sm:$0xff]
  %v50 = vpack.c.bf16 %v44, %v42
  %v51 = vpack.c.bf16 %v45, %v43
  %v52 = vpack.c.bf16 %v48, %v46
  %v53 = vpack.c.bf16 %v49, %v47
  %v54 = vld [vmem:[%s2] sm:$0xff]
  %v55 = vld [vmem:[%s2 + $0x8] sm:$0xff]
  %v56 = vld [vmem:[%s2 + $0x10] sm:$0xff]
  %v57 = vld [vmem:[%s2 + $0x18] sm:$0xff]
  %59 = vset.pattern.permute.xlu0 0
  %60 = vperm.xlu0 %59, %v54
  %v61 = vpop.permute.xlu0 %60
  %64 = vset.pattern.permute.xlu0 0
  %65 = vperm.xlu0 %64, %v55
  %v66 = vpop.permute.xlu0 %65
  %69 = vset.pattern.permute.xlu0 0
  %70 = vperm.xlu0 %69, %v56
  %v71 = vpop.permute.xlu0 %70
  %74 = vset.pattern.permute.xlu0 0
  %75 = vperm.xlu0 %74, %v57
  %v76 = vpop.permute.xlu0 %75
  %v102 = vunpack.c.l.b16 %v18
  %v103 = vunpack.c.l.b16 %v19
  %v104 = vunpack.c.l.b16 %v20
  %v105 = vunpack.c.l.b16 %v21
  %v106 = vunpack.c.l.b16 %v22
  %v107 = vunpack.c.l.b16 %v23
  %v108 = vunpack.c.l.b16 %v24
  %v109 = vunpack.c.l.b16 %v25
  %v110 = vunpack.c.l.b16 %v26
  %v111 = vunpack.c.l.b16 %v27
  %v112 = vunpack.c.l.b16 %v28
  %v113 = vunpack.c.l.b16 %v29
  %v114 = vunpack.c.l.b16 %v30
  %v115 = vunpack.c.l.b16 %v31
  %v116 = vunpack.c.l.b16 %v32
  %v117 = vunpack.c.l.b16 %v33
  %v118 = vunpack.c.l.b16 %v34
  %v119 = vunpack.c.l.b16 %v35
  %v120 = vunpack.c.l.b16 %v36
  %v121 = vunpack.c.l.b16 %v37
  %v122 = vunpack.c.l.b16 %v38
  %v123 = vunpack.c.l.b16 %v39
  %v124 = vunpack.c.l.b16 %v40
  %v125 = vunpack.c.l.b16 %v41
  %v126 = vpack.c.b16 %v103, %v102
  %v127 = vpack.c.b16 %v105, %v104
  %v128 = vpack.c.b16 %v107, %v106
  %v129 = vpack.c.b16 %v109, %v108
  %v130 = vpack.c.b16 %v111, %v110
  %v131 = vpack.c.b16 %v113, %v112
  %v132 = vpack.c.b16 %v115, %v114
  %v133 = vpack.c.b16 %v117, %v116
  %v134 = vpack.c.b16 %v119, %v118
  %v135 = vpack.c.b16 %v121, %v120
  %v136 = vpack.c.b16 %v123, %v122
  %v137 = vpack.c.b16 %v125, %v124
  %vm150 = vcmask 523264
  %v152 = vsel %vm150, %v51, 0
  %v155 = vsel %vm150, %v53, 0
  %157 = vmatpush.bf16.msra.mxu0 %v133
  %158 = vmatpush.bf16.msra.mxu0 %v132
  %159 = vmatpush.bf16.msra.mxu0 %v131
  %160 = vmatpush.bf16.msra.mxu0 %v130
  %161 = vmatpush.bf16.msra.mxu0 %v129
  %162 = vmatpush.bf16.msra.mxu0 %v128
  %163 = vmatpush.bf16.msra.mxu0 %v127
  %164 = vmatpush.bf16.msra.mxu0 %v126
  %165 = vmatmul.bf16.gmra.mxu0 %v50
  %v166 = vpop.f32.mrf.mxu0
  %v167 = vadd.f32 %v61, %v166
  %v168 = vpop.f32.mrf.mxu0
  %v169 = vadd.f32 %v66, %v168
  %170 = vmatmul.bf16.gmra.mxu0 %v52
  %v171 = vpop.f32.mrf.mxu0
  %v172 = vadd.f32 %v71, %v171
  %v173 = vpop.f32.mrf.mxu0
  %v174 = vadd.f32 %v76, %v173
  %175 = vdwg.mxu0
  %176 = vmatpush.bf16.msra.mxu0 0
  %177 = vmatpush.bf16.msra.mxu0 0
  %178 = vmatpush.bf16.msra.mxu0 0
  %179 = vmatpush.bf16.msra.mxu0 0
  %180 = vmatpush.bf16.msra.mxu0 %v137
  %181 = vmatpush.bf16.msra.mxu0 %v136
  %182 = vmatpush.bf16.msra.mxu0 %v135
  %183 = vmatpush.bf16.msra.mxu0 %v134
  %184 = vmatmul.bf16.gmra.mxu0 %v152
  %v185 = vpop.f32.mrf.mxu0
  %v186 = vadd.f32 %v167, %v185
  %v187 = vpop.f32.mrf.mxu0
  %v188 = vadd.f32 %v169, %v187
  %189 = vmatmul.bf16.gmra.mxu0 %v155
  %v190 = vpop.f32.mrf.mxu0
  %v191 = vadd.f32 %v172, %v190
  %v192 = vpop.f32.mrf.mxu0
  %v193 = vadd.f32 %v174, %v192
  %194 = vdwg.mxu0
  %v195 = vld [vmem:[%s3] sm:$0x1]
  %v197 = vperm.slane %v195, 0
  %v199 = vmul.f32 %v186, %v197
  %v200 = vmul.f32 %v188, %v197
  %v201 = vmul.f32 %v191, %v197
  %v202 = vmul.f32 %v193, %v197
  %vm203 = vcmask 261120
  %204 = vst.msk [vmem:[%s4] sm:$0xff] %vm203, %v199
  %205 = vst.msk [vmem:[%s4 + $0x8] sm:$0xff] %vm203, %v200
  %206 = vst.msk [vmem:[%s4 + $0x10] sm:$0xff] %vm203, %v201
  %207 = vst.msk [vmem:[%s4 + $0x18] sm:$0xff] %vm203, %v202
  // Predicated region
  $region18: #{flow_generator_forward.45} parent=0 // pred_check
    _
  $region19: #{flow_generator_forward.45} parent=0 // pred_check_branch
    %209 = sbr.rel (0) target = $region21
  $region20: #{flow_generator_forward.45} parent=0 // pred_region
    _
  $region21: #{flow_generator_forward.45} parent=0 // pred_fallthru
    _
  // Predicated region
  $region22: #{flow_generator_forward.45} parent=0 // pred_check
    _
  $region23: #{flow_generator_forward.45} parent=0 // pred_check_branch
    %211 = sbr.rel (0) target = $region25
  $region24: #{flow_generator_forward.45} parent=0 // pred_region
    _
  $region25: #{flow_generator_forward.45} parent=0 // pred_fallthru
    _

// kernel: flow_generator_forward.46
$region0: #{flow_generator_forward.46}
  #allocation0 [shape = 'u32[]', space=smem, size = 0x4, offset = 0x4, fixed_abs, tag = 'smem constant byte address 0x4 - core index']
  #allocation1 [shape = 'u32[72,128]{1,0:T(1,128)}', space=vmem, size = 0x9000, scoped, tag = 'internal scratch']
  %s0 = inlined_call_operand.vmem [shape: f32[32,32], index: 0, kind: input, shape index: {}]
  %s1 = inlined_call_operand.vmem [shape: f32[32,1], index: 1, kind: input, shape index: {}]
  %s2 = inlined_call_operand.vmem [shape: f32[32,1], index: 2, kind: input, shape index: {}]
  %s3 = inlined_call_operand.vmem [shape: f32[32,32], index: 3, kind: input, shape index: {}]
  %s4 = inlined_call_operand.vmem [shape: f32[32,32], index: 4, kind: output, shape index: {}]
  %s5 = sld [smem:[#allocation0]]
  $region26: #{flow_generator_forward.46} parent=0
    _
  %s7 = ssub.s32 1, %s5
  %s8 = scalar_select 0, %s7, %s5
  // Predicated region
  $region2: #{flow_generator_forward.46} parent=0 // pred_check
    _
  $region3: #{flow_generator_forward.46} parent=0 // pred_check_branch
    %10 = sbr.rel (0) target = $region5
  $region4: #{flow_generator_forward.46} parent=0 // pred_region
    _
  $region5: #{flow_generator_forward.46} parent=0 // pred_fallthru
    _
  // Predicated region
  $region6: #{flow_generator_forward.46} parent=0 // pred_check
    _
  $region7: #{flow_generator_forward.46} parent=0 // pred_check_branch
    %12 = sbr.rel (0) target = $region9
  $region8: #{flow_generator_forward.46} parent=0 // pred_region
    _
  $region9: #{flow_generator_forward.46} parent=0 // pred_fallthru
    _
  // Predicated region
  $region10: #{flow_generator_forward.46} parent=0 // pred_check
    _
  $region11: #{flow_generator_forward.46} parent=0 // pred_check_branch
    %14 = sbr.rel (0) target = $region13
  $region12: #{flow_generator_forward.46} parent=0 // pred_region
    _
  $region13: #{flow_generator_forward.46} parent=0 // pred_fallthru
    _
  // Predicated region
  $region14: #{flow_generator_forward.46} parent=0 // pred_check
    _
  $region15: #{flow_generator_forward.46} parent=0 // pred_check_branch
    %16 = sbr.rel (0) target = $region17
  $region16: #{flow_generator_forward.46} parent=0 // pred_region
    _
  $region17: #{flow_generator_forward.46} parent=0 // pred_fallthru
    _
  %v17 = vld [vmem:[%s0] sm:$0xff]
  %v18 = vld [vmem:[%s0 + $0x8] sm:$0xff]
  %v19 = vld [vmem:[%s0 + $0x10] sm:$0xff]
  %v20 = vld [vmem:[%s0 + $0x18] sm:$0xff]
  %v21 = vld [vmem:[%s3] sm:$0xff]
  %v22 = vld [vmem:[%s3 + $0x8] sm:$0xff]
  %v23 = vld [vmem:[%s3 + $0x10] sm:$0xff]
  %v24 = vld [vmem:[%s3 + $0x18] sm:$0xff]
  %v25 = vadd.f32 %v17, %v21
  %v26 = vadd.f32 %v18, %v22
  %v27 = vadd.f32 %v19, %v23
  %v28 = vadd.f32 %v20, %v24
  %vm29 = vcmask 261120
  %v30 = vsel %vm29, %v25, 0.0
  %v31 = vsel %vm29, %v26, 0.0
  %v32 = vadd.f32 %v30, %v31
  %v33 = vsel %vm29, %v27, 0.0
  %v34 = vadd.f32 %v32, %v33
  %v35 = vsel %vm29, %v28, 0.0
  %v36 = vadd.f32 %v34, %v35
  %v37 = vrot.slane %v36, 4
  %v38 = vadd.f32 %v36, %v37
  %v39 = vrot.slane %v38, 2
  %v40 = vadd.f32 %v38, %v39
  %v41 = vrot.slane %v40, 1
  %v42 = vadd.f32 %v40, %v41
  %v43 = vrcp.pop 32.0
  %v44 = vmul.f32 32.0, %v43
  %v45 = vsub.f32 1.0, %v44
  %v46 = vmul.f32 %v43, %v45
  %v47 = vadd.f32 %v43, %v46
  %vm48 = vweird.f32 %v43
  %v49 = vsel %vm48, %v43, %v47
  %v50 = vmul.f32 %v42, %v49
  %v51 = vsub.f32 %v25, %v50
  %v52 = vsub.f32 %v26, %v50
  %v53 = vsub.f32 %v27, %v50
  %v54 = vsub.f32 %v28, %v50
  %v55 = vmul.f32 %v51, %v51
  %v56 = vmul.f32 %v52, %v52
  %v57 = vmul.f32 %v53, %v53
  %v58 = vmul.f32 %v54, %v54
  %v59 = vsel %vm29, %v55, 0.0
  %v60 = vsel %vm29, %v56, 0.0
  %v61 = vadd.f32 %v59, %v60
  %v62 = vsel %vm29, %v57, 0.0
  %v63 = vadd.f32 %v61, %v62
  %v64 = vsel %vm29, %v58, 0.0
  %v65 = vadd.f32 %v63, %v64
  %v66 = vrot.slane %v65, 4
  %v67 = vadd.f32 %v65, %v66
  %v68 = vrot.slane %v67, 2
  %v69 = vadd.f32 %v67, %v68
  %v70 = vrot.slane %v69, 1
  %v71 = vadd.f32 %v69, %v70
  %v72 = vmul.f32 %v71, %v49
  %v73 = vadd.f32 %v72, 0.0001
  %v74 = vrsqrt.pop %v73
  %v75 = vmul.f32 %v74, %v73
  %v76 = vmul.f32 %v75, %v74
  %v77 = vmul.f32 0.5, %v76
  %v78 = vsub.f32 1.5, %v77
  %v79 = vmul.f32 %v74, %v78
  %vm80 = vweird.f32 %v73
  %vm81 = vweird.f32 %v74
  %vm82 = vmor %vm80, %vm81
  %v83 = vsel %vm82, %v74, %v79
  %v84 = vmul.f32 %v51, %v83
  %v85 = vmul.f32 %v52, %v83
  %v86 = vmul.f32 %v53, %v83
  %v87 = vmul.f32 %v54, %v83
  %v88 = vld [vmem:[%s1] sm:$0xff]
  %v89 = vld [vmem:[%s1 + $0x8] sm:$0xff]
  %v90 = vld [vmem:[%s1 + $0x10] sm:$0xff]
  %v91 = vld [vmem:[%s1 + $0x18] sm:$0xff]
  %93 = vset.pattern.permute.xlu0 0
  %94 = vperm.xlu0 %93, %v88
  %v95 = vpop.permute.xlu0 %94
  %98 = vset.pattern.permute.xlu0 0
  %99 = vperm.xlu0 %98, %v89
  %v100 = vpop.permute.xlu0 %99
  %103 = vset.pattern.permute.xlu0 0
  %104 = vperm.xlu0 %103, %v90
  %v105 = vpop.permute.xlu0 %104
  %108 = vset.pattern.permute.xlu0 0
  %109 = vperm.xlu0 %108, %v91
  %v110 = vpop.permute.xlu0 %109
  %v112 = vmul.f32 %v84, %v95
  %v113 = vmul.f32 %v85, %v100
  %v114 = vmul.f32 %v86, %v105
  %v115 = vmul.f32 %v87, %v110
  %v116 = vld [vmem:[%s2] sm:$0xff]
  %v117 = vld [vmem:[%s2 + $0x8] sm:$0xff]
  %v118 = vld [vmem:[%s2 + $0x10] sm:$0xff]
  %v119 = vld [vmem:[%s2 + $0x18] sm:$0xff]
  %121 = vset.pattern.permute.xlu0 0
  %122 = vperm.xlu0 %121, %v116
  %v123 = vpop.permute.xlu0 %122
  %126 = vset.pattern.permute.xlu0 0
  %127 = vperm.xlu0 %126, %v117
  %v128 = vpop.permute.xlu0 %127
  %131 = vset.pattern.permute.xlu0 0
  %132 = vperm.xlu0 %131, %v118
  %v133 = vpop.permute.xlu0 %132
  %136 = vset.pattern.permute.xlu0 0
  %137 = vperm.xlu0 %136, %v119
  %v138 = vpop.permute.xlu0 %137
  %v140 = vadd.f32 %v112, %v123
  %v141 = vadd.f32 %v113, %v128
  %v142 = vadd.f32 %v114, %v133
  %v143 = vadd.f32 %v115, %v138
  %144 = vst.msk [vmem:[%s4] sm:$0xff] %vm29, %v140
  %145 = vst.msk [vmem:[%s4 + $0x8] sm:$0xff] %vm29, %v141
  %146 = vst.msk [vmem:[%s4 + $0x10] sm:$0xff] %vm29, %v142
  %147 = vst.msk [vmem:[%s4 + $0x18] sm:$0xff] %vm29, %v143
  // Predicated region
  $region18: #{flow_generator_forward.46} parent=0 // pred_check
    _
  $region19: #{flow_generator_forward.46} parent=0 // pred_check_branch
    %149 = sbr.rel (0) target = $region21
  $region20: #{flow_generator_forward.46} parent=0 // pred_region
    _
  $region21: #{flow_generator_forward.46} parent=0 // pred_fallthru
    _
  // Predicated region
  $region22: #{flow_generator_forward.46} parent=0 // pred_check
    _
  $region23: #{flow_generator_forward.46} parent=0 // pred_check_branch
    %151 = sbr.rel (0) target = $region25
  $region24: #{flow_generator_forward.46} parent=0 // pred_region
    _
  $region25: #{flow_generator_forward.46} parent=0 // pred_fallthru
    _

// kernel: flow_generator_forward.53
$region0: #{flow_generator_forward.53}
  #allocation0 [shape = 'u32[]', space=smem, size = 0x4, offset = 0x4, fixed_abs, tag = 'smem constant byte address 0x4 - core index']
  #allocation1 [shape = 'u32[72,128]{1,0:T(1,128)}', space=vmem, size = 0x9000, scoped, tag = 'internal scratch']
  %s0 = inlined_call_operand.vmem [shape: f32[32,32], index: 0, kind: input, shape index: {}]
  %s1 = inlined_call_operand.vmem [shape: f32[32,1], index: 1, kind: input, shape index: {}]
  %s2 = inlined_call_operand.vmem [shape: f32[32,1], index: 2, kind: input, shape index: {}]
  %s3 = inlined_call_operand.vmem [shape: f32[32,32], index: 3, kind: input, shape index: {}]
  %s4 = inlined_call_operand.vmem [shape: f32[1,32], index: 4, kind: input, shape index: {}]
  %s5 = inlined_call_operand.vmem [shape: f32[32,32], index: 5, kind: output, shape index: {}]
  %s6 = sld [smem:[#allocation0]]
  $region30: #{flow_generator_forward.53} parent=0
    _
  %s8 = ssub.s32 1, %s6
  %s9 = scalar_select 0, %s8, %s6
  // Predicated region
  $region2: #{flow_generator_forward.53} parent=0 // pred_check
    _
  $region3: #{flow_generator_forward.53} parent=0 // pred_check_branch
    %11 = sbr.rel (0) target = $region5
  $region4: #{flow_generator_forward.53} parent=0 // pred_region
    _
  $region5: #{flow_generator_forward.53} parent=0 // pred_fallthru
    _
  // Predicated region
  $region6: #{flow_generator_forward.53} parent=0 // pred_check
    _
  $region7: #{flow_generator_forward.53} parent=0 // pred_check_branch
    %13 = sbr.rel (0) target = $region9
  $region8: #{flow_generator_forward.53} parent=0 // pred_region
    _
  $region9: #{flow_generator_forward.53} parent=0 // pred_fallthru
    _
  // Predicated region
  $region10: #{flow_generator_forward.53} parent=0 // pred_check
    _
  $region11: #{flow_generator_forward.53} parent=0 // pred_check_branch
    %15 = sbr.rel (0) target = $region13
  $region12: #{flow_generator_forward.53} parent=0 // pred_region
    _
  $region13: #{flow_generator_forward.53} parent=0 // pred_fallthru
    _
  // Predicated region
  $region14: #{flow_generator_forward.53} parent=0 // pred_check
    _
  $region15: #{flow_generator_forward.53} parent=0 // pred_check_branch
    %17 = sbr.rel (0) target = $region17
  $region16: #{flow_generator_forward.53} parent=0 // pred_region
    _
  $region17: #{flow_generator_forward.53} parent=0 // pred_fallthru
    _
  // Predicated region
  $region18: #{flow_generator_forward.53} parent=0 // pred_check
    _
  $region19: #{flow_generator_forward.53} parent=0 // pred_check_branch
    %19 = sbr.rel (0) target = $region21
  $region20: #{flow_generator_forward.53} parent=0 // pred_region
    _
  $region21: #{flow_generator_forward.53} parent=0 // pred_fallthru
    _
  %v20 = vld [vmem:[%s0] sm:$0xff]
  %v21 = vld [vmem:[%s0 + $0x8] sm:$0xff]
  %v22 = vld [vmem:[%s0 + $0x10] sm:$0xff]
  %v23 = vld [vmem:[%s0 + $0x18] sm:$0xff]
  %v24 = vld [vmem:[%s3] sm:$0xff]
  %v25 = vld [vmem:[%s3 + $0x8] sm:$0xff]
  %v26 = vld [vmem:[%s3 + $0x10] sm:$0xff]
  %v27 = vld [vmem:[%s3 + $0x18] sm:$0xff]
  %v28 = vadd.f32 %v20, %v24
  %v29 = vadd.f32 %v21, %v25
  %v30 = vadd.f32 %v22, %v26
  %v31 = vadd.f32 %v23, %v27
  %vm32 = vcmask 261120
  %v33 = vsel %vm32, %v28, 0.0
  %v34 = vsel %vm32, %v29, 0.0
  %v35 = vadd.f32 %v33, %v34
  %v36 = vsel %vm32, %v30, 0.0
  %v37 = vadd.f32 %v35, %v36
  %v38 = vsel %vm32, %v31, 0.0
  %v39 = vadd.f32 %v37, %v38
  %v40 = vrot.slane %v39, 4
  %v41 = vadd.f32 %v39, %v40
  %v42 = vrot.slane %v41, 2
  %v43 = vadd.f32 %v41, %v42
  %v44 = vrot.slane %v43, 1
  %v45 = vadd.f32 %v43, %v44
  %v46 = vrcp.pop 32.0
  %v47 = vmul.f32 32.0, %v46
  %v48 = vsub.f32 1.0, %v47
  %v49 = vmul.f32 %v46, %v48
  %v50 = vadd.f32 %v46, %v49
  %vm51 = vweird.f32 %v46
  %v52 = vsel %vm51, %v46, %v50
  %v53 = vmul.f32 %v45, %v52
  %v54 = vsub.f32 %v28, %v53
  %v55 = vsub.f32 %v29, %v53
  %v56 = vsub.f32 %v30, %v53
  %v57 = vsub.f32 %v31, %v53
  %v58 = vmul.f32 %v54, %v54
  %v59 = vmul.f32 %v55, %v55
  %v60 = vmul.f32 %v56, %v56
  %v61 = vmul.f32 %v57, %v57
  %v62 = vsel %vm32, %v58, 0.0
  %v63 = vsel %vm32, %v59, 0.0
  %v64 = vadd.f32 %v62, %v63
  %v65 = vsel %vm32, %v60, 0.0
  %v66 = vadd.f32 %v64, %v65
  %v67 = vsel %vm32, %v61, 0.0
  %v68 = vadd.f32 %v66, %v67
  %v69 = vrot.slane %v68, 4
  %v70 = vadd.f32 %v68, %v69
  %v71 = vrot.slane %v70, 2
  %v72 = vadd.f32 %v70, %v71
  %v73 = vrot.slane %v72, 1
  %v74 = vadd.f32 %v72, %v73
  %v75 = vmul.f32 %v74, %v52
  %v76 = vadd.f32 %v75, 0.0001
  %v77 = vrsqrt.pop %v76
  %v78 = vmul.f32 %v77, %v76
  %v79 = vmul.f32 %v78, %v77
  %v80 = vmul.f32 0.5, %v79
  %v81 = vsub.f32 1.5, %v80
  %v82 = vmul.f32 %v77, %v81
  %vm83 = vweird.f32 %v76
  %vm84 = vweird.f32 %v77
  %vm85 = vmor %vm83, %vm84
  %v86 = vsel %vm85, %v77, %v82
  %v87 = vmul.f32 %v54, %v86
  %v88 = vmul.f32 %v55, %v86
  %v89 = vmul.f32 %v56, %v86
  %v90 = vmul.f32 %v57, %v86
  %v91 = vld [vmem:[%s1] sm:$0xff]
  %v92 = vld [vmem:[%s1 + $0x8] sm:$0xff]
  %v93 = vld [vmem:[%s1 + $0x10] sm:$0xff]
  %v94 = vld [vmem:[%s1 + $0x18] sm:$0xff]
  %96 = vset.pattern.permute.xlu0 0
  %97 = vperm.xlu0 %96, %v91
  %v98 = vpop.permute.xlu0 %97
  %101 = vset.pattern.permute.xlu0 0
  %102 = vperm.xlu0 %101, %v92
  %v103 = vpop.permute.xlu0 %102
  %106 = vset.pattern.permute.xlu0 0
  %107 = vperm.xlu0 %106, %v93
  %v108 = vpop.permute.xlu0 %107
  %111 = vset.pattern.permute.xlu0 0
  %112 = vperm.xlu0 %111, %v94
  %v113 = vpop.permute.xlu0 %112
  %v115 = vmul.f32 %v87, %v98
  %v116 = vmul.f32 %v88, %v103
  %v117 = vmul.f32 %v89, %v108
  %v118 = vmul.f32 %v90, %v113
  %v119 = vld [vmem:[%s2] sm:$0xff]
  %v120 = vld [vmem:[%s2 + $0x8] sm:$0xff]
  %v121 = vld [vmem:[%s2 + $0x10] sm:$0xff]
  %v122 = vld [vmem:[%s2 + $0x18] sm:$0xff]
  %124 = vset.pattern.permute.xlu0 0
  %125 = vperm.xlu0 %124, %v119
  %v126 = vpop.permute.xlu0 %125
  %129 = vset.pattern.permute.xlu0 0
  %130 = vperm.xlu0 %129, %v120
  %v131 = vpop.permute.xlu0 %130
  %134 = vset.pattern.permute.xlu0 0
  %135 = vperm.xlu0 %134, %v121
  %v136 = vpop.permute.xlu0 %135
  %139 = vset.pattern.permute.xlu0 0
  %140 = vperm.xlu0 %139, %v122
  %v141 = vpop.permute.xlu0 %140
  %v143 = vadd.f32 %v115, %v126
  %v144 = vadd.f32 %v116, %v131
  %v145 = vadd.f32 %v117, %v136
  %v146 = vadd.f32 %v118, %v141
  %v147 = vld [vmem:[%s4] sm:$0x1]
  %v149 = vperm.slane %v147, 0
  %v151 = vmul.f32 %v143, %v149
  %v152 = vmul.f32 %v144, %v149
  %v153 = vmul.f32 %v145, %v149
  %v154 = vmul.f32 %v146, %v149
  %155 = vst.msk [vmem:[%s5] sm:$0xff] %vm32, %v151
  %156 = vst.msk [vmem:[%s5 + $0x8] sm:$0xff] %vm32, %v152
  %157 = vst.msk [vmem:[%s5 + $0x10] sm:$0xff] %vm32, %v153
  %158 = vst.msk [vmem:[%s5 + $0x18] sm:$0xff] %vm32, %v154
  // Predicated region
  $region22: #{flow_generator_forward.53} parent=0 // pred_check
    _
  $region23: #{flow_generator_forward.53} parent=0 // pred_check_branch
    %160 = sbr.rel (0) target = $region25
  $region24: #{flow_generator_forward.53} parent=0 // pred_region
    _
  $region25: #{flow_generator_forward.53} parent=0 // pred_fallthru
    _
  // Predicated region
  $region26: #{flow_generator_forward.53} parent=0 // pred_check
    _
  $region27: #{flow_generator_forward.53} parent=0 // pred_check_branch
    %162 = sbr.rel (0) target = $region29
  $region28: #{flow_generator_forward.53} parent=0 // pred_region
    _
  $region29: #{flow_generator_forward.53} parent=0 // pred_fallthru
    _

// kernel: custom-call.17
$region0: #{custom-call.17}
  %s0 = inlined_call_operand.vmem [shape: f32[2,16], index: 0, kind: output, shape index: {}]

// kernel: flow_generator_forward.54
$region0: #{flow_generator_forward.54}
  #allocation0 [shape = 'u32[]', space=smem, size = 0x4, offset = 0x4, fixed_abs, tag = 'smem constant byte address 0x4 - core index']
  #allocation1 [shape = 'u32[72,128]{1,0:T(1,128)}', space=vmem, size = 0x9000, scoped, tag = 'internal scratch']
  %s0 = inlined_call_operand.vmem [shape: f32[32,32], index: 0, kind: input, shape index: {}]
  %s1 = inlined_call_operand.vmem [shape: f32[32,32], index: 1, kind: input, shape index: {}]
  %s2 = inlined_call_operand.vmem [shape: f32[32,1], index: 2, kind: input, shape index: {}]
  %s3 = inlined_call_operand.vmem [shape: f32[1,32], index: 3, kind: input, shape index: {}]
  %s4 = inlined_call_operand.vmem [shape: f32[32,32], index: 4, kind: output, shape index: {}]
  %s5 = sld [smem:[#allocation0]]
  $region26: #{flow_generator_forward.54} parent=0
    _
  %s7 = ssub.s32 1, %s5
  %s8 = scalar_select 0, %s7, %s5
  // Predicated region
  $region2: #{flow_generator_forward.54} parent=0 // pred_check
    _
  $region3: #{flow_generator_forward.54} parent=0 // pred_check_branch
    %10 = sbr.rel (0) target = $region5
  $region4: #{flow_generator_forward.54} parent=0 // pred_region
    _
  $region5: #{flow_generator_forward.54} parent=0 // pred_fallthru
    _
  // Predicated region
  $region6: #{flow_generator_forward.54} parent=0 // pred_check
    _
  $region7: #{flow_generator_forward.54} parent=0 // pred_check_branch
    %12 = sbr.rel (0) target = $region9
  $region8: #{flow_generator_forward.54} parent=0 // pred_region
    _
  $region9: #{flow_generator_forward.54} parent=0 // pred_fallthru
    _
  // Predicated region
  $region10: #{flow_generator_forward.54} parent=0 // pred_check
    _
  $region11: #{flow_generator_forward.54} parent=0 // pred_check_branch
    %14 = sbr.rel (0) target = $region13
  $region12: #{flow_generator_forward.54} parent=0 // pred_region
    _
  $region13: #{flow_generator_forward.54} parent=0 // pred_fallthru
    _
  // Predicated region
  $region14: #{flow_generator_forward.54} parent=0 // pred_check
    _
  $region15: #{flow_generator_forward.54} parent=0 // pred_check_branch
    %16 = sbr.rel (0) target = $region17
  $region16: #{flow_generator_forward.54} parent=0 // pred_region
    _
  $region17: #{flow_generator_forward.54} parent=0 // pred_fallthru
    _
  %v18 = vld [vmem:[%s0] sm:$0xff]
  %v19 = vld [vmem:[%s0 + $0x8] sm:$0xff]
  %v20 = vld [vmem:[%s0 + $0x10] sm:$0xff]
  %v21 = vld [vmem:[%s0 + $0x18] sm:$0xff]
  %v22 = vld [vmem:[%s1] sm:$0xff]
  %v23 = vld [vmem:[%s1 + $0x8] sm:$0xff]
  %v24 = vld [vmem:[%s1 + $0x10] sm:$0xff]
  %v25 = vld [vmem:[%s1 + $0x18] sm:$0xff]
  %v26 = vpack.c.bf16 %v23, %v22
  %v27 = vpack.c.bf16 %v25, %v24
  %v28 = vpack.c.bf16 %v19, %v18
  %v29 = vpack.c.bf16 %v21, %v20
  %v30 = vld [vmem:[%s2] sm:$0xff]
  %v31 = vld [vmem:[%s2 + $0x8] sm:$0xff]
  %v32 = vld [vmem:[%s2 + $0x10] sm:$0xff]
  %v33 = vld [vmem:[%s2 + $0x18] sm:$0xff]
  %35 = vset.pattern.permute.xlu0 0
  %36 = vperm.xlu0 %35, %v30
  %v37 = vpop.permute.xlu0 %36
  %40 = vset.pattern.permute.xlu0 0
  %41 = vperm.xlu0 %40, %v31
  %v42 = vpop.permute.xlu0 %41
  %45 = vset.pattern.permute.xlu0 0
  %46 = vperm.xlu0 %45, %v32
  %v47 = vpop.permute.xlu0 %46
  %50 = vset.pattern.permute.xlu0 0
  %51 = vperm.xlu0 %50, %v33
  %v52 = vpop.permute.xlu0 %51
  %vm54 = vcmask 261120
  %v56 = vsel %vm54, %v26, 0
  %v59 = vsel %vm54, %v27, 0
  %61 = vmatpush.bf16.msra.mxu0 0
  %62 = vmatpush.bf16.msra.mxu0 0
  %63 = vmatpush.bf16.msra.mxu0 0
  %64 = vmatpush.bf16.msra.mxu0 0
  %65 = vmatpush.bf16.msra.mxu0 0
  %66 = vmatpush.bf16.msra.mxu0 0
  %67 = vmatpush.bf16.msra.mxu0 %v29
  %68 = vmatpush.bf16.msra.mxu0 %v28
  %69 = vmatmul.bf16.gmra.mxu0 %v56
  %v70 = vpop.f32.mrf.mxu0
  %v71 = vadd.f32 %v37, %v70
  %v72 = vpop.f32.mrf.mxu0
  %v73 = vadd.f32 %v42, %v72
  %74 = vmatmul.bf16.gmra.mxu0 %v59
  %v75 = vpop.f32.mrf.mxu0
  %v76 = vadd.f32 %v47, %v75
  %v77 = vpop.f32.mrf.mxu0
  %v78 = vadd.f32 %v52, %v77
  %79 = vdwg.mxu0
  %v80 = vld [vmem:[%s3] sm:$0x1]
  %v82 = vperm.slane %v80, 0
  %v84 = vmul.f32 %v71, %v82
  %v85 = vmul.f32 %v73, %v82
  %v86 = vmul.f32 %v76, %v82
  %v87 = vmul.f32 %v78, %v82
  %88 = vst.msk [vmem:[%s4] sm:$0xff] %vm54, %v84
  %89 = vst.msk [vmem:[%s4 + $0x8] sm:$0xff] %vm54, %v85
  %90 = vst.msk [vmem:[%s4 + $0x10] sm:$0xff] %vm54, %v86
  %91 = vst.msk [vmem:[%s4 + $0x18] sm:$0xff] %vm54, %v87
  // Predicated region
  $region18: #{flow_generator_forward.54} parent=0 // pred_check
    _
  $region19: #{flow_generator_forward.54} parent=0 // pred_check_branch
    %93 = sbr.rel (0) target = $region21
  $region20: #{flow_generator_forward.54} parent=0 // pred_region
    _
  $region21: #{flow_generator_forward.54} parent=0 // pred_fallthru
    _
  // Predicated region
  $region22: #{flow_generator_forward.54} parent=0 // pred_check
    _
  $region23: #{flow_generator_forward.54} parent=0 // pred_check_branch
    %95 = sbr.rel (0) target = $region25
  $region24: #{flow_generator_forward.54} parent=0 // pred_region
    _
  $region25: #{flow_generator_forward.54} parent=0 // pred_fallthru
    _

// kernel: flow_generator_forward.78
$region0: #{flow_generator_forward.78}
  #allocation0 [shape = 'u32[]', space=smem, size = 0x4, offset = 0x4, fixed_abs, tag = 'smem constant byte address 0x4 - core index']
  #allocation1 [shape = 'u32[72,128]{1,0:T(1,128)}', space=vmem, size = 0x9000, scoped, tag = 'internal scratch']
  %s0 = inlined_call_operand.vmem [shape: f32[2,16,16], index: 0, kind: input, shape index: {}]
  %s1 = inlined_call_operand.vmem [shape: f32[2,16,16], index: 1, kind: input, shape index: {}]
  %s2 = inlined_call_operand.vmem [shape: f32[2,16,24], index: 2, kind: input, shape index: {}]
  %s3 = inlined_call_operand.vmem [shape: f32[2,16,24], index: 3, kind: output, shape index: {}]
  %s4 = sld [smem:[#allocation0]]
  $region45: #{flow_generator_forward.78} parent=0
    _
  %s6 = ssub.s32 1, %s4
  %s7 = scalar_select 0, %s6, %s4
  loop: start=0, step=1, limit=4
  $region2: #{flow_generator_forward.78} parent=0 // loop_pre_header
    _
  $region3: #{flow_generator_forward.78} parent=0 // loop_header
    %s9 = sphi 0, %s13
    %p10 = scmp.ge.s32.totalorder %s9, 4
    %s19 = sphi 0, %s21
    %s22 = sphi 0, %s19
    %s23 = sphi 0, %s22
    %s39 = sphi 0, %s23
    %s45 = sphi 0, %s47
    %s48 = sphi 0, %s45
    %s49 = sphi 0, %s48
    %s65 = sphi 0, %s49
    %s71 = sphi 0, %s73
    %s74 = sphi 0, %s71
    %s75 = sphi 0, %s74
    %s91 = sphi 0, %s75
    %s97 = sphi 0, %s99
    %s100 = sphi 0, %s97
    %s101 = sphi 0, %s100
    %s117 = sphi 0, %s101
  $region4: #{flow_generator_forward.78} parent=0 // loop_header_branch
    %12 = sbr.rel (%p10) target = $region8
  $region5: #{flow_generator_forward.78} parent=0 // loop_body
    %s14 = ssub.s32 %s9, 1
    %s15 = ssub.s32 %s9, 2
    %s16 = sadd.s32 %s9, 1
    %s17 = ssub.s32 %s9, %s16
    %p18 = scmp.eq.s32.totalorder %s17, 0
    %s20 = sadd.s32 %s19, 1
    %s21 = scalar_select %p18, %s19, %s20
    %p24 = pneg %p18
    %p25 = scmp.eq.s32.totalorder %s9, 1
    %p26 = por %p24, %p25
    %p27 = scmp.ne.s32.totalorder %s19, %s22
    %p28 = scmp.eq.s32.totalorder %s9, 0
    %p29 = por %p27, %p28
    %p30 = scmp.ne.s32.totalorder %s19, %s22
    %p31 = scmp.eq.s32.totalorder %s14, 1
    %p32 = por %p30, %p31
    %p33 = scmp.ne.s32.totalorder %s22, %s23
    %p34 = scmp.eq.s32.totalorder %s14, 0
    %p35 = por %p33, %p34
    %p36 = scmp.ne.s32.totalorder %s22, %s23
    %p37 = scmp.eq.s32.totalorder %s15, 1
    %p38 = por %p36, %p37
    %p40 = scmp.ne.s32.totalorder %s23, %s39
    %p41 = scmp.eq.s32.totalorder %s15, 0
    %p42 = por %p40, %p41
    %s43 = ssub.s32 %s9, %s16
    %p44 = scmp.eq.s32.totalorder %s43, 0
    %s46 = sadd.s32 %s45, 1
    %s47 = scalar_select %p44, %s45, %s46
    %p50 = pneg %p44
    %p51 = scmp.eq.s32.totalorder %s9, 1
    %p52 = por %p50, %p51
    %p53 = scmp.ne.s32.totalorder %s45, %s48
    %p54 = scmp.eq.s32.totalorder %s9, 0
    %p55 = por %p53, %p54
    %p56 = scmp.ne.s32.totalorder %s45, %s48
    %p57 = scmp.eq.s32.totalorder %s14, 1
    %p58 = por %p56, %p57
    %p59 = scmp.ne.s32.totalorder %s48, %s49
    %p60 = scmp.eq.s32.totalorder %s14, 0
    %p61 = por %p59, %p60
    %p62 = scmp.ne.s32.totalorder %s48, %s49
    %p63 = scmp.eq.s32.totalorder %s15, 1
    %p64 = por %p62, %p63
    %p66 = scmp.ne.s32.totalorder %s49, %s65
    %p67 = scmp.eq.s32.totalorder %s15, 0
    %p68 = por %p66, %p67
    %s69 = ssub.s32 %s9, %s16
    %p70 = scmp.eq.s32.totalorder %s69, 0
    %s72 = sadd.s32 %s71, 1
    %s73 = scalar_select %p70, %s71, %s72
    %p76 = pneg %p70
    %p77 = scmp.eq.s32.totalorder %s9, 1
    %p78 = por %p76, %p77
    %p79 = scmp.ne.s32.totalorder %s71, %s74
    %p80 = scmp.eq.s32.totalorder %s9, 0
    %p81 = por %p79, %p80
    %p82 = scmp.ne.s32.totalorder %s71, %s74
    %p83 = scmp.eq.s32.totalorder %s14, 1
    %p84 = por %p82, %p83
    %p85 = scmp.ne.s32.totalorder %s74, %s75
    %p86 = scmp.eq.s32.totalorder %s14, 0
    %p87 = por %p85, %p86
    %p88 = scmp.ne.s32.totalorder %s74, %s75
    %p89 = scmp.eq.s32.totalorder %s15, 1
    %p90 = por %p88, %p89
    %p92 = scmp.ne.s32.totalorder %s75, %s91
    %p93 = scmp.eq.s32.totalorder %s15, 0
    %p94 = por %p92, %p93
    %s95 = ssub.s32 %s9, %s16
    %p96 = scmp.eq.s32.totalorder %s95, 0
    %s98 = sadd.s32 %s97, 1
    %s99 = scalar_select %p96, %s97, %s98
    %p102 = pneg %p96
    %p103 = scmp.eq.s32.totalorder %s9, 1
    %p104 = por %p102, %p103
    %p105 = scmp.ne.s32.totalorder %s97, %s100
    %p106 = scmp.eq.s32.totalorder %s9, 0
    %p107 = por %p105, %p106
    %p108 = scmp.ne.s32.totalorder %s97, %s100
    %p109 = scmp.eq.s32.totalorder %s14, 1
    %p110 = por %p108, %p109
    %p111 = scmp.ne.s32.totalorder %s100, %s101
    %p112 = scmp.eq.s32.totalorder %s14, 0
    %p113 = por %p111, %p112
    %p114 = scmp.ne.s32.totalorder %s100, %s101
    %p115 = scmp.eq.s32.totalorder %s15, 1
    %p116 = por %p114, %p115
    %p118 = scmp.ne.s32.totalorder %s101, %s117
    %p119 = scmp.eq.s32.totalorder %s15, 0
    %p120 = por %p118, %p119
    %p121 = scmp.le.s32.totalorder 1, %s9
    %p122 = scmp.lt.s32.totalorder %s9, 3
    %p123 = pnand %p121, %p122
    %p124 = pneg %p123
    // Predicated region
    $region9: #{flow_generator_forward.78} parent=5 // pred_check
      _
    $region10: #{flow_generator_forward.78} parent=5 // pred_check_branch
      %126 = sbr.rel (%p123) target = $region12
    $region11: #{flow_generator_forward.78} parent=5 // pred_region
      %s127 = ssub.s32 %s9, 1
    $region12: #{flow_generator_forward.78} parent=5 // pred_fallthru
      _
    %p128 = scmp.lt.s32.totalorder %s9, 2
    // Predicated region
    $region13: #{flow_generator_forward.78} parent=5 // pred_check
      %p129 = pneg %p128
    $region14: #{flow_generator_forward.78} parent=5 // pred_check_branch
      %131 = sbr.rel (%p129) target = $region16
    $region15: #{flow_generator_forward.78} parent=5 // pred_region
      // Predicated region
      $region17: #{flow_generator_forward.78} parent=15 // pred_check
        %p132 = pneg %p29
      $region18: #{flow_generator_forward.78} parent=15 // pred_check_branch
        %134 = sbr.rel (%p132) target = $region20
      $region19: #{flow_generator_forward.78} parent=15 // pred_region
        %p135 = scmp.lt.s32.totalorder %s9, 1
        %s136 = scalar_select %p135, %s9, 1
        %s137 = smul.addr %s136, 2
        %s138 = smul.addr %s137, 8
        %s139 = scalar_lea.vmem %s0, %s138
      $region20: #{flow_generator_forward.78} parent=15 // pred_fallthru
        _
      // Predicated region
      $region21: #{flow_generator_forward.78} parent=15 // pred_check
        %p140 = pneg %p55
      $region22: #{flow_generator_forward.78} parent=15 // pred_check_branch
        %142 = sbr.rel (%p140) target = $region24
      $region23: #{flow_generator_forward.78} parent=15 // pred_region
        %p143 = scmp.lt.s32.totalorder %s9, 1
        %s144 = scalar_select %p143, %s9, 1
        %s145 = smul.addr %s144, 2
        %s146 = smul.addr %s145, 8
        %s147 = scalar_lea.vmem %s1, %s146
      $region24: #{flow_generator_forward.78} parent=15 // pred_fallthru
        _
      // Predicated region
      $region25: #{flow_generator_forward.78} parent=15 // pred_check
        %p148 = pneg %p81
      $region26: #{flow_generator_forward.78} parent=15 // pred_check_branch
        %150 = sbr.rel (%p148) target = $region28
      $region27: #{flow_generator_forward.78} parent=15 // pred_region
        %p151 = scmp.lt.s32.totalorder %s9, 1
        %s152 = scalar_select %p151, %s9, 1
        %s153 = smul.addr %s152, 2
        %s154 = smul.addr %s153, 8
        %s155 = scalar_lea.vmem %s2, %s154
      $region28: #{flow_generator_forward.78} parent=15 // pred_fallthru
        _
    $region16: #{flow_generator_forward.78} parent=5 // pred_fallthru
      _
    %p156 = scmp.le.s32.totalorder 1, %s9
    %p157 = scmp.lt.s32.totalorder %s9, 3
    %p158 = pnand %p156, %p157
    %p159 = pneg %p158
    // Predicated region
    $region29: #{flow_generator_forward.78} parent=5 // pred_check
      _
    $region30: #{flow_generator_forward.78} parent=5 // pred_check_branch
      %161 = sbr.rel (%p158) target = $region32
    $region31: #{flow_generator_forward.78} parent=5 // pred_region
      %s162 = ssub.s32 %s9, 1
      %p163 = scmp.lt.s32.totalorder %s14, 1
      %s164 = scalar_select %p163, %s14, 1
      %s165 = smul.addr %s164, 2
      %s166 = smul.addr %s165, 8
      %s167 = scalar_lea.vmem %s0, %s166
      %p168 = pneg %p35
      %p169 = pneg %p32
      %p170 = scmp.lt.s32.totalorder %s14, 1
      %s171 = scalar_select %p170, %s14, 1
      %s172 = smul.addr %s171, 2
      %s173 = smul.addr %s172, 8
      %s174 = scalar_lea.vmem %s1, %s173
      %p175 = pneg %p61
      %p176 = pneg %p58
      %p177 = scmp.lt.s32.totalorder %s14, 1
      %s178 = scalar_select %p177, %s14, 1
      %s179 = smul.addr %s178, 2
      %s180 = smul.addr %s179, 8
      %s181 = scalar_lea.vmem %s2, %s180
      %p182 = pneg %p87
      %p183 = pneg %p84
      %p184 = pneg %p113
      %p185 = pneg %p110
      %p186 = scmp.lt.s32.totalorder %s14, 1
      %s187 = scalar_select %p186, %s14, 1
      %s188 = smul.addr %s187, 2
      %s189 = smul.addr %s188, 8
      %s190 = scalar_lea.vmem %s3, %s189
      %p191 = scmp.lt.s32.totalorder %s14, 1
      %s192 = scalar_select %p191, %s14, 1
      %s193 = smul.addr %s192, 2
      %s194 = smul.addr %s193, 8
      %s195 = scalar_lea.vmem %s0, %s194
      %p196 = scmp.lt.s32.totalorder %s14, 1
      %s197 = scalar_select %p196, %s14, 1
      %s198 = smul.addr %s197, 2
      %s199 = smul.addr %s198, 8
      %s200 = scalar_lea.vmem %s1, %s199
      %p201 = scmp.lt.s32.totalorder %s14, 1
      %s202 = scalar_select %p201, %s14, 1
      %s203 = smul.addr %s202, 2
      %s204 = smul.addr %s203, 8
      %s205 = scalar_lea.vmem %s2, %s204
      %p206 = scmp.lt.s32.totalorder %s14, 1
      %s207 = scalar_select %p206, %s14, 1
      %s208 = smul.addr %s207, 2
      %s209 = smul.addr %s208, 8
      %s210 = scalar_lea.vmem %s3, %s209
      %v212 = vld [vmem:[%s195] sm:$0xff]
      %v213 = vld [vmem:[%s195 + $0x8] sm:$0xff]
      %v214 = vld [vmem:[%s200] sm:$0xff]
      %v215 = vld [vmem:[%s200 + $0x8] sm:$0xff]
      %v216 = vld [vmem:[%s205] sm:$0xff]
      %v217 = vld [vmem:[%s205 + $0x8] sm:$0xff]
      %v218 = vmul.f32 %v214, -2.0
      %v219 = vmul.f32 %v215, -2.0
      %v220 = vmul.f32 %v218, 1.442695
      %v221 = vpow.pop %v220
      %v222 = vmul.f32 %v219, 1.442695
      %v223 = vpow.pop %v222
      %v224 = vpack.c.bf16 %v223, %v221
      %v225 = vmul.f32 %v216, -0.5
      %v226 = vmul.f32 %v217, -0.5
      %v227 = vmul.f32 %v225, %v216
      %v228 = vmul.f32 %v226, %v217
      %v229 = vpack.c.bf16 %v228, %v227
      %230 = vxpose.xlu0.c.b16.start [1/8] %v224, 128
      %231 = vxpose.xlu0.c.b16.cont [2/8] 0, 128
      %232 = vxpose.xlu0.c.b16.cont [3/8] 0, 128
      %233 = vxpose.xlu0.c.b16.cont [4/8] 0, 128
      %234 = vxpose.xlu0.c.b16.cont [5/8] 0, 128
      %235 = vxpose.xlu0.c.b16.cont [6/8] 0, 128
      %236 = vxpose.xlu0.c.b16.cont [7/8] 0, 128
      %237 = vxpose.xlu0.c.b16.end [8/8] 0, 128
      %v238 = vpop.trf.xlu0
      %v239 = vpop.trf.xlu0
      %v240 = vpop.trf.xlu0
      %v241 = vpop.trf.xlu0
      %v242 = vpop.trf.xlu0
      %v243 = vpop.trf.xlu0
      %v244 = vpop.trf.xlu0
      %v245 = vpop.trf.xlu0
      %vm246 = vcmask 130048
      %v248 = vsel %vm246, %v238, 0
      %250 = vmatpush.bf16.msra.mxu0 0
      %251 = vmatpush.bf16.msra.mxu0 0
      %252 = vmatpush.bf16.msra.mxu0 0
      %253 = vmatpush.bf16.msra.mxu0 0
      %254 = vmatpush.bf16.msra.mxu0 0
      %255 = vmatpush.bf16.msra.mxu0 0
      %256 = vmatpush.bf16.msra.mxu0 0
      %257 = vmatpush.bf16.msra.mxu0 %v229
      %258 = vmatmul.bf16.gmra.mxu0 %v248
      %v259 = vpop.f32.mrf.mxu0
      %v260 = vadd.f32 0.0, %v259
      %v261 = vpop.f32.mrf.mxu0
      %v262 = vadd.f32 0.0, %v261
      %263 = vdwg.mxu0
      %v264 = vmul.f32 %v212, %v221
      %v265 = vmul.f32 %v213, %v223
      %v266 = vpack.c.bf16 %v265, %v264
      %v267 = vpack.c.bf16 %v217, %v216
      %268 = vxpose.xlu0.c.b16.start [1/8] %v266, 128
      %269 = vxpose.xlu0.c.b16.cont [2/8] 0, 128
      %270 = vxpose.xlu0.c.b16.cont [3/8] 0, 128
      %271 = vxpose.xlu0.c.b16.cont [4/8] 0, 128
      %272 = vxpose.xlu0.c.b16.cont [5/8] 0, 128
      %273 = vxpose.xlu0.c.b16.cont [6/8] 0, 128
      %274 = vxpose.xlu0.c.b16.cont [7/8] 0, 128
      %275 = vxpose.xlu0.c.b16.end [8/8] 0, 128
      %v276 = vpop.trf.xlu0
      %v277 = vpop.trf.xlu0
      %v278 = vpop.trf.xlu0
      %v279 = vpop.trf.xlu0
      %v280 = vpop.trf.xlu0
      %v281 = vpop.trf.xlu0
      %v282 = vpop.trf.xlu0
      %v283 = vpop.trf.xlu0
      %v285 = vsel %vm246, %v276, 0
      %287 = vmatpush.bf16.msra.mxu0 0
      %288 = vmatpush.bf16.msra.mxu0 0
      %289 = vmatpush.bf16.msra.mxu0 0
      %290 = vmatpush.bf16.msra.mxu0 0
      %291 = vmatpush.bf16.msra.mxu0 0
      %292 = vmatpush.bf16.msra.mxu0 0
      %293 = vmatpush.bf16.msra.mxu0 0
      %294 = vmatpush.bf16.msra.mxu0 %v267
      %295 = vmatmul.bf16.gmra.mxu0 %v285
      %v296 = vpop.f32.mrf.mxu0
      %v297 = vadd.f32 0.0, %v296
      %v298 = vpop.f32.mrf.mxu0
      %v299 = vadd.f32 0.0, %v298
      %300 = vdwg.mxu0
      %v301 = vsub.f32 -0.9189385, %v214
      %v302 = vsub.f32 -0.9189385, %v215
      %v303 = vmul.f32 %v212, 0.5
      %v304 = vmul.f32 %v213, 0.5
      %v305 = vmul.f32 %v303, %v212
      %v306 = vmul.f32 %v304, %v213
      %v307 = vmul.f32 %v305, %v221
      %v308 = vmul.f32 %v306, %v223
      %v309 = vsub.f32 %v301, %v307
      %v310 = vsub.f32 %v302, %v308
      %311 = vxpose.xlu0.b32.start [1/16] %v309, 128
      %312 = vxpose.xlu0.b32.cont [2/16] %v310, 128
      %313 = vxpose.xlu0.b32.cont [3/16] 0.0, 128
      %314 = vxpose.xlu0.b32.cont [4/16] 0.0, 128
      %315 = vxpose.xlu0.b32.cont [5/16] 0.0, 128
      %316 = vxpose.xlu0.b32.cont [6/16] 0.0, 128
      %317 = vxpose.xlu0.b32.cont [7/16] 0.0, 128
      %318 = vxpose.xlu0.b32.cont [8/16] 0.0, 128
      %319 = vxpose.xlu0.b32.cont [9/16] 0.0, 128
      %320 = vxpose.xlu0.b32.cont [10/16] 0.0, 128
      %321 = vxpose.xlu0.b32.cont [11/16] 0.0, 128
      %322 = vxpose.xlu0.b32.cont [12/16] 0.0, 128
      %323 = vxpose.xlu0.b32.cont [13/16] 0.0, 128
      %324 = vxpose.xlu0.b32.cont [14/16] 0.0, 128
      %325 = vxpose.xlu0.b32.cont [15/16] 0.0, 128
      %326 = vxpose.xlu0.b32.end [16/16] 0.0, 128
      %v327 = vpop.trf.xlu0
      %v328 = vpop.trf.xlu0
      %v329 = vpop.trf.xlu0
      %v330 = vpop.trf.xlu0
      %v331 = vpop.trf.xlu0
      %v332 = vpop.trf.xlu0
      %v333 = vpop.trf.xlu0
      %v334 = vpop.trf.xlu0
      %v335 = vpop.trf.xlu0
      %v336 = vpop.trf.xlu0
      %v337 = vpop.trf.xlu0
      %v338 = vpop.trf.xlu0
      %v339 = vpop.trf.xlu0
      %v340 = vpop.trf.xlu0
      %v341 = vpop.trf.xlu0
      %v342 = vpop.trf.xlu0
      %v344 = vsel %vm246, %v327, 0
      %v347 = vsel %vm246, %v328, 0
      %349 = vmatpush.msra.mxu0 0.0
      %350 = vmatpush.msra.mxu0 0.0
      %351 = vmatpush.msra.mxu0 0.0
      %352 = vmatpush.msra.mxu0 0.0
      %353 = vmatpush.msra.mxu0 0.0
      %354 = vmatpush.msra.mxu0 0.0
      %355 = vmatpush.msra.mxu0 0.0
      %356 = vmatpush.msra.mxu0 0.0
      %357 = vmatpush.msra.mxu0 0.0
      %358 = vmatpush.msra.mxu0 0.0
      %359 = vmatpush.msra.mxu0 0.0
      %360 = vmatpush.msra.mxu0 0.0
      %361 = vmatpush.msra.mxu0 0.0
      %362 = vmatpush.msra.mxu0 0.0
      %363 = vmatpush.msra.mxu0 1.0
      %364 = vmatpush.msra.mxu0 1.0
      %365 = vmatmul.f32.gmra.mxu0 %v344
      %v366 = vpop.f32.mrf.mxu0
      %v367 = vadd.f32 %v260, %v366
      %368 = vmatmul.f32.gmra.mxu0 %v347
      %v369 = vpop.f32.mrf.mxu0
      %v370 = vadd.f32 %v262, %v369
      %371 = vdwg.mxu0
      %v372 = vadd.f32 %v367, %v297
      %v373 = vadd.f32 %v370, %v299
      %vm374 = vcmask 195584
      %375 = vst.msk [vmem:[%s210] sm:$0xff] %vm374, %v372
      %376 = vst.msk [vmem:[%s210 + $0x8] sm:$0xff] %vm374, %v373
      %p377 = scmp.lt.s32.totalorder %s14, 1
      %s378 = scalar_select %p377, %s14, 1
      %s379 = smul.addr %s378, 2
      %s380 = smul.addr %s379, 8
      %s381 = scalar_lea.vmem %s3, %s380
      // Predicated region
      $region33: #{flow_generator_forward.78} parent=31 // pred_check
        %p382 = pneg %p110
      $region34: #{flow_generator_forward.78} parent=31 // pred_check_branch
        %384 = sbr.rel (%p382) target = $region36
      $region35: #{flow_generator_forward.78} parent=31 // pred_region
        _
      $region36: #{flow_generator_forward.78} parent=31 // pred_fallthru
        _
    $region32: #{flow_generator_forward.78} parent=5 // pred_fallthru
      _
    %p385 = scmp.le.s32.totalorder 2, %s9
    // Predicated region
    $region37: #{flow_generator_forward.78} parent=5 // pred_check
      %p386 = pneg %p385
    $region38: #{flow_generator_forward.78} parent=5 // pred_check_branch
      %388 = sbr.rel (%p386) target = $region40
    $region39: #{flow_generator_forward.78} parent=5 // pred_region
      %s389 = ssub.s32 %s9, 2
      // Predicated region
      $region41: #{flow_generator_forward.78} parent=39 // pred_check
        %p390 = pneg %p116
      $region42: #{flow_generator_forward.78} parent=39 // pred_check_branch
        %392 = sbr.rel (%p390) target = $region44
      $region43: #{flow_generator_forward.78} parent=39 // pred_region
        %p393 = scmp.lt.s32.totalorder %s15, 1
        %s394 = scalar_select %p393, %s15, 1
        %s395 = smul.addr %s394, 2
        %s396 = smul.addr %s395, 8
        %s397 = scalar_lea.vmem %s3, %s396
      $region44: #{flow_generator_forward.78} parent=39 // pred_fallthru
        _
    $region40: #{flow_generator_forward.78} parent=5 // pred_fallthru
      _
  $region6: #{flow_generator_forward.78} parent=0 // loop_footer
    %s13 = sadd.s32 1, %s9
  $region7: #{flow_generator_forward.78} parent=0 // loop_footer_branch
    %8 = sbr.rel target = $region3
  $region8: #{flow_generator_forward.78} parent=0 // loop_exit
    _

// kernel: custom-call.18
$region0: #{custom-call.18}
  %s0 = inlined_call_operand.vmem [shape: f32[4,4], index: 0, kind: input, shape index: {}]
  %s1 = inlined_call_operand.vmem [shape: f32[4,4], index: 1, kind: output, shape index: {0}]
  %s2 = inlined_call_operand.vmem [shape: s32[4], index: 2, kind: output, shape index: {1}]
  %s3 = inlined_call_operand.hbm [shape: s32[4], index: 3, kind: output, shape index: {2}]
  %4 = xla_tuple %s1, %s2, %s3
  $region1: #{custom-call.18} parent=0
    #allocation0 [shape = 'u8[4096]{0}', space=vmem, size = 0x1000, scoped, tag = 'operand span for operand 0']
    #allocation1 [shape = 'u8[2048]{0}', space=vmem, size = 0x800, scoped, tag = 'packed  for operand 0']
    #allocation2 [shape = 'u8[4096]{0}', space=vmem, size = 0x1000, scoped, tag = 'operand span for operand 1']
    #allocation3 [shape = 'u8[2048]{0}', space=vmem, size = 0x800, scoped, tag = 'packed  for operand 1']
    #allocation4 [shape = 'u8[4096]{0}', space=vmem, size = 0x1000, scoped, tag = 'operand span for operand 2']
    #allocation5 [shape = 'u8[512]{0}', space=vmem, size = 0x400, scoped, tag = 'packed  for operand 2']
    #allocation6 [shape = 'u8[4096]{0}', space=vmem, size = 0x1000, scoped, tag = 'operand span for operand 3']
    #allocation7 [shape = 'u8[512]{0}', space=vmem, size = 0x400, scoped, tag = 'packed  for operand 3']
    #allocation8 [shape = 's32[1]{0}', space=sflag, size = 0x4, scoped, tag = 'scoped memory for custom-call.18']
    #allocation9 [shape = 's32[4,128]{1,0}', space=vmem, size = 0x1000, scoped, tag = 'scratch for permutations']
    %5 = vsyncpa [#allocation8], 0
    // Predicated region
    $region2: #{custom-call.18} parent=1 // pred_check
      _
    $region3: #{custom-call.18} parent=1 // pred_check_branch
      %7 = sbr.rel (0) target = $region5
    $region4: #{custom-call.18} parent=1 // pred_region
      %p9 = scmp.gt.s32.totalorder 0, 0
      // Predicated region
      $region6: #{custom-call.18} parent=4 // pred_check
        %p10 = pneg %p9
      $region7: #{custom-call.18} parent=4 // pred_check_branch
        %12 = sbr.rel (%p10) target = $region9
      $region8: #{custom-call.18} parent=4 // pred_region
        %s13 = ssub.s32 0, 1
        %s14 = smul.u32 %s13, 8
        %s15 = scalar_lea.vmem %s0, %s14
        %v16 = vld [vmem:[%s0] sm:$0xff]
        // While loop
        $region10: #{custom-call.18} parent=8 // loop_pre_header
          _
        $region11: #{custom-call.18} parent=8 // loop_header
          %s17 = sphi %s0, %s39
          %s18 = sphi [#allocation1], %s40
          %v19 = vphi %v16, %v41
          %s20 = ssub.s32 %s15, 64
          %p21 = scmp.gt.s32.totalorder %s17, %s20
        $region12: #{custom-call.18} parent=8 // loop_header_branch
          %23 = sbr.rel (%p21) target = $region16
        $region13: #{custom-call.18} parent=8 // loop_body
          %24 = vst [vmem:[%s18] sm:$0xff] %v19
          %v25 = vld [vmem:[%s17 + $0x8] sm:$0xff]
          %26 = vst [vmem:[%s18 + $0x8] sm:$0xff] %v25
          %v27 = vld [vmem:[%s17 + $0x10] sm:$0xff]
          %28 = vst [vmem:[%s18 + $0x10] sm:$0xff] %v27
          %v29 = vld [vmem:[%s17 + $0x18] sm:$0xff]
          %30 = vst [vmem:[%s18 + $0x18] sm:$0xff] %v29
          %v31 = vld [vmem:[%s17 + $0x20] sm:$0xff]
          %32 = vst [vmem:[%s18 + $0x20] sm:$0xff] %v31
          %v33 = vld [vmem:[%s17 + $0x28] sm:$0xff]
          %34 = vst [vmem:[%s18 + $0x28] sm:$0xff] %v33
          %v35 = vld [vmem:[%s17 + $0x30] sm:$0xff]
          %36 = vst [vmem:[%s18 + $0x30] sm:$0xff] %v35
          %v37 = vld [vmem:[%s17 + $0x38] sm:$0xff]
          %38 = vst [vmem:[%s18 + $0x38] sm:$0xff] %v37
        $region14: #{custom-call.18} parent=8 // loop_footer
          %s39 = scalar_lea.vmem %s17, 64
          %s40 = scalar_lea.vmem %s18, 64
          %v41 = vld [vmem:[%s17 + $0x40] sm:$0xff]
        $region15: #{custom-call.18} parent=8 // loop_footer_branch
          %42 = sbr.rel target = $region11
        $region16: #{custom-call.18} parent=8 // loop_exit
          _
        // While loop
        $region17: #{custom-call.18} parent=8 // loop_pre_header
          _
        $region18: #{custom-call.18} parent=8 // loop_header
          %s43 = sphi %s17, %s51
          %s44 = sphi %s18, %s52
          %v45 = vphi %v19, %v45
          %p46 = scmp.gt.s32.totalorder %s43, %s15
        $region19: #{custom-call.18} parent=8 // loop_header_branch
          %48 = sbr.rel (%p46) target = $region23
        $region20: #{custom-call.18} parent=8 // loop_body
          %v49 = vld [vmem:[%s43] sm:$0xff]
          %50 = vst [vmem:[%s44] sm:$0xff] %v49
        $region21: #{custom-call.18} parent=8 // loop_footer
          %s51 = scalar_lea.vmem %s43, 8
          %s52 = scalar_lea.vmem %s44, 8
        $region22: #{custom-call.18} parent=8 // loop_footer_branch
          %53 = sbr.rel target = $region18
        $region23: #{custom-call.18} parent=8 // loop_exit
          _
      $region9: #{custom-call.18} parent=4 // pred_fallthru
        _
      %s55 = ssub.s32 16, 1
      %s56 = smul.u32 0, 8
      %s57 = scalar_lea.vmem [#allocation1], %s56
      %s58 = smul.u32 0, 8
      %s59 = scalar_lea.vmem %s0, %s58
      %v60 = vld [vmem:[%s59] sm:%s55]
      %61 = vst [vmem:[%s57] sm:%s55] %v60
    $region5: #{custom-call.18} parent=1 // pred_fallthru
      _
    %s63 = ssub.s32 16, 1
    %v64 = vld [vmem:[#allocation1] sm:%s63]
    %65 = vst [vmem:[#allocation0] sm:%s63] %v64
    %v66 = vld [vmem:[#allocation0] sm:$0xff]
    %67 = vst [vmem:[#allocation2] sm:$0xff] %v66
    %68 = vst [vmem:[#allocation4] sm:$0x1] 0
    %v69 = vlaneseq
    %v70 = vshrl.u32 %v69, 7
    %v71 = vmov %v70
    %73 = vst [vmem:[#allocation9] sm:$0xff] %v71
    loop: start=0, step=1, limit=4
    $region25: #{custom-call.18} parent=1 // loop_pre_header
      _
    $region26: #{custom-call.18} parent=1 // loop_header
      %s75 = sphi 0, %s79
      %p76 = scmp.ge.s32.totalorder %s75, 4
    $region27: #{custom-call.18} parent=1 // loop_header_branch
      %78 = sbr.rel (%p76) target = $region31
    $region28: #{custom-call.18} parent=1 // loop_body
      %v80 = vstv %s75
      %v81 = vlaneseq
      %v82 = vshrl.u32 %v81, 7
      %v83 = vmov %v82
      %v84 = vld [vmem:[#allocation2] sm:$0xff]
      %v85 = vand.u32 2147483647, %v84
      %v87 = vstv %s75
      %vm88 = vcmp.ge.s32.totalorder %v83, %v87
      %vm89 = vcmp.lt.s32.totalorder %v83, 4
      %vm90 = vmand %vm88, %vm89
      %vm91 = vcmp.lt.f32.partialorder -inf, %v85
      %vm92 = vmand %vm90, %vm91
      %v93 = vsel %vm92, %v83, %v80
      %v94 = vsel %vm92, %v85, -inf
      %v95 = vrot.slane %v94, 1
      %v96 = vrot.slane %v93, 1
      %vm97 = vcmp.ge.f32.partialorder %v95, %v94
      %v98 = vsel %vm97, %v95, %v94
      %v99 = vsel %vm97, %v96, %v93
      %v100 = vrot.slane %v95, 1
      %v101 = vrot.slane %v96, 1
      %vm102 = vcmp.ge.f32.partialorder %v100, %v98
      %v103 = vsel %vm102, %v100, %v98
      %v104 = vsel %vm102, %v101, %v99
      %v105 = vrot.slane %v100, 1
      %v106 = vrot.slane %v101, 1
      %vm107 = vcmp.ge.f32.partialorder %v105, %v103
      %v108 = vsel %vm107, %v105, %v103
      %v109 = vsel %vm107, %v106, %v104
      %v110 = vrot.slane %v105, 1
      %v111 = vrot.slane %v106, 1
      %vm112 = vcmp.ge.f32.partialorder %v110, %v108
      %v113 = vsel %vm112, %v110, %v108
      %v114 = vsel %vm112, %v111, %v109
      %v115 = vrot.slane %v110, 1
      %v116 = vrot.slane %v111, 1
      %vm117 = vcmp.ge.f32.partialorder %v115, %v113
      %v118 = vsel %vm117, %v115, %v113
      %v119 = vsel %vm117, %v116, %v114
      %v120 = vrot.slane %v115, 1
      %v121 = vrot.slane %v116, 1
      %vm122 = vcmp.ge.f32.partialorder %v120, %v118
      %v123 = vsel %vm122, %v120, %v118
      %v124 = vsel %vm122, %v121, %v119
      %v125 = vrot.slane %v120, 1
      %v126 = vrot.slane %v121, 1
      %vm127 = vcmp.ge.f32.partialorder %v125, %v123
      %v128 = vsel %vm127, %v125, %v123
      %v129 = vsel %vm127, %v126, %v124
      %s130 = ssub.s32 128, %s75
      %131 = vrot.lane.b32.xlu0 %v129, %s130
      %v132 = vpop.permute.xlu0 %131
      %s133 = vtos %v132
      %v134 = vstv %s75
      %v135 = vlaneseq
      %v136 = vand.u32 %v135, 127
      %vm137 = vcmp.eq.s32.totalorder %v136, %v134
      %v138 = vstv %s133
      %v139 = vld [vmem:[#allocation4] ss:$0 sm:$0xff]
      %v140 = vsel %vm137, %v138, %v139
      %141 = vst [vmem:[#allocation4] sm:$0x1] %v140
      %s142 = scalar_lea.vmem [#allocation2], %s75
      %s143 = scalar_lea.vmem [#allocation2], %s133
      %v144 = vld [vmem:[%s142] ss:$0 sm:$0xff]
      %v145 = vld [vmem:[%s143] ss:$0 sm:$0xff]
      %146 = vst [vmem:[%s143] sm:$0x1] %v144
      %147 = vst [vmem:[%s142] sm:$0x1] %v145
      %s148 = scalar_lea.vmem [#allocation9], %s75
      %s149 = scalar_lea.vmem [#allocation9], %s133
      %v150 = vld [vmem:[%s148] ss:$0 sm:$0xff]
      %v151 = vld [vmem:[%s149] ss:$0 sm:$0xff]
      %152 = vst [vmem:[%s149] sm:$0x1] %v150
      %153 = vst [vmem:[%s148] sm:$0x1] %v151
      %vm154 = vcmp.ne.f32.partialorder %v145, 0.0
      %vm155 = vmand %vm137, %vm154
      %v156 = vsel %vm155, %v145, 1.0
      %v157 = vlaneseq
      %v158 = vand.u32 %v157, 127
      %v159 = vstv %s75
      %vm160 = vcmp.gt.s32.totalorder %v158, %v159
      %v161 = vsel %vm160, %v145, 0.0
      %v162 = vlaneseq
      %v163 = vshrl.u32 %v162, 7
      %v164 = vmov %v163
      %v165 = vld [vmem:[#allocation2] sm:$0xff]
      %v167 = vstv %s75
      %vm168 = vcmp.gt.s32.totalorder %v164, %v167
      %v169 = vsel %vm168, %v156, 1.0
      %v170 = vrcp.pop %v169
      %v171 = vmul.f32 %v169, %v170
      %v172 = vsub.f32 1.0, %v171
      %v173 = vmul.f32 %v170, %v172
      %v174 = vadd.f32 %v170, %v173
      %vm175 = vweird.f32 %v169
      %vm176 = vweird.f32 %v170
      %vm177 = vmor %vm175, %vm176
      %v178 = vsel %vm177, %v170, %v174
      %v179 = vand.u32 2147483647, %v169
      %vm180 = vcmp.eq.f32.partialorder %v179, 8.507059e+37
      %v181 = vand.u32 %v169, 2147483648
      %v182 = vor.u32 1.1754944e-38, %v181
      %v183 = vsel %vm180, %v182, %v178
      %v184 = vmul.f32 %v165, %v183
      %vm185 = vmand %vm168, %vm137
      %v186 = vsel %vm185, %v184, 0.0
      %187 = vadd.xlane.f32.xlu0 %v186
      %v188 = vpop.xlane.xlu0 %187
      %v189 = vmul.f32 %v188, %v161
      %v190 = vsub.f32 %v184, %v189
      %191 = vst [vmem:[#allocation2] sm:$0xff] %v190
    $region29: #{custom-call.18} parent=1 // loop_footer
      %s79 = sadd.s32 1, %s75
    $region30: #{custom-call.18} parent=1 // loop_footer_branch
      %74 = sbr.rel target = $region26
    $region31: #{custom-call.18} parent=1 // loop_exit
      _
    %v192 = vld [vmem:[#allocation9] sm:$0xff]
    %s193 = scalar_lea.vmem [#allocation9], 8
    %s194 = scalar_lea.vmem [#allocation9], 16
    %s195 = scalar_lea.vmem [#allocation9], 24
    %s196 = scalar_lea.vmem [#allocation9], 32
    %s197 = scalar_lea.vmem [#allocation9], 40
    %s198 = scalar_lea.vmem [#allocation9], 48
    %s199 = scalar_lea.vmem [#allocation9], 56
    %s200 = scalar_lea.vmem [#allocation9], 64
    %s201 = scalar_lea.vmem [#allocation9], 72
    %s202 = scalar_lea.vmem [#allocation9], 80
    %s203 = scalar_lea.vmem [#allocation9], 88
    %s204 = scalar_lea.vmem [#allocation9], 96
    %s205 = scalar_lea.vmem [#allocation9], 104
    %s206 = scalar_lea.vmem [#allocation9], 112
    %s207 = scalar_lea.vmem [#allocation9], 120
    %208 = vxpose.xlu0.b32.start [1/16] %v192, 128
    %209 = vxpose.xlu0.b32.cont [2/16] 0, 128
    %210 = vxpose.xlu0.b32.cont [3/16] 0, 128
    %211 = vxpose.xlu0.b32.cont [4/16] 0, 128
    %212 = vxpose.xlu0.b32.cont [5/16] 0, 128
    %213 = vxpose.xlu0.b32.cont [6/16] 0, 128
    %214 = vxpose.xlu0.b32.cont [7/16] 0, 128
    %215 = vxpose.xlu0.b32.cont [8/16] 0, 128
    %216 = vxpose.xlu0.b32.cont [9/16] 0, 128
    %217 = vxpose.xlu0.b32.cont [10/16] 0, 128
    %218 = vxpose.xlu0.b32.cont [11/16] 0, 128
    %219 = vxpose.xlu0.b32.cont [12/16] 0, 128
    %220 = vxpose.xlu0.b32.cont [13/16] 0, 128
    %221 = vxpose.xlu0.b32.cont [14/16] 0, 128
    %222 = vxpose.xlu0.b32.cont [15/16] 0, 128
    %223 = vxpose.xlu0.b32.end [16/16] 0, 128
    %v224 = vpop.trf.xlu0
    %v225 = vpop.trf.xlu0
    %v226 = vpop.trf.xlu0
    %v227 = vpop.trf.xlu0
    %v228 = vpop.trf.xlu0
    %v229 = vpop.trf.xlu0
    %v230 = vpop.trf.xlu0
    %v231 = vpop.trf.xlu0
    %v232 = vpop.trf.xlu0
    %v233 = vpop.trf.xlu0
    %v234 = vpop.trf.xlu0
    %v235 = vpop.trf.xlu0
    %v236 = vpop.trf.xlu0
    %v237 = vpop.trf.xlu0
    %v238 = vpop.trf.xlu0
    %v239 = vpop.trf.xlu0
    %240 = vst [vmem:[#allocation6] sm:$0x1] %v224
    %s242 = ssub.s32 16, 1
    %v243 = vld [vmem:[#allocation2] sm:%s242]
    %s245 = ssub.s32 16, 1
    %246 = vst [vmem:[#allocation3] sm:%s245] %v243
    %s248 = ssub.s32 2, 1
    %v249 = vld [vmem:[#allocation4] sm:%s248]
    %s251 = ssub.s32 2, 1
    %252 = vst [vmem:[#allocation5] sm:%s251] %v249
    %s254 = ssub.s32 2, 1
    %v255 = vld [vmem:[#allocation6] sm:%s254]
    %s257 = ssub.s32 2, 1
    %258 = vst [vmem:[#allocation7] sm:%s257] %v255
    // Predicated region
    $region32: #{custom-call.18} parent=1 // pred_check
      _
    $region33: #{custom-call.18} parent=1 // pred_check_branch
      %260 = sbr.rel (0) target = $region35
    $region34: #{custom-call.18} parent=1 // pred_region
      %p262 = scmp.gt.s32.totalorder 0, 0
      // Predicated region
      $region36: #{custom-call.18} parent=34 // pred_check
        %p263 = pneg %p262
      $region37: #{custom-call.18} parent=34 // pred_check_branch
        %265 = sbr.rel (%p263) target = $region39
      $region38: #{custom-call.18} parent=34 // pred_region
        %s266 = ssub.s32 0, 1
        %s267 = smul.u32 %s266, 8
        %s268 = scalar_lea.vmem [#allocation3], %s267
        %v269 = vld [vmem:[#allocation3] sm:$0xff]
        // While loop
        $region40: #{custom-call.18} parent=38 // loop_pre_header
          _
        $region41: #{custom-call.18} parent=38 // loop_header
          %s270 = sphi [#allocation3], %s292
          %s271 = sphi %s1, %s293
          %v272 = vphi %v269, %v294
          %s273 = ssub.s32 %s268, 64
          %p274 = scmp.gt.s32.totalorder %s270, %s273
        $region42: #{custom-call.18} parent=38 // loop_header_branch
          %276 = sbr.rel (%p274) target = $region46
        $region43: #{custom-call.18} parent=38 // loop_body
          %277 = vst [vmem:[%s271] sm:$0xff] %v272
          %v278 = vld [vmem:[%s270 + $0x8] sm:$0xff]
          %279 = vst [vmem:[%s271 + $0x8] sm:$0xff] %v278
          %v280 = vld [vmem:[%s270 + $0x10] sm:$0xff]
          %281 = vst [vmem:[%s271 + $0x10] sm:$0xff] %v280
          %v282 = vld [vmem:[%s270 + $0x18] sm:$0xff]
          %283 = vst [vmem:[%s271 + $0x18] sm:$0xff] %v282
          %v284 = vld [vmem:[%s270 + $0x20] sm:$0xff]
          %285 = vst [vmem:[%s271 + $0x20] sm:$0xff] %v284
          %v286 = vld [vmem:[%s270 + $0x28] sm:$0xff]
          %287 = vst [vmem:[%s271 + $0x28] sm:$0xff] %v286
          %v288 = vld [vmem:[%s270 + $0x30] sm:$0xff]
          %289 = vst [vmem:[%s271 + $0x30] sm:$0xff] %v288
          %v290 = vld [vmem:[%s270 + $0x38] sm:$0xff]
          %291 = vst [vmem:[%s271 + $0x38] sm:$0xff] %v290
        $region44: #{custom-call.18} parent=38 // loop_footer
          %s292 = scalar_lea.vmem %s270, 64
          %s293 = scalar_lea.vmem %s271, 64
          %v294 = vld [vmem:[%s270 + $0x40] sm:$0xff]
        $region45: #{custom-call.18} parent=38 // loop_footer_branch
          %295 = sbr.rel target = $region41
        $region46: #{custom-call.18} parent=38 // loop_exit
          _
        // While loop
        $region47: #{custom-call.18} parent=38 // loop_pre_header
          _
        $region48: #{custom-call.18} parent=38 // loop_header
          %s296 = sphi %s270, %s304
          %s297 = sphi %s271, %s305
          %v298 = vphi %v272, %v298
          %p299 = scmp.gt.s32.totalorder %s296, %s268
        $region49: #{custom-call.18} parent=38 // loop_header_branch
          %301 = sbr.rel (%p299) target = $region53
        $region50: #{custom-call.18} parent=38 // loop_body
          %v302 = vld [vmem:[%s296] sm:$0xff]
          %303 = vst [vmem:[%s297] sm:$0xff] %v302
        $region51: #{custom-call.18} parent=38 // loop_footer
          %s304 = scalar_lea.vmem %s296, 8
          %s305 = scalar_lea.vmem %s297, 8
        $region52: #{custom-call.18} parent=38 // loop_footer_branch
          %306 = sbr.rel target = $region48
        $region53: #{custom-call.18} parent=38 // loop_exit
          _
      $region39: #{custom-call.18} parent=34 // pred_fallthru
        _
      %s308 = ssub.s32 16, 1
      %s309 = smul.u32 0, 8
      %s310 = scalar_lea.vmem %s1, %s309
      %s311 = smul.u32 0, 8
      %s312 = scalar_lea.vmem [#allocation3], %s311
      %v313 = vld [vmem:[%s312] sm:%s308]
      %314 = vst [vmem:[%s310] sm:%s308] %v313
    $region35: #{custom-call.18} parent=1 // pred_fallthru
      _
    // Predicated region
    $region54: #{custom-call.18} parent=1 // pred_check
      _
    $region55: #{custom-call.18} parent=1 // pred_check_branch
      %316 = sbr.rel (0) target = $region57
    $region56: #{custom-call.18} parent=1 // pred_region
      // Predicated region
      $region58: #{custom-call.18} parent=56 // pred_check
        _
      $region59: #{custom-call.18} parent=56 // pred_check_branch
        %318 = sbr.rel (0) target = $region61
      $region60: #{custom-call.18} parent=56 // pred_region
        %p320 = scmp.gt.s32.totalorder 0, 0
        // Predicated region
        $region62: #{custom-call.18} parent=60 // pred_check
          %p321 = pneg %p320
        $region63: #{custom-call.18} parent=60 // pred_check_branch
          %323 = sbr.rel (%p321) target = $region65
        $region64: #{custom-call.18} parent=60 // pred_region
          %s324 = ssub.s32 0, 1
          %s325 = smul.u32 %s324, 8
          %s326 = scalar_lea.vmem [#allocation5], %s325
          %v327 = vld [vmem:[#allocation5] sm:$0xff]
          // While loop
          $region66: #{custom-call.18} parent=64 // loop_pre_header
            _
          $region67: #{custom-call.18} parent=64 // loop_header
            %s328 = sphi [#allocation5], %s350
            %s329 = sphi %s2, %s351
            %v330 = vphi %v327, %v352
            %s331 = ssub.s32 %s326, 64
            %p332 = scmp.gt.s32.totalorder %s328, %s331
          $region68: #{custom-call.18} parent=64 // loop_header_branch
            %334 = sbr.rel (%p332) target = $region72
          $region69: #{custom-call.18} parent=64 // loop_body
            %335 = vst [vmem:[%s329] sm:$0xff] %v330
            %v336 = vld [vmem:[%s328 + $0x8] sm:$0xff]
            %337 = vst [vmem:[%s329 + $0x8] sm:$0xff] %v336
            %v338 = vld [vmem:[%s328 + $0x10] sm:$0xff]
            %339 = vst [vmem:[%s329 + $0x10] sm:$0xff] %v338
            %v340 = vld [vmem:[%s328 + $0x18] sm:$0xff]
            %341 = vst [vmem:[%s329 + $0x18] sm:$0xff] %v340
            %v342 = vld [vmem:[%s328 + $0x20] sm:$0xff]
            %343 = vst [vmem:[%s329 + $0x20] sm:$0xff] %v342
            %v344 = vld [vmem:[%s328 + $0x28] sm:$0xff]
            %345 = vst [vmem:[%s329 + $0x28] sm:$0xff] %v344
            %v346 = vld [vmem:[%s328 + $0x30] sm:$0xff]
            %347 = vst [vmem:[%s329 + $0x30] sm:$0xff] %v346
            %v348 = vld [vmem:[%s328 + $0x38] sm:$0xff]
            %349 = vst [vmem:[%s329 + $0x38] sm:$0xff] %v348
          $region70: #{custom-call.18} parent=64 // loop_footer
            %s350 = scalar_lea.vmem %s328, 64
            %s351 = scalar_lea.vmem %s329, 64
            %v352 = vld [vmem:[%s328 + $0x40] sm:$0xff]
          $region71: #{custom-call.18} parent=64 // loop_footer_branch
            %353 = sbr.rel target = $region67
          $region72: #{custom-call.18} parent=64 // loop_exit
            _
          // While loop
          $region73: #{custom-call.18} parent=64 // loop_pre_header
            _
          $region74: #{custom-call.18} parent=64 // loop_header
            %s354 = sphi %s328, %s362
            %s355 = sphi %s329, %s363
            %v356 = vphi %v330, %v356
            %p357 = scmp.gt.s32.totalorder %s354, %s326
          $region75: #{custom-call.18} parent=64 // loop_header_branch
            %359 = sbr.rel (%p357) target = $region79
          $region76: #{custom-call.18} parent=64 // loop_body
            %v360 = vld [vmem:[%s354] sm:$0xff]
            %361 = vst [vmem:[%s355] sm:$0xff] %v360
          $region77: #{custom-call.18} parent=64 // loop_footer
            %s362 = scalar_lea.vmem %s354, 8
            %s363 = scalar_lea.vmem %s355, 8
          $region78: #{custom-call.18} parent=64 // loop_footer_branch
            %364 = sbr.rel target = $region74
          $region79: #{custom-call.18} parent=64 // loop_exit
            _
        $region65: #{custom-call.18} parent=60 // pred_fallthru
          _
        %s366 = ssub.s32 2, 1
        %s367 = smul.u32 0, 8
        %s368 = scalar_lea.vmem %s2, %s367
        %s369 = smul.u32 0, 8
        %s370 = scalar_lea.vmem [#allocation5], %s369
        %v371 = vld [vmem:[%s370] sm:%s366]
        %372 = vst [vmem:[%s368] sm:%s366] %v371
      $region61: #{custom-call.18} parent=56 // pred_fallthru
        _
    $region57: #{custom-call.18} parent=1 // pred_fallthru
      _
    // Predicated region
    $region80: #{custom-call.18} parent=1 // pred_check
      _
    $region81: #{custom-call.18} parent=1 // pred_check_branch
      %374 = sbr.rel (0) target = $region83
    $region82: #{custom-call.18} parent=1 // pred_region
      %376 = vsyncadd [#allocation8], 0
      %s378 = sshll.u32 [#allocation7], 4
      %s379 = int_to_ptr.vmem [resolvable:$true] %s378
      %s380 = sshll.u32 %s3, 4
      %s381 = int_to_ptr.hbm [resolvable:$true] %s380
      %383 = dma.vmem_to_hbm [thread:$0]  %s379, 16, %s381, [#allocation8]
    $region83: #{custom-call.18} parent=1 // pred_fallthru
      _
    // Predicated region
    $region84: #{custom-call.18} parent=1 // pred_check
      _
    $region85: #{custom-call.18} parent=1 // pred_check_branch
      %385 = sbr.rel (0) target = $region87
    $region86: #{custom-call.18} parent=1 // pred_region
      _
    $region87: #{custom-call.18} parent=1 // pred_fallthru
      _
    // Predicated region
    $region88: #{custom-call.18} parent=1 // pred_check
      _
    $region89: #{custom-call.18} parent=1 // pred_check_branch
      %387 = sbr.rel (0) target = $region91
    $region90: #{custom-call.18} parent=1 // pred_region
      %389 = dma.done [#allocation8], 16
    $region91: #{custom-call.18} parent=1 // pred_fallthru
      _
    %390 = vsyncpa [#allocation8], 1

// kernel: flow_generator_forward.79
$region0: #{flow_generator_forward.79}
  #allocation0 [shape = 'u32[]', space=smem, size = 0x4, offset = 0x4, fixed_abs, tag = 'smem constant byte address 0x4 - core index']
  #allocation1 [shape = 'u32[72,128]{1,0:T(1,128)}', space=vmem, size = 0x9000, scoped, tag = 'internal scratch']
  %s0 = inlined_call_operand.vmem [shape: f32[2,16,24], index: 0, kind: input, shape index: {}]
  %s1 = inlined_call_operand.vmem [shape: f32[2,16,16], index: 1, kind: input, shape index: {}]
  %s2 = inlined_call_operand.vmem [shape: f32[2,16,16], index: 2, kind: input, shape index: {}]
  %s3 = inlined_call_operand.hbm [shape: f32[2,16,24], index: 3, kind: output, shape index: {0}]
  %s4 = inlined_call_operand.hbm [shape: f32[2,16,24], index: 4, kind: output, shape index: {1}]
  %5 = xla_tuple %s3, %s4
  %s6 = sld [smem:[#allocation0]]
  $region53: #{flow_generator_forward.79} parent=0
    _
  %s8 = ssub.s32 1, %s6
  %s9 = scalar_select 0, %s8, %s6
  $region1: #{flow_generator_forward.79} parent=0
    #allocation2 [shape = 'u8[16384]{0}', space=vmem, size = 0x4000, scoped, tag = 'output window, operand 0']
    #allocation3 [shape = 's32[2]{0}', space=sflag, size = 0x8, scoped, tag = 'scoped memory for flow_generator_forward.79']
    #allocation4 [shape = 'u8[16384]{0}', space=vmem, size = 0x4000, scoped, tag = 'output window, operand 1']
    #allocation5 [shape = 's32[2]{0}', space=sflag, size = 0x8, scoped, tag = 'scoped memory for flow_generator_forward.79']
    %10 = vsyncpa [#allocation3], 0
    %s11 = scalar_lea.sflag [#allocation3], 1
    %12 = vsyncpa %s11, 0
    %13 = vsyncpa [#allocation5], 0
    %s14 = scalar_lea.sflag [#allocation5], 1
    %15 = vsyncpa %s14, 0
    loop: start=0, step=1, limit=4
    $region2: #{flow_generator_forward.79} parent=1 // loop_pre_header
      _
    $region3: #{flow_generator_forward.79} parent=1 // loop_header
      %s17 = sphi 0, %s21
      %p18 = scmp.ge.s32.totalorder %s17, 4
      %s27 = sphi 0, %s29
      %s30 = sphi 0, %s27
      %s31 = sphi 0, %s30
      %s47 = sphi 0, %s31
      %s53 = sphi 0, %s55
      %s56 = sphi 0, %s53
      %s57 = sphi 0, %s56
      %s73 = sphi 0, %s57
      %s79 = sphi 0, %s81
      %s82 = sphi 0, %s79
      %s83 = sphi 0, %s82
      %s99 = sphi 0, %s83
      %s105 = sphi 0, %s107
      %s108 = sphi 0, %s105
      %s109 = sphi 0, %s108
      %s125 = sphi 0, %s109
      %s131 = sphi 0, %s133
      %s134 = sphi 0, %s131
      %s135 = sphi 0, %s134
      %s151 = sphi 0, %s135
    $region4: #{flow_generator_forward.79} parent=1 // loop_header_branch
      %20 = sbr.rel (%p18) target = $region8
    $region5: #{flow_generator_forward.79} parent=1 // loop_body
      %s22 = ssub.s32 %s17, 1
      %s23 = ssub.s32 %s17, 2
      %s24 = sadd.s32 %s17, 1
      %s25 = ssub.s32 %s17, %s24
      %p26 = scmp.eq.s32.totalorder %s25, 0
      %s28 = sadd.s32 %s27, 1
      %s29 = scalar_select %p26, %s27, %s28
      %p32 = pneg %p26
      %p33 = scmp.eq.s32.totalorder %s17, 1
      %p34 = por %p32, %p33
      %p35 = scmp.ne.s32.totalorder %s27, %s30
      %p36 = scmp.eq.s32.totalorder %s17, 0
      %p37 = por %p35, %p36
      %p38 = scmp.ne.s32.totalorder %s27, %s30
      %p39 = scmp.eq.s32.totalorder %s22, 1
      %p40 = por %p38, %p39
      %p41 = scmp.ne.s32.totalorder %s30, %s31
      %p42 = scmp.eq.s32.totalorder %s22, 0
      %p43 = por %p41, %p42
      %p44 = scmp.ne.s32.totalorder %s30, %s31
      %p45 = scmp.eq.s32.totalorder %s23, 1
      %p46 = por %p44, %p45
      %p48 = scmp.ne.s32.totalorder %s31, %s47
      %p49 = scmp.eq.s32.totalorder %s23, 0
      %p50 = por %p48, %p49
      %s51 = ssub.s32 %s17, %s24
      %p52 = scmp.eq.s32.totalorder %s51, 0
      %s54 = sadd.s32 %s53, 1
      %s55 = scalar_select %p52, %s53, %s54
      %p58 = pneg %p52
      %p59 = scmp.eq.s32.totalorder %s17, 1
      %p60 = por %p58, %p59
      %p61 = scmp.ne.s32.totalorder %s53, %s56
      %p62 = scmp.eq.s32.totalorder %s17, 0
      %p63 = por %p61, %p62
      %p64 = scmp.ne.s32.totalorder %s53, %s56
      %p65 = scmp.eq.s32.totalorder %s22, 1
      %p66 = por %p64, %p65
      %p67 = scmp.ne.s32.totalorder %s56, %s57
      %p68 = scmp.eq.s32.totalorder %s22, 0
      %p69 = por %p67, %p68
      %p70 = scmp.ne.s32.totalorder %s56, %s57
      %p71 = scmp.eq.s32.totalorder %s23, 1
      %p72 = por %p70, %p71
      %p74 = scmp.ne.s32.totalorder %s57, %s73
      %p75 = scmp.eq.s32.totalorder %s23, 0
      %p76 = por %p74, %p75
      %s77 = ssub.s32 %s17, %s24
      %p78 = scmp.eq.s32.totalorder %s77, 0
      %s80 = sadd.s32 %s79, 1
      %s81 = scalar_select %p78, %s79, %s80
      %p84 = pneg %p78
      %p85 = scmp.eq.s32.totalorder %s17, 1
      %p86 = por %p84, %p85
      %p87 = scmp.ne.s32.totalorder %s79, %s82
      %p88 = scmp.eq.s32.totalorder %s17, 0
      %p89 = por %p87, %p88
      %p90 = scmp.ne.s32.totalorder %s79, %s82
      %p91 = scmp.eq.s32.totalorder %s22, 1
      %p92 = por %p90, %p91
      %p93 = scmp.ne.s32.totalorder %s82, %s83
      %p94 = scmp.eq.s32.totalorder %s22, 0
      %p95 = por %p93, %p94
      %p96 = scmp.ne.s32.totalorder %s82, %s83
      %p97 = scmp.eq.s32.totalorder %s23, 1
      %p98 = por %p96, %p97
      %p100 = scmp.ne.s32.totalorder %s83, %s99
      %p101 = scmp.eq.s32.totalorder %s23, 0
      %p102 = por %p100, %p101
      %s103 = ssub.s32 %s17, %s24
      %p104 = scmp.eq.s32.totalorder %s103, 0
      %s106 = sadd.s32 %s105, 1
      %s107 = scalar_select %p104, %s105, %s106
      %p110 = pneg %p104
      %p111 = scmp.eq.s32.totalorder %s17, 1
      %p112 = por %p110, %p111
      %p113 = scmp.ne.s32.totalorder %s105, %s108
      %p114 = scmp.eq.s32.totalorder %s17, 0
      %p115 = por %p113, %p114
      %p116 = scmp.ne.s32.totalorder %s105, %s108
      %p117 = scmp.eq.s32.totalorder %s22, 1
      %p118 = por %p116, %p117
      %p119 = scmp.ne.s32.totalorder %s108, %s109
      %p120 = scmp.eq.s32.totalorder %s22, 0
      %p121 = por %p119, %p120
      %p122 = scmp.ne.s32.totalorder %s108, %s109
      %p123 = scmp.eq.s32.totalorder %s23, 1
      %p124 = por %p122, %p123
      %p126 = scmp.ne.s32.totalorder %s109, %s125
      %p127 = scmp.eq.s32.totalorder %s23, 0
      %p128 = por %p126, %p127
      %s129 = ssub.s32 %s17, %s24
      %p130 = scmp.eq.s32.totalorder %s129, 0
      %s132 = sadd.s32 %s131, 1
      %s133 = scalar_select %p130, %s131, %s132
      %p136 = pneg %p130
      %p137 = scmp.eq.s32.totalorder %s17, 1
      %p138 = por %p136, %p137
      %p139 = scmp.ne.s32.totalorder %s131, %s134
      %p140 = scmp.eq.s32.totalorder %s17, 0
      %p141 = por %p139, %p140
      %p142 = scmp.ne.s32.totalorder %s131, %s134
      %p143 = scmp.eq.s32.totalorder %s22, 1
      %p144 = por %p142, %p143
      %p145 = scmp.ne.s32.totalorder %s134, %s135
      %p146 = scmp.eq.s32.totalorder %s22, 0
      %p147 = por %p145, %p146
      %p148 = scmp.ne.s32.totalorder %s134, %s135
      %p149 = scmp.eq.s32.totalorder %s23, 1
      %p150 = por %p148, %p149
      %p152 = scmp.ne.s32.totalorder %s135, %s151
      %p153 = scmp.eq.s32.totalorder %s23, 0
      %p154 = por %p152, %p153
      %p155 = scmp.le.s32.totalorder 1, %s17
      %p156 = scmp.lt.s32.totalorder %s17, 3
      %p157 = pnand %p155, %p156
      %p158 = pneg %p157
      // Predicated region
      $region9: #{flow_generator_forward.79} parent=5 // pred_check
        _
      $region10: #{flow_generator_forward.79} parent=5 // pred_check_branch
        %160 = sbr.rel (%p157) target = $region12
      $region11: #{flow_generator_forward.79} parent=5 // pred_region
        %s161 = ssub.s32 %s17, 1
      $region12: #{flow_generator_forward.79} parent=5 // pred_fallthru
        _
      %p162 = scmp.lt.s32.totalorder %s17, 2
      // Predicated region
      $region13: #{flow_generator_forward.79} parent=5 // pred_check
        %p163 = pneg %p162
      $region14: #{flow_generator_forward.79} parent=5 // pred_check_branch
        %165 = sbr.rel (%p163) target = $region16
      $region15: #{flow_generator_forward.79} parent=5 // pred_region
        // Predicated region
        $region17: #{flow_generator_forward.79} parent=15 // pred_check
          %p166 = pneg %p37
        $region18: #{flow_generator_forward.79} parent=15 // pred_check_branch
          %168 = sbr.rel (%p166) target = $region20
        $region19: #{flow_generator_forward.79} parent=15 // pred_region
          %p169 = scmp.lt.s32.totalorder %s17, 1
          %s170 = scalar_select %p169, %s17, 1
          %s171 = smul.addr %s170, 2
          %s172 = smul.addr %s171, 8
          %s173 = scalar_lea.vmem %s0, %s172
        $region20: #{flow_generator_forward.79} parent=15 // pred_fallthru
          _
        // Predicated region
        $region21: #{flow_generator_forward.79} parent=15 // pred_check
          %p174 = pneg %p63
        $region22: #{flow_generator_forward.79} parent=15 // pred_check_branch
          %176 = sbr.rel (%p174) target = $region24
        $region23: #{flow_generator_forward.79} parent=15 // pred_region
          %p177 = scmp.lt.s32.totalorder %s17, 1
          %s178 = scalar_select %p177, %s17, 1
          %s179 = smul.addr %s178, 2
          %s180 = smul.addr %s179, 8
          %s181 = scalar_lea.vmem %s1, %s180
        $region24: #{flow_generator_forward.79} parent=15 // pred_fallthru
          _
        // Predicated region
        $region25: #{flow_generator_forward.79} parent=15 // pred_check
          %p182 = pneg %p89
        $region26: #{flow_generator_forward.79} parent=15 // pred_check_branch
          %184 = sbr.rel (%p182) target = $region28
        $region27: #{flow_generator_forward.79} parent=15 // pred_region
          %p185 = scmp.lt.s32.totalorder %s17, 1
          %s186 = scalar_select %p185, %s17, 1
          %s187 = smul.addr %s186, 2
          %s188 = smul.addr %s187, 8
          %s189 = scalar_lea.vmem %s2, %s188
        $region28: #{flow_generator_forward.79} parent=15 // pred_fallthru
          _
      $region16: #{flow_generator_forward.79} parent=5 // pred_fallthru
        _
      %p190 = scmp.le.s32.totalorder 1, %s17
      %p191 = scmp.lt.s32.totalorder %s17, 3
      %p192 = pnand %p190, %p191
      %p193 = pneg %p192
      // Predicated region
      $region29: #{flow_generator_forward.79} parent=5 // pred_check
        _
      $region30: #{flow_generator_forward.79} parent=5 // pred_check_branch
        %195 = sbr.rel (%p192) target = $region32
      $region31: #{flow_generator_forward.79} parent=5 // pred_region
        %s196 = ssub.s32 %s17, 1
        %p197 = scmp.lt.s32.totalorder %s22, 1
        %s198 = scalar_select %p197, %s22, 1
        %s199 = smul.addr %s198, 2
        %s200 = smul.addr %s199, 8
        %s201 = scalar_lea.vmem %s0, %s200
        %p202 = pneg %p43
        %p203 = pneg %p40
        %p204 = scmp.lt.s32.totalorder %s22, 1
        %s205 = scalar_select %p204, %s22, 1
        %s206 = smul.addr %s205, 2
        %s207 = smul.addr %s206, 8
        %s208 = scalar_lea.vmem %s1, %s207
        %p209 = pneg %p69
        %p210 = pneg %p66
        %p211 = scmp.lt.s32.totalorder %s22, 1
        %s212 = scalar_select %p211, %s22, 1
        %s213 = smul.addr %s212, 2
        %s214 = smul.addr %s213, 8
        %s215 = scalar_lea.vmem %s2, %s214
        %p216 = pneg %p95
        %p217 = pneg %p92
        %p218 = pneg %p121
        %p219 = pneg %p118
        %s220 = sand.u32 %s108, 1
        %s221 = scalar_lea.sflag [#allocation3], %s220
        %s222 = sand.u32 %s108, 1
        %s223 = smul.addr %s222, 16
        %s224 = scalar_lea.vmem [#allocation2], %s223
        %p225 = pneg %p147
        %p226 = pneg %p144
        %s227 = sand.u32 %s134, 1
        %s228 = scalar_lea.sflag [#allocation5], %s227
        %s229 = sand.u32 %s134, 1
        %s230 = smul.addr %s229, 16
        %s231 = scalar_lea.vmem [#allocation4], %s230
        %p232 = scmp.lt.s32.totalorder %s22, 1
        %s233 = scalar_select %p232, %s22, 1
        %s234 = smul.addr %s233, 2
        %s235 = smul.addr %s234, 8
        %s236 = scalar_lea.vmem %s0, %s235
        %p237 = scmp.lt.s32.totalorder %s22, 1
        %s238 = scalar_select %p237, %s22, 1
        %s239 = smul.addr %s238, 2
        %s240 = smul.addr %s239, 8
        %s241 = scalar_lea.vmem %s1, %s240
        %p242 = scmp.lt.s32.totalorder %s22, 1
        %s243 = scalar_select %p242, %s22, 1
        %s244 = smul.addr %s243, 2
        %s245 = smul.addr %s244, 8
        %s246 = scalar_lea.vmem %s2, %s245
        %v248 = vld [vmem:[%s236] sm:$0xff]
        %v249 = vld [vmem:[%s236 + $0x8] sm:$0xff]
        %v250 = vpack.c.bf16 %v249, %v248
        %v251 = vld [vmem:[%s241] sm:$0xff]
        %v252 = vld [vmem:[%s241 + $0x8] sm:$0xff]
        %v253 = vpack.c.bf16 %v252, %v251
        %vm254 = vcmask 130048
        %v256 = vsel %vm254, %v253, 0
        %258 = vmatpush.bf16.msra.mxu0 0
        %259 = vmatpush.bf16.msra.mxu0 0
        %260 = vmatpush.bf16.msra.mxu0 0
        %261 = vmatpush.bf16.msra.mxu0 0
        %262 = vmatpush.bf16.msra.mxu0 0
        %263 = vmatpush.bf16.msra.mxu0 0
        %264 = vmatpush.bf16.msra.mxu0 0
        %265 = vmatpush.bf16.msra.mxu0 %v250
        %266 = vmatmul.bf16.gmra.mxu0 %v256
        %v267 = vpop.f32.mrf.mxu0
        %v268 = vadd.f32 0.0, %v267
        %v269 = vpop.f32.mrf.mxu0
        %v270 = vadd.f32 0.0, %v269
        %271 = vdwg.mxu0
        %vm272 = vcmask 195584
        %273 = vst.msk [vmem:[%s224] sm:$0xff] %vm272, %v268
        %274 = vst.msk [vmem:[%s224 + $0x8] sm:$0xff] %vm272, %v270
        %v275 = vld [vmem:[%s246] sm:$0xff]
        %v276 = vld [vmem:[%s246 + $0x8] sm:$0xff]
        %v277 = vpack.c.bf16 %v276, %v275
        %v279 = vsel %vm254, %v277, 0
        %281 = vmatpush.bf16.msra.mxu0 0
        %282 = vmatpush.bf16.msra.mxu0 0
        %283 = vmatpush.bf16.msra.mxu0 0
        %284 = vmatpush.bf16.msra.mxu0 0
        %285 = vmatpush.bf16.msra.mxu0 0
        %286 = vmatpush.bf16.msra.mxu0 0
        %287 = vmatpush.bf16.msra.mxu0 0
        %288 = vmatpush.bf16.msra.mxu0 %v250
        %289 = vmatmul.bf16.gmra.mxu0 %v279
        %v290 = vpop.f32.mrf.mxu0
        %v291 = vadd.f32 0.0, %v290
        %v292 = vpop.f32.mrf.mxu0
        %v293 = vadd.f32 0.0, %v292
        %294 = vdwg.mxu0
        %295 = vst.msk [vmem:[%s231] sm:$0xff] %vm272, %v291
        %296 = vst.msk [vmem:[%s231 + $0x8] sm:$0xff] %vm272, %v293
        %s297 = sand.u32 %s108, 1
        %s298 = scalar_lea.sflag [#allocation3], %s297
        %s299 = sand.u32 %s108, 1
        %s300 = smul.addr %s299, 16
        %s301 = scalar_lea.vmem [#allocation2], %s300
        %s302 = sand.u32 %s134, 1
        %s303 = scalar_lea.sflag [#allocation5], %s302
        %s304 = sand.u32 %s134, 1
        %s305 = smul.addr %s304, 16
        %s306 = scalar_lea.vmem [#allocation4], %s305
        // Predicated region
        $region33: #{flow_generator_forward.79} parent=31 // pred_check
          %p307 = pneg %p118
        $region34: #{flow_generator_forward.79} parent=31 // pred_check_branch
          %309 = sbr.rel (%p307) target = $region36
        $region35: #{flow_generator_forward.79} parent=31 // pred_region
          %311 = vsyncadd %s298, 0
          %s312 = smul.addr %s22, 2
          %s313 = smul.addr %s312, 8
          %s314 = scalar_lea.hbm %s3, %s313
          %s315 = sshll.u32 %s301, 4
          %s316 = int_to_ptr.vmem [resolvable:$true] %s315
          %s317 = sshll.u32 %s314, 4
          %s318 = int_to_ptr.hbm [resolvable:$true] %s317
          %323 = dma.vmem_to_hbm [thread:$0]  %s316, 256, %s318, %s298, 128, 128, 8
        $region36: #{flow_generator_forward.79} parent=31 // pred_fallthru
          _
        // Predicated region
        $region37: #{flow_generator_forward.79} parent=31 // pred_check
          %p324 = pneg %p144
        $region38: #{flow_generator_forward.79} parent=31 // pred_check_branch
          %326 = sbr.rel (%p324) target = $region40
        $region39: #{flow_generator_forward.79} parent=31 // pred_region
          %328 = vsyncadd %s303, 0
          %s329 = smul.addr %s22, 2
          %s330 = smul.addr %s329, 8
          %s331 = scalar_lea.hbm %s4, %s330
          %s332 = sshll.u32 %s306, 4
          %s333 = int_to_ptr.vmem [resolvable:$true] %s332
          %s334 = sshll.u32 %s331, 4
          %s335 = int_to_ptr.hbm [resolvable:$true] %s334
          %340 = dma.vmem_to_hbm [thread:$0]  %s333, 256, %s335, %s303, 128, 128, 8
        $region40: #{flow_generator_forward.79} parent=31 // pred_fallthru
          _
      $region32: #{flow_generator_forward.79} parent=5 // pred_fallthru
        _
      %p341 = scmp.le.s32.totalorder 2, %s17
      // Predicated region
      $region41: #{flow_generator_forward.79} parent=5 // pred_check
        %p342 = pneg %p341
      $region42: #{flow_generator_forward.79} parent=5 // pred_check_branch
        %344 = sbr.rel (%p342) target = $region44
      $region43: #{flow_generator_forward.79} parent=5 // pred_region
        %s345 = ssub.s32 %s17, 2
        // Predicated region
        $region45: #{flow_generator_forward.79} parent=43 // pred_check
          %p346 = pneg %p124
        $region46: #{flow_generator_forward.79} parent=43 // pred_check_branch
          %348 = sbr.rel (%p346) target = $region48
        $region47: #{flow_generator_forward.79} parent=43 // pred_region
          %s349 = sand.u32 %s109, 1
          %s350 = scalar_lea.sflag [#allocation3], %s349
          %s351 = sand.u32 %s109, 1
          %s352 = smul.addr %s351, 16
          %s353 = scalar_lea.vmem [#allocation2], %s352
          %355 = dma.done %s350, 256
        $region48: #{flow_generator_forward.79} parent=43 // pred_fallthru
          _
        // Predicated region
        $region49: #{flow_generator_forward.79} parent=43 // pred_check
          %p356 = pneg %p150
        $region50: #{flow_generator_forward.79} parent=43 // pred_check_branch
          %358 = sbr.rel (%p356) target = $region52
        $region51: #{flow_generator_forward.79} parent=43 // pred_region
          %s359 = sand.u32 %s135, 1
          %s360 = scalar_lea.sflag [#allocation5], %s359
          %s361 = sand.u32 %s135, 1
          %s362 = smul.addr %s361, 16
          %s363 = scalar_lea.vmem [#allocation4], %s362
          %365 = dma.done %s360, 256
        $region52: #{flow_generator_forward.79} parent=43 // pred_fallthru
          _
      $region44: #{flow_generator_forward.79} parent=5 // pred_fallthru
        _
    $region6: #{flow_generator_forward.79} parent=1 // loop_footer
      %s21 = sadd.s32 1, %s17
    $region7: #{flow_generator_forward.79} parent=1 // loop_footer_branch
      %16 = sbr.rel target = $region3
    $region8: #{flow_generator_forward.79} parent=1 // loop_exit
      _
    %366 = vsyncpa [#allocation3], 1
    %s367 = scalar_lea.sflag [#allocation3], 1
    %368 = vsyncpa %s367, 1
    %369 = vsyncpa [#allocation5], 1
    %s370 = scalar_lea.sflag [#allocation5], 1
    %371 = vsyncpa %s370, 1

// kernel: flow_generator_forward.60
$region0: #{flow_generator_forward.60}
  #allocation0 [shape = 'u32[]', space=smem, size = 0x4, offset = 0x4, fixed_abs, tag = 'smem constant byte address 0x4 - core index']
  #allocation1 [shape = 'u32[72,128]{1,0:T(1,128)}', space=vmem, size = 0x9000, scoped, tag = 'internal scratch']
  %s0 = inlined_call_operand.vmem [shape: bf16[192,32], index: 0, kind: input, shape index: {}]
  %s1 = inlined_call_operand.vmem [shape: f32[32,192], index: 1, kind: input, shape index: {}]
  %s2 = inlined_call_operand.vmem [shape: f32[32,1], index: 2, kind: input, shape index: {}]
  %s3 = inlined_call_operand.vmem [shape: f32[32,32], index: 3, kind: output, shape index: {}]
  %s4 = sld [smem:[#allocation0]]
  $region22: #{flow_generator_forward.60} parent=0
    _
  %s6 = ssub.s32 1, %s4
  %s7 = scalar_select 0, %s6, %s4
  // Predicated region
  $region2: #{flow_generator_forward.60} parent=0 // pred_check
    _
  $region3: #{flow_generator_forward.60} parent=0 // pred_check_branch
    %9 = sbr.rel (0) target = $region5
  $region4: #{flow_generator_forward.60} parent=0 // pred_region
    _
  $region5: #{flow_generator_forward.60} parent=0 // pred_fallthru
    _
  // Predicated region
  $region6: #{flow_generator_forward.60} parent=0 // pred_check
    _
  $region7: #{flow_generator_forward.60} parent=0 // pred_check_branch
    %11 = sbr.rel (0) target = $region9
  $region8: #{flow_generator_forward.60} parent=0 // pred_region
    _
  $region9: #{flow_generator_forward.60} parent=0 // pred_fallthru
    _
  // Predicated region
  $region10: #{flow_generator_forward.60} parent=0 // pred_check
    _
  $region11: #{flow_generator_forward.60} parent=0 // pred_check_branch
    %13 = sbr.rel (0) target = $region13
  $region12: #{flow_generator_forward.60} parent=0 // pred_region
    _
  $region13: #{flow_generator_forward.60} parent=0 // pred_fallthru
    _
  %v15 = vld [vmem:[%s0] sm:$0xf]
  %v16 = vld [vmem:[%s0 + $0x4] sm:$0xf]
  %v17 = vld [vmem:[%s0 + $0x8] sm:$0xf]
  %v18 = vld [vmem:[%s0 + $0xc] sm:$0xf]
  %v19 = vld [vmem:[%s0 + $0x10] sm:$0xf]
  %v20 = vld [vmem:[%s0 + $0x14] sm:$0xf]
  %v21 = vld [vmem:[%s0 + $0x18] sm:$0xf]
  %v22 = vld [vmem:[%s0 + $0x1c] sm:$0xf]
  %v23 = vld [vmem:[%s0 + $0x20] sm:$0xf]
  %v24 = vld [vmem:[%s0 + $0x24] sm:$0xf]
  %v25 = vld [vmem:[%s0 + $0x28] sm:$0xf]
  %v26 = vld [vmem:[%s0 + $0x2c] sm:$0xf]
  %v27 = vld [vmem:[%s0 + $0x30] sm:$0xf]
  %v28 = vld [vmem:[%s0 + $0x34] sm:$0xf]
  %v29 = vld [vmem:[%s0 + $0x38] sm:$0xf]
  %v30 = vld [vmem:[%s0 + $0x3c] sm:$0xf]
  %v31 = vld [vmem:[%s0 + $0x40] sm:$0xf]
  %v32 = vld [vmem:[%s0 + $0x44] sm:$0xf]
  %v33 = vld [vmem:[%s0 + $0x48] sm:$0xf]
  %v34 = vld [vmem:[%s0 + $0x4c] sm:$0xf]
  %v35 = vld [vmem:[%s0 + $0x50] sm:$0xf]
  %v36 = vld [vmem:[%s0 + $0x54] sm:$0xf]
  %v37 = vld [vmem:[%s0 + $0x58] sm:$0xf]
  %v38 = vld [vmem:[%s0 + $0x5c] sm:$0xf]
  %v39 = vld [vmem:[%s1] sm:$0xff]
  %v40 = vld [vmem:[%s1 + $0x8] sm:$0xff]
  %v41 = vld [vmem:[%s1 + $0x10] sm:$0xff]
  %v42 = vld [vmem:[%s1 + $0x18] sm:$0xff]
  %v43 = vld [vmem:[%s1 + $0x20] sm:$0xff]
  %v44 = vld [vmem:[%s1 + $0x28] sm:$0xff]
  %v45 = vld [vmem:[%s1 + $0x30] sm:$0xff]
  %v46 = vld [vmem:[%s1 + $0x38] sm:$0xff]
  %v47 = vpack.c.bf16 %v41, %v39
  %v48 = vpack.c.bf16 %v42, %v40
  %v49 = vpack.c.bf16 %v45, %v43
  %v50 = vpack.c.bf16 %v46, %v44
  %v51 = vld [vmem:[%s2] sm:$0xff]
  %v52 = vld [vmem:[%s2 + $0x8] sm:$0xff]
  %v53 = vld [vmem:[%s2 + $0x10] sm:$0xff]
  %v54 = vld [vmem:[%s2 + $0x18] sm:$0xff]
  %56 = vset.pattern.permute.xlu0 0
  %57 = vperm.xlu0 %56, %v51
  %v58 = vpop.permute.xlu0 %57
  %61 = vset.pattern.permute.xlu0 0
  %62 = vperm.xlu0 %61, %v52
  %v63 = vpop.permute.xlu0 %62
  %66 = vset.pattern.permute.xlu0 0
  %67 = vperm.xlu0 %66, %v53
  %v68 = vpop.permute.xlu0 %67
  %71 = vset.pattern.permute.xlu0 0
  %72 = vperm.xlu0 %71, %v54
  %v73 = vpop.permute.xlu0 %72
  %v99 = vunpack.c.l.b16 %v15
  %v100 = vunpack.c.l.b16 %v16
  %v101 = vunpack.c.l.b16 %v17
  %v102 = vunpack.c.l.b16 %v18
  %v103 = vunpack.c.l.b16 %v19
  %v104 = vunpack.c.l.b16 %v20
  %v105 = vunpack.c.l.b16 %v21
  %v106 = vunpack.c.l.b16 %v22
  %v107 = vunpack.c.l.b16 %v23
  %v108 = vunpack.c.l.b16 %v24
  %v109 = vunpack.c.l.b16 %v25
  %v110 = vunpack.c.l.b16 %v26
  %v111 = vunpack.c.l.b16 %v27
  %v112 = vunpack.c.l.b16 %v28
  %v113 = vunpack.c.l.b16 %v29
  %v114 = vunpack.c.l.b16 %v30
  %v115 = vunpack.c.l.b16 %v31
  %v116 = vunpack.c.l.b16 %v32
  %v117 = vunpack.c.l.b16 %v33
  %v118 = vunpack.c.l.b16 %v34
  %v119 = vunpack.c.l.b16 %v35
  %v120 = vunpack.c.l.b16 %v36
  %v121 = vunpack.c.l.b16 %v37
  %v122 = vunpack.c.l.b16 %v38
  %v123 = vpack.c.b16 %v100, %v99
  %v124 = vpack.c.b16 %v102, %v101
  %v125 = vpack.c.b16 %v104, %v103
  %v126 = vpack.c.b16 %v106, %v105
  %v127 = vpack.c.b16 %v108, %v107
  %v128 = vpack.c.b16 %v110, %v109
  %v129 = vpack.c.b16 %v112, %v111
  %v130 = vpack.c.b16 %v114, %v113
  %v131 = vpack.c.b16 %v116, %v115
  %v132 = vpack.c.b16 %v118, %v117
  %v133 = vpack.c.b16 %v120, %v119
  %v134 = vpack.c.b16 %v122, %v121
  %vm147 = vcmask 523264
  %v149 = vsel %vm147, %v48, 0
  %v152 = vsel %vm147, %v50, 0
  %154 = vmatpush.bf16.msra.mxu0 %v130
  %155 = vmatpush.bf16.msra.mxu0 %v129
  %156 = vmatpush.bf16.msra.mxu0 %v128
  %157 = vmatpush.bf16.msra.mxu0 %v127
  %158 = vmatpush.bf16.msra.mxu0 %v126
  %159 = vmatpush.bf16.msra.mxu0 %v125
  %160 = vmatpush.bf16.msra.mxu0 %v124
  %161 = vmatpush.bf16.msra.mxu0 %v123
  %162 = vmatmul.bf16.gmra.mxu0 %v47
  %v163 = vpop.f32.mrf.mxu0
  %v164 = vadd.f32 %v58, %v163
  %v165 = vpop.f32.mrf.mxu0
  %v166 = vadd.f32 %v63, %v165
  %167 = vmatmul.bf16.gmra.mxu0 %v49
  %v168 = vpop.f32.mrf.mxu0
  %v169 = vadd.f32 %v68, %v168
  %v170 = vpop.f32.mrf.mxu0
  %v171 = vadd.f32 %v73, %v170
  %172 = vdwg.mxu0
  %173 = vmatpush.bf16.msra.mxu0 0
  %174 = vmatpush.bf16.msra.mxu0 0
  %175 = vmatpush.bf16.msra.mxu0 0
  %176 = vmatpush.bf16.msra.mxu0 0
  %177 = vmatpush.bf16.msra.mxu0 %v134
  %178 = vmatpush.bf16.msra.mxu0 %v133
  %179 = vmatpush.bf16.msra.mxu0 %v132
  %180 = vmatpush.bf16.msra.mxu0 %v131
  %181 = vmatmul.bf16.gmra.mxu0 %v149
  %v182 = vpop.f32.mrf.mxu0
  %v183 = vadd.f32 %v164, %v182
  %v184 = vpop.f32.mrf.mxu0
  %v185 = vadd.f32 %v166, %v184
  %186 = vmatmul.bf16.gmra.mxu0 %v152
  %v187 = vpop.f32.mrf.mxu0
  %v188 = vadd.f32 %v169, %v187
  %v189 = vpop.f32.mrf.mxu0
  %v190 = vadd.f32 %v171, %v189
  %191 = vdwg.mxu0
  %v192 = vmax.f32 %v183, 0.0
  %v193 = vmax.f32 %v185, 0.0
  %v194 = vmax.f32 %v188, 0.0
  %v195 = vmax.f32 %v190, 0.0
  %vm196 = vcmask 261120
  %197 = vst.msk [vmem:[%s3] sm:$0xff] %vm196, %v192
  %198 = vst.msk [vmem:[%s3 + $0x8] sm:$0xff] %vm196, %v193
  %199 = vst.msk [vmem:[%s3 + $0x10] sm:$0xff] %vm196, %v194
  %200 = vst.msk [vmem:[%s3 + $0x18] sm:$0xff] %vm196, %v195
  // Predicated region
  $region14: #{flow_generator_forward.60} parent=0 // pred_check
    _
  $region15: #{flow_generator_forward.60} parent=0 // pred_check_branch
    %202 = sbr.rel (0) target = $region17
  $region16: #{flow_generator_forward.60} parent=0 // pred_region
    _
  $region17: #{flow_generator_forward.60} parent=0 // pred_fallthru
    _
  // Predicated region
  $region18: #{flow_generator_forward.60} parent=0 // pred_check
    _
  $region19: #{flow_generator_forward.60} parent=0 // pred_check_branch
    %204 = sbr.rel (0) target = $region21
  $region20: #{flow_generator_forward.60} parent=0 // pred_region
    _
  $region21: #{flow_generator_forward.60} parent=0 // pred_fallthru
    _

// kernel: flow_generator_forward.61
$region0: #{flow_generator_forward.61}
  #allocation0 [shape = 'u32[]', space=smem, size = 0x4, offset = 0x4, fixed_abs, tag = 'smem constant byte address 0x4 - core index']
  #allocation1 [shape = 'u32[72,128]{1,0:T(1,128)}', space=vmem, size = 0x9000, scoped, tag = 'internal scratch']
  %s0 = inlined_call_operand.vmem [shape: f32[32,32], index: 0, kind: input, shape index: {}]
  %s1 = inlined_call_operand.vmem [shape: f32[32,1], index: 1, kind: input, shape index: {}]
  %s2 = inlined_call_operand.vmem [shape: f32[32,1], index: 2, kind: input, shape index: {}]
  %s3 = inlined_call_operand.vmem [shape: f32[32,32], index: 3, kind: output, shape index: {}]
  %s4 = sld [smem:[#allocation0]]
  $region22: #{flow_generator_forward.61} parent=0
    _
  %s6 = ssub.s32 1, %s4
  %s7 = scalar_select 0, %s6, %s4
  // Predicated region
  $region2: #{flow_generator_forward.61} parent=0 // pred_check
    _
  $region3: #{flow_generator_forward.61} parent=0 // pred_check_branch
    %9 = sbr.rel (0) target = $region5
  $region4: #{flow_generator_forward.61} parent=0 // pred_region
    _
  $region5: #{flow_generator_forward.61} parent=0 // pred_fallthru
    _
  // Predicated region
  $region6: #{flow_generator_forward.61} parent=0 // pred_check
    _
  $region7: #{flow_generator_forward.61} parent=0 // pred_check_branch
    %11 = sbr.rel (0) target = $region9
  $region8: #{flow_generator_forward.61} parent=0 // pred_region
    _
  $region9: #{flow_generator_forward.61} parent=0 // pred_fallthru
    _
  // Predicated region
  $region10: #{flow_generator_forward.61} parent=0 // pred_check
    _
  $region11: #{flow_generator_forward.61} parent=0 // pred_check_branch
    %13 = sbr.rel (0) target = $region13
  $region12: #{flow_generator_forward.61} parent=0 // pred_region
    _
  $region13: #{flow_generator_forward.61} parent=0 // pred_fallthru
    _
  %v14 = vld [vmem:[%s0] sm:$0xff]
  %v15 = vld [vmem:[%s0 + $0x8] sm:$0xff]
  %v16 = vld [vmem:[%s0 + $0x10] sm:$0xff]
  %v17 = vld [vmem:[%s0 + $0x18] sm:$0xff]
  %vm18 = vcmask 261120
  %v19 = vsel %vm18, %v14, 0.0
  %v20 = vsel %vm18, %v15, 0.0
  %v21 = vadd.f32 %v19, %v20
  %v22 = vsel %vm18, %v16, 0.0
  %v23 = vadd.f32 %v21, %v22
  %v24 = vsel %vm18, %v17, 0.0
  %v25 = vadd.f32 %v23, %v24
  %v26 = vrot.slane %v25, 4
  %v27 = vadd.f32 %v25, %v26
  %v28 = vrot.slane %v27, 2
  %v29 = vadd.f32 %v27, %v28
  %v30 = vrot.slane %v29, 1
  %v31 = vadd.f32 %v29, %v30
  %v32 = vrcp.pop 32.0
  %v33 = vmul.f32 32.0, %v32
  %v34 = vsub.f32 1.0, %v33
  %v35 = vmul.f32 %v32, %v34
  %v36 = vadd.f32 %v32, %v35
  %vm37 = vweird.f32 %v32
  %v38 = vsel %vm37, %v32, %v36
  %v39 = vmul.f32 %v31, %v38
  %v40 = vsub.f32 %v14, %v39
  %v41 = vsub.f32 %v15, %v39
  %v42 = vsub.f32 %v16, %v39
  %v43 = vsub.f32 %v17, %v39
  %v44 = vmul.f32 %v40, %v40
  %v45 = vmul.f32 %v41, %v41
  %v46 = vmul.f32 %v42, %v42
  %v47 = vmul.f32 %v43, %v43
  %v48 = vsel %vm18, %v44, 0.0
  %v49 = vsel %vm18, %v45, 0.0
  %v50 = vadd.f32 %v48, %v49
  %v51 = vsel %vm18, %v46, 0.0
  %v52 = vadd.f32 %v50, %v51
  %v53 = vsel %vm18, %v47, 0.0
  %v54 = vadd.f32 %v52, %v53
  %v55 = vrot.slane %v54, 4
  %v56 = vadd.f32 %v54, %v55
  %v57 = vrot.slane %v56, 2
  %v58 = vadd.f32 %v56, %v57
  %v59 = vrot.slane %v58, 1
  %v60 = vadd.f32 %v58, %v59
  %v61 = vmul.f32 %v60, %v38
  %v62 = vadd.f32 %v61, 0.0001
  %v63 = vrsqrt.pop %v62
  %v64 = vmul.f32 %v63, %v62
  %v65 = vmul.f32 %v64, %v63
  %v66 = vmul.f32 0.5, %v65
  %v67 = vsub.f32 1.5, %v66
  %v68 = vmul.f32 %v63, %v67
  %vm69 = vweird.f32 %v62
  %vm70 = vweird.f32 %v63
  %vm71 = vmor %vm69, %vm70
  %v72 = vsel %vm71, %v63, %v68
  %v73 = vmul.f32 %v40, %v72
  %v74 = vmul.f32 %v41, %v72
  %v75 = vmul.f32 %v42, %v72
  %v76 = vmul.f32 %v43, %v72
  %v77 = vld [vmem:[%s1] sm:$0xff]
  %v78 = vld [vmem:[%s1 + $0x8] sm:$0xff]
  %v79 = vld [vmem:[%s1 + $0x10] sm:$0xff]
  %v80 = vld [vmem:[%s1 + $0x18] sm:$0xff]
  %82 = vset.pattern.permute.xlu0 0
  %83 = vperm.xlu0 %82, %v77
  %v84 = vpop.permute.xlu0 %83
  %87 = vset.pattern.permute.xlu0 0
  %88 = vperm.xlu0 %87, %v78
  %v89 = vpop.permute.xlu0 %88
  %92 = vset.pattern.permute.xlu0 0
  %93 = vperm.xlu0 %92, %v79
  %v94 = vpop.permute.xlu0 %93
  %97 = vset.pattern.permute.xlu0 0
  %98 = vperm.xlu0 %97, %v80
  %v99 = vpop.permute.xlu0 %98
  %v101 = vmul.f32 %v73, %v84
  %v102 = vmul.f32 %v74, %v89
  %v103 = vmul.f32 %v75, %v94
  %v104 = vmul.f32 %v76, %v99
  %v105 = vld [vmem:[%s2] sm:$0xff]
  %v106 = vld [vmem:[%s2 + $0x8] sm:$0xff]
  %v107 = vld [vmem:[%s2 + $0x10] sm:$0xff]
  %v108 = vld [vmem:[%s2 + $0x18] sm:$0xff]
  %110 = vset.pattern.permute.xlu0 0
  %111 = vperm.xlu0 %110, %v105
  %v112 = vpop.permute.xlu0 %111
  %115 = vset.pattern.permute.xlu0 0
  %116 = vperm.xlu0 %115, %v106
  %v117 = vpop.permute.xlu0 %116
  %120 = vset.pattern.permute.xlu0 0
  %121 = vperm.xlu0 %120, %v107
  %v122 = vpop.permute.xlu0 %121
  %125 = vset.pattern.permute.xlu0 0
  %126 = vperm.xlu0 %125, %v108
  %v127 = vpop.permute.xlu0 %126
  %v129 = vadd.f32 %v101, %v112
  %v130 = vadd.f32 %v102, %v117
  %v131 = vadd.f32 %v103, %v122
  %v132 = vadd.f32 %v104, %v127
  %133 = vst.msk [vmem:[%s3] sm:$0xff] %vm18, %v129
  %134 = vst.msk [vmem:[%s3 + $0x8] sm:$0xff] %vm18, %v130
  %135 = vst.msk [vmem:[%s3 + $0x10] sm:$0xff] %vm18, %v131
  %136 = vst.msk [vmem:[%s3 + $0x18] sm:$0xff] %vm18, %v132
  // Predicated region
  $region14: #{flow_generator_forward.61} parent=0 // pred_check
    _
  $region15: #{flow_generator_forward.61} parent=0 // pred_check_branch
    %138 = sbr.rel (0) target = $region17
  $region16: #{flow_generator_forward.61} parent=0 // pred_region
    _
  $region17: #{flow_generator_forward.61} parent=0 // pred_fallthru
    _
  // Predicated region
  $region18: #{flow_generator_forward.61} parent=0 // pred_check
    _
  $region19: #{flow_generator_forward.61} parent=0 // pred_check_branch
    %140 = sbr.rel (0) target = $region21
  $region20: #{flow_generator_forward.61} parent=0 // pred_region
    _
  $region21: #{flow_generator_forward.61} parent=0 // pred_fallthru
    _

// kernel: flow_generator_forward.57
$region0: #{flow_generator_forward.57}
  #allocation0 [shape = 'u32[]', space=smem, size = 0x4, offset = 0x4, fixed_abs, tag = 'smem constant byte address 0x4 - core index']
  #allocation1 [shape = 'u32[72,128]{1,0:T(1,128)}', space=vmem, size = 0x9000, scoped, tag = 'internal scratch']
  %s0 = inlined_call_operand.vmem [shape: bf16[96,32], index: 0, kind: input, shape index: {}]
  %s1 = inlined_call_operand.vmem [shape: f32[32,96], index: 1, kind: input, shape index: {}]
  %s2 = inlined_call_operand.vmem [shape: f32[32,1], index: 2, kind: input, shape index: {}]
  %s3 = inlined_call_operand.vmem [shape: f32[32,32], index: 3, kind: output, shape index: {}]
  %s4 = sld [smem:[#allocation0]]
  $region22: #{flow_generator_forward.57} parent=0
    _
  %s6 = ssub.s32 1, %s4
  %s7 = scalar_select 0, %s6, %s4
  // Predicated region
  $region2: #{flow_generator_forward.57} parent=0 // pred_check
    _
  $region3: #{flow_generator_forward.57} parent=0 // pred_check_branch
    %9 = sbr.rel (0) target = $region5
  $region4: #{flow_generator_forward.57} parent=0 // pred_region
    _
  $region5: #{flow_generator_forward.57} parent=0 // pred_fallthru
    _
  // Predicated region
  $region6: #{flow_generator_forward.57} parent=0 // pred_check
    _
  $region7: #{flow_generator_forward.57} parent=0 // pred_check_branch
    %11 = sbr.rel (0) target = $region9
  $region8: #{flow_generator_forward.57} parent=0 // pred_region
    _
  $region9: #{flow_generator_forward.57} parent=0 // pred_fallthru
    _
  // Predicated region
  $region10: #{flow_generator_forward.57} parent=0 // pred_check
    _
  $region11: #{flow_generator_forward.57} parent=0 // pred_check_branch
    %13 = sbr.rel (0) target = $region13
  $region12: #{flow_generator_forward.57} parent=0 // pred_region
    _
  $region13: #{flow_generator_forward.57} parent=0 // pred_fallthru
    _
  %v15 = vld [vmem:[%s0] sm:$0xf]
  %v16 = vld [vmem:[%s0 + $0x4] sm:$0xf]
  %v17 = vld [vmem:[%s0 + $0x8] sm:$0xf]
  %v18 = vld [vmem:[%s0 + $0xc] sm:$0xf]
  %v19 = vld [vmem:[%s0 + $0x10] sm:$0xf]
  %v20 = vld [vmem:[%s0 + $0x14] sm:$0xf]
  %v21 = vld [vmem:[%s0 + $0x18] sm:$0xf]
  %v22 = vld [vmem:[%s0 + $0x1c] sm:$0xf]
  %v23 = vld [vmem:[%s0 + $0x20] sm:$0xf]
  %v24 = vld [vmem:[%s0 + $0x24] sm:$0xf]
  %v25 = vld [vmem:[%s0 + $0x28] sm:$0xf]
  %v26 = vld [vmem:[%s0 + $0x2c] sm:$0xf]
  %v27 = vld [vmem:[%s1] sm:$0xff]
  %v28 = vld [vmem:[%s1 + $0x8] sm:$0xff]
  %v29 = vld [vmem:[%s1 + $0x10] sm:$0xff]
  %v30 = vld [vmem:[%s1 + $0x18] sm:$0xff]
  %v31 = vpack.c.bf16 %v28, %v27
  %v32 = vpack.c.bf16 %v30, %v29
  %v33 = vld [vmem:[%s2] sm:$0xff]
  %v34 = vld [vmem:[%s2 + $0x8] sm:$0xff]
  %v35 = vld [vmem:[%s2 + $0x10] sm:$0xff]
  %v36 = vld [vmem:[%s2 + $0x18] sm:$0xff]
  %38 = vset.pattern.permute.xlu0 0
  %39 = vperm.xlu0 %38, %v33
  %v40 = vpop.permute.xlu0 %39
  %43 = vset.pattern.permute.xlu0 0
  %44 = vperm.xlu0 %43, %v34
  %v45 = vpop.permute.xlu0 %44
  %48 = vset.pattern.permute.xlu0 0
  %49 = vperm.xlu0 %48, %v35
  %v50 = vpop.permute.xlu0 %49
  %53 = vset.pattern.permute.xlu0 0
  %54 = vperm.xlu0 %53, %v36
  %v55 = vpop.permute.xlu0 %54
  %v69 = vunpack.c.l.b16 %v15
  %v70 = vunpack.c.l.b16 %v16
  %v71 = vunpack.c.l.b16 %v17
  %v72 = vunpack.c.l.b16 %v18
  %v73 = vunpack.c.l.b16 %v19
  %v74 = vunpack.c.l.b16 %v20
  %v75 = vunpack.c.l.b16 %v21
  %v76 = vunpack.c.l.b16 %v22
  %v77 = vunpack.c.l.b16 %v23
  %v78 = vunpack.c.l.b16 %v24
  %v79 = vunpack.c.l.b16 %v25
  %v80 = vunpack.c.l.b16 %v26
  %v81 = vpack.c.b16 %v70, %v69
  %v82 = vpack.c.b16 %v72, %v71
  %v83 = vpack.c.b16 %v74, %v73
  %v84 = vpack.c.b16 %v76, %v75
  %v85 = vpack.c.b16 %v78, %v77
  %v86 = vpack.c.b16 %v80, %v79
  %vm93 = vcmask 785408
  %v95 = vsel %vm93, %v31, 0
  %v98 = vsel %vm93, %v32, 0
  %100 = vmatpush.bf16.msra.mxu0 0
  %101 = vmatpush.bf16.msra.mxu0 0
  %102 = vmatpush.bf16.msra.mxu0 %v86
  %103 = vmatpush.bf16.msra.mxu0 %v85
  %104 = vmatpush.bf16.msra.mxu0 %v84
  %105 = vmatpush.bf16.msra.mxu0 %v83
  %106 = vmatpush.bf16.msra.mxu0 %v82
  %107 = vmatpush.bf16.msra.mxu0 %v81
  %108 = vmatmul.bf16.gmra.mxu0 %v95
  %v109 = vpop.f32.mrf.mxu0
  %v110 = vadd.f32 %v40, %v109
  %v111 = vpop.f32.mrf.mxu0
  %v112 = vadd.f32 %v45, %v111
  %113 = vmatmul.bf16.gmra.mxu0 %v98
  %v114 = vpop.f32.mrf.mxu0
  %v115 = vadd.f32 %v50, %v114
  %v116 = vpop.f32.mrf.mxu0
  %v117 = vadd.f32 %v55, %v116
  %118 = vdwg.mxu0
  %v119 = vmax.f32 %v110, 0.0
  %v120 = vmax.f32 %v112, 0.0
  %v121 = vmax.f32 %v115, 0.0
  %v122 = vmax.f32 %v117, 0.0
  %vm123 = vcmask 261120
  %124 = vst.msk [vmem:[%s3] sm:$0xff] %vm123, %v119
  %125 = vst.msk [vmem:[%s3 + $0x8] sm:$0xff] %vm123, %v120
  %126 = vst.msk [vmem:[%s3 + $0x10] sm:$0xff] %vm123, %v121
  %127 = vst.msk [vmem:[%s3 + $0x18] sm:$0xff] %vm123, %v122
  // Predicated region
  $region14: #{flow_generator_forward.57} parent=0 // pred_check
    _
  $region15: #{flow_generator_forward.57} parent=0 // pred_check_branch
    %129 = sbr.rel (0) target = $region17
  $region16: #{flow_generator_forward.57} parent=0 // pred_region
    _
  $region17: #{flow_generator_forward.57} parent=0 // pred_fallthru
    _
  // Predicated region
  $region18: #{flow_generator_forward.57} parent=0 // pred_check
    _
  $region19: #{flow_generator_forward.57} parent=0 // pred_check_branch
    %131 = sbr.rel (0) target = $region21
  $region20: #{flow_generator_forward.57} parent=0 // pred_region
    _
  $region21: #{flow_generator_forward.57} parent=0 // pred_fallthru
    _

// kernel: flow_generator_forward.59
$region0: #{flow_generator_forward.59}
  #allocation0 [shape = 'u32[]', space=smem, size = 0x4, offset = 0x4, fixed_abs, tag = 'smem constant byte address 0x4 - core index']
  #allocation1 [shape = 'u32[72,128]{1,0:T(1,128)}', space=vmem, size = 0x9000, scoped, tag = 'internal scratch']
  #allocation2 [shape = 'f32[1,1]{1,0:T(1,128)S(1)}', space=vmem, size = 0x200, scoped, tag = 'scoped memory for flow_generator_forward.59']
  %s0 = inlined_call_operand.vmem [shape: f32[32,32], index: 0, kind: input, shape index: {}]
  %s1 = inlined_call_operand.vmem [shape: f32[1,32], index: 1, kind: input, shape index: {}]
  %s2 = inlined_call_operand.<no memory space> [shape: f32[1,1], index: 2, kind: input, shape index: {}]
  %s3 = inlined_call_operand.vmem [shape: f32[1,32], index: 3, kind: input, shape index: {}, may-alias: {3,4}]
  %s4 = inlined_call_operand.vmem [shape: f32[1,32], index: 4, kind: input, shape index: {}, may-alias: {3,4}]
  %s5 = inlined_call_operand.vmem [shape: f32[1,32], index: 5, kind: output, shape index: {}]
  %s6 = sld [smem:[#allocation0]]
  $region30: #{flow_generator_forward.59} parent=0
    _
  %s8 = ssub.s32 1, %s6
  %s9 = scalar_select 0, %s8, %s6
  %v10 = vstv %s2
  %11 = vst [vmem:[#allocation2] sm:$0x1] %v10
  // Predicated region
  $region2: #{flow_generator_forward.59} parent=0 // pred_check
    _
  $region3: #{flow_generator_forward.59} parent=0 // pred_check_branch
    %13 = sbr.rel (0) target = $region5
  $region4: #{flow_generator_forward.59} parent=0 // pred_region
    _
  $region5: #{flow_generator_forward.59} parent=0 // pred_fallthru
    _
  // Predicated region
  $region6: #{flow_generator_forward.59} parent=0 // pred_check
    _
  $region7: #{flow_generator_forward.59} parent=0 // pred_check_branch
    %15 = sbr.rel (0) target = $region9
  $region8: #{flow_generator_forward.59} parent=0 // pred_region
    _
  $region9: #{flow_generator_forward.59} parent=0 // pred_fallthru
    _
  // Predicated region
  $region10: #{flow_generator_forward.59} parent=0 // pred_check
    _
  $region11: #{flow_generator_forward.59} parent=0 // pred_check_branch
    %17 = sbr.rel (0) target = $region13
  $region12: #{flow_generator_forward.59} parent=0 // pred_region
    _
  $region13: #{flow_generator_forward.59} parent=0 // pred_fallthru
    _
  // Predicated region
  $region14: #{flow_generator_forward.59} parent=0 // pred_check
    _
  $region15: #{flow_generator_forward.59} parent=0 // pred_check_branch
    %19 = sbr.rel (0) target = $region17
  $region16: #{flow_generator_forward.59} parent=0 // pred_region
    _
  $region17: #{flow_generator_forward.59} parent=0 // pred_fallthru
    _
  // Predicated region
  $region18: #{flow_generator_forward.59} parent=0 // pred_check
    _
  $region19: #{flow_generator_forward.59} parent=0 // pred_check_branch
    %21 = sbr.rel (0) target = $region21
  $region20: #{flow_generator_forward.59} parent=0 // pred_region
    _
  $region21: #{flow_generator_forward.59} parent=0 // pred_fallthru
    _
  %v22 = vld [vmem:[%s0] sm:$0xff]
  %v23 = vld [vmem:[%s0 + $0x8] sm:$0xff]
  %v24 = vld [vmem:[%s0 + $0x10] sm:$0xff]
  %v25 = vld [vmem:[%s0 + $0x18] sm:$0xff]
  %v26 = vld [vmem:[%s3] sm:$0x1]
  %v28 = vperm.slane %v26, 0
  %v30 = vmul.f32 %v22, %v28
  %v31 = vmul.f32 %v23, %v28
  %v32 = vmul.f32 %v24, %v28
  %v33 = vmul.f32 %v25, %v28
  %v34 = vld [vmem:[%s1] sm:$0x1]
  %v35 = vperm.slane %v34, 0
  %v36 = vlaneseq
  %v37 = vshrl.u32 %v36, 7
  %39 = vset.pattern.permute.xlu0 %v37
  %40 = vperm.xlu0 %39, %v35
  %v41 = vpop.permute.xlu0 %40
  %v42 = vlaneseq
  %v43 = vshrl.u32 %v42, 7
  %v44 = vadd.s32 %v43, 8
  %45 = vset.pattern.permute.xlu0 %v44
  %46 = vperm.xlu0 %45, %v35
  %v47 = vpop.permute.xlu0 %46
  %v48 = vlaneseq
  %v49 = vshrl.u32 %v48, 7
  %v50 = vadd.s32 %v49, 16
  %51 = vset.pattern.permute.xlu0 %v50
  %52 = vperm.xlu0 %51, %v35
  %v53 = vpop.permute.xlu0 %52
  %v54 = vlaneseq
  %v55 = vshrl.u32 %v54, 7
  %v56 = vadd.s32 %v55, 24
  %57 = vset.pattern.permute.xlu0 %v56
  %58 = vperm.xlu0 %57, %v35
  %v59 = vpop.permute.xlu0 %58
  %v60 = vmul.f32 %v41, %v30
  %v61 = vmul.f32 %v47, %v31
  %v62 = vmul.f32 %v53, %v32
  %v63 = vmul.f32 %v59, %v33
  %vm64 = vcmask 261120
  %v65 = vsel %vm64, %v60, 0.0
  %v66 = vsel %vm64, %v61, 0.0
  %v67 = vadd.f32 %v65, %v66
  %v68 = vsel %vm64, %v62, 0.0
  %v69 = vadd.f32 %v67, %v68
  %v70 = vsel %vm64, %v63, 0.0
  %v71 = vadd.f32 %v69, %v70
  %v72 = vrot.slane %v71, 4
  %v73 = vadd.f32 %v71, %v72
  %v74 = vrot.slane %v73, 2
  %v75 = vadd.f32 %v73, %v74
  %v76 = vrot.slane %v75, 1
  %v77 = vadd.f32 %v75, %v76
  %v78 = vld [vmem:[#allocation2] sm:$0x1]
  %80 = vset.pattern.permute.xlu0 0
  %81 = vperm.xlu0 %80, %v78
  %v82 = vpop.permute.xlu0 %81
  %v84 = vperm.slane %v82, 0
  %v85 = vadd.f32 %v77, %v84
  %v86 = vld [vmem:[%s4] sm:$0x1]
  %v87 = vmul.f32 %v85, %v86
  %vm88 = vcmask 253952
  %89 = vst.msk [vmem:[%s5] sm:$0x1] %vm88, %v87
  // Predicated region
  $region22: #{flow_generator_forward.59} parent=0 // pred_check
    _
  $region23: #{flow_generator_forward.59} parent=0 // pred_check_branch
    %91 = sbr.rel (0) target = $region25
  $region24: #{flow_generator_forward.59} parent=0 // pred_region
    _
  $region25: #{flow_generator_forward.59} parent=0 // pred_fallthru
    _
  // Predicated region
  $region26: #{flow_generator_forward.59} parent=0 // pred_check
    _
  $region27: #{flow_generator_forward.59} parent=0 // pred_check_branch
    %93 = sbr.rel (0) target = $region29
  $region28: #{flow_generator_forward.59} parent=0 // pred_region
    _
  $region29: #{flow_generator_forward.59} parent=0 // pred_fallthru
    _

</llo_original>
